<compile_context>
chip_gen: v7x
topology: tpu7x:2x2x1
jax: 0.10.0
libtpu: 0.0.40
codegen_flags: <defaults>
</compile_context>

<pallas_src>
import math
import numpy as np
import jax
import jax.numpy as jnp
from jax.experimental import pallas as pl
from jax.experimental.pallas import tpu as pltpu

# ----------------------- small configuration (consistent with the module) ------
NUM_CLASSES = 10
D_MODEL = 128          # lane friendly / divisible by N_HEADS (module default is 144)
N_HEADS = 4
HEAD_DIM = D_MODEL // N_HEADS
NUM_LAYERS = 2         # small subset (module default is 4)
FF_MULT = 4
FF_DIM = D_MODEL * FF_MULT
CONV_K = 7
N_MELS = 80
SR = 16000
N_FFT = 400
HOP = 160
LN_EPS = 1e-5
BN_EPS = 1e-5
FC_PAD = 128           # classifier columns padded to a full lane width

LAYER_PARAM_NAMES = (
    "ff1_g", "ff1_b", "ff1_w1", "ff1_b1", "ff1_w2", "ff1_b2",
    "attn_g", "attn_b", "wqkv", "bqkv", "wo", "bo",
    "conv_g", "conv_b", "pw1_w", "pw1_b", "dw_w", "dw_b",
    "bn_g", "bn_bt", "bn_m", "bn_v", "pw2_w", "pw2_b",
    "ff2_g", "ff2_b", "ff2_w1", "ff2_b1", "ff2_w2", "ff2_b2",
    "out_g", "out_b",
)
N_LP = len(LAYER_PARAM_NAMES)
# matmul weight matrices stored in bf16 (biases / LN / BN / depthwise taps stay f32)
BF16_LAYER_WEIGHTS = {"ff1_w1", "ff1_w2", "wqkv", "wo", "pw1_w", "pw2_w",
                      "ff2_w1", "ff2_w2"}


# ------------------------------- in-kernel helpers ------------------------------
def _layernorm(x, gamma, beta):
    mu = jnp.mean(x, axis=-1, keepdims=True)
    var = jnp.mean(jnp.square(x - mu), axis=-1, keepdims=True)
    return (x - mu) * jax.lax.rsqrt(var + LN_EPS) * gamma + beta


def _ffn(x, p, pre):
    # x + 0.5 * (W2 @ relu(W1 @ LN(x) + b1) + b2)   (dropout = identity in eval)
    h = _layernorm(x, p[pre + "_g"][...], p[pre + "_b"][...]).astype(jnp.bfloat16)
    h = jnp.dot(h, p[pre + "_w1"][...],
                preferred_element_type=jnp.float32) + p[pre + "_b1"][...]
    h = jnp.maximum(h, 0.0).astype(jnp.bfloat16)
    y = jnp.dot(h, p[pre + "_w2"][...],
                preferred_element_type=jnp.float32) + p[pre + "_b2"][...]
    return x + 0.5 * y


def _mhsa(x, p, B, T):
    # Pre-LN multi-head self-attention + residual on the flattened (B*T, D)
    # activation.  (No key-padding mask, matching the reference self.attn(x,x,x).)
    BT = B * T
    xn = _layernorm(x, p["attn_g"][...], p["attn_b"][...]).astype(jnp.bfloat16)
    qkv = jnp.dot(xn, p["wqkv"][...],
                  preferred_element_type=jnp.float32) + p["bqkv"][...]   # (BT, 3D)
    q = qkv[:, :D_MODEL].reshape(B, T, D_MODEL).astype(jnp.bfloat16)
    k = qkv[:, D_MODEL:2 * D_MODEL].reshape(B, T, D_MODEL).astype(jnp.bfloat16)
    v = qkv[:, 2 * D_MODEL:].reshape(B, T, D_MODEL).astype(jnp.bfloat16)
    scale = 1.0 / math.sqrt(HEAD_DIM)

    heads = []
    for h in range(N_HEADS):                         # heads are lane blocks
        lo = h * HEAD_DIM
        s = jnp.einsum("bqd,bkd->bqk", q[:, :, lo:lo + HEAD_DIM],
                       k[:, :, lo:lo + HEAD_DIM],
                       preferred_element_type=jnp.float32) * scale
        s = s - jnp.max(s, axis=-1, keepdims=True)
        e = jnp.exp(s)
        prob = (e * pl.reciprocal(jnp.sum(e, axis=-1, keepdims=True),
                                  approx=True)).astype(jnp.bfloat16)
        heads.append(jnp.einsum("bqk,bkd->bqd", prob, v[:, :, lo:lo + HEAD_DIM],
                                preferred_element_type=jnp.float32))      # (B,T,hd)

    # One K=128 output projection instead of four K=32 contractions.
    ctx = jnp.concatenate(heads, axis=-1).reshape(BT, D_MODEL).astype(jnp.bfloat16)
    out = jnp.dot(ctx, p["wo"][...],
                  preferred_element_type=jnp.float32) + p["bo"][...]
    return x + out


def _conv_module(x, p, masks_ref):
    # LN -> pointwise conv (matmul) -> GLU -> depthwise conv (sublane rolls +
    # host-precomputed masks) -> BatchNorm(eval) -> ReLU -> pointwise conv -> residual
    xn = _layernorm(x, p["conv_g"][...], p["conv_b"][...]).astype(jnp.bfloat16)
    y = jnp.dot(xn, p["pw1_w"][...],
                preferred_element_type=jnp.float32) + p["pw1_b"][...]     # (BT, 2D)
    a = y[:, :D_MODEL]
    gate = y[:, D_MODEL:]
    glu = a * pl.reciprocal(1.0 + jnp.exp(-gate), approx=True)            # a*sigmoid

    BT = glu.shape[0]
    dw = p["dw_w"][...]                                                   # (K, D)
    half = CONV_K // 2
    acc = dw[half:half + 1, :] * glu                                      # center tap
    for kk in range(CONV_K):          # y[t] += w[kk] * x[t + kk - half]
        s = kk - half
        if s == 0:
            continue
        rolled = pltpu.roll(glu, shift=(-s) % BT, axis=0)
        acc = acc + dw[kk:kk + 1, :] * (rolled * masks_ref[kk])
    acc = acc + p["dw_b"][...]

    # TODO(synk): BatchNorm1d implemented with eval-mode running statistics.
    h = (acc - p["bn_m"][...]) * jax.lax.rsqrt(p["bn_v"][...] + BN_EPS) \
        * p["bn_g"][...] + p["bn_bt"][...]
    h = jnp.maximum(h, 0.0).astype(jnp.bfloat16)
    z = jnp.dot(h, p["pw2_w"][...],
                preferred_element_type=jnp.float32) + p["pw2_b"][...]
    return x + z


# --------------------------------- fused kernel ---------------------------------
def conformer_net_kernel(*refs):
    """One grid step == one Conformer block.  Input Linear at step 0, classifier
    at the last step.  Residual stream lives in a VMEM scratch across steps."""
    mel_ref, masks_ref, in_w_ref, in_b_ref = refs[:4]
    layer_refs = refs[4:4 + N_LP]
    fc_w_ref, fc_b_ref = refs[4 + N_LP], refs[5 + N_LP]
    o_ref = refs[6 + N_LP]
    x_scr = refs[7 + N_LP]

    B, T, _ = mel_ref.shape
    BT = B * T
    l = pl.program_id(0)

    # Per-layer params: already layer-selected Ref views (zero-cost); load at use site.
    p = dict(zip(LAYER_PARAM_NAMES, layer_refs))

    @pl.when(l == 0)
    def _():
        mel = mel_ref[...].reshape(BT, N_MELS).astype(jnp.bfloat16)
        x_scr[...] = jnp.dot(mel, in_w_ref[...],
                             preferred_element_type=jnp.float32) + in_b_ref[...]

    x = x_scr[...]
    x = _ffn(x, p, "ff1")                               # x + 0.5 * FFN1
    x = _mhsa(x, p, B, T)                               # x + MHSA
    x = _conv_module(x, p, masks_ref)                   # x + conv module
    x = _ffn(x, p, "ff2")                               # x + 0.5 * FFN2
    x = _layernorm(x, p["out_g"][...], p["out_b"][...]) # block output LN
    x_scr[...] = x

    @pl.when(l == pl.num_programs(0) - 1)
    def _():
        logits = jnp.dot(x.astype(jnp.bfloat16), fc_w_ref[...],
                         preferred_element_type=jnp.float32) + fc_b_ref[...]
        o_ref[...] = logits.reshape(B, T, FC_PAD)


@jax.jit
def conformer_apply(mel_padded, packed):
    B, T, _ = mel_padded.shape
    BT = B * T

    # Depthwise-conv edge / batch-boundary masks for the flattened (B*T, D)
    # activation.  Built on the host and passed as an INPUT (kernels must not
    # capture array constants).
    half = CONV_K // 2
    t_idx = np.tile(np.arange(T), B)
    mask_np = np.empty((CONV_K, BT, 1), np.float32)
    for kk in range(CONV_K):
        s = kk - half
        mask_np[kk, :, 0] = ((t_idx + s >= 0) & (t_idx + s < T)).astype(np.float32)
    masks = jnp.asarray(mask_np)

    in_w, in_b = packed[0], packed[1]
    layer_arrs = packed[2:2 + N_LP]
    fc_w, fc_b = packed[-2], packed[-1]

    def full(a):                       # resident across all grid steps
        return pl.BlockSpec(a.shape, lambda l, n=a.ndim: (0,) * n)

    def per_layer(a):                  # grid step l selects layer l (double-buffered)
        return pl.BlockSpec((None,) + a.shape[1:],
                            lambda l, n=a.ndim - 1: (l,) + (0,) * n)

    logits_padded = pl.pallas_call(
        conformer_net_kernel,
        out_shape=jax.ShapeDtypeStruct((B, T, FC_PAD), jnp.float32),
        grid=(NUM_LAYERS,),
        in_specs=([full(mel_padded), full(masks), full(in_w), full(in_b)]
                  + [per_layer(a) for a in layer_arrs]
                  + [full(fc_w), full(fc_b)]),
        out_specs=pl.BlockSpec((B, T, FC_PAD), lambda l: (0, 0, 0)),
        scratch_shapes=[pltpu.VMEM((BT, D_MODEL), jnp.float32)],   # residual stream
        compiler_params=pltpu.CompilerParams(
            dimension_semantics=("arbitrary",)),
    )(mel_padded, masks, *packed)
    return logits_padded[:, :, :NUM_CLASSES]            # drop lane padding outside


# ------------------------------- parameter init ---------------------------------
def init_params(key):
    keys = iter(jax.random.split(key, 512))

    def dense(fan_in, shape):
        return jax.random.normal(next(keys), shape, jnp.float32) / np.sqrt(fan_in)

    ones = lambda n: jnp.ones((1, n), jnp.float32)
    zeros = lambda n: jnp.zeros((1, n), jnp.float32)
    H = FF_DIM

    params = {
        "in_w": dense(N_MELS, (N_MELS, D_MODEL)),
        "in_b": dense(N_MELS, (1, D_MODEL)),
        "fc_w": dense(D_MODEL, (D_MODEL, NUM_CLASSES)),
        "fc_b": dense(D_MODEL, (1, NUM_CLASSES)),
        "layers": [],
    }
    for _ in range(NUM_LAYERS):
        p = {
            # macaron FFN 1
            "ff1_g": ones(D_MODEL), "ff1_b": zeros(D_MODEL),
            "ff1_w1": dense(D_MODEL, (D_MODEL, H)), "ff1_b1": dense(D_MODEL, (1, H)),
            "ff1_w2": dense(H, (H, D_MODEL)), "ff1_b2": dense(H, (1, D_MODEL)),
            # self-attention
            "attn_g": ones(D_MODEL), "attn_b": zeros(D_MODEL),
            "wq": dense(D_MODEL, (D_MODEL, D_MODEL)), "bq": dense(D_MODEL, (1, D_MODEL)),
            "wk": dense(D_MODEL, (D_MODEL, D_MODEL)), "bk": dense(D_MODEL, (1, D_MODEL)),
            "wv": dense(D_MODEL, (D_MODEL, D_MODEL)), "bv": dense(D_MODEL, (1, D_MODEL)),
            "wo": dense(D_MODEL, (D_MODEL, D_MODEL)), "bo": dense(D_MODEL, (1, D_MODEL)),
            # conv module
            "conv_g": ones(D_MODEL), "conv_b": zeros(D_MODEL),
            "pw1_w": dense(D_MODEL, (D_MODEL, 2 * D_MODEL)),
            "pw1_b": dense(D_MODEL, (1, 2 * D_MODEL)),
            "dw_w": dense(CONV_K, (CONV_K, D_MODEL)), "dw_b": dense(CONV_K, (1, D_MODEL)),
            "bn_g": ones(D_MODEL), "bn_bt": zeros(D_MODEL),
            "bn_m": zeros(D_MODEL), "bn_v": ones(D_MODEL),
            "pw2_w": dense(D_MODEL, (D_MODEL, D_MODEL)),
            "pw2_b": dense(D_MODEL, (1, D_MODEL)),
            # macaron FFN 2 + output LN
            "ff2_g": ones(D_MODEL), "ff2_b": zeros(D_MODEL),
            "ff2_w1": dense(D_MODEL, (D_MODEL, H)), "ff2_b1": dense(D_MODEL, (1, H)),
            "ff2_w2": dense(H, (H, D_MODEL)), "ff2_b2": dense(H, (1, D_MODEL)),
            "out_g": ones(D_MODEL), "out_b": zeros(D_MODEL),
        }
        params["layers"].append(p)
    return params


def pack_params(params):
    """Stack per-layer params along a leading layer axis (selected by the grid),
    fuse wq/wk/wv into one (D, 3D) projection, cast matmul weights to bf16 and
    pad the classifier to a lane-dense 128-wide output block."""
    layers = params["layers"]
    stacked = []
    for name in LAYER_PARAM_NAMES:
        if name == "wqkv":
            arrs = [jnp.concatenate([lay["wq"], lay["wk"], lay["wv"]], axis=1)
                    for lay in layers]
        elif name == "bqkv":
            arrs = [jnp.concatenate([lay["bq"], lay["bk"], lay["bv"]], axis=1)
                    for lay in layers]
        else:
            arrs = [lay[name] for lay in layers]
        a = jnp.stack(arrs)
        if name in BF16_LAYER_WEIGHTS:
            a = a.astype(jnp.bfloat16)
        stacked.append(a)

    fc_w = jnp.zeros((D_MODEL, FC_PAD), jnp.float32)
    fc_w = fc_w.at[:, :NUM_CLASSES].set(params["fc_w"]).astype(jnp.bfloat16)
    fc_b = jnp.zeros((1, FC_PAD), jnp.float32).at[:, :NUM_CLASSES].set(params["fc_b"])
    in_w = params["in_w"].astype(jnp.bfloat16)
    return (in_w, params["in_b"]) + tuple(stacked) + (fc_w, fc_b)


# ----------------------- mel-spectrogram frontend (plain glue) -------------------
def _mel_filterbank():
    n_freqs = N_FFT // 2 + 1
    all_freqs = np.linspace(0.0, SR / 2.0, n_freqs)
    hz2mel = lambda f: 2595.0 * np.log10(1.0 + f / 700.0)
    mel2hz = lambda m: 700.0 * (10.0 ** (m / 2595.0) - 1.0)
    m_pts = np.linspace(hz2mel(0.0), hz2mel(SR / 2.0), N_MELS + 2)
    f_pts = mel2hz(m_pts)
    f_diff = f_pts[1:] - f_pts[:-1]
    slopes = f_pts[None, :] - all_freqs[:, None]
    down = -slopes[:, :-2] / f_diff[:-1]
    up = slopes[:, 2:] / f_diff[1:]
    return np.maximum(0.0, np.minimum(down, up)).astype(np.float32)   # (n_freqs, n_mels)


_MEL_FB = _mel_filterbank()


def mel_db_features(wav_np):
    # TODO(synk): torchaudio MelSpectrogram/AmplitudeToDB (STFT) has no clean Pallas
    # equivalent; computed here in plain numpy as deterministic host preprocessing.
    L = wav_np.shape[0]
    pad = N_FFT // 2
    wp = np.pad(wav_np, (pad, pad), mode="reflect")
    n_frames = 1 + L // HOP
    n = np.arange(N_FFT)
    window = 0.5 * (1.0 - np.cos(2.0 * np.pi * n / N_FFT))            # periodic hann
    idx = np.arange(n_frames)[:, None] * HOP + n[None, :]
    frames = wp[idx] * window[None, :]
    spec = np.abs(np.fft.rfft(frames, axis=-1)) ** 2                  # power spectrum
    mel = spec @ _MEL_FB                                              # (n_frames, n_mels)
    return (10.0 * np.log10(np.maximum(mel, 1e-10))).astype(np.float32)


# ------------------------------ SmallConformer forward ---------------------------
def small_conformer_forward(x, lengths, packed):
    """x: [B, 1, T_wave] raw audio; lengths: python ints."""
    x_np = np.asarray(x)
    B = x_np.shape[0]
    mels, mel_lengths = [], []
    for i in range(B):
        mel_i = mel_db_features(x_np[i, 0, :lengths[i]])              # (T_i, 80)
        mels.append(mel_i)
        mel_lengths.append(mel_i.shape[0])
    # pad_sequence semantics: pad to the batch max length with -80 dB.
    # (T is not padded further; keep hop/length choices making T % 8 == 0 so the
    #  (B,T,.) <-> (BT,.) reshapes inside the kernel stay layout no-ops — true here.)
    T = max(mel_lengths)
    mel_padded = np.full((B, T, N_MELS), -80.0, np.float32)
    for i, m in enumerate(mels):
        mel_padded[i, : m.shape[0]] = m

    logits = conformer_apply(jnp.asarray(mel_padded), packed)         # one fused pallas_call
    return logits, mel_lengths


# -------------------------------------- main -------------------------------------
if __name__ == "__main__":
    key = jax.random.PRNGKey(0)
    k_param, k_data = jax.random.split(key)
    params = init_params(k_param)
    packed = pack_params(params)

    # raw audio: B=2, padded waveform length 2400 (-> 16 / 11 mel frames)
    x = jax.random.normal(k_data, (2, 1, 2400), jnp.float32) * 0.1
    lengths = [2400, 1600]

    logits, mel_lengths = small_conformer_forward(x, lengths, packed)
    jax.block_until_ready(logits)
    assert logits.shape == (2, 16, NUM_CLASSES)
    assert mel_lengths == [16, 11]
    print("KERNEL_OK")
</pallas_src>

<mosaic_0001>
module attributes {stable_mosaic.version = 11 : i64} {
  func.func @conformer_net_kernel(%arg0: i32, %arg1: memref<2x16x80xf32, #tpu.memory_space<vmem>>, %arg2: memref<7x32x1xf32, #tpu.memory_space<vmem>>, %arg3: memref<80x128xbf16, #tpu.memory_space<vmem>>, %arg4: memref<1x128xf32, #tpu.memory_space<vmem>>, %arg5: memref<1x1x128xf32, #tpu.memory_space<vmem>>, %arg6: memref<1x1x128xf32, #tpu.memory_space<vmem>>, %arg7: memref<1x128x512xbf16, #tpu.memory_space<vmem>>, %arg8: memref<1x1x512xf32, #tpu.memory_space<vmem>>, %arg9: memref<1x512x128xbf16, #tpu.memory_space<vmem>>, %arg10: memref<1x1x128xf32, #tpu.memory_space<vmem>>, %arg11: memref<1x1x128xf32, #tpu.memory_space<vmem>>, %arg12: memref<1x1x128xf32, #tpu.memory_space<vmem>>, %arg13: memref<1x128x384xbf16, #tpu.memory_space<vmem>>, %arg14: memref<1x1x384xf32, #tpu.memory_space<vmem>>, %arg15: memref<1x128x128xbf16, #tpu.memory_space<vmem>>, %arg16: memref<1x1x128xf32, #tpu.memory_space<vmem>>, %arg17: memref<1x1x128xf32, #tpu.memory_space<vmem>>, %arg18: memref<1x1x128xf32, #tpu.memory_space<vmem>>, %arg19: memref<1x128x256xbf16, #tpu.memory_space<vmem>>, %arg20: memref<1x1x256xf32, #tpu.memory_space<vmem>>, %arg21: memref<1x7x128xf32, #tpu.memory_space<vmem>>, %arg22: memref<1x1x128xf32, #tpu.memory_space<vmem>>, %arg23: memref<1x1x128xf32, #tpu.memory_space<vmem>>, %arg24: memref<1x1x128xf32, #tpu.memory_space<vmem>>, %arg25: memref<1x1x128xf32, #tpu.memory_space<vmem>>, %arg26: memref<1x1x128xf32, #tpu.memory_space<vmem>>, %arg27: memref<1x128x128xbf16, #tpu.memory_space<vmem>>, %arg28: memref<1x1x128xf32, #tpu.memory_space<vmem>>, %arg29: memref<1x1x128xf32, #tpu.memory_space<vmem>>, %arg30: memref<1x1x128xf32, #tpu.memory_space<vmem>>, %arg31: memref<1x128x512xbf16, #tpu.memory_space<vmem>>, %arg32: memref<1x1x512xf32, #tpu.memory_space<vmem>>, %arg33: memref<1x512x128xbf16, #tpu.memory_space<vmem>>, %arg34: memref<1x1x128xf32, #tpu.memory_space<vmem>>, %arg35: memref<1x1x128xf32, #tpu.memory_space<vmem>>, %arg36: memref<1x1x128xf32, #tpu.memory_space<vmem>>, %arg37: memref<128x128xbf16, #tpu.memory_space<vmem>>, %arg38: memref<1x128xf32, #tpu.memory_space<vmem>>, %arg39: memref<2x16x128xf32, #tpu.memory_space<vmem>>, %arg40: memref<32x128xf32, #tpu.memory_space<vmem>>) attributes {dimension_semantics = [#tpu.dimension_semantics<arbitrary>], iteration_bounds = array<i64: 2>, scalar_prefetch = 0 : i64, scratch_operands = 1 : i64, tpu.core_type = #tpu.core_type<tc>, window_params = [{pipeline_mode = #tpu.pipeline_mode<synchronous>, transform_indices = @transform_0, window_bounds = array<i64: 2, 16, 80>}, {pipeline_mode = #tpu.pipeline_mode<synchronous>, transform_indices = @transform_1, window_bounds = array<i64: 7, 32, 1>}, {pipeline_mode = #tpu.pipeline_mode<synchronous>, transform_indices = @transform_2, window_bounds = array<i64: 80, 128>}, {pipeline_mode = #tpu.pipeline_mode<synchronous>, transform_indices = @transform_3, window_bounds = array<i64: 1, 128>}, {transform_indices = @transform_4, window_bounds = array<i64: 1, 1, 128>}, {transform_indices = @transform_5, window_bounds = array<i64: 1, 1, 128>}, {transform_indices = @transform_6, window_bounds = array<i64: 1, 128, 512>}, {transform_indices = @transform_7, window_bounds = array<i64: 1, 1, 512>}, {transform_indices = @transform_8, window_bounds = array<i64: 1, 512, 128>}, {transform_indices = @transform_9, window_bounds = array<i64: 1, 1, 128>}, {transform_indices = @transform_10, window_bounds = array<i64: 1, 1, 128>}, {transform_indices = @transform_11, window_bounds = array<i64: 1, 1, 128>}, {transform_indices = @transform_12, window_bounds = array<i64: 1, 128, 384>}, {transform_indices = @transform_13, window_bounds = array<i64: 1, 1, 384>}, {transform_indices = @transform_14, window_bounds = array<i64: 1, 128, 128>}, {transform_indices = @transform_15, window_bounds = array<i64: 1, 1, 128>}, {transform_indices = @transform_16, window_bounds = array<i64: 1, 1, 128>}, {transform_indices = @transform_17, window_bounds = array<i64: 1, 1, 128>}, {transform_indices = @transform_18, window_bounds = array<i64: 1, 128, 256>}, {transform_indices = @transform_19, window_bounds = array<i64: 1, 1, 256>}, {transform_indices = @transform_20, window_bounds = array<i64: 1, 7, 128>}, {transform_indices = @transform_21, window_bounds = array<i64: 1, 1, 128>}, {transform_indices = @transform_22, window_bounds = array<i64: 1, 1, 128>}, {transform_indices = @transform_23, window_bounds = array<i64: 1, 1, 128>}, {transform_indices = @transform_24, window_bounds = array<i64: 1, 1, 128>}, {transform_indices = @transform_25, window_bounds = array<i64: 1, 1, 128>}, {transform_indices = @transform_26, window_bounds = array<i64: 1, 128, 128>}, {transform_indices = @transform_27, window_bounds = array<i64: 1, 1, 128>}, {transform_indices = @transform_28, window_bounds = array<i64: 1, 1, 128>}, {transform_indices = @transform_29, window_bounds = array<i64: 1, 1, 128>}, {transform_indices = @transform_30, window_bounds = array<i64: 1, 128, 512>}, {transform_indices = @transform_31, window_bounds = array<i64: 1, 1, 512>}, {transform_indices = @transform_32, window_bounds = array<i64: 1, 512, 128>}, {transform_indices = @transform_33, window_bounds = array<i64: 1, 1, 128>}, {transform_indices = @transform_34, window_bounds = array<i64: 1, 1, 128>}, {transform_indices = @transform_35, window_bounds = array<i64: 1, 1, 128>}, {pipeline_mode = #tpu.pipeline_mode<synchronous>, transform_indices = @transform_36, window_bounds = array<i64: 128, 128>}, {pipeline_mode = #tpu.pipeline_mode<synchronous>, transform_indices = @transform_37, window_bounds = array<i64: 1, 128>}, {pipeline_mode = #tpu.pipeline_mode<synchronous>, transform_indices = @transform_38, window_bounds = array<i64: 2, 16, 128>}]} {
    %c0_i32 = arith.constant 0 : i32
    %0 = arith.cmpi eq, %arg0, %c0_i32 : i32
    %1 = arith.extui %0 : i1 to i32
    %c0_i32_0 = arith.constant 0 : i32
    %2 = arith.cmpi ne, %1, %c0_i32_0 : i32
    scf.if %2 {
      %c0_175 = arith.constant 0 : index
      %c0_176 = arith.constant 0 : index
      %c0_177 = arith.constant 0 : index
      %390 = vector.load %arg1[%c0_175, %c0_176, %c0_177] : memref<2x16x80xf32, #tpu.memory_space<vmem>>, vector<2x16x80xf32>
      %391 = vector.shape_cast %390 : vector<2x16x80xf32> to vector<32x80xf32>
      %392 = arith.truncf %391 : vector<32x80xf32> to vector<32x80xbf16>
      %c0_178 = arith.constant 0 : index
      %c0_179 = arith.constant 0 : index
      %393 = vector.load %arg3[%c0_178, %c0_179] : memref<80x128xbf16, #tpu.memory_space<vmem>>, vector<80x128xbf16>
      %cst_180 = arith.constant dense<0.000000e+00> : vector<32x128xf32>
      %394 = tpu.matmul %392, %393, %cst_180 {dimension_numbers = #tpu.dot_dimension_numbers<[1], [0], [0], [1], [0, 0, 1, 1], [], []>} : vector<32x80xbf16>, vector<80x128xbf16>, vector<32x128xf32> -> vector<32x128xf32>
      %c0_181 = arith.constant 0 : index
      %c0_182 = arith.constant 0 : index
      %395 = vector.load %arg4[%c0_181, %c0_182] : memref<1x128xf32, #tpu.memory_space<vmem>>, vector<1x128xf32>
      %396 = vector.broadcast %395 : vector<1x128xf32> to vector<32x128xf32>
      %397 = arith.addf %394, %396 : vector<32x128xf32>
      %c0_183 = arith.constant 0 : index
      %c0_184 = arith.constant 0 : index
      %398 = vector.load %arg40[%c0_183, %c0_184] : memref<32x128xf32, #tpu.memory_space<vmem>>, vector<32x128xf32>
      tpu.vector_store %arg40[%c0_183, %c0_184], %397 {strides = array<i32>} : memref<32x128xf32, #tpu.memory_space<vmem>>, vector<32x128xf32>,
    } else {
    }
    %c0 = arith.constant 0 : index
    %c0_1 = arith.constant 0 : index
    %3 = vector.load %arg40[%c0, %c0_1] : memref<32x128xf32, #tpu.memory_space<vmem>>, vector<32x128xf32>
    %c0_2 = arith.constant 0 : index
    %c0_3 = arith.constant 0 : index
    %c0_4 = arith.constant 0 : index
    %4 = vector.load %arg5[%c0_2, %c0_3, %c0_4] : memref<1x1x128xf32, #tpu.memory_space<vmem>>, vector<1x1x128xf32>
    %5 = vector.shape_cast %4 : vector<1x1x128xf32> to vector<1x128xf32>
    %c0_5 = arith.constant 0 : index
    %c0_6 = arith.constant 0 : index
    %c0_7 = arith.constant 0 : index
    %6 = vector.load %arg6[%c0_5, %c0_6, %c0_7] : memref<1x1x128xf32, #tpu.memory_space<vmem>>, vector<1x1x128xf32>
    %7 = vector.shape_cast %6 : vector<1x1x128xf32> to vector<1x128xf32>
    %cst = arith.constant dense<0.000000e+00> : vector<32xf32>
    %8 = vector.multi_reduction <add>, %3, %cst [1] : vector<32x128xf32> to vector<32xf32>
    %9 = vector.shape_cast %8 : vector<32xf32> to vector<32x1xf32>
    %cst_8 = arith.constant 1.280000e+02 : f32
    %10 = vector.broadcast %cst_8 : f32 to vector<32x1xf32>
    %11 = arith.divf %9, %10 : vector<32x1xf32>
    %12 = vector.broadcast %11 : vector<32x1xf32> to vector<32x128xf32>
    %13 = arith.subf %3, %12 : vector<32x128xf32>
    %14 = arith.mulf %13, %13 : vector<32x128xf32>
    %cst_9 = arith.constant dense<0.000000e+00> : vector<32xf32>
    %15 = vector.multi_reduction <add>, %14, %cst_9 [1] : vector<32x128xf32> to vector<32xf32>
    %16 = vector.shape_cast %15 : vector<32xf32> to vector<32x1xf32>
    %cst_10 = arith.constant 1.280000e+02 : f32
    %17 = vector.broadcast %cst_10 : f32 to vector<32x1xf32>
    %18 = arith.divf %16, %17 : vector<32x1xf32>
    %19 = vector.broadcast %11 : vector<32x1xf32> to vector<32x128xf32>
    %20 = arith.subf %3, %19 : vector<32x128xf32>
    %cst_11 = arith.constant 9.99999974E-6 : f32
    %21 = vector.broadcast %cst_11 : f32 to vector<32x1xf32>
    %22 = arith.addf %18, %21 : vector<32x1xf32>
    %23 = math.rsqrt %22 : vector<32x1xf32>
    %24 = vector.broadcast %23 : vector<32x1xf32> to vector<32x128xf32>
    %25 = arith.mulf %20, %24 : vector<32x128xf32>
    %26 = vector.broadcast %5 : vector<1x128xf32> to vector<32x128xf32>
    %27 = arith.mulf %25, %26 : vector<32x128xf32>
    %28 = vector.broadcast %7 : vector<1x128xf32> to vector<32x128xf32>
    %29 = arith.addf %27, %28 : vector<32x128xf32>
    %30 = arith.truncf %29 : vector<32x128xf32> to vector<32x128xbf16>
    %c0_12 = arith.constant 0 : index
    %c0_13 = arith.constant 0 : index
    %c0_14 = arith.constant 0 : index
    %31 = vector.load %arg7[%c0_12, %c0_13, %c0_14] : memref<1x128x512xbf16, #tpu.memory_space<vmem>>, vector<1x128x512xbf16>
    %32 = vector.shape_cast %31 : vector<1x128x512xbf16> to vector<128x512xbf16>
    %cst_15 = arith.constant dense<0.000000e+00> : vector<32x512xf32>
    %33 = tpu.matmul %30, %32, %cst_15 {dimension_numbers = #tpu.dot_dimension_numbers<[1], [0], [0], [1], [0, 0, 1, 1], [], []>} : vector<32x128xbf16>, vector<128x512xbf16>, vector<32x512xf32> -> vector<32x512xf32>
    %c0_16 = arith.constant 0 : index
    %c0_17 = arith.constant 0 : index
    %c0_18 = arith.constant 0 : index
    %34 = vector.load %arg8[%c0_16, %c0_17, %c0_18] : memref<1x1x512xf32, #tpu.memory_space<vmem>>, vector<1x1x512xf32>
    %35 = vector.shape_cast %34 : vector<1x1x512xf32> to vector<1x512xf32>
    %36 = vector.broadcast %35 : vector<1x512xf32> to vector<32x512xf32>
    %37 = arith.addf %33, %36 : vector<32x512xf32>
    %cst_19 = arith.constant 0.000000e+00 : f32
    %38 = vector.broadcast %cst_19 : f32 to vector<32x512xf32>
    %39 = arith.maximumf %37, %38 : vector<32x512xf32>
    %40 = arith.truncf %39 : vector<32x512xf32> to vector<32x512xbf16>
    %c0_20 = arith.constant 0 : index
    %c0_21 = arith.constant 0 : index
    %c0_22 = arith.constant 0 : index
    %41 = vector.load %arg9[%c0_20, %c0_21, %c0_22] : memref<1x512x128xbf16, #tpu.memory_space<vmem>>, vector<1x512x128xbf16>
    %42 = vector.shape_cast %41 : vector<1x512x128xbf16> to vector<512x128xbf16>
    %cst_23 = arith.constant dense<0.000000e+00> : vector<32x128xf32>
    %43 = tpu.matmul %40, %42, %cst_23 {dimension_numbers = #tpu.dot_dimension_numbers<[1], [0], [0], [1], [0, 0, 1, 1], [], []>} : vector<32x512xbf16>, vector<512x128xbf16>, vector<32x128xf32> -> vector<32x128xf32>
    %c0_24 = arith.constant 0 : index
    %c0_25 = arith.constant 0 : index
    %c0_26 = arith.constant 0 : index
    %44 = vector.load %arg10[%c0_24, %c0_25, %c0_26] : memref<1x1x128xf32, #tpu.memory_space<vmem>>, vector<1x1x128xf32>
    %45 = vector.shape_cast %44 : vector<1x1x128xf32> to vector<1x128xf32>
    %46 = vector.broadcast %45 : vector<1x128xf32> to vector<32x128xf32>
    %47 = arith.addf %43, %46 : vector<32x128xf32>
    %cst_27 = arith.constant 5.000000e-01 : f32
    %48 = vector.broadcast %cst_27 : f32 to vector<32x128xf32>
    %49 = arith.mulf %48, %47 : vector<32x128xf32>
    %50 = arith.addf %3, %49 : vector<32x128xf32>
    %c0_28 = arith.constant 0 : index
    %c0_29 = arith.constant 0 : index
    %c0_30 = arith.constant 0 : index
    %51 = vector.load %arg11[%c0_28, %c0_29, %c0_30] : memref<1x1x128xf32, #tpu.memory_space<vmem>>, vector<1x1x128xf32>
    %52 = vector.shape_cast %51 : vector<1x1x128xf32> to vector<1x128xf32>
    %c0_31 = arith.constant 0 : index
    %c0_32 = arith.constant 0 : index
    %c0_33 = arith.constant 0 : index
    %53 = vector.load %arg12[%c0_31, %c0_32, %c0_33] : memref<1x1x128xf32, #tpu.memory_space<vmem>>, vector<1x1x128xf32>
    %54 = vector.shape_cast %53 : vector<1x1x128xf32> to vector<1x128xf32>
    %cst_34 = arith.constant dense<0.000000e+00> : vector<32xf32>
    %55 = vector.multi_reduction <add>, %50, %cst_34 [1] : vector<32x128xf32> to vector<32xf32>
    %56 = vector.shape_cast %55 : vector<32xf32> to vector<32x1xf32>
    %cst_35 = arith.constant 1.280000e+02 : f32
    %57 = vector.broadcast %cst_35 : f32 to vector<32x1xf32>
    %58 = arith.divf %56, %57 : vector<32x1xf32>
    %59 = vector.broadcast %58 : vector<32x1xf32> to vector<32x128xf32>
    %60 = arith.subf %50, %59 : vector<32x128xf32>
    %61 = arith.mulf %60, %60 : vector<32x128xf32>
    %cst_36 = arith.constant dense<0.000000e+00> : vector<32xf32>
    %62 = vector.multi_reduction <add>, %61, %cst_36 [1] : vector<32x128xf32> to vector<32xf32>
    %63 = vector.shape_cast %62 : vector<32xf32> to vector<32x1xf32>
    %cst_37 = arith.constant 1.280000e+02 : f32
    %64 = vector.broadcast %cst_37 : f32 to vector<32x1xf32>
    %65 = arith.divf %63, %64 : vector<32x1xf32>
    %66 = vector.broadcast %58 : vector<32x1xf32> to vector<32x128xf32>
    %67 = arith.subf %50, %66 : vector<32x128xf32>
    %cst_38 = arith.constant 9.99999974E-6 : f32
    %68 = vector.broadcast %cst_38 : f32 to vector<32x1xf32>
    %69 = arith.addf %65, %68 : vector<32x1xf32>
    %70 = math.rsqrt %69 : vector<32x1xf32>
    %71 = vector.broadcast %70 : vector<32x1xf32> to vector<32x128xf32>
    %72 = arith.mulf %67, %71 : vector<32x128xf32>
    %73 = vector.broadcast %52 : vector<1x128xf32> to vector<32x128xf32>
    %74 = arith.mulf %72, %73 : vector<32x128xf32>
    %75 = vector.broadcast %54 : vector<1x128xf32> to vector<32x128xf32>
    %76 = arith.addf %74, %75 : vector<32x128xf32>
    %77 = arith.truncf %76 : vector<32x128xf32> to vector<32x128xbf16>
    %c0_39 = arith.constant 0 : index
    %c0_40 = arith.constant 0 : index
    %c0_41 = arith.constant 0 : index
    %78 = vector.load %arg13[%c0_39, %c0_40, %c0_41] : memref<1x128x384xbf16, #tpu.memory_space<vmem>>, vector<1x128x384xbf16>
    %79 = vector.shape_cast %78 : vector<1x128x384xbf16> to vector<128x384xbf16>
    %cst_42 = arith.constant dense<0.000000e+00> : vector<32x384xf32>
    %80 = tpu.matmul %77, %79, %cst_42 {dimension_numbers = #tpu.dot_dimension_numbers<[1], [0], [0], [1], [0, 0, 1, 1], [], []>} : vector<32x128xbf16>, vector<128x384xbf16>, vector<32x384xf32> -> vector<32x384xf32>
    %c0_43 = arith.constant 0 : index
    %c0_44 = arith.constant 0 : index
    %c0_45 = arith.constant 0 : index
    %81 = vector.load %arg14[%c0_43, %c0_44, %c0_45] : memref<1x1x384xf32, #tpu.memory_space<vmem>>, vector<1x1x384xf32>
    %82 = vector.shape_cast %81 : vector<1x1x384xf32> to vector<1x384xf32>
    %83 = vector.broadcast %82 : vector<1x384xf32> to vector<32x384xf32>
    %84 = arith.addf %80, %83 : vector<32x384xf32>
    %85 = vector.extract_strided_slice %84 {offsets = [0, 0], sizes = [32, 128], strides = [1, 1]} : vector<32x384xf32> to vector<32x128xf32>
    %86 = vector.shape_cast %85 : vector<32x128xf32> to vector<2x16x128xf32>
    %87 = arith.truncf %86 : vector<2x16x128xf32> to vector<2x16x128xbf16>
    %88 = vector.extract_strided_slice %84 {offsets = [0, 128], sizes = [32, 128], strides = [1, 1]} : vector<32x384xf32> to vector<32x128xf32>
    %89 = vector.shape_cast %88 : vector<32x128xf32> to vector<2x16x128xf32>
    %90 = arith.truncf %89 : vector<2x16x128xf32> to vector<2x16x128xbf16>
    %91 = vector.extract_strided_slice %84 {offsets = [0, 256], sizes = [32, 128], strides = [1, 1]} : vector<32x384xf32> to vector<32x128xf32>
    %92 = vector.shape_cast %91 : vector<32x128xf32> to vector<2x16x128xf32>
    %93 = arith.truncf %92 : vector<2x16x128xf32> to vector<2x16x128xbf16>
    %94 = vector.extract_strided_slice %87 {offsets = [0, 0, 0], sizes = [2, 16, 32], strides = [1, 1, 1]} : vector<2x16x128xbf16> to vector<2x16x32xbf16>
    %95 = vector.extract_strided_slice %90 {offsets = [0, 0, 0], sizes = [2, 16, 32], strides = [1, 1, 1]} : vector<2x16x128xbf16> to vector<2x16x32xbf16>
    "tpu.trace_start"() <{level = 10 : i32, message = "bqd,bkd->bqk"}> : () -> ()
    %cst_46 = arith.constant dense<0.000000e+00> : vector<2x16x16xf32>
    %96 = tpu.matmul %94, %95, %cst_46 {dimension_numbers = #tpu.dot_dimension_numbers<[2], [2], [1], [1], [0, 0, 0, 1, 1, 1], [0], [0]>} : vector<2x16x32xbf16>, vector<2x16x32xbf16>, vector<2x16x16xf32> -> vector<2x16x16xf32>
    "tpu.trace_stop"() : () -> ()
    %cst_47 = arith.constant 0.176776692 : f32
    %97 = vector.broadcast %cst_47 : f32 to vector<2x16x16xf32>
    %98 = arith.mulf %96, %97 : vector<2x16x16xf32>
    %cst_48 = arith.constant dense<0xFF800000> : vector<2x16xf32>
    %99 = vector.multi_reduction <maximumf>, %98, %cst_48 [2] : vector<2x16x16xf32> to vector<2x16xf32>
    %100 = vector.shape_cast %99 : vector<2x16xf32> to vector<2x16x1xf32>
    %101 = vector.broadcast %100 : vector<2x16x1xf32> to vector<2x16x16xf32>
    %102 = arith.subf %98, %101 : vector<2x16x16xf32>
    %103 = math.exp %102 : vector<2x16x16xf32>
    %cst_49 = arith.constant dense<0.000000e+00> : vector<2x16xf32>
    %104 = vector.multi_reduction <add>, %103, %cst_49 [2] : vector<2x16x16xf32> to vector<2x16xf32>
    %105 = vector.shape_cast %104 : vector<2x16xf32> to vector<2x16x1xf32>
    %106 = tpu.reciprocal %105 {approx = true} : vector<2x16x1xf32> -> vector<2x16x1xf32>
    %107 = vector.broadcast %106 : vector<2x16x1xf32> to vector<2x16x16xf32>
    %108 = arith.mulf %103, %107 : vector<2x16x16xf32>
    %109 = arith.truncf %108 : vector<2x16x16xf32> to vector<2x16x16xbf16>
    %110 = vector.extract_strided_slice %93 {offsets = [0, 0, 0], sizes = [2, 16, 32], strides = [1, 1, 1]} : vector<2x16x128xbf16> to vector<2x16x32xbf16>
    "tpu.trace_start"() <{level = 10 : i32, message = "bqk,bkd->bqd"}> : () -> ()
    %cst_50 = arith.constant dense<0.000000e+00> : vector<2x16x32xf32>
    %111 = tpu.matmul %109, %110, %cst_50 {dimension_numbers = #tpu.dot_dimension_numbers<[2], [1], [1], [2], [0, 0, 0, 1, 1, 2], [0], [0]>} : vector<2x16x16xbf16>, vector<2x16x32xbf16>, vector<2x16x32xf32> -> vector<2x16x32xf32>
    "tpu.trace_stop"() : () -> ()
    %112 = vector.extract_strided_slice %87 {offsets = [0, 0, 32], sizes = [2, 16, 32], strides = [1, 1, 1]} : vector<2x16x128xbf16> to vector<2x16x32xbf16>
    %113 = vector.extract_strided_slice %90 {offsets = [0, 0, 32], sizes = [2, 16, 32], strides = [1, 1, 1]} : vector<2x16x128xbf16> to vector<2x16x32xbf16>
    "tpu.trace_start"() <{level = 10 : i32, message = "bqd,bkd->bqk"}> : () -> ()
    %cst_51 = arith.constant dense<0.000000e+00> : vector<2x16x16xf32>
    %114 = tpu.matmul %112, %113, %cst_51 {dimension_numbers = #tpu.dot_dimension_numbers<[2], [2], [1], [1], [0, 0, 0, 1, 1, 1], [0], [0]>} : vector<2x16x32xbf16>, vector<2x16x32xbf16>, vector<2x16x16xf32> -> vector<2x16x16xf32>
    "tpu.trace_stop"() : () -> ()
    %cst_52 = arith.constant 0.176776692 : f32
    %115 = vector.broadcast %cst_52 : f32 to vector<2x16x16xf32>
    %116 = arith.mulf %114, %115 : vector<2x16x16xf32>
    %cst_53 = arith.constant dense<0xFF800000> : vector<2x16xf32>
    %117 = vector.multi_reduction <maximumf>, %116, %cst_53 [2] : vector<2x16x16xf32> to vector<2x16xf32>
    %118 = vector.shape_cast %117 : vector<2x16xf32> to vector<2x16x1xf32>
    %119 = vector.broadcast %118 : vector<2x16x1xf32> to vector<2x16x16xf32>
    %120 = arith.subf %116, %119 : vector<2x16x16xf32>
    %121 = math.exp %120 : vector<2x16x16xf32>
    %cst_54 = arith.constant dense<0.000000e+00> : vector<2x16xf32>
    %122 = vector.multi_reduction <add>, %121, %cst_54 [2] : vector<2x16x16xf32> to vector<2x16xf32>
    %123 = vector.shape_cast %122 : vector<2x16xf32> to vector<2x16x1xf32>
    %124 = tpu.reciprocal %123 {approx = true} : vector<2x16x1xf32> -> vector<2x16x1xf32>
    %125 = vector.broadcast %124 : vector<2x16x1xf32> to vector<2x16x16xf32>
    %126 = arith.mulf %121, %125 : vector<2x16x16xf32>
    %127 = arith.truncf %126 : vector<2x16x16xf32> to vector<2x16x16xbf16>
    %128 = vector.extract_strided_slice %93 {offsets = [0, 0, 32], sizes = [2, 16, 32], strides = [1, 1, 1]} : vector<2x16x128xbf16> to vector<2x16x32xbf16>
    "tpu.trace_start"() <{level = 10 : i32, message = "bqk,bkd->bqd"}> : () -> ()
    %cst_55 = arith.constant dense<0.000000e+00> : vector<2x16x32xf32>
    %129 = tpu.matmul %127, %128, %cst_55 {dimension_numbers = #tpu.dot_dimension_numbers<[2], [1], [1], [2], [0, 0, 0, 1, 1, 2], [0], [0]>} : vector<2x16x16xbf16>, vector<2x16x32xbf16>, vector<2x16x32xf32> -> vector<2x16x32xf32>
    "tpu.trace_stop"() : () -> ()
    %130 = vector.extract_strided_slice %87 {offsets = [0, 0, 64], sizes = [2, 16, 32], strides = [1, 1, 1]} : vector<2x16x128xbf16> to vector<2x16x32xbf16>
    %131 = vector.extract_strided_slice %90 {offsets = [0, 0, 64], sizes = [2, 16, 32], strides = [1, 1, 1]} : vector<2x16x128xbf16> to vector<2x16x32xbf16>
    "tpu.trace_start"() <{level = 10 : i32, message = "bqd,bkd->bqk"}> : () -> ()
    %cst_56 = arith.constant dense<0.000000e+00> : vector<2x16x16xf32>
    %132 = tpu.matmul %130, %131, %cst_56 {dimension_numbers = #tpu.dot_dimension_numbers<[2], [2], [1], [1], [0, 0, 0, 1, 1, 1], [0], [0]>} : vector<2x16x32xbf16>, vector<2x16x32xbf16>, vector<2x16x16xf32> -> vector<2x16x16xf32>
    "tpu.trace_stop"() : () -> ()
    %cst_57 = arith.constant 0.176776692 : f32
    %133 = vector.broadcast %cst_57 : f32 to vector<2x16x16xf32>
    %134 = arith.mulf %132, %133 : vector<2x16x16xf32>
    %cst_58 = arith.constant dense<0xFF800000> : vector<2x16xf32>
    %135 = vector.multi_reduction <maximumf>, %134, %cst_58 [2] : vector<2x16x16xf32> to vector<2x16xf32>
    %136 = vector.shape_cast %135 : vector<2x16xf32> to vector<2x16x1xf32>
    %137 = vector.broadcast %136 : vector<2x16x1xf32> to vector<2x16x16xf32>
    %138 = arith.subf %134, %137 : vector<2x16x16xf32>
    %139 = math.exp %138 : vector<2x16x16xf32>
    %cst_59 = arith.constant dense<0.000000e+00> : vector<2x16xf32>
    %140 = vector.multi_reduction <add>, %139, %cst_59 [2] : vector<2x16x16xf32> to vector<2x16xf32>
    %141 = vector.shape_cast %140 : vector<2x16xf32> to vector<2x16x1xf32>
    %142 = tpu.reciprocal %141 {approx = true} : vector<2x16x1xf32> -> vector<2x16x1xf32>
    %143 = vector.broadcast %142 : vector<2x16x1xf32> to vector<2x16x16xf32>
    %144 = arith.mulf %139, %143 : vector<2x16x16xf32>
    %145 = arith.truncf %144 : vector<2x16x16xf32> to vector<2x16x16xbf16>
    %146 = vector.extract_strided_slice %93 {offsets = [0, 0, 64], sizes = [2, 16, 32], strides = [1, 1, 1]} : vector<2x16x128xbf16> to vector<2x16x32xbf16>
    "tpu.trace_start"() <{level = 10 : i32, message = "bqk,bkd->bqd"}> : () -> ()
    %cst_60 = arith.constant dense<0.000000e+00> : vector<2x16x32xf32>
    %147 = tpu.matmul %145, %146, %cst_60 {dimension_numbers = #tpu.dot_dimension_numbers<[2], [1], [1], [2], [0, 0, 0, 1, 1, 2], [0], [0]>} : vector<2x16x16xbf16>, vector<2x16x32xbf16>, vector<2x16x32xf32> -> vector<2x16x32xf32>
    "tpu.trace_stop"() : () -> ()
    %148 = vector.extract_strided_slice %87 {offsets = [0, 0, 96], sizes = [2, 16, 32], strides = [1, 1, 1]} : vector<2x16x128xbf16> to vector<2x16x32xbf16>
    %149 = vector.extract_strided_slice %90 {offsets = [0, 0, 96], sizes = [2, 16, 32], strides = [1, 1, 1]} : vector<2x16x128xbf16> to vector<2x16x32xbf16>
    "tpu.trace_start"() <{level = 10 : i32, message = "bqd,bkd->bqk"}> : () -> ()
    %cst_61 = arith.constant dense<0.000000e+00> : vector<2x16x16xf32>
    %150 = tpu.matmul %148, %149, %cst_61 {dimension_numbers = #tpu.dot_dimension_numbers<[2], [2], [1], [1], [0, 0, 0, 1, 1, 1], [0], [0]>} : vector<2x16x32xbf16>, vector<2x16x32xbf16>, vector<2x16x16xf32> -> vector<2x16x16xf32>
    "tpu.trace_stop"() : () -> ()
    %cst_62 = arith.constant 0.176776692 : f32
    %151 = vector.broadcast %cst_62 : f32 to vector<2x16x16xf32>
    %152 = arith.mulf %150, %151 : vector<2x16x16xf32>
    %cst_63 = arith.constant dense<0xFF800000> : vector<2x16xf32>
    %153 = vector.multi_reduction <maximumf>, %152, %cst_63 [2] : vector<2x16x16xf32> to vector<2x16xf32>
    %154 = vector.shape_cast %153 : vector<2x16xf32> to vector<2x16x1xf32>
    %155 = vector.broadcast %154 : vector<2x16x1xf32> to vector<2x16x16xf32>
    %156 = arith.subf %152, %155 : vector<2x16x16xf32>
    %157 = math.exp %156 : vector<2x16x16xf32>
    %cst_64 = arith.constant dense<0.000000e+00> : vector<2x16xf32>
    %158 = vector.multi_reduction <add>, %157, %cst_64 [2] : vector<2x16x16xf32> to vector<2x16xf32>
    %159 = vector.shape_cast %158 : vector<2x16xf32> to vector<2x16x1xf32>
    %160 = tpu.reciprocal %159 {approx = true} : vector<2x16x1xf32> -> vector<2x16x1xf32>
    %161 = vector.broadcast %160 : vector<2x16x1xf32> to vector<2x16x16xf32>
    %162 = arith.mulf %157, %161 : vector<2x16x16xf32>
    %163 = arith.truncf %162 : vector<2x16x16xf32> to vector<2x16x16xbf16>
    %164 = vector.extract_strided_slice %93 {offsets = [0, 0, 96], sizes = [2, 16, 32], strides = [1, 1, 1]} : vector<2x16x128xbf16> to vector<2x16x32xbf16>
    "tpu.trace_start"() <{level = 10 : i32, message = "bqk,bkd->bqd"}> : () -> ()
    %cst_65 = arith.constant dense<0.000000e+00> : vector<2x16x32xf32>
    %165 = tpu.matmul %163, %164, %cst_65 {dimension_numbers = #tpu.dot_dimension_numbers<[2], [1], [1], [2], [0, 0, 0, 1, 1, 2], [0], [0]>} : vector<2x16x16xbf16>, vector<2x16x32xbf16>, vector<2x16x32xf32> -> vector<2x16x32xf32>
    "tpu.trace_stop"() : () -> ()
    %166 = tpu.concatenate %111, %129, %147, %165 in 2 : vector<2x16x32xf32>, vector<2x16x32xf32>, vector<2x16x32xf32>, vector<2x16x32xf32> -> vector<2x16x128xf32>
    %167 = vector.shape_cast %166 : vector<2x16x128xf32> to vector<32x128xf32>
    %168 = arith.truncf %167 : vector<32x128xf32> to vector<32x128xbf16>
    %c0_66 = arith.constant 0 : index
    %c0_67 = arith.constant 0 : index
    %c0_68 = arith.constant 0 : index
    %169 = vector.load %arg15[%c0_66, %c0_67, %c0_68] : memref<1x128x128xbf16, #tpu.memory_space<vmem>>, vector<1x128x128xbf16>
    %170 = vector.shape_cast %169 : vector<1x128x128xbf16> to vector<128x128xbf16>
    %cst_69 = arith.constant dense<0.000000e+00> : vector<32x128xf32>
    %171 = tpu.matmul %168, %170, %cst_69 {dimension_numbers = #tpu.dot_dimension_numbers<[1], [0], [0], [1], [0, 0, 1, 1], [], []>} : vector<32x128xbf16>, vector<128x128xbf16>, vector<32x128xf32> -> vector<32x128xf32>
    %c0_70 = arith.constant 0 : index
    %c0_71 = arith.constant 0 : index
    %c0_72 = arith.constant 0 : index
    %172 = vector.load %arg16[%c0_70, %c0_71, %c0_72] : memref<1x1x128xf32, #tpu.memory_space<vmem>>, vector<1x1x128xf32>
    %173 = vector.shape_cast %172 : vector<1x1x128xf32> to vector<1x128xf32>
    %174 = vector.broadcast %173 : vector<1x128xf32> to vector<32x128xf32>
    %175 = arith.addf %171, %174 : vector<32x128xf32>
    %176 = arith.addf %50, %175 : vector<32x128xf32>
    %c0_73 = arith.constant 0 : index
    %c0_74 = arith.constant 0 : index
    %c0_75 = arith.constant 0 : index
    %177 = vector.load %arg17[%c0_73, %c0_74, %c0_75] : memref<1x1x128xf32, #tpu.memory_space<vmem>>, vector<1x1x128xf32>
    %178 = vector.shape_cast %177 : vector<1x1x128xf32> to vector<1x128xf32>
    %c0_76 = arith.constant 0 : index
    %c0_77 = arith.constant 0 : index
    %c0_78 = arith.constant 0 : index
    %179 = vector.load %arg18[%c0_76, %c0_77, %c0_78] : memref<1x1x128xf32, #tpu.memory_space<vmem>>, vector<1x1x128xf32>
    %180 = vector.shape_cast %179 : vector<1x1x128xf32> to vector<1x128xf32>
    %cst_79 = arith.constant dense<0.000000e+00> : vector<32xf32>
    %181 = vector.multi_reduction <add>, %176, %cst_79 [1] : vector<32x128xf32> to vector<32xf32>
    %182 = vector.shape_cast %181 : vector<32xf32> to vector<32x1xf32>
    %cst_80 = arith.constant 1.280000e+02 : f32
    %183 = vector.broadcast %cst_80 : f32 to vector<32x1xf32>
    %184 = arith.divf %182, %183 : vector<32x1xf32>
    %185 = vector.broadcast %184 : vector<32x1xf32> to vector<32x128xf32>
    %186 = arith.subf %176, %185 : vector<32x128xf32>
    %187 = arith.mulf %186, %186 : vector<32x128xf32>
    %cst_81 = arith.constant dense<0.000000e+00> : vector<32xf32>
    %188 = vector.multi_reduction <add>, %187, %cst_81 [1] : vector<32x128xf32> to vector<32xf32>
    %189 = vector.shape_cast %188 : vector<32xf32> to vector<32x1xf32>
    %cst_82 = arith.constant 1.280000e+02 : f32
    %190 = vector.broadcast %cst_82 : f32 to vector<32x1xf32>
    %191 = arith.divf %189, %190 : vector<32x1xf32>
    %192 = vector.broadcast %184 : vector<32x1xf32> to vector<32x128xf32>
    %193 = arith.subf %176, %192 : vector<32x128xf32>
    %cst_83 = arith.constant 9.99999974E-6 : f32
    %194 = vector.broadcast %cst_83 : f32 to vector<32x1xf32>
    %195 = arith.addf %191, %194 : vector<32x1xf32>
    %196 = math.rsqrt %195 : vector<32x1xf32>
    %197 = vector.broadcast %196 : vector<32x1xf32> to vector<32x128xf32>
    %198 = arith.mulf %193, %197 : vector<32x128xf32>
    %199 = vector.broadcast %178 : vector<1x128xf32> to vector<32x128xf32>
    %200 = arith.mulf %198, %199 : vector<32x128xf32>
    %201 = vector.broadcast %180 : vector<1x128xf32> to vector<32x128xf32>
    %202 = arith.addf %200, %201 : vector<32x128xf32>
    %203 = arith.truncf %202 : vector<32x128xf32> to vector<32x128xbf16>
    %c0_84 = arith.constant 0 : index
    %c0_85 = arith.constant 0 : index
    %c0_86 = arith.constant 0 : index
    %204 = vector.load %arg19[%c0_84, %c0_85, %c0_86] : memref<1x128x256xbf16, #tpu.memory_space<vmem>>, vector<1x128x256xbf16>
    %205 = vector.shape_cast %204 : vector<1x128x256xbf16> to vector<128x256xbf16>
    %cst_87 = arith.constant dense<0.000000e+00> : vector<32x256xf32>
    %206 = tpu.matmul %203, %205, %cst_87 {dimension_numbers = #tpu.dot_dimension_numbers<[1], [0], [0], [1], [0, 0, 1, 1], [], []>} : vector<32x128xbf16>, vector<128x256xbf16>, vector<32x256xf32> -> vector<32x256xf32>
    %c0_88 = arith.constant 0 : index
    %c0_89 = arith.constant 0 : index
    %c0_90 = arith.constant 0 : index
    %207 = vector.load %arg20[%c0_88, %c0_89, %c0_90] : memref<1x1x256xf32, #tpu.memory_space<vmem>>, vector<1x1x256xf32>
    %208 = vector.shape_cast %207 : vector<1x1x256xf32> to vector<1x256xf32>
    %209 = vector.broadcast %208 : vector<1x256xf32> to vector<32x256xf32>
    %210 = arith.addf %206, %209 : vector<32x256xf32>
    %211 = vector.extract_strided_slice %210 {offsets = [0, 0], sizes = [32, 128], strides = [1, 1]} : vector<32x256xf32> to vector<32x128xf32>
    %212 = vector.extract_strided_slice %210 {offsets = [0, 128], sizes = [32, 128], strides = [1, 1]} : vector<32x256xf32> to vector<32x128xf32>
    %cst_91 = arith.constant 0.000000e+00 : f32
    %213 = vector.broadcast %cst_91 : f32 to vector<32x128xf32>
    %214 = arith.subf %213, %212 : vector<32x128xf32>
    %215 = math.exp %214 : vector<32x128xf32>
    %cst_92 = arith.constant 1.000000e+00 : f32
    %216 = vector.broadcast %cst_92 : f32 to vector<32x128xf32>
    %217 = arith.addf %216, %215 : vector<32x128xf32>
    %218 = tpu.reciprocal %217 {approx = true} : vector<32x128xf32> -> vector<32x128xf32>
    %219 = arith.mulf %211, %218 : vector<32x128xf32>
    %c0_93 = arith.constant 0 : index
    %c0_94 = arith.constant 0 : index
    %c0_95 = arith.constant 0 : index
    %220 = vector.load %arg21[%c0_93, %c0_94, %c0_95] : memref<1x7x128xf32, #tpu.memory_space<vmem>>, vector<1x7x128xf32>
    %221 = vector.shape_cast %220 : vector<1x7x128xf32> to vector<7x128xf32>
    %222 = vector.extract_strided_slice %221 {offsets = [3, 0], sizes = [1, 128], strides = [1, 1]} : vector<7x128xf32> to vector<1x128xf32>
    %223 = vector.broadcast %222 : vector<1x128xf32> to vector<32x128xf32>
    %224 = arith.mulf %223, %219 : vector<32x128xf32>
    %c3_i32 = arith.constant 3 : i32
    %225 = tpu.dynamic_rotate %219 by %c3_i32 dim 0 : vector<32x128xf32>, i32 -> vector<32x128xf32>
    %226 = vector.extract_strided_slice %221 {offsets = [0, 0], sizes = [1, 128], strides = [1, 1]} : vector<7x128xf32> to vector<1x128xf32>
    %c0_96 = arith.constant 0 : index
    %c0_97 = arith.constant 0 : index
    %c0_98 = arith.constant 0 : index
    %227 = vector.load %arg2[%c0_96, %c0_97, %c0_98] : memref<7x32x1xf32, #tpu.memory_space<vmem>>, vector<1x32x1xf32>
    %228 = vector.shape_cast %227 : vector<1x32x1xf32> to vector<32x1xf32>
    %229 = vector.broadcast %228 : vector<32x1xf32> to vector<32x128xf32>
    %230 = arith.mulf %225, %229 : vector<32x128xf32>
    %231 = vector.broadcast %226 : vector<1x128xf32> to vector<32x128xf32>
    %232 = arith.mulf %231, %230 : vector<32x128xf32>
    %233 = arith.addf %224, %232 : vector<32x128xf32>
    %c2_i32 = arith.constant 2 : i32
    %234 = tpu.dynamic_rotate %219 by %c2_i32 dim 0 : vector<32x128xf32>, i32 -> vector<32x128xf32>
    %235 = vector.extract_strided_slice %221 {offsets = [1, 0], sizes = [1, 128], strides = [1, 1]} : vector<7x128xf32> to vector<1x128xf32>
    %c1 = arith.constant 1 : index
    %c0_99 = arith.constant 0 : index
    %c0_100 = arith.constant 0 : index
    %236 = vector.load %arg2[%c1, %c0_99, %c0_100] : memref<7x32x1xf32, #tpu.memory_space<vmem>>, vector<1x32x1xf32>
    %237 = vector.shape_cast %236 : vector<1x32x1xf32> to vector<32x1xf32>
    %238 = vector.broadcast %237 : vector<32x1xf32> to vector<32x128xf32>
    %239 = arith.mulf %234, %238 : vector<32x128xf32>
    %240 = vector.broadcast %235 : vector<1x128xf32> to vector<32x128xf32>
    %241 = arith.mulf %240, %239 : vector<32x128xf32>
    %242 = arith.addf %233, %241 : vector<32x128xf32>
    %c1_i32 = arith.constant 1 : i32
    %243 = tpu.dynamic_rotate %219 by %c1_i32 dim 0 : vector<32x128xf32>, i32 -> vector<32x128xf32>
    %244 = vector.extract_strided_slice %221 {offsets = [2, 0], sizes = [1, 128], strides = [1, 1]} : vector<7x128xf32> to vector<1x128xf32>
    %c2 = arith.constant 2 : index
    %c0_101 = arith.constant 0 : index
    %c0_102 = arith.constant 0 : index
    %245 = vector.load %arg2[%c2, %c0_101, %c0_102] : memref<7x32x1xf32, #tpu.memory_space<vmem>>, vector<1x32x1xf32>
    %246 = vector.shape_cast %245 : vector<1x32x1xf32> to vector<32x1xf32>
    %247 = vector.broadcast %246 : vector<32x1xf32> to vector<32x128xf32>
    %248 = arith.mulf %243, %247 : vector<32x128xf32>
    %249 = vector.broadcast %244 : vector<1x128xf32> to vector<32x128xf32>
    %250 = arith.mulf %249, %248 : vector<32x128xf32>
    %251 = arith.addf %242, %250 : vector<32x128xf32>
    %c31_i32 = arith.constant 31 : i32
    %252 = tpu.dynamic_rotate %219 by %c31_i32 dim 0 : vector<32x128xf32>, i32 -> vector<32x128xf32>
    %253 = vector.extract_strided_slice %221 {offsets = [4, 0], sizes = [1, 128], strides = [1, 1]} : vector<7x128xf32> to vector<1x128xf32>
    %c4 = arith.constant 4 : index
    %c0_103 = arith.constant 0 : index
    %c0_104 = arith.constant 0 : index
    %254 = vector.load %arg2[%c4, %c0_103, %c0_104] : memref<7x32x1xf32, #tpu.memory_space<vmem>>, vector<1x32x1xf32>
    %255 = vector.shape_cast %254 : vector<1x32x1xf32> to vector<32x1xf32>
    %256 = vector.broadcast %255 : vector<32x1xf32> to vector<32x128xf32>
    %257 = arith.mulf %252, %256 : vector<32x128xf32>
    %258 = vector.broadcast %253 : vector<1x128xf32> to vector<32x128xf32>
    %259 = arith.mulf %258, %257 : vector<32x128xf32>
    %260 = arith.addf %251, %259 : vector<32x128xf32>
    %c30_i32 = arith.constant 30 : i32
    %261 = tpu.dynamic_rotate %219 by %c30_i32 dim 0 : vector<32x128xf32>, i32 -> vector<32x128xf32>
    %262 = vector.extract_strided_slice %221 {offsets = [5, 0], sizes = [1, 128], strides = [1, 1]} : vector<7x128xf32> to vector<1x128xf32>
    %c5 = arith.constant 5 : index
    %c0_105 = arith.constant 0 : index
    %c0_106 = arith.constant 0 : index
    %263 = vector.load %arg2[%c5, %c0_105, %c0_106] : memref<7x32x1xf32, #tpu.memory_space<vmem>>, vector<1x32x1xf32>
    %264 = vector.shape_cast %263 : vector<1x32x1xf32> to vector<32x1xf32>
    %265 = vector.broadcast %264 : vector<32x1xf32> to vector<32x128xf32>
    %266 = arith.mulf %261, %265 : vector<32x128xf32>
    %267 = vector.broadcast %262 : vector<1x128xf32> to vector<32x128xf32>
    %268 = arith.mulf %267, %266 : vector<32x128xf32>
    %269 = arith.addf %260, %268 : vector<32x128xf32>
    %c29_i32 = arith.constant 29 : i32
    %270 = tpu.dynamic_rotate %219 by %c29_i32 dim 0 : vector<32x128xf32>, i32 -> vector<32x128xf32>
    %271 = vector.extract_strided_slice %221 {offsets = [6, 0], sizes = [1, 128], strides = [1, 1]} : vector<7x128xf32> to vector<1x128xf32>
    %c6 = arith.constant 6 : index
    %c0_107 = arith.constant 0 : index
    %c0_108 = arith.constant 0 : index
    %272 = vector.load %arg2[%c6, %c0_107, %c0_108] : memref<7x32x1xf32, #tpu.memory_space<vmem>>, vector<1x32x1xf32>
    %273 = vector.shape_cast %272 : vector<1x32x1xf32> to vector<32x1xf32>
    %274 = vector.broadcast %273 : vector<32x1xf32> to vector<32x128xf32>
    %275 = arith.mulf %270, %274 : vector<32x128xf32>
    %276 = vector.broadcast %271 : vector<1x128xf32> to vector<32x128xf32>
    %277 = arith.mulf %276, %275 : vector<32x128xf32>
    %278 = arith.addf %269, %277 : vector<32x128xf32>
    %c0_109 = arith.constant 0 : index
    %c0_110 = arith.constant 0 : index
    %c0_111 = arith.constant 0 : index
    %279 = vector.load %arg22[%c0_109, %c0_110, %c0_111] : memref<1x1x128xf32, #tpu.memory_space<vmem>>, vector<1x1x128xf32>
    %280 = vector.shape_cast %279 : vector<1x1x128xf32> to vector<1x128xf32>
    %281 = vector.broadcast %280 : vector<1x128xf32> to vector<32x128xf32>
    %282 = arith.addf %278, %281 : vector<32x128xf32>
    %c0_112 = arith.constant 0 : index
    %c0_113 = arith.constant 0 : index
    %c0_114 = arith.constant 0 : index
    %283 = vector.load %arg25[%c0_112, %c0_113, %c0_114] : memref<1x1x128xf32, #tpu.memory_space<vmem>>, vector<1x1x128xf32>
    %284 = vector.shape_cast %283 : vector<1x1x128xf32> to vector<1x128xf32>
    %285 = vector.broadcast %284 : vector<1x128xf32> to vector<32x128xf32>
    %286 = arith.subf %282, %285 : vector<32x128xf32>
    %c0_115 = arith.constant 0 : index
    %c0_116 = arith.constant 0 : index
    %c0_117 = arith.constant 0 : index
    %287 = vector.load %arg26[%c0_115, %c0_116, %c0_117] : memref<1x1x128xf32, #tpu.memory_space<vmem>>, vector<1x1x128xf32>
    %288 = vector.shape_cast %287 : vector<1x1x128xf32> to vector<1x128xf32>
    %cst_118 = arith.constant 9.99999974E-6 : f32
    %289 = vector.broadcast %cst_118 : f32 to vector<1x128xf32>
    %290 = arith.addf %288, %289 : vector<1x128xf32>
    %291 = math.rsqrt %290 : vector<1x128xf32>
    %292 = vector.broadcast %291 : vector<1x128xf32> to vector<32x128xf32>
    %293 = arith.mulf %286, %292 : vector<32x128xf32>
    %c0_119 = arith.constant 0 : index
    %c0_120 = arith.constant 0 : index
    %c0_121 = arith.constant 0 : index
    %294 = vector.load %arg23[%c0_119, %c0_120, %c0_121] : memref<1x1x128xf32, #tpu.memory_space<vmem>>, vector<1x1x128xf32>
    %295 = vector.shape_cast %294 : vector<1x1x128xf32> to vector<1x128xf32>
    %296 = vector.broadcast %295 : vector<1x128xf32> to vector<32x128xf32>
    %297 = arith.mulf %293, %296 : vector<32x128xf32>
    %c0_122 = arith.constant 0 : index
    %c0_123 = arith.constant 0 : index
    %c0_124 = arith.constant 0 : index
    %298 = vector.load %arg24[%c0_122, %c0_123, %c0_124] : memref<1x1x128xf32, #tpu.memory_space<vmem>>, vector<1x1x128xf32>
    %299 = vector.shape_cast %298 : vector<1x1x128xf32> to vector<1x128xf32>
    %300 = vector.broadcast %299 : vector<1x128xf32> to vector<32x128xf32>
    %301 = arith.addf %297, %300 : vector<32x128xf32>
    %cst_125 = arith.constant 0.000000e+00 : f32
    %302 = vector.broadcast %cst_125 : f32 to vector<32x128xf32>
    %303 = arith.maximumf %301, %302 : vector<32x128xf32>
    %304 = arith.truncf %303 : vector<32x128xf32> to vector<32x128xbf16>
    %c0_126 = arith.constant 0 : index
    %c0_127 = arith.constant 0 : index
    %c0_128 = arith.constant 0 : index
    %305 = vector.load %arg27[%c0_126, %c0_127, %c0_128] : memref<1x128x128xbf16, #tpu.memory_space<vmem>>, vector<1x128x128xbf16>
    %306 = vector.shape_cast %305 : vector<1x128x128xbf16> to vector<128x128xbf16>
    %cst_129 = arith.constant dense<0.000000e+00> : vector<32x128xf32>
    %307 = tpu.matmul %304, %306, %cst_129 {dimension_numbers = #tpu.dot_dimension_numbers<[1], [0], [0], [1], [0, 0, 1, 1], [], []>} : vector<32x128xbf16>, vector<128x128xbf16>, vector<32x128xf32> -> vector<32x128xf32>
    %c0_130 = arith.constant 0 : index
    %c0_131 = arith.constant 0 : index
    %c0_132 = arith.constant 0 : index
    %308 = vector.load %arg28[%c0_130, %c0_131, %c0_132] : memref<1x1x128xf32, #tpu.memory_space<vmem>>, vector<1x1x128xf32>
    %309 = vector.shape_cast %308 : vector<1x1x128xf32> to vector<1x128xf32>
    %310 = vector.broadcast %309 : vector<1x128xf32> to vector<32x128xf32>
    %311 = arith.addf %307, %310 : vector<32x128xf32>
    %312 = arith.addf %176, %311 : vector<32x128xf32>
    %c0_133 = arith.constant 0 : index
    %c0_134 = arith.constant 0 : index
    %c0_135 = arith.constant 0 : index
    %313 = vector.load %arg29[%c0_133, %c0_134, %c0_135] : memref<1x1x128xf32, #tpu.memory_space<vmem>>, vector<1x1x128xf32>
    %314 = vector.shape_cast %313 : vector<1x1x128xf32> to vector<1x128xf32>
    %c0_136 = arith.constant 0 : index
    %c0_137 = arith.constant 0 : index
    %c0_138 = arith.constant 0 : index
    %315 = vector.load %arg30[%c0_136, %c0_137, %c0_138] : memref<1x1x128xf32, #tpu.memory_space<vmem>>, vector<1x1x128xf32>
    %316 = vector.shape_cast %315 : vector<1x1x128xf32> to vector<1x128xf32>
    %cst_139 = arith.constant dense<0.000000e+00> : vector<32xf32>
    %317 = vector.multi_reduction <add>, %312, %cst_139 [1] : vector<32x128xf32> to vector<32xf32>
    %318 = vector.shape_cast %317 : vector<32xf32> to vector<32x1xf32>
    %cst_140 = arith.constant 1.280000e+02 : f32
    %319 = vector.broadcast %cst_140 : f32 to vector<32x1xf32>
    %320 = arith.divf %318, %319 : vector<32x1xf32>
    %321 = vector.broadcast %320 : vector<32x1xf32> to vector<32x128xf32>
    %322 = arith.subf %312, %321 : vector<32x128xf32>
    %323 = arith.mulf %322, %322 : vector<32x128xf32>
    %cst_141 = arith.constant dense<0.000000e+00> : vector<32xf32>
    %324 = vector.multi_reduction <add>, %323, %cst_141 [1] : vector<32x128xf32> to vector<32xf32>
    %325 = vector.shape_cast %324 : vector<32xf32> to vector<32x1xf32>
    %cst_142 = arith.constant 1.280000e+02 : f32
    %326 = vector.broadcast %cst_142 : f32 to vector<32x1xf32>
    %327 = arith.divf %325, %326 : vector<32x1xf32>
    %328 = vector.broadcast %320 : vector<32x1xf32> to vector<32x128xf32>
    %329 = arith.subf %312, %328 : vector<32x128xf32>
    %cst_143 = arith.constant 9.99999974E-6 : f32
    %330 = vector.broadcast %cst_143 : f32 to vector<32x1xf32>
    %331 = arith.addf %327, %330 : vector<32x1xf32>
    %332 = math.rsqrt %331 : vector<32x1xf32>
    %333 = vector.broadcast %332 : vector<32x1xf32> to vector<32x128xf32>
    %334 = arith.mulf %329, %333 : vector<32x128xf32>
    %335 = vector.broadcast %314 : vector<1x128xf32> to vector<32x128xf32>
    %336 = arith.mulf %334, %335 : vector<32x128xf32>
    %337 = vector.broadcast %316 : vector<1x128xf32> to vector<32x128xf32>
    %338 = arith.addf %336, %337 : vector<32x128xf32>
    %339 = arith.truncf %338 : vector<32x128xf32> to vector<32x128xbf16>
    %c0_144 = arith.constant 0 : index
    %c0_145 = arith.constant 0 : index
    %c0_146 = arith.constant 0 : index
    %340 = vector.load %arg31[%c0_144, %c0_145, %c0_146] : memref<1x128x512xbf16, #tpu.memory_space<vmem>>, vector<1x128x512xbf16>
    %341 = vector.shape_cast %340 : vector<1x128x512xbf16> to vector<128x512xbf16>
    %cst_147 = arith.constant dense<0.000000e+00> : vector<32x512xf32>
    %342 = tpu.matmul %339, %341, %cst_147 {dimension_numbers = #tpu.dot_dimension_numbers<[1], [0], [0], [1], [0, 0, 1, 1], [], []>} : vector<32x128xbf16>, vector<128x512xbf16>, vector<32x512xf32> -> vector<32x512xf32>
    %c0_148 = arith.constant 0 : index
    %c0_149 = arith.constant 0 : index
    %c0_150 = arith.constant 0 : index
    %343 = vector.load %arg32[%c0_148, %c0_149, %c0_150] : memref<1x1x512xf32, #tpu.memory_space<vmem>>, vector<1x1x512xf32>
    %344 = vector.shape_cast %343 : vector<1x1x512xf32> to vector<1x512xf32>
    %345 = vector.broadcast %344 : vector<1x512xf32> to vector<32x512xf32>
    %346 = arith.addf %342, %345 : vector<32x512xf32>
    %cst_151 = arith.constant 0.000000e+00 : f32
    %347 = vector.broadcast %cst_151 : f32 to vector<32x512xf32>
    %348 = arith.maximumf %346, %347 : vector<32x512xf32>
    %349 = arith.truncf %348 : vector<32x512xf32> to vector<32x512xbf16>
    %c0_152 = arith.constant 0 : index
    %c0_153 = arith.constant 0 : index
    %c0_154 = arith.constant 0 : index
    %350 = vector.load %arg33[%c0_152, %c0_153, %c0_154] : memref<1x512x128xbf16, #tpu.memory_space<vmem>>, vector<1x512x128xbf16>
    %351 = vector.shape_cast %350 : vector<1x512x128xbf16> to vector<512x128xbf16>
    %cst_155 = arith.constant dense<0.000000e+00> : vector<32x128xf32>
    %352 = tpu.matmul %349, %351, %cst_155 {dimension_numbers = #tpu.dot_dimension_numbers<[1], [0], [0], [1], [0, 0, 1, 1], [], []>} : vector<32x512xbf16>, vector<512x128xbf16>, vector<32x128xf32> -> vector<32x128xf32>
    %c0_156 = arith.constant 0 : index
    %c0_157 = arith.constant 0 : index
    %c0_158 = arith.constant 0 : index
    %353 = vector.load %arg34[%c0_156, %c0_157, %c0_158] : memref<1x1x128xf32, #tpu.memory_space<vmem>>, vector<1x1x128xf32>
    %354 = vector.shape_cast %353 : vector<1x1x128xf32> to vector<1x128xf32>
    %355 = vector.broadcast %354 : vector<1x128xf32> to vector<32x128xf32>
    %356 = arith.addf %352, %355 : vector<32x128xf32>
    %cst_159 = arith.constant 5.000000e-01 : f32
    %357 = vector.broadcast %cst_159 : f32 to vector<32x128xf32>
    %358 = arith.mulf %357, %356 : vector<32x128xf32>
    %359 = arith.addf %312, %358 : vector<32x128xf32>
    %c0_160 = arith.constant 0 : index
    %c0_161 = arith.constant 0 : index
    %c0_162 = arith.constant 0 : index
    %360 = vector.load %arg35[%c0_160, %c0_161, %c0_162] : memref<1x1x128xf32, #tpu.memory_space<vmem>>, vector<1x1x128xf32>
    %361 = vector.shape_cast %360 : vector<1x1x128xf32> to vector<1x128xf32>
    %c0_163 = arith.constant 0 : index
    %c0_164 = arith.constant 0 : index
    %c0_165 = arith.constant 0 : index
    %362 = vector.load %arg36[%c0_163, %c0_164, %c0_165] : memref<1x1x128xf32, #tpu.memory_space<vmem>>, vector<1x1x128xf32>
    %363 = vector.shape_cast %362 : vector<1x1x128xf32> to vector<1x128xf32>
    %cst_166 = arith.constant dense<0.000000e+00> : vector<32xf32>
    %364 = vector.multi_reduction <add>, %359, %cst_166 [1] : vector<32x128xf32> to vector<32xf32>
    %365 = vector.shape_cast %364 : vector<32xf32> to vector<32x1xf32>
    %cst_167 = arith.constant 1.280000e+02 : f32
    %366 = vector.broadcast %cst_167 : f32 to vector<32x1xf32>
    %367 = arith.divf %365, %366 : vector<32x1xf32>
    %368 = vector.broadcast %367 : vector<32x1xf32> to vector<32x128xf32>
    %369 = arith.subf %359, %368 : vector<32x128xf32>
    %370 = arith.mulf %369, %369 : vector<32x128xf32>
    %cst_168 = arith.constant dense<0.000000e+00> : vector<32xf32>
    %371 = vector.multi_reduction <add>, %370, %cst_168 [1] : vector<32x128xf32> to vector<32xf32>
    %372 = vector.shape_cast %371 : vector<32xf32> to vector<32x1xf32>
    %cst_169 = arith.constant 1.280000e+02 : f32
    %373 = vector.broadcast %cst_169 : f32 to vector<32x1xf32>
    %374 = arith.divf %372, %373 : vector<32x1xf32>
    %375 = vector.broadcast %367 : vector<32x1xf32> to vector<32x128xf32>
    %376 = arith.subf %359, %375 : vector<32x128xf32>
    %cst_170 = arith.constant 9.99999974E-6 : f32
    %377 = vector.broadcast %cst_170 : f32 to vector<32x1xf32>
    %378 = arith.addf %374, %377 : vector<32x1xf32>
    %379 = math.rsqrt %378 : vector<32x1xf32>
    %380 = vector.broadcast %379 : vector<32x1xf32> to vector<32x128xf32>
    %381 = arith.mulf %376, %380 : vector<32x128xf32>
    %382 = vector.broadcast %361 : vector<1x128xf32> to vector<32x128xf32>
    %383 = arith.mulf %381, %382 : vector<32x128xf32>
    %384 = vector.broadcast %363 : vector<1x128xf32> to vector<32x128xf32>
    %385 = arith.addf %383, %384 : vector<32x128xf32>
    %c0_171 = arith.constant 0 : index
    %c0_172 = arith.constant 0 : index
    %386 = vector.load %arg40[%c0_171, %c0_172] : memref<32x128xf32, #tpu.memory_space<vmem>>, vector<32x128xf32>
    tpu.vector_store %arg40[%c0_171, %c0_172], %385 {strides = array<i32>} : memref<32x128xf32, #tpu.memory_space<vmem>>, vector<32x128xf32>,
    %c1_i32_173 = arith.constant 1 : i32
    %387 = arith.cmpi eq, %arg0, %c1_i32_173 : i32
    %388 = arith.extui %387 : i1 to i32
    %c0_i32_174 = arith.constant 0 : i32
    %389 = arith.cmpi ne, %388, %c0_i32_174 : i32
    scf.if %389 {
      %390 = arith.truncf %385 : vector<32x128xf32> to vector<32x128xbf16>
      %c0_175 = arith.constant 0 : index
      %c0_176 = arith.constant 0 : index
      %391 = vector.load %arg37[%c0_175, %c0_176] : memref<128x128xbf16, #tpu.memory_space<vmem>>, vector<128x128xbf16>
      %cst_177 = arith.constant dense<0.000000e+00> : vector<32x128xf32>
      %392 = tpu.matmul %390, %391, %cst_177 {dimension_numbers = #tpu.dot_dimension_numbers<[1], [0], [0], [1], [0, 0, 1, 1], [], []>} : vector<32x128xbf16>, vector<128x128xbf16>, vector<32x128xf32> -> vector<32x128xf32>
      %c0_178 = arith.constant 0 : index
      %c0_179 = arith.constant 0 : index
      %393 = vector.load %arg38[%c0_178, %c0_179] : memref<1x128xf32, #tpu.memory_space<vmem>>, vector<1x128xf32>
      %394 = vector.broadcast %393 : vector<1x128xf32> to vector<32x128xf32>
      %395 = arith.addf %392, %394 : vector<32x128xf32>
      %396 = vector.shape_cast %395 : vector<32x128xf32> to vector<2x16x128xf32>
      %c0_180 = arith.constant 0 : index
      %c0_181 = arith.constant 0 : index
      %c0_182 = arith.constant 0 : index
      %397 = vector.load %arg39[%c0_180, %c0_181, %c0_182] : memref<2x16x128xf32, #tpu.memory_space<vmem>>, vector<2x16x128xf32>
      tpu.vector_store %arg39[%c0_180, %c0_181, %c0_182], %396 {strides = array<i32>} : memref<2x16x128xf32, #tpu.memory_space<vmem>>, vector<2x16x128xf32>,
    } else {
    }
    return
  }
  func.func @transform_0(%arg0: i32) -> (i32, i32, i32) {
    %c0_i32 = arith.constant 0 : i32
    %c0_i32_0 = arith.constant 0 : i32
    %c0_i32_1 = arith.constant 0 : i32
    %c0_i32_2 = arith.constant 0 : i32
    return %c0_i32, %c0_i32_0, %c0_i32_1 : i32, i32, i32
  }
  func.func @transform_1(%arg0: i32) -> (i32, i32, i32) {
    %c0_i32 = arith.constant 0 : i32
    %c0_i32_0 = arith.constant 0 : i32
    %c0_i32_1 = arith.constant 0 : i32
    %c0_i32_2 = arith.constant 0 : i32
    return %c0_i32, %c0_i32_0, %c0_i32_1 : i32, i32, i32
  }
  func.func @transform_2(%arg0: i32) -> (i32, i32) {
    %c0_i32 = arith.constant 0 : i32
    %c0_i32_0 = arith.constant 0 : i32
    %c0_i32_1 = arith.constant 0 : i32
    return %c0_i32, %c0_i32_0 : i32, i32
  }
  func.func @transform_3(%arg0: i32) -> (i32, i32) {
    %c0_i32 = arith.constant 0 : i32
    %c0_i32_0 = arith.constant 0 : i32
    %c0_i32_1 = arith.constant 0 : i32
    return %c0_i32, %c0_i32_0 : i32, i32
  }
  func.func @transform_4(%arg0: i32) -> (i32, i32, i32) {
    %c0_i32 = arith.constant 0 : i32
    %c0_i32_0 = arith.constant 0 : i32
    %c0_i32_1 = arith.constant 0 : i32
    return %arg0, %c0_i32, %c0_i32_0 : i32, i32, i32
  }
  func.func @transform_5(%arg0: i32) -> (i32, i32, i32) {
    %c0_i32 = arith.constant 0 : i32
    %c0_i32_0 = arith.constant 0 : i32
    %c0_i32_1 = arith.constant 0 : i32
    return %arg0, %c0_i32, %c0_i32_0 : i32, i32, i32
  }
  func.func @transform_6(%arg0: i32) -> (i32, i32, i32) {
    %c0_i32 = arith.constant 0 : i32
    %c0_i32_0 = arith.constant 0 : i32
    %c0_i32_1 = arith.constant 0 : i32
    return %arg0, %c0_i32, %c0_i32_0 : i32, i32, i32
  }
  func.func @transform_7(%arg0: i32) -> (i32, i32, i32) {
    %c0_i32 = arith.constant 0 : i32
    %c0_i32_0 = arith.constant 0 : i32
    %c0_i32_1 = arith.constant 0 : i32
    return %arg0, %c0_i32, %c0_i32_0 : i32, i32, i32
  }
  func.func @transform_8(%arg0: i32) -> (i32, i32, i32) {
    %c0_i32 = arith.constant 0 : i32
    %c0_i32_0 = arith.constant 0 : i32
    %c0_i32_1 = arith.constant 0 : i32
    return %arg0, %c0_i32, %c0_i32_0 : i32, i32, i32
  }
  func.func @transform_9(%arg0: i32) -> (i32, i32, i32) {
    %c0_i32 = arith.constant 0 : i32
    %c0_i32_0 = arith.constant 0 : i32
    %c0_i32_1 = arith.constant 0 : i32
    return %arg0, %c0_i32, %c0_i32_0 : i32, i32, i32
  }
  func.func @transform_10(%arg0: i32) -> (i32, i32, i32) {
    %c0_i32 = arith.constant 0 : i32
    %c0_i32_0 = arith.constant 0 : i32
    %c0_i32_1 = arith.constant 0 : i32
    return %arg0, %c0_i32, %c0_i32_0 : i32, i32, i32
  }
  func.func @transform_11(%arg0: i32) -> (i32, i32, i32) {
    %c0_i32 = arith.constant 0 : i32
    %c0_i32_0 = arith.constant 0 : i32
    %c0_i32_1 = arith.constant 0 : i32
    return %arg0, %c0_i32, %c0_i32_0 : i32, i32, i32
  }
  func.func @transform_12(%arg0: i32) -> (i32, i32, i32) {
    %c0_i32 = arith.constant 0 : i32
    %c0_i32_0 = arith.constant 0 : i32
    %c0_i32_1 = arith.constant 0 : i32
    return %arg0, %c0_i32, %c0_i32_0 : i32, i32, i32
  }
  func.func @transform_13(%arg0: i32) -> (i32, i32, i32) {
    %c0_i32 = arith.constant 0 : i32
    %c0_i32_0 = arith.constant 0 : i32
    %c0_i32_1 = arith.constant 0 : i32
    return %arg0, %c0_i32, %c0_i32_0 : i32, i32, i32
  }
  func.func @transform_14(%arg0: i32) -> (i32, i32, i32) {
    %c0_i32 = arith.constant 0 : i32
    %c0_i32_0 = arith.constant 0 : i32
    %c0_i32_1 = arith.constant 0 : i32
    return %arg0, %c0_i32, %c0_i32_0 : i32, i32, i32
  }
  func.func @transform_15(%arg0: i32) -> (i32, i32, i32) {
    %c0_i32 = arith.constant 0 : i32
    %c0_i32_0 = arith.constant 0 : i32
    %c0_i32_1 = arith.constant 0 : i32
    return %arg0, %c0_i32, %c0_i32_0 : i32, i32, i32
  }
  func.func @transform_16(%arg0: i32) -> (i32, i32, i32) {
    %c0_i32 = arith.constant 0 : i32
    %c0_i32_0 = arith.constant 0 : i32
    %c0_i32_1 = arith.constant 0 : i32
    return %arg0, %c0_i32, %c0_i32_0 : i32, i32, i32
  }
  func.func @transform_17(%arg0: i32) -> (i32, i32, i32) {
    %c0_i32 = arith.constant 0 : i32
    %c0_i32_0 = arith.constant 0 : i32
    %c0_i32_1 = arith.constant 0 : i32
    return %arg0, %c0_i32, %c0_i32_0 : i32, i32, i32
  }
  func.func @transform_18(%arg0: i32) -> (i32, i32, i32) {
    %c0_i32 = arith.constant 0 : i32
    %c0_i32_0 = arith.constant 0 : i32
    %c0_i32_1 = arith.constant 0 : i32
    return %arg0, %c0_i32, %c0_i32_0 : i32, i32, i32
  }
  func.func @transform_19(%arg0: i32) -> (i32, i32, i32) {
    %c0_i32 = arith.constant 0 : i32
    %c0_i32_0 = arith.constant 0 : i32
    %c0_i32_1 = arith.constant 0 : i32
    return %arg0, %c0_i32, %c0_i32_0 : i32, i32, i32
  }
  func.func @transform_20(%arg0: i32) -> (i32, i32, i32) {
    %c0_i32 = arith.constant 0 : i32
    %c0_i32_0 = arith.constant 0 : i32
    %c0_i32_1 = arith.constant 0 : i32
    return %arg0, %c0_i32, %c0_i32_0 : i32, i32, i32
  }
  func.func @transform_21(%arg0: i32) -> (i32, i32, i32) {
    %c0_i32 = arith.constant 0 : i32
    %c0_i32_0 = arith.constant 0 : i32
    %c0_i32_1 = arith.constant 0 : i32
    return %arg0, %c0_i32, %c0_i32_0 : i32, i32, i32
  }
  func.func @transform_22(%arg0: i32) -> (i32, i32, i32) {
    %c0_i32 = arith.constant 0 : i32
    %c0_i32_0 = arith.constant 0 : i32
    %c0_i32_1 = arith.constant 0 : i32
    return %arg0, %c0_i32, %c0_i32_0 : i32, i32, i32
  }
  func.func @transform_23(%arg0: i32) -> (i32, i32, i32) {
    %c0_i32 = arith.constant 0 : i32
    %c0_i32_0 = arith.constant 0 : i32
    %c0_i32_1 = arith.constant 0 : i32
    return %arg0, %c0_i32, %c0_i32_0 : i32, i32, i32
  }
  func.func @transform_24(%arg0: i32) -> (i32, i32, i32) {
    %c0_i32 = arith.constant 0 : i32
    %c0_i32_0 = arith.constant 0 : i32
    %c0_i32_1 = arith.constant 0 : i32
    return %arg0, %c0_i32, %c0_i32_0 : i32, i32, i32
  }
  func.func @transform_25(%arg0: i32) -> (i32, i32, i32) {
    %c0_i32 = arith.constant 0 : i32
    %c0_i32_0 = arith.constant 0 : i32
    %c0_i32_1 = arith.constant 0 : i32
    return %arg0, %c0_i32, %c0_i32_0 : i32, i32, i32
  }
  func.func @transform_26(%arg0: i32) -> (i32, i32, i32) {
    %c0_i32 = arith.constant 0 : i32
    %c0_i32_0 = arith.constant 0 : i32
    %c0_i32_1 = arith.constant 0 : i32
    return %arg0, %c0_i32, %c0_i32_0 : i32, i32, i32
  }
  func.func @transform_27(%arg0: i32) -> (i32, i32, i32) {
    %c0_i32 = arith.constant 0 : i32
    %c0_i32_0 = arith.constant 0 : i32
    %c0_i32_1 = arith.constant 0 : i32
    return %arg0, %c0_i32, %c0_i32_0 : i32, i32, i32
  }
  func.func @transform_28(%arg0: i32) -> (i32, i32, i32) {
    %c0_i32 = arith.constant 0 : i32
    %c0_i32_0 = arith.constant 0 : i32
    %c0_i32_1 = arith.constant 0 : i32
    return %arg0, %c0_i32, %c0_i32_0 : i32, i32, i32
  }
  func.func @transform_29(%arg0: i32) -> (i32, i32, i32) {
    %c0_i32 = arith.constant 0 : i32
    %c0_i32_0 = arith.constant 0 : i32
    %c0_i32_1 = arith.constant 0 : i32
    return %arg0, %c0_i32, %c0_i32_0 : i32, i32, i32
  }
  func.func @transform_30(%arg0: i32) -> (i32, i32, i32) {
    %c0_i32 = arith.constant 0 : i32
    %c0_i32_0 = arith.constant 0 : i32
    %c0_i32_1 = arith.constant 0 : i32
    return %arg0, %c0_i32, %c0_i32_0 : i32, i32, i32
  }
  func.func @transform_31(%arg0: i32) -> (i32, i32, i32) {
    %c0_i32 = arith.constant 0 : i32
    %c0_i32_0 = arith.constant 0 : i32
    %c0_i32_1 = arith.constant 0 : i32
    return %arg0, %c0_i32, %c0_i32_0 : i32, i32, i32
  }
  func.func @transform_32(%arg0: i32) -> (i32, i32, i32) {
    %c0_i32 = arith.constant 0 : i32
    %c0_i32_0 = arith.constant 0 : i32
    %c0_i32_1 = arith.constant 0 : i32
    return %arg0, %c0_i32, %c0_i32_0 : i32, i32, i32
  }
  func.func @transform_33(%arg0: i32) -> (i32, i32, i32) {
    %c0_i32 = arith.constant 0 : i32
    %c0_i32_0 = arith.constant 0 : i32
    %c0_i32_1 = arith.constant 0 : i32
    return %arg0, %c0_i32, %c0_i32_0 : i32, i32, i32
  }
  func.func @transform_34(%arg0: i32) -> (i32, i32, i32) {
    %c0_i32 = arith.constant 0 : i32
    %c0_i32_0 = arith.constant 0 : i32
    %c0_i32_1 = arith.constant 0 : i32
    return %arg0, %c0_i32, %c0_i32_0 : i32, i32, i32
  }
  func.func @transform_35(%arg0: i32) -> (i32, i32, i32) {
    %c0_i32 = arith.constant 0 : i32
    %c0_i32_0 = arith.constant 0 : i32
    %c0_i32_1 = arith.constant 0 : i32
    return %arg0, %c0_i32, %c0_i32_0 : i32, i32, i32
  }
  func.func @transform_36(%arg0: i32) -> (i32, i32) {
    %c0_i32 = arith.constant 0 : i32
    %c0_i32_0 = arith.constant 0 : i32
    %c0_i32_1 = arith.constant 0 : i32
    return %c0_i32, %c0_i32_0 : i32, i32
  }
  func.func @transform_37(%arg0: i32) -> (i32, i32) {
    %c0_i32 = arith.constant 0 : i32
    %c0_i32_0 = arith.constant 0 : i32
    %c0_i32_1 = arith.constant 0 : i32
    return %c0_i32, %c0_i32_0 : i32, i32
  }
  func.func @transform_38(%arg0: i32) -> (i32, i32, i32) {
    %c0_i32 = arith.constant 0 : i32
    %c0_i32_0 = arith.constant 0 : i32
    %c0_i32_1 = arith.constant 0 : i32
    %c0_i32_2 = arith.constant 0 : i32
    return %c0_i32, %c0_i32_0, %c0_i32_1 : i32, i32, i32
  }
}

</mosaic_0001>

<llo_original>
// kernel: conformer_apply.1
$region0: #{conformer_apply.1}
  #allocation0 [shape = 'u32[]', space=smem, size = 0x4, offset = 0x4, fixed_abs, tag = 'smem constant byte address 0x4 - core index']
  #allocation1 [shape = 'u32[144,128]{1,0:T(1,128)}', space=vmem, size = 0x12000, scoped, tag = 'internal scratch']
  #allocation2 [shape = 'f32[32,128]{1,0:T(8,128)}', space=vmem, size = 0x4000, scoped, tag = 'scratch operand']
  %s0 = inlined_call_operand.smem [shape: u32[39], index: -1, kind: input, shape index: {}]
  %s1 = sld [smem:[%s0]]
  %s2 = scalar_lea.smem %s0, 1
  %s3 = sld [smem:[%s2]]
  %s4 = scalar_lea.smem %s0, 2
  %s5 = sld [smem:[%s4]]
  %s6 = scalar_lea.smem %s0, 3
  %s7 = sld [smem:[%s6]]
  %s8 = scalar_lea.smem %s0, 4
  %s9 = sld [smem:[%s8]]
  %s10 = scalar_lea.smem %s0, 5
  %s11 = sld [smem:[%s10]]
  %s12 = scalar_lea.smem %s0, 6
  %s13 = sld [smem:[%s12]]
  %s14 = scalar_lea.smem %s0, 7
  %s15 = sld [smem:[%s14]]
  %s16 = scalar_lea.smem %s0, 8
  %s17 = sld [smem:[%s16]]
  %s18 = scalar_lea.smem %s0, 9
  %s19 = sld [smem:[%s18]]
  %s20 = scalar_lea.smem %s0, 10
  %s21 = sld [smem:[%s20]]
  %s22 = scalar_lea.smem %s0, 11
  %s23 = sld [smem:[%s22]]
  %s24 = scalar_lea.smem %s0, 12
  %s25 = sld [smem:[%s24]]
  %s26 = scalar_lea.smem %s0, 13
  %s27 = sld [smem:[%s26]]
  %s28 = scalar_lea.smem %s0, 14
  %s29 = sld [smem:[%s28]]
  %s30 = scalar_lea.smem %s0, 15
  %s31 = sld [smem:[%s30]]
  %s32 = scalar_lea.smem %s0, 16
  %s33 = sld [smem:[%s32]]
  %s34 = scalar_lea.smem %s0, 17
  %s35 = sld [smem:[%s34]]
  %s36 = scalar_lea.smem %s0, 18
  %s37 = sld [smem:[%s36]]
  %s38 = scalar_lea.smem %s0, 19
  %s39 = sld [smem:[%s38]]
  %s40 = scalar_lea.smem %s0, 20
  %s41 = sld [smem:[%s40]]
  %s42 = scalar_lea.smem %s0, 21
  %s43 = sld [smem:[%s42]]
  %s44 = scalar_lea.smem %s0, 22
  %s45 = sld [smem:[%s44]]
  %s46 = scalar_lea.smem %s0, 23
  %s47 = sld [smem:[%s46]]
  %s48 = scalar_lea.smem %s0, 24
  %s49 = sld [smem:[%s48]]
  %s50 = scalar_lea.smem %s0, 25
  %s51 = sld [smem:[%s50]]
  %s52 = scalar_lea.smem %s0, 26
  %s53 = sld [smem:[%s52]]
  %s54 = scalar_lea.smem %s0, 27
  %s55 = sld [smem:[%s54]]
  %s56 = scalar_lea.smem %s0, 28
  %s57 = sld [smem:[%s56]]
  %s58 = scalar_lea.smem %s0, 29
  %s59 = sld [smem:[%s58]]
  %s60 = scalar_lea.smem %s0, 30
  %s61 = sld [smem:[%s60]]
  %s62 = scalar_lea.smem %s0, 31
  %s63 = sld [smem:[%s62]]
  %s64 = scalar_lea.smem %s0, 32
  %s65 = sld [smem:[%s64]]
  %s66 = scalar_lea.smem %s0, 33
  %s67 = sld [smem:[%s66]]
  %s68 = scalar_lea.smem %s0, 34
  %s69 = sld [smem:[%s68]]
  %s70 = scalar_lea.smem %s0, 35
  %s71 = sld [smem:[%s70]]
  %s72 = scalar_lea.smem %s0, 36
  %s73 = sld [smem:[%s72]]
  %s74 = scalar_lea.smem %s0, 37
  %s75 = sld [smem:[%s74]]
  %s76 = scalar_lea.smem %s0, 38
  %s77 = sld [smem:[%s76]]
  %s78 = sld [smem:[#allocation0]]
  $region249: #{conformer_apply.1} parent=0
    _
  %s80 = ssub.s32 1, %s78
  %s81 = scalar_select 0, %s80, %s78
  $region1: #{conformer_apply.1} parent=0
    #allocation3 [shape = 'u8[16384]{0}', space=vmem, size = 0x4000, scoped, tag = 'input window, operand 0, single buffered']
    #allocation4 [shape = 's32[2]{0}', space=sflag, size = 0x8, scoped, tag = 'scoped memory for conformer_apply.1']
    #allocation5 [shape = 'u8[114688]{0}', space=vmem, size = 0x1c000, scoped, tag = 'input window, operand 1, single buffered']
    #allocation6 [shape = 's32[1]{0}', space=sflag, size = 0x4, scoped, tag = 'scoped memory for conformer_apply.1']
    #allocation7 [shape = 'u8[20480]{0}', space=vmem, size = 0x5000, scoped, tag = 'input window, operand 2, single buffered']
    #allocation8 [shape = 'u8[512]{0}', space=vmem, size = 0x400, scoped, tag = 'input window, operand 3, single buffered']
    #allocation9 [shape = 's32[1]{0}', space=sflag, size = 0x4, scoped, tag = 'scoped memory for conformer_apply.1']
    #allocation10 [shape = 'u8[262144]{0}', space=vmem, size = 0x40000, scoped, tag = 'input window, operand 6']
    #allocation11 [shape = 'u8[262144]{0}', space=vmem, size = 0x40000, scoped, tag = 'input window, operand 8']
    #allocation12 [shape = 'u8[196608]{0}', space=vmem, size = 0x30000, scoped, tag = 'input window, operand 12']
    #allocation13 [shape = 'u8[65536]{0}', space=vmem, size = 0x10000, scoped, tag = 'input window, operand 14']
    #allocation14 [shape = 'u8[131072]{0}', space=vmem, size = 0x20000, scoped, tag = 'input window, operand 18']
    #allocation15 [shape = 'u8[1024]{0}', space=vmem, size = 0x400, scoped, tag = 'input window, operand 25']
    #allocation16 [shape = 'u8[65536]{0}', space=vmem, size = 0x10000, scoped, tag = 'input window, operand 26']
    #allocation17 [shape = 'u8[1024]{0}', space=vmem, size = 0x400, scoped, tag = 'input window, operand 27']
    #allocation18 [shape = 'u8[262144]{0}', space=vmem, size = 0x40000, scoped, tag = 'input window, operand 30']
    #allocation19 [shape = 'u8[262144]{0}', space=vmem, size = 0x40000, scoped, tag = 'input window, operand 32']
    %82 = vsyncpa [#allocation4], 0
    %83 = vsyncpa [#allocation6], 0
    %84 = vsyncpa [#allocation9], 0
    loop: start=0, step=1, limit=4
    $region2: #{conformer_apply.1} parent=1 // loop_pre_header
      _
    $region3: #{conformer_apply.1} parent=1 // loop_header
      %s86 = sphi 0, %s90
      %p87 = scmp.ge.s32.totalorder %s86, 4
      %s94 = sphi 0, %s94
      %s96 = sphi 0, %s94
      %s97 = sphi 0, %s96
      %s111 = sphi 0, %s97
      %s115 = sphi 0, %s115
      %s117 = sphi 0, %s115
      %s118 = sphi 0, %s117
      %s132 = sphi 0, %s118
      %s136 = sphi 0, %s136
      %s138 = sphi 0, %s136
      %s139 = sphi 0, %s138
      %s153 = sphi 0, %s139
      %s157 = sphi 0, %s157
      %s159 = sphi 0, %s157
      %s160 = sphi 0, %s159
      %s174 = sphi 0, %s160
      %s180 = sphi 0, %s182
      %s183 = sphi 0, %s180
      %s184 = sphi 0, %s183
      %s200 = sphi 0, %s184
      %s206 = sphi 0, %s208
      %s209 = sphi 0, %s206
      %s210 = sphi 0, %s209
      %s226 = sphi 0, %s210
      %s232 = sphi 0, %s234
      %s235 = sphi 0, %s232
      %s236 = sphi 0, %s235
      %s252 = sphi 0, %s236
      %s258 = sphi 0, %s260
      %s261 = sphi 0, %s258
      %s262 = sphi 0, %s261
      %s278 = sphi 0, %s262
      %s284 = sphi 0, %s286
      %s287 = sphi 0, %s284
      %s288 = sphi 0, %s287
      %s304 = sphi 0, %s288
      %s310 = sphi 0, %s312
      %s313 = sphi 0, %s310
      %s314 = sphi 0, %s313
      %s330 = sphi 0, %s314
      %s336 = sphi 0, %s338
      %s339 = sphi 0, %s336
      %s340 = sphi 0, %s339
      %s356 = sphi 0, %s340
      %s362 = sphi 0, %s364
      %s365 = sphi 0, %s362
      %s366 = sphi 0, %s365
      %s382 = sphi 0, %s366
      %s388 = sphi 0, %s390
      %s391 = sphi 0, %s388
      %s392 = sphi 0, %s391
      %s408 = sphi 0, %s392
      %s414 = sphi 0, %s416
      %s417 = sphi 0, %s414
      %s418 = sphi 0, %s417
      %s434 = sphi 0, %s418
      %s440 = sphi 0, %s442
      %s443 = sphi 0, %s440
      %s444 = sphi 0, %s443
      %s460 = sphi 0, %s444
      %s466 = sphi 0, %s468
      %s469 = sphi 0, %s466
      %s470 = sphi 0, %s469
      %s486 = sphi 0, %s470
      %s492 = sphi 0, %s494
      %s495 = sphi 0, %s492
      %s496 = sphi 0, %s495
      %s512 = sphi 0, %s496
      %s518 = sphi 0, %s520
      %s521 = sphi 0, %s518
      %s522 = sphi 0, %s521
      %s538 = sphi 0, %s522
      %s544 = sphi 0, %s546
      %s547 = sphi 0, %s544
      %s548 = sphi 0, %s547
      %s564 = sphi 0, %s548
      %s570 = sphi 0, %s572
      %s573 = sphi 0, %s570
      %s574 = sphi 0, %s573
      %s590 = sphi 0, %s574
      %s596 = sphi 0, %s598
      %s599 = sphi 0, %s596
      %s600 = sphi 0, %s599
      %s616 = sphi 0, %s600
      %s622 = sphi 0, %s624
      %s625 = sphi 0, %s622
      %s626 = sphi 0, %s625
      %s642 = sphi 0, %s626
      %s648 = sphi 0, %s650
      %s651 = sphi 0, %s648
      %s652 = sphi 0, %s651
      %s668 = sphi 0, %s652
      %s674 = sphi 0, %s676
      %s677 = sphi 0, %s674
      %s678 = sphi 0, %s677
      %s694 = sphi 0, %s678
      %s700 = sphi 0, %s702
      %s703 = sphi 0, %s700
      %s704 = sphi 0, %s703
      %s720 = sphi 0, %s704
      %s726 = sphi 0, %s728
      %s729 = sphi 0, %s726
      %s730 = sphi 0, %s729
      %s746 = sphi 0, %s730
      %s752 = sphi 0, %s754
      %s755 = sphi 0, %s752
      %s756 = sphi 0, %s755
      %s772 = sphi 0, %s756
      %s778 = sphi 0, %s780
      %s781 = sphi 0, %s778
      %s782 = sphi 0, %s781
      %s798 = sphi 0, %s782
      %s804 = sphi 0, %s806
      %s807 = sphi 0, %s804
      %s808 = sphi 0, %s807
      %s824 = sphi 0, %s808
      %s830 = sphi 0, %s832
      %s833 = sphi 0, %s830
      %s834 = sphi 0, %s833
      %s850 = sphi 0, %s834
      %s856 = sphi 0, %s858
      %s859 = sphi 0, %s856
      %s860 = sphi 0, %s859
      %s876 = sphi 0, %s860
      %s882 = sphi 0, %s884
      %s885 = sphi 0, %s882
      %s886 = sphi 0, %s885
      %s902 = sphi 0, %s886
      %s908 = sphi 0, %s910
      %s911 = sphi 0, %s908
      %s912 = sphi 0, %s911
      %s928 = sphi 0, %s912
      %s934 = sphi 0, %s936
      %s937 = sphi 0, %s934
      %s938 = sphi 0, %s937
      %s954 = sphi 0, %s938
      %s960 = sphi 0, %s962
      %s963 = sphi 0, %s960
      %s964 = sphi 0, %s963
      %s980 = sphi 0, %s964
      %s986 = sphi 0, %s988
      %s989 = sphi 0, %s986
      %s990 = sphi 0, %s989
      %s1006 = sphi 0, %s990
      %s1010 = sphi 0, %s1010
      %s1012 = sphi 0, %s1010
      %s1013 = sphi 0, %s1012
      %s1027 = sphi 0, %s1013
      %s1031 = sphi 0, %s1031
      %s1033 = sphi 0, %s1031
      %s1034 = sphi 0, %s1033
      %s1048 = sphi 0, %s1034
      %s1052 = sphi 0, %s1052
      %s1054 = sphi 0, %s1052
      %s1055 = sphi 0, %s1054
      %s1069 = sphi 0, %s1055
    $region4: #{conformer_apply.1} parent=1 // loop_header_branch
      %89 = sbr.rel (%p87) target = $region8
    $region5: #{conformer_apply.1} parent=1 // loop_body
      %s91 = ssub.s32 %s86, 1
      %s92 = ssub.s32 %s86, 2
      %s93 = sadd.s32 %s86, 1
      %s95 = sadd.s32 %s94, 1
      %p98 = scmp.eq.s32.totalorder %s86, 1
      %p99 = scmp.ne.s32.totalorder %s94, %s96
      %p100 = scmp.eq.s32.totalorder %s86, 0
      %p101 = por %p99, %p100
      %p102 = scmp.ne.s32.totalorder %s94, %s96
      %p103 = scmp.eq.s32.totalorder %s91, 1
      %p104 = por %p102, %p103
      %p105 = scmp.ne.s32.totalorder %s96, %s97
      %p106 = scmp.eq.s32.totalorder %s91, 0
      %p107 = por %p105, %p106
      %p108 = scmp.ne.s32.totalorder %s96, %s97
      %p109 = scmp.eq.s32.totalorder %s92, 1
      %p110 = por %p108, %p109
      %p112 = scmp.ne.s32.totalorder %s97, %s111
      %p113 = scmp.eq.s32.totalorder %s92, 0
      %p114 = por %p112, %p113
      %s116 = sadd.s32 %s115, 1
      %p119 = scmp.eq.s32.totalorder %s86, 1
      %p120 = scmp.ne.s32.totalorder %s115, %s117
      %p121 = scmp.eq.s32.totalorder %s86, 0
      %p122 = por %p120, %p121
      %p123 = scmp.ne.s32.totalorder %s115, %s117
      %p124 = scmp.eq.s32.totalorder %s91, 1
      %p125 = por %p123, %p124
      %p126 = scmp.ne.s32.totalorder %s117, %s118
      %p127 = scmp.eq.s32.totalorder %s91, 0
      %p128 = por %p126, %p127
      %p129 = scmp.ne.s32.totalorder %s117, %s118
      %p130 = scmp.eq.s32.totalorder %s92, 1
      %p131 = por %p129, %p130
      %p133 = scmp.ne.s32.totalorder %s118, %s132
      %p134 = scmp.eq.s32.totalorder %s92, 0
      %p135 = por %p133, %p134
      %s137 = sadd.s32 %s136, 1
      %p140 = scmp.eq.s32.totalorder %s86, 1
      %p141 = scmp.ne.s32.totalorder %s136, %s138
      %p142 = scmp.eq.s32.totalorder %s86, 0
      %p143 = por %p141, %p142
      %p144 = scmp.ne.s32.totalorder %s136, %s138
      %p145 = scmp.eq.s32.totalorder %s91, 1
      %p146 = por %p144, %p145
      %p147 = scmp.ne.s32.totalorder %s138, %s139
      %p148 = scmp.eq.s32.totalorder %s91, 0
      %p149 = por %p147, %p148
      %p150 = scmp.ne.s32.totalorder %s138, %s139
      %p151 = scmp.eq.s32.totalorder %s92, 1
      %p152 = por %p150, %p151
      %p154 = scmp.ne.s32.totalorder %s139, %s153
      %p155 = scmp.eq.s32.totalorder %s92, 0
      %p156 = por %p154, %p155
      %s158 = sadd.s32 %s157, 1
      %p161 = scmp.eq.s32.totalorder %s86, 1
      %p162 = scmp.ne.s32.totalorder %s157, %s159
      %p163 = scmp.eq.s32.totalorder %s86, 0
      %p164 = por %p162, %p163
      %p165 = scmp.ne.s32.totalorder %s157, %s159
      %p166 = scmp.eq.s32.totalorder %s91, 1
      %p167 = por %p165, %p166
      %p168 = scmp.ne.s32.totalorder %s159, %s160
      %p169 = scmp.eq.s32.totalorder %s91, 0
      %p170 = por %p168, %p169
      %p171 = scmp.ne.s32.totalorder %s159, %s160
      %p172 = scmp.eq.s32.totalorder %s92, 1
      %p173 = por %p171, %p172
      %p175 = scmp.ne.s32.totalorder %s160, %s174
      %p176 = scmp.eq.s32.totalorder %s92, 0
      %p177 = por %p175, %p176
      %s178 = ssub.s32 %s86, %s93
      %p179 = scmp.eq.s32.totalorder %s178, 0
      %s181 = sadd.s32 %s180, 1
      %s182 = scalar_select %p179, %s180, %s181
      %p185 = pneg %p179
      %p186 = scmp.eq.s32.totalorder %s86, 1
      %p187 = por %p185, %p186
      %p188 = scmp.ne.s32.totalorder %s180, %s183
      %p189 = scmp.eq.s32.totalorder %s86, 0
      %p190 = por %p188, %p189
      %p191 = scmp.ne.s32.totalorder %s180, %s183
      %p192 = scmp.eq.s32.totalorder %s91, 1
      %p193 = por %p191, %p192
      %p194 = scmp.ne.s32.totalorder %s183, %s184
      %p195 = scmp.eq.s32.totalorder %s91, 0
      %p196 = por %p194, %p195
      %p197 = scmp.ne.s32.totalorder %s183, %s184
      %p198 = scmp.eq.s32.totalorder %s92, 1
      %p199 = por %p197, %p198
      %p201 = scmp.ne.s32.totalorder %s184, %s200
      %p202 = scmp.eq.s32.totalorder %s92, 0
      %p203 = por %p201, %p202
      %s204 = ssub.s32 %s86, %s93
      %p205 = scmp.eq.s32.totalorder %s204, 0
      %s207 = sadd.s32 %s206, 1
      %s208 = scalar_select %p205, %s206, %s207
      %p211 = pneg %p205
      %p212 = scmp.eq.s32.totalorder %s86, 1
      %p213 = por %p211, %p212
      %p214 = scmp.ne.s32.totalorder %s206, %s209
      %p215 = scmp.eq.s32.totalorder %s86, 0
      %p216 = por %p214, %p215
      %p217 = scmp.ne.s32.totalorder %s206, %s209
      %p218 = scmp.eq.s32.totalorder %s91, 1
      %p219 = por %p217, %p218
      %p220 = scmp.ne.s32.totalorder %s209, %s210
      %p221 = scmp.eq.s32.totalorder %s91, 0
      %p222 = por %p220, %p221
      %p223 = scmp.ne.s32.totalorder %s209, %s210
      %p224 = scmp.eq.s32.totalorder %s92, 1
      %p225 = por %p223, %p224
      %p227 = scmp.ne.s32.totalorder %s210, %s226
      %p228 = scmp.eq.s32.totalorder %s92, 0
      %p229 = por %p227, %p228
      %s230 = ssub.s32 %s86, %s93
      %p231 = scmp.eq.s32.totalorder %s230, 0
      %s233 = sadd.s32 %s232, 1
      %s234 = scalar_select %p231, %s232, %s233
      %p237 = pneg %p231
      %p238 = scmp.eq.s32.totalorder %s86, 1
      %p239 = por %p237, %p238
      %p240 = scmp.ne.s32.totalorder %s232, %s235
      %p241 = scmp.eq.s32.totalorder %s86, 0
      %p242 = por %p240, %p241
      %p243 = scmp.ne.s32.totalorder %s232, %s235
      %p244 = scmp.eq.s32.totalorder %s91, 1
      %p245 = por %p243, %p244
      %p246 = scmp.ne.s32.totalorder %s235, %s236
      %p247 = scmp.eq.s32.totalorder %s91, 0
      %p248 = por %p246, %p247
      %p249 = scmp.ne.s32.totalorder %s235, %s236
      %p250 = scmp.eq.s32.totalorder %s92, 1
      %p251 = por %p249, %p250
      %p253 = scmp.ne.s32.totalorder %s236, %s252
      %p254 = scmp.eq.s32.totalorder %s92, 0
      %p255 = por %p253, %p254
      %s256 = ssub.s32 %s86, %s93
      %p257 = scmp.eq.s32.totalorder %s256, 0
      %s259 = sadd.s32 %s258, 1
      %s260 = scalar_select %p257, %s258, %s259
      %p263 = pneg %p257
      %p264 = scmp.eq.s32.totalorder %s86, 1
      %p265 = por %p263, %p264
      %p266 = scmp.ne.s32.totalorder %s258, %s261
      %p267 = scmp.eq.s32.totalorder %s86, 0
      %p268 = por %p266, %p267
      %p269 = scmp.ne.s32.totalorder %s258, %s261
      %p270 = scmp.eq.s32.totalorder %s91, 1
      %p271 = por %p269, %p270
      %p272 = scmp.ne.s32.totalorder %s261, %s262
      %p273 = scmp.eq.s32.totalorder %s91, 0
      %p274 = por %p272, %p273
      %p275 = scmp.ne.s32.totalorder %s261, %s262
      %p276 = scmp.eq.s32.totalorder %s92, 1
      %p277 = por %p275, %p276
      %p279 = scmp.ne.s32.totalorder %s262, %s278
      %p280 = scmp.eq.s32.totalorder %s92, 0
      %p281 = por %p279, %p280
      %s282 = ssub.s32 %s86, %s93
      %p283 = scmp.eq.s32.totalorder %s282, 0
      %s285 = sadd.s32 %s284, 1
      %s286 = scalar_select %p283, %s284, %s285
      %p289 = pneg %p283
      %p290 = scmp.eq.s32.totalorder %s86, 1
      %p291 = por %p289, %p290
      %p292 = scmp.ne.s32.totalorder %s284, %s287
      %p293 = scmp.eq.s32.totalorder %s86, 0
      %p294 = por %p292, %p293
      %p295 = scmp.ne.s32.totalorder %s284, %s287
      %p296 = scmp.eq.s32.totalorder %s91, 1
      %p297 = por %p295, %p296
      %p298 = scmp.ne.s32.totalorder %s287, %s288
      %p299 = scmp.eq.s32.totalorder %s91, 0
      %p300 = por %p298, %p299
      %p301 = scmp.ne.s32.totalorder %s287, %s288
      %p302 = scmp.eq.s32.totalorder %s92, 1
      %p303 = por %p301, %p302
      %p305 = scmp.ne.s32.totalorder %s288, %s304
      %p306 = scmp.eq.s32.totalorder %s92, 0
      %p307 = por %p305, %p306
      %s308 = ssub.s32 %s86, %s93
      %p309 = scmp.eq.s32.totalorder %s308, 0
      %s311 = sadd.s32 %s310, 1
      %s312 = scalar_select %p309, %s310, %s311
      %p315 = pneg %p309
      %p316 = scmp.eq.s32.totalorder %s86, 1
      %p317 = por %p315, %p316
      %p318 = scmp.ne.s32.totalorder %s310, %s313
      %p319 = scmp.eq.s32.totalorder %s86, 0
      %p320 = por %p318, %p319
      %p321 = scmp.ne.s32.totalorder %s310, %s313
      %p322 = scmp.eq.s32.totalorder %s91, 1
      %p323 = por %p321, %p322
      %p324 = scmp.ne.s32.totalorder %s313, %s314
      %p325 = scmp.eq.s32.totalorder %s91, 0
      %p326 = por %p324, %p325
      %p327 = scmp.ne.s32.totalorder %s313, %s314
      %p328 = scmp.eq.s32.totalorder %s92, 1
      %p329 = por %p327, %p328
      %p331 = scmp.ne.s32.totalorder %s314, %s330
      %p332 = scmp.eq.s32.totalorder %s92, 0
      %p333 = por %p331, %p332
      %s334 = ssub.s32 %s86, %s93
      %p335 = scmp.eq.s32.totalorder %s334, 0
      %s337 = sadd.s32 %s336, 1
      %s338 = scalar_select %p335, %s336, %s337
      %p341 = pneg %p335
      %p342 = scmp.eq.s32.totalorder %s86, 1
      %p343 = por %p341, %p342
      %p344 = scmp.ne.s32.totalorder %s336, %s339
      %p345 = scmp.eq.s32.totalorder %s86, 0
      %p346 = por %p344, %p345
      %p347 = scmp.ne.s32.totalorder %s336, %s339
      %p348 = scmp.eq.s32.totalorder %s91, 1
      %p349 = por %p347, %p348
      %p350 = scmp.ne.s32.totalorder %s339, %s340
      %p351 = scmp.eq.s32.totalorder %s91, 0
      %p352 = por %p350, %p351
      %p353 = scmp.ne.s32.totalorder %s339, %s340
      %p354 = scmp.eq.s32.totalorder %s92, 1
      %p355 = por %p353, %p354
      %p357 = scmp.ne.s32.totalorder %s340, %s356
      %p358 = scmp.eq.s32.totalorder %s92, 0
      %p359 = por %p357, %p358
      %s360 = ssub.s32 %s86, %s93
      %p361 = scmp.eq.s32.totalorder %s360, 0
      %s363 = sadd.s32 %s362, 1
      %s364 = scalar_select %p361, %s362, %s363
      %p367 = pneg %p361
      %p368 = scmp.eq.s32.totalorder %s86, 1
      %p369 = por %p367, %p368
      %p370 = scmp.ne.s32.totalorder %s362, %s365
      %p371 = scmp.eq.s32.totalorder %s86, 0
      %p372 = por %p370, %p371
      %p373 = scmp.ne.s32.totalorder %s362, %s365
      %p374 = scmp.eq.s32.totalorder %s91, 1
      %p375 = por %p373, %p374
      %p376 = scmp.ne.s32.totalorder %s365, %s366
      %p377 = scmp.eq.s32.totalorder %s91, 0
      %p378 = por %p376, %p377
      %p379 = scmp.ne.s32.totalorder %s365, %s366
      %p380 = scmp.eq.s32.totalorder %s92, 1
      %p381 = por %p379, %p380
      %p383 = scmp.ne.s32.totalorder %s366, %s382
      %p384 = scmp.eq.s32.totalorder %s92, 0
      %p385 = por %p383, %p384
      %s386 = ssub.s32 %s86, %s93
      %p387 = scmp.eq.s32.totalorder %s386, 0
      %s389 = sadd.s32 %s388, 1
      %s390 = scalar_select %p387, %s388, %s389
      %p393 = pneg %p387
      %p394 = scmp.eq.s32.totalorder %s86, 1
      %p395 = por %p393, %p394
      %p396 = scmp.ne.s32.totalorder %s388, %s391
      %p397 = scmp.eq.s32.totalorder %s86, 0
      %p398 = por %p396, %p397
      %p399 = scmp.ne.s32.totalorder %s388, %s391
      %p400 = scmp.eq.s32.totalorder %s91, 1
      %p401 = por %p399, %p400
      %p402 = scmp.ne.s32.totalorder %s391, %s392
      %p403 = scmp.eq.s32.totalorder %s91, 0
      %p404 = por %p402, %p403
      %p405 = scmp.ne.s32.totalorder %s391, %s392
      %p406 = scmp.eq.s32.totalorder %s92, 1
      %p407 = por %p405, %p406
      %p409 = scmp.ne.s32.totalorder %s392, %s408
      %p410 = scmp.eq.s32.totalorder %s92, 0
      %p411 = por %p409, %p410
      %s412 = ssub.s32 %s86, %s93
      %p413 = scmp.eq.s32.totalorder %s412, 0
      %s415 = sadd.s32 %s414, 1
      %s416 = scalar_select %p413, %s414, %s415
      %p419 = pneg %p413
      %p420 = scmp.eq.s32.totalorder %s86, 1
      %p421 = por %p419, %p420
      %p422 = scmp.ne.s32.totalorder %s414, %s417
      %p423 = scmp.eq.s32.totalorder %s86, 0
      %p424 = por %p422, %p423
      %p425 = scmp.ne.s32.totalorder %s414, %s417
      %p426 = scmp.eq.s32.totalorder %s91, 1
      %p427 = por %p425, %p426
      %p428 = scmp.ne.s32.totalorder %s417, %s418
      %p429 = scmp.eq.s32.totalorder %s91, 0
      %p430 = por %p428, %p429
      %p431 = scmp.ne.s32.totalorder %s417, %s418
      %p432 = scmp.eq.s32.totalorder %s92, 1
      %p433 = por %p431, %p432
      %p435 = scmp.ne.s32.totalorder %s418, %s434
      %p436 = scmp.eq.s32.totalorder %s92, 0
      %p437 = por %p435, %p436
      %s438 = ssub.s32 %s86, %s93
      %p439 = scmp.eq.s32.totalorder %s438, 0
      %s441 = sadd.s32 %s440, 1
      %s442 = scalar_select %p439, %s440, %s441
      %p445 = pneg %p439
      %p446 = scmp.eq.s32.totalorder %s86, 1
      %p447 = por %p445, %p446
      %p448 = scmp.ne.s32.totalorder %s440, %s443
      %p449 = scmp.eq.s32.totalorder %s86, 0
      %p450 = por %p448, %p449
      %p451 = scmp.ne.s32.totalorder %s440, %s443
      %p452 = scmp.eq.s32.totalorder %s91, 1
      %p453 = por %p451, %p452
      %p454 = scmp.ne.s32.totalorder %s443, %s444
      %p455 = scmp.eq.s32.totalorder %s91, 0
      %p456 = por %p454, %p455
      %p457 = scmp.ne.s32.totalorder %s443, %s444
      %p458 = scmp.eq.s32.totalorder %s92, 1
      %p459 = por %p457, %p458
      %p461 = scmp.ne.s32.totalorder %s444, %s460
      %p462 = scmp.eq.s32.totalorder %s92, 0
      %p463 = por %p461, %p462
      %s464 = ssub.s32 %s86, %s93
      %p465 = scmp.eq.s32.totalorder %s464, 0
      %s467 = sadd.s32 %s466, 1
      %s468 = scalar_select %p465, %s466, %s467
      %p471 = pneg %p465
      %p472 = scmp.eq.s32.totalorder %s86, 1
      %p473 = por %p471, %p472
      %p474 = scmp.ne.s32.totalorder %s466, %s469
      %p475 = scmp.eq.s32.totalorder %s86, 0
      %p476 = por %p474, %p475
      %p477 = scmp.ne.s32.totalorder %s466, %s469
      %p478 = scmp.eq.s32.totalorder %s91, 1
      %p479 = por %p477, %p478
      %p480 = scmp.ne.s32.totalorder %s469, %s470
      %p481 = scmp.eq.s32.totalorder %s91, 0
      %p482 = por %p480, %p481
      %p483 = scmp.ne.s32.totalorder %s469, %s470
      %p484 = scmp.eq.s32.totalorder %s92, 1
      %p485 = por %p483, %p484
      %p487 = scmp.ne.s32.totalorder %s470, %s486
      %p488 = scmp.eq.s32.totalorder %s92, 0
      %p489 = por %p487, %p488
      %s490 = ssub.s32 %s86, %s93
      %p491 = scmp.eq.s32.totalorder %s490, 0
      %s493 = sadd.s32 %s492, 1
      %s494 = scalar_select %p491, %s492, %s493
      %p497 = pneg %p491
      %p498 = scmp.eq.s32.totalorder %s86, 1
      %p499 = por %p497, %p498
      %p500 = scmp.ne.s32.totalorder %s492, %s495
      %p501 = scmp.eq.s32.totalorder %s86, 0
      %p502 = por %p500, %p501
      %p503 = scmp.ne.s32.totalorder %s492, %s495
      %p504 = scmp.eq.s32.totalorder %s91, 1
      %p505 = por %p503, %p504
      %p506 = scmp.ne.s32.totalorder %s495, %s496
      %p507 = scmp.eq.s32.totalorder %s91, 0
      %p508 = por %p506, %p507
      %p509 = scmp.ne.s32.totalorder %s495, %s496
      %p510 = scmp.eq.s32.totalorder %s92, 1
      %p511 = por %p509, %p510
      %p513 = scmp.ne.s32.totalorder %s496, %s512
      %p514 = scmp.eq.s32.totalorder %s92, 0
      %p515 = por %p513, %p514
      %s516 = ssub.s32 %s86, %s93
      %p517 = scmp.eq.s32.totalorder %s516, 0
      %s519 = sadd.s32 %s518, 1
      %s520 = scalar_select %p517, %s518, %s519
      %p523 = pneg %p517
      %p524 = scmp.eq.s32.totalorder %s86, 1
      %p525 = por %p523, %p524
      %p526 = scmp.ne.s32.totalorder %s518, %s521
      %p527 = scmp.eq.s32.totalorder %s86, 0
      %p528 = por %p526, %p527
      %p529 = scmp.ne.s32.totalorder %s518, %s521
      %p530 = scmp.eq.s32.totalorder %s91, 1
      %p531 = por %p529, %p530
      %p532 = scmp.ne.s32.totalorder %s521, %s522
      %p533 = scmp.eq.s32.totalorder %s91, 0
      %p534 = por %p532, %p533
      %p535 = scmp.ne.s32.totalorder %s521, %s522
      %p536 = scmp.eq.s32.totalorder %s92, 1
      %p537 = por %p535, %p536
      %p539 = scmp.ne.s32.totalorder %s522, %s538
      %p540 = scmp.eq.s32.totalorder %s92, 0
      %p541 = por %p539, %p540
      %s542 = ssub.s32 %s86, %s93
      %p543 = scmp.eq.s32.totalorder %s542, 0
      %s545 = sadd.s32 %s544, 1
      %s546 = scalar_select %p543, %s544, %s545
      %p549 = pneg %p543
      %p550 = scmp.eq.s32.totalorder %s86, 1
      %p551 = por %p549, %p550
      %p552 = scmp.ne.s32.totalorder %s544, %s547
      %p553 = scmp.eq.s32.totalorder %s86, 0
      %p554 = por %p552, %p553
      %p555 = scmp.ne.s32.totalorder %s544, %s547
      %p556 = scmp.eq.s32.totalorder %s91, 1
      %p557 = por %p555, %p556
      %p558 = scmp.ne.s32.totalorder %s547, %s548
      %p559 = scmp.eq.s32.totalorder %s91, 0
      %p560 = por %p558, %p559
      %p561 = scmp.ne.s32.totalorder %s547, %s548
      %p562 = scmp.eq.s32.totalorder %s92, 1
      %p563 = por %p561, %p562
      %p565 = scmp.ne.s32.totalorder %s548, %s564
      %p566 = scmp.eq.s32.totalorder %s92, 0
      %p567 = por %p565, %p566
      %s568 = ssub.s32 %s86, %s93
      %p569 = scmp.eq.s32.totalorder %s568, 0
      %s571 = sadd.s32 %s570, 1
      %s572 = scalar_select %p569, %s570, %s571
      %p575 = pneg %p569
      %p576 = scmp.eq.s32.totalorder %s86, 1
      %p577 = por %p575, %p576
      %p578 = scmp.ne.s32.totalorder %s570, %s573
      %p579 = scmp.eq.s32.totalorder %s86, 0
      %p580 = por %p578, %p579
      %p581 = scmp.ne.s32.totalorder %s570, %s573
      %p582 = scmp.eq.s32.totalorder %s91, 1
      %p583 = por %p581, %p582
      %p584 = scmp.ne.s32.totalorder %s573, %s574
      %p585 = scmp.eq.s32.totalorder %s91, 0
      %p586 = por %p584, %p585
      %p587 = scmp.ne.s32.totalorder %s573, %s574
      %p588 = scmp.eq.s32.totalorder %s92, 1
      %p589 = por %p587, %p588
      %p591 = scmp.ne.s32.totalorder %s574, %s590
      %p592 = scmp.eq.s32.totalorder %s92, 0
      %p593 = por %p591, %p592
      %s594 = ssub.s32 %s86, %s93
      %p595 = scmp.eq.s32.totalorder %s594, 0
      %s597 = sadd.s32 %s596, 1
      %s598 = scalar_select %p595, %s596, %s597
      %p601 = pneg %p595
      %p602 = scmp.eq.s32.totalorder %s86, 1
      %p603 = por %p601, %p602
      %p604 = scmp.ne.s32.totalorder %s596, %s599
      %p605 = scmp.eq.s32.totalorder %s86, 0
      %p606 = por %p604, %p605
      %p607 = scmp.ne.s32.totalorder %s596, %s599
      %p608 = scmp.eq.s32.totalorder %s91, 1
      %p609 = por %p607, %p608
      %p610 = scmp.ne.s32.totalorder %s599, %s600
      %p611 = scmp.eq.s32.totalorder %s91, 0
      %p612 = por %p610, %p611
      %p613 = scmp.ne.s32.totalorder %s599, %s600
      %p614 = scmp.eq.s32.totalorder %s92, 1
      %p615 = por %p613, %p614
      %p617 = scmp.ne.s32.totalorder %s600, %s616
      %p618 = scmp.eq.s32.totalorder %s92, 0
      %p619 = por %p617, %p618
      %s620 = ssub.s32 %s86, %s93
      %p621 = scmp.eq.s32.totalorder %s620, 0
      %s623 = sadd.s32 %s622, 1
      %s624 = scalar_select %p621, %s622, %s623
      %p627 = pneg %p621
      %p628 = scmp.eq.s32.totalorder %s86, 1
      %p629 = por %p627, %p628
      %p630 = scmp.ne.s32.totalorder %s622, %s625
      %p631 = scmp.eq.s32.totalorder %s86, 0
      %p632 = por %p630, %p631
      %p633 = scmp.ne.s32.totalorder %s622, %s625
      %p634 = scmp.eq.s32.totalorder %s91, 1
      %p635 = por %p633, %p634
      %p636 = scmp.ne.s32.totalorder %s625, %s626
      %p637 = scmp.eq.s32.totalorder %s91, 0
      %p638 = por %p636, %p637
      %p639 = scmp.ne.s32.totalorder %s625, %s626
      %p640 = scmp.eq.s32.totalorder %s92, 1
      %p641 = por %p639, %p640
      %p643 = scmp.ne.s32.totalorder %s626, %s642
      %p644 = scmp.eq.s32.totalorder %s92, 0
      %p645 = por %p643, %p644
      %s646 = ssub.s32 %s86, %s93
      %p647 = scmp.eq.s32.totalorder %s646, 0
      %s649 = sadd.s32 %s648, 1
      %s650 = scalar_select %p647, %s648, %s649
      %p653 = pneg %p647
      %p654 = scmp.eq.s32.totalorder %s86, 1
      %p655 = por %p653, %p654
      %p656 = scmp.ne.s32.totalorder %s648, %s651
      %p657 = scmp.eq.s32.totalorder %s86, 0
      %p658 = por %p656, %p657
      %p659 = scmp.ne.s32.totalorder %s648, %s651
      %p660 = scmp.eq.s32.totalorder %s91, 1
      %p661 = por %p659, %p660
      %p662 = scmp.ne.s32.totalorder %s651, %s652
      %p663 = scmp.eq.s32.totalorder %s91, 0
      %p664 = por %p662, %p663
      %p665 = scmp.ne.s32.totalorder %s651, %s652
      %p666 = scmp.eq.s32.totalorder %s92, 1
      %p667 = por %p665, %p666
      %p669 = scmp.ne.s32.totalorder %s652, %s668
      %p670 = scmp.eq.s32.totalorder %s92, 0
      %p671 = por %p669, %p670
      %s672 = ssub.s32 %s86, %s93
      %p673 = scmp.eq.s32.totalorder %s672, 0
      %s675 = sadd.s32 %s674, 1
      %s676 = scalar_select %p673, %s674, %s675
      %p679 = pneg %p673
      %p680 = scmp.eq.s32.totalorder %s86, 1
      %p681 = por %p679, %p680
      %p682 = scmp.ne.s32.totalorder %s674, %s677
      %p683 = scmp.eq.s32.totalorder %s86, 0
      %p684 = por %p682, %p683
      %p685 = scmp.ne.s32.totalorder %s674, %s677
      %p686 = scmp.eq.s32.totalorder %s91, 1
      %p687 = por %p685, %p686
      %p688 = scmp.ne.s32.totalorder %s677, %s678
      %p689 = scmp.eq.s32.totalorder %s91, 0
      %p690 = por %p688, %p689
      %p691 = scmp.ne.s32.totalorder %s677, %s678
      %p692 = scmp.eq.s32.totalorder %s92, 1
      %p693 = por %p691, %p692
      %p695 = scmp.ne.s32.totalorder %s678, %s694
      %p696 = scmp.eq.s32.totalorder %s92, 0
      %p697 = por %p695, %p696
      %s698 = ssub.s32 %s86, %s93
      %p699 = scmp.eq.s32.totalorder %s698, 0
      %s701 = sadd.s32 %s700, 1
      %s702 = scalar_select %p699, %s700, %s701
      %p705 = pneg %p699
      %p706 = scmp.eq.s32.totalorder %s86, 1
      %p707 = por %p705, %p706
      %p708 = scmp.ne.s32.totalorder %s700, %s703
      %p709 = scmp.eq.s32.totalorder %s86, 0
      %p710 = por %p708, %p709
      %p711 = scmp.ne.s32.totalorder %s700, %s703
      %p712 = scmp.eq.s32.totalorder %s91, 1
      %p713 = por %p711, %p712
      %p714 = scmp.ne.s32.totalorder %s703, %s704
      %p715 = scmp.eq.s32.totalorder %s91, 0
      %p716 = por %p714, %p715
      %p717 = scmp.ne.s32.totalorder %s703, %s704
      %p718 = scmp.eq.s32.totalorder %s92, 1
      %p719 = por %p717, %p718
      %p721 = scmp.ne.s32.totalorder %s704, %s720
      %p722 = scmp.eq.s32.totalorder %s92, 0
      %p723 = por %p721, %p722
      %s724 = ssub.s32 %s86, %s93
      %p725 = scmp.eq.s32.totalorder %s724, 0
      %s727 = sadd.s32 %s726, 1
      %s728 = scalar_select %p725, %s726, %s727
      %p731 = pneg %p725
      %p732 = scmp.eq.s32.totalorder %s86, 1
      %p733 = por %p731, %p732
      %p734 = scmp.ne.s32.totalorder %s726, %s729
      %p735 = scmp.eq.s32.totalorder %s86, 0
      %p736 = por %p734, %p735
      %p737 = scmp.ne.s32.totalorder %s726, %s729
      %p738 = scmp.eq.s32.totalorder %s91, 1
      %p739 = por %p737, %p738
      %p740 = scmp.ne.s32.totalorder %s729, %s730
      %p741 = scmp.eq.s32.totalorder %s91, 0
      %p742 = por %p740, %p741
      %p743 = scmp.ne.s32.totalorder %s729, %s730
      %p744 = scmp.eq.s32.totalorder %s92, 1
      %p745 = por %p743, %p744
      %p747 = scmp.ne.s32.totalorder %s730, %s746
      %p748 = scmp.eq.s32.totalorder %s92, 0
      %p749 = por %p747, %p748
      %s750 = ssub.s32 %s86, %s93
      %p751 = scmp.eq.s32.totalorder %s750, 0
      %s753 = sadd.s32 %s752, 1
      %s754 = scalar_select %p751, %s752, %s753
      %p757 = pneg %p751
      %p758 = scmp.eq.s32.totalorder %s86, 1
      %p759 = por %p757, %p758
      %p760 = scmp.ne.s32.totalorder %s752, %s755
      %p761 = scmp.eq.s32.totalorder %s86, 0
      %p762 = por %p760, %p761
      %p763 = scmp.ne.s32.totalorder %s752, %s755
      %p764 = scmp.eq.s32.totalorder %s91, 1
      %p765 = por %p763, %p764
      %p766 = scmp.ne.s32.totalorder %s755, %s756
      %p767 = scmp.eq.s32.totalorder %s91, 0
      %p768 = por %p766, %p767
      %p769 = scmp.ne.s32.totalorder %s755, %s756
      %p770 = scmp.eq.s32.totalorder %s92, 1
      %p771 = por %p769, %p770
      %p773 = scmp.ne.s32.totalorder %s756, %s772
      %p774 = scmp.eq.s32.totalorder %s92, 0
      %p775 = por %p773, %p774
      %s776 = ssub.s32 %s86, %s93
      %p777 = scmp.eq.s32.totalorder %s776, 0
      %s779 = sadd.s32 %s778, 1
      %s780 = scalar_select %p777, %s778, %s779
      %p783 = pneg %p777
      %p784 = scmp.eq.s32.totalorder %s86, 1
      %p785 = por %p783, %p784
      %p786 = scmp.ne.s32.totalorder %s778, %s781
      %p787 = scmp.eq.s32.totalorder %s86, 0
      %p788 = por %p786, %p787
      %p789 = scmp.ne.s32.totalorder %s778, %s781
      %p790 = scmp.eq.s32.totalorder %s91, 1
      %p791 = por %p789, %p790
      %p792 = scmp.ne.s32.totalorder %s781, %s782
      %p793 = scmp.eq.s32.totalorder %s91, 0
      %p794 = por %p792, %p793
      %p795 = scmp.ne.s32.totalorder %s781, %s782
      %p796 = scmp.eq.s32.totalorder %s92, 1
      %p797 = por %p795, %p796
      %p799 = scmp.ne.s32.totalorder %s782, %s798
      %p800 = scmp.eq.s32.totalorder %s92, 0
      %p801 = por %p799, %p800
      %s802 = ssub.s32 %s86, %s93
      %p803 = scmp.eq.s32.totalorder %s802, 0
      %s805 = sadd.s32 %s804, 1
      %s806 = scalar_select %p803, %s804, %s805
      %p809 = pneg %p803
      %p810 = scmp.eq.s32.totalorder %s86, 1
      %p811 = por %p809, %p810
      %p812 = scmp.ne.s32.totalorder %s804, %s807
      %p813 = scmp.eq.s32.totalorder %s86, 0
      %p814 = por %p812, %p813
      %p815 = scmp.ne.s32.totalorder %s804, %s807
      %p816 = scmp.eq.s32.totalorder %s91, 1
      %p817 = por %p815, %p816
      %p818 = scmp.ne.s32.totalorder %s807, %s808
      %p819 = scmp.eq.s32.totalorder %s91, 0
      %p820 = por %p818, %p819
      %p821 = scmp.ne.s32.totalorder %s807, %s808
      %p822 = scmp.eq.s32.totalorder %s92, 1
      %p823 = por %p821, %p822
      %p825 = scmp.ne.s32.totalorder %s808, %s824
      %p826 = scmp.eq.s32.totalorder %s92, 0
      %p827 = por %p825, %p826
      %s828 = ssub.s32 %s86, %s93
      %p829 = scmp.eq.s32.totalorder %s828, 0
      %s831 = sadd.s32 %s830, 1
      %s832 = scalar_select %p829, %s830, %s831
      %p835 = pneg %p829
      %p836 = scmp.eq.s32.totalorder %s86, 1
      %p837 = por %p835, %p836
      %p838 = scmp.ne.s32.totalorder %s830, %s833
      %p839 = scmp.eq.s32.totalorder %s86, 0
      %p840 = por %p838, %p839
      %p841 = scmp.ne.s32.totalorder %s830, %s833
      %p842 = scmp.eq.s32.totalorder %s91, 1
      %p843 = por %p841, %p842
      %p844 = scmp.ne.s32.totalorder %s833, %s834
      %p845 = scmp.eq.s32.totalorder %s91, 0
      %p846 = por %p844, %p845
      %p847 = scmp.ne.s32.totalorder %s833, %s834
      %p848 = scmp.eq.s32.totalorder %s92, 1
      %p849 = por %p847, %p848
      %p851 = scmp.ne.s32.totalorder %s834, %s850
      %p852 = scmp.eq.s32.totalorder %s92, 0
      %p853 = por %p851, %p852
      %s854 = ssub.s32 %s86, %s93
      %p855 = scmp.eq.s32.totalorder %s854, 0
      %s857 = sadd.s32 %s856, 1
      %s858 = scalar_select %p855, %s856, %s857
      %p861 = pneg %p855
      %p862 = scmp.eq.s32.totalorder %s86, 1
      %p863 = por %p861, %p862
      %p864 = scmp.ne.s32.totalorder %s856, %s859
      %p865 = scmp.eq.s32.totalorder %s86, 0
      %p866 = por %p864, %p865
      %p867 = scmp.ne.s32.totalorder %s856, %s859
      %p868 = scmp.eq.s32.totalorder %s91, 1
      %p869 = por %p867, %p868
      %p870 = scmp.ne.s32.totalorder %s859, %s860
      %p871 = scmp.eq.s32.totalorder %s91, 0
      %p872 = por %p870, %p871
      %p873 = scmp.ne.s32.totalorder %s859, %s860
      %p874 = scmp.eq.s32.totalorder %s92, 1
      %p875 = por %p873, %p874
      %p877 = scmp.ne.s32.totalorder %s860, %s876
      %p878 = scmp.eq.s32.totalorder %s92, 0
      %p879 = por %p877, %p878
      %s880 = ssub.s32 %s86, %s93
      %p881 = scmp.eq.s32.totalorder %s880, 0
      %s883 = sadd.s32 %s882, 1
      %s884 = scalar_select %p881, %s882, %s883
      %p887 = pneg %p881
      %p888 = scmp.eq.s32.totalorder %s86, 1
      %p889 = por %p887, %p888
      %p890 = scmp.ne.s32.totalorder %s882, %s885
      %p891 = scmp.eq.s32.totalorder %s86, 0
      %p892 = por %p890, %p891
      %p893 = scmp.ne.s32.totalorder %s882, %s885
      %p894 = scmp.eq.s32.totalorder %s91, 1
      %p895 = por %p893, %p894
      %p896 = scmp.ne.s32.totalorder %s885, %s886
      %p897 = scmp.eq.s32.totalorder %s91, 0
      %p898 = por %p896, %p897
      %p899 = scmp.ne.s32.totalorder %s885, %s886
      %p900 = scmp.eq.s32.totalorder %s92, 1
      %p901 = por %p899, %p900
      %p903 = scmp.ne.s32.totalorder %s886, %s902
      %p904 = scmp.eq.s32.totalorder %s92, 0
      %p905 = por %p903, %p904
      %s906 = ssub.s32 %s86, %s93
      %p907 = scmp.eq.s32.totalorder %s906, 0
      %s909 = sadd.s32 %s908, 1
      %s910 = scalar_select %p907, %s908, %s909
      %p913 = pneg %p907
      %p914 = scmp.eq.s32.totalorder %s86, 1
      %p915 = por %p913, %p914
      %p916 = scmp.ne.s32.totalorder %s908, %s911
      %p917 = scmp.eq.s32.totalorder %s86, 0
      %p918 = por %p916, %p917
      %p919 = scmp.ne.s32.totalorder %s908, %s911
      %p920 = scmp.eq.s32.totalorder %s91, 1
      %p921 = por %p919, %p920
      %p922 = scmp.ne.s32.totalorder %s911, %s912
      %p923 = scmp.eq.s32.totalorder %s91, 0
      %p924 = por %p922, %p923
      %p925 = scmp.ne.s32.totalorder %s911, %s912
      %p926 = scmp.eq.s32.totalorder %s92, 1
      %p927 = por %p925, %p926
      %p929 = scmp.ne.s32.totalorder %s912, %s928
      %p930 = scmp.eq.s32.totalorder %s92, 0
      %p931 = por %p929, %p930
      %s932 = ssub.s32 %s86, %s93
      %p933 = scmp.eq.s32.totalorder %s932, 0
      %s935 = sadd.s32 %s934, 1
      %s936 = scalar_select %p933, %s934, %s935
      %p939 = pneg %p933
      %p940 = scmp.eq.s32.totalorder %s86, 1
      %p941 = por %p939, %p940
      %p942 = scmp.ne.s32.totalorder %s934, %s937
      %p943 = scmp.eq.s32.totalorder %s86, 0
      %p944 = por %p942, %p943
      %p945 = scmp.ne.s32.totalorder %s934, %s937
      %p946 = scmp.eq.s32.totalorder %s91, 1
      %p947 = por %p945, %p946
      %p948 = scmp.ne.s32.totalorder %s937, %s938
      %p949 = scmp.eq.s32.totalorder %s91, 0
      %p950 = por %p948, %p949
      %p951 = scmp.ne.s32.totalorder %s937, %s938
      %p952 = scmp.eq.s32.totalorder %s92, 1
      %p953 = por %p951, %p952
      %p955 = scmp.ne.s32.totalorder %s938, %s954
      %p956 = scmp.eq.s32.totalorder %s92, 0
      %p957 = por %p955, %p956
      %s958 = ssub.s32 %s86, %s93
      %p959 = scmp.eq.s32.totalorder %s958, 0
      %s961 = sadd.s32 %s960, 1
      %s962 = scalar_select %p959, %s960, %s961
      %p965 = pneg %p959
      %p966 = scmp.eq.s32.totalorder %s86, 1
      %p967 = por %p965, %p966
      %p968 = scmp.ne.s32.totalorder %s960, %s963
      %p969 = scmp.eq.s32.totalorder %s86, 0
      %p970 = por %p968, %p969
      %p971 = scmp.ne.s32.totalorder %s960, %s963
      %p972 = scmp.eq.s32.totalorder %s91, 1
      %p973 = por %p971, %p972
      %p974 = scmp.ne.s32.totalorder %s963, %s964
      %p975 = scmp.eq.s32.totalorder %s91, 0
      %p976 = por %p974, %p975
      %p977 = scmp.ne.s32.totalorder %s963, %s964
      %p978 = scmp.eq.s32.totalorder %s92, 1
      %p979 = por %p977, %p978
      %p981 = scmp.ne.s32.totalorder %s964, %s980
      %p982 = scmp.eq.s32.totalorder %s92, 0
      %p983 = por %p981, %p982
      %s984 = ssub.s32 %s86, %s93
      %p985 = scmp.eq.s32.totalorder %s984, 0
      %s987 = sadd.s32 %s986, 1
      %s988 = scalar_select %p985, %s986, %s987
      %p991 = pneg %p985
      %p992 = scmp.eq.s32.totalorder %s86, 1
      %p993 = por %p991, %p992
      %p994 = scmp.ne.s32.totalorder %s986, %s989
      %p995 = scmp.eq.s32.totalorder %s86, 0
      %p996 = por %p994, %p995
      %p997 = scmp.ne.s32.totalorder %s986, %s989
      %p998 = scmp.eq.s32.totalorder %s91, 1
      %p999 = por %p997, %p998
      %p1000 = scmp.ne.s32.totalorder %s989, %s990
      %p1001 = scmp.eq.s32.totalorder %s91, 0
      %p1002 = por %p1000, %p1001
      %p1003 = scmp.ne.s32.totalorder %s989, %s990
      %p1004 = scmp.eq.s32.totalorder %s92, 1
      %p1005 = por %p1003, %p1004
      %p1007 = scmp.ne.s32.totalorder %s990, %s1006
      %p1008 = scmp.eq.s32.totalorder %s92, 0
      %p1009 = por %p1007, %p1008
      %s1011 = sadd.s32 %s1010, 1
      %p1014 = scmp.eq.s32.totalorder %s86, 1
      %p1015 = scmp.ne.s32.totalorder %s1010, %s1012
      %p1016 = scmp.eq.s32.totalorder %s86, 0
      %p1017 = por %p1015, %p1016
      %p1018 = scmp.ne.s32.totalorder %s1010, %s1012
      %p1019 = scmp.eq.s32.totalorder %s91, 1
      %p1020 = por %p1018, %p1019
      %p1021 = scmp.ne.s32.totalorder %s1012, %s1013
      %p1022 = scmp.eq.s32.totalorder %s91, 0
      %p1023 = por %p1021, %p1022
      %p1024 = scmp.ne.s32.totalorder %s1012, %s1013
      %p1025 = scmp.eq.s32.totalorder %s92, 1
      %p1026 = por %p1024, %p1025
      %p1028 = scmp.ne.s32.totalorder %s1013, %s1027
      %p1029 = scmp.eq.s32.totalorder %s92, 0
      %p1030 = por %p1028, %p1029
      %s1032 = sadd.s32 %s1031, 1
      %p1035 = scmp.eq.s32.totalorder %s86, 1
      %p1036 = scmp.ne.s32.totalorder %s1031, %s1033
      %p1037 = scmp.eq.s32.totalorder %s86, 0
      %p1038 = por %p1036, %p1037
      %p1039 = scmp.ne.s32.totalorder %s1031, %s1033
      %p1040 = scmp.eq.s32.totalorder %s91, 1
      %p1041 = por %p1039, %p1040
      %p1042 = scmp.ne.s32.totalorder %s1033, %s1034
      %p1043 = scmp.eq.s32.totalorder %s91, 0
      %p1044 = por %p1042, %p1043
      %p1045 = scmp.ne.s32.totalorder %s1033, %s1034
      %p1046 = scmp.eq.s32.totalorder %s92, 1
      %p1047 = por %p1045, %p1046
      %p1049 = scmp.ne.s32.totalorder %s1034, %s1048
      %p1050 = scmp.eq.s32.totalorder %s92, 0
      %p1051 = por %p1049, %p1050
      %s1053 = sadd.s32 %s1052, 1
      %p1056 = scmp.eq.s32.totalorder %s86, 1
      %p1057 = scmp.ne.s32.totalorder %s1052, %s1054
      %p1058 = scmp.eq.s32.totalorder %s86, 0
      %p1059 = por %p1057, %p1058
      %p1060 = scmp.ne.s32.totalorder %s1052, %s1054
      %p1061 = scmp.eq.s32.totalorder %s91, 1
      %p1062 = por %p1060, %p1061
      %p1063 = scmp.ne.s32.totalorder %s1054, %s1055
      %p1064 = scmp.eq.s32.totalorder %s91, 0
      %p1065 = por %p1063, %p1064
      %p1066 = scmp.ne.s32.totalorder %s1054, %s1055
      %p1067 = scmp.eq.s32.totalorder %s92, 1
      %p1068 = por %p1066, %p1067
      %p1070 = scmp.ne.s32.totalorder %s1055, %s1069
      %p1071 = scmp.eq.s32.totalorder %s92, 0
      %p1072 = por %p1070, %p1071
      %p1073 = scmp.le.s32.totalorder 1, %s86
      %p1074 = scmp.lt.s32.totalorder %s86, 3
      %p1075 = pnand %p1073, %p1074
      %p1076 = pneg %p1075
      // Predicated region
      $region9: #{conformer_apply.1} parent=5 // pred_check
        _
      $region10: #{conformer_apply.1} parent=5 // pred_check_branch
        %1078 = sbr.rel (%p1075) target = $region12
      $region11: #{conformer_apply.1} parent=5 // pred_region
        %s1079 = ssub.s32 %s86, 1
        // Predicated region
        $region13: #{conformer_apply.1} parent=11 // pred_check
          %p1080 = pneg %p107
        $region14: #{conformer_apply.1} parent=11 // pred_check_branch
          %1082 = sbr.rel (%p1080) target = $region16
        $region15: #{conformer_apply.1} parent=11 // pred_region
          %s1084 = ssub.s32 512, 512
          %1085 = vsyncadd [#allocation4], %s1084
          %s1086 = sshll.u32 [#allocation3], 4
          %s1087 = int_to_ptr.vmem [resolvable:$true] %s1086
          %1092 = dma.hbm_to_vmem [thread:$0]  %s1, 512, %s1087, [#allocation4], 128, 128, 8
        $region16: #{conformer_apply.1} parent=11 // pred_fallthru
          _
        // Predicated region
        $region17: #{conformer_apply.1} parent=11 // pred_check
          %p1093 = pneg %p128
        $region18: #{conformer_apply.1} parent=11 // pred_check_branch
          %1095 = sbr.rel (%p1093) target = $region20
        $region19: #{conformer_apply.1} parent=11 // pred_region
          %s1097 = ssub.s32 3584, 3584
          %1098 = vsyncadd [#allocation6], %s1097
          %s1099 = sshll.u32 [#allocation5], 4
          %s1100 = int_to_ptr.vmem [resolvable:$true] %s1099
          %1105 = dma.hbm_to_vmem [thread:$0]  %s3, 3584, %s1100, [#allocation6], 128, 128, 8
        $region20: #{conformer_apply.1} parent=11 // pred_fallthru
          _
        // Predicated region
        $region21: #{conformer_apply.1} parent=11 // pred_check
          %p1106 = pneg %p149
        $region22: #{conformer_apply.1} parent=11 // pred_check_branch
          %1108 = sbr.rel (%p1106) target = $region24
        $region23: #{conformer_apply.1} parent=11 // pred_region
          %s1110 = ssub.s32 640, 640
          %1111 = vsyncadd [#allocation6], %s1110
          %s1112 = sshll.u32 [#allocation7], 4
          %s1113 = int_to_ptr.vmem [resolvable:$true] %s1112
          %1118 = dma.hbm_to_vmem [thread:$0]  %s5, 640, %s1113, [#allocation6], 64, 64, 4
        $region24: #{conformer_apply.1} parent=11 // pred_fallthru
          _
        // Predicated region
        $region25: #{conformer_apply.1} parent=11 // pred_check
          %p1119 = pneg %p170
        $region26: #{conformer_apply.1} parent=11 // pred_check_branch
          %1121 = sbr.rel (%p1119) target = $region28
        $region27: #{conformer_apply.1} parent=11 // pred_region
          %s1123 = ssub.s32 16, 16
          %1124 = vsyncadd [#allocation9], %s1123
          %s1126 = sshll.u32 [#allocation8], 4
          %s1127 = int_to_ptr.vmem [resolvable:$true] %s1126
          %1129 = dma.hbm_to_vmem [thread:$0]  %s7, 16, %s1127, [#allocation9]
        $region28: #{conformer_apply.1} parent=11 // pred_fallthru
          _
        // Predicated region
        $region29: #{conformer_apply.1} parent=11 // pred_check
          %p1130 = pneg %p1023
        $region30: #{conformer_apply.1} parent=11 // pred_check_branch
          %1132 = sbr.rel (%p1130) target = $region32
        $region31: #{conformer_apply.1} parent=11 // pred_region
          _
        $region32: #{conformer_apply.1} parent=11 // pred_fallthru
          _
        // Predicated region
        $region33: #{conformer_apply.1} parent=11 // pred_check
          %p1133 = pneg %p1044
        $region34: #{conformer_apply.1} parent=11 // pred_check_branch
          %1135 = sbr.rel (%p1133) target = $region36
        $region35: #{conformer_apply.1} parent=11 // pred_region
          _
        $region36: #{conformer_apply.1} parent=11 // pred_fallthru
          _
      $region12: #{conformer_apply.1} parent=5 // pred_fallthru
        _
      %p1136 = scmp.lt.s32.totalorder %s86, 2
      // Predicated region
      $region37: #{conformer_apply.1} parent=5 // pred_check
        %p1137 = pneg %p1136
      $region38: #{conformer_apply.1} parent=5 // pred_check_branch
        %1139 = sbr.rel (%p1137) target = $region40
      $region39: #{conformer_apply.1} parent=5 // pred_region
        // Predicated region
        $region41: #{conformer_apply.1} parent=39 // pred_check
          %p1140 = pneg %p190
        $region42: #{conformer_apply.1} parent=39 // pred_check_branch
          %1142 = sbr.rel (%p1140) target = $region44
        $region43: #{conformer_apply.1} parent=39 // pred_region
          %p1143 = scmp.lt.s32.totalorder %s86, 1
          %s1144 = scalar_select %p1143, %s86, 1
          %s1145 = scalar_lea.vmem %s9, %s1144
        $region44: #{conformer_apply.1} parent=39 // pred_fallthru
          _
        // Predicated region
        $region45: #{conformer_apply.1} parent=39 // pred_check
          %p1146 = pneg %p216
        $region46: #{conformer_apply.1} parent=39 // pred_check_branch
          %1148 = sbr.rel (%p1146) target = $region48
        $region47: #{conformer_apply.1} parent=39 // pred_region
          %p1149 = scmp.lt.s32.totalorder %s86, 1
          %s1150 = scalar_select %p1149, %s86, 1
          %s1151 = scalar_lea.vmem %s11, %s1150
        $region48: #{conformer_apply.1} parent=39 // pred_fallthru
          _
        // Predicated region
        $region49: #{conformer_apply.1} parent=39 // pred_check
          %p1152 = pneg %p242
        $region50: #{conformer_apply.1} parent=39 // pred_check_branch
          %1154 = sbr.rel (%p1152) target = $region52
        $region51: #{conformer_apply.1} parent=39 // pred_region
          %s1155 = sand.u32 %s86, 1
          %s1156 = scalar_lea.sflag [#allocation4], %s1155
          %s1157 = sand.u32 %s232, 1
          %s1158 = smul.addr %s1157, 256
          %s1159 = scalar_lea.vmem [#allocation10], %s1158
          %s1161 = ssub.s32 4096, 4096
          %1162 = vsyncadd %s1156, %s1161
          %s1163 = smul.addr %s86, 64
          %s1164 = smul.addr %s1163, 64
          %s1165 = scalar_lea.hbm %s13, %s1164
          %s1166 = sshll.u32 %s1159, 4
          %s1167 = int_to_ptr.vmem [resolvable:$true] %s1166
          %1172 = dma.hbm_to_vmem [thread:$0]  %s1165, 4096, %s1167, %s1156, 256, 256, 16
        $region52: #{conformer_apply.1} parent=39 // pred_fallthru
          _
        // Predicated region
        $region53: #{conformer_apply.1} parent=39 // pred_check
          %p1173 = pneg %p268
        $region54: #{conformer_apply.1} parent=39 // pred_check_branch
          %1175 = sbr.rel (%p1173) target = $region56
        $region55: #{conformer_apply.1} parent=39 // pred_region
          %p1176 = scmp.lt.s32.totalorder %s86, 1
          %s1177 = scalar_select %p1176, %s86, 1
          %s1178 = smul.addr %s1177, 4
          %s1179 = scalar_lea.vmem %s15, %s1178
        $region56: #{conformer_apply.1} parent=39 // pred_fallthru
          _
        // Predicated region
        $region57: #{conformer_apply.1} parent=39 // pred_check
          %p1180 = pneg %p294
        $region58: #{conformer_apply.1} parent=39 // pred_check_branch
          %1182 = sbr.rel (%p1180) target = $region60
        $region59: #{conformer_apply.1} parent=39 // pred_region
          %s1183 = sand.u32 %s86, 1
          %s1184 = scalar_lea.sflag [#allocation4], %s1183
          %s1185 = sand.u32 %s284, 1
          %s1186 = smul.addr %s1185, 256
          %s1187 = scalar_lea.vmem [#allocation11], %s1186
          %s1189 = ssub.s32 4096, 4096
          %1190 = vsyncadd %s1184, %s1189
          %s1191 = smul.addr %s86, 64
          %s1192 = smul.addr %s1191, 64
          %s1193 = scalar_lea.hbm %s17, %s1192
          %s1194 = sshll.u32 %s1187, 4
          %s1195 = int_to_ptr.vmem [resolvable:$true] %s1194
          %1200 = dma.hbm_to_vmem [thread:$0]  %s1193, 4096, %s1195, %s1184, 64, 64, 4
        $region60: #{conformer_apply.1} parent=39 // pred_fallthru
          _
        // Predicated region
        $region61: #{conformer_apply.1} parent=39 // pred_check
          %p1201 = pneg %p320
        $region62: #{conformer_apply.1} parent=39 // pred_check_branch
          %1203 = sbr.rel (%p1201) target = $region64
        $region63: #{conformer_apply.1} parent=39 // pred_region
          %p1204 = scmp.lt.s32.totalorder %s86, 1
          %s1205 = scalar_select %p1204, %s86, 1
          %s1206 = scalar_lea.vmem %s19, %s1205
        $region64: #{conformer_apply.1} parent=39 // pred_fallthru
          _
        // Predicated region
        $region65: #{conformer_apply.1} parent=39 // pred_check
          %p1207 = pneg %p346
        $region66: #{conformer_apply.1} parent=39 // pred_check_branch
          %1209 = sbr.rel (%p1207) target = $region68
        $region67: #{conformer_apply.1} parent=39 // pred_region
          %p1210 = scmp.lt.s32.totalorder %s86, 1
          %s1211 = scalar_select %p1210, %s86, 1
          %s1212 = scalar_lea.vmem %s21, %s1211
        $region68: #{conformer_apply.1} parent=39 // pred_fallthru
          _
        // Predicated region
        $region69: #{conformer_apply.1} parent=39 // pred_check
          %p1213 = pneg %p372
        $region70: #{conformer_apply.1} parent=39 // pred_check_branch
          %1215 = sbr.rel (%p1213) target = $region72
        $region71: #{conformer_apply.1} parent=39 // pred_region
          %p1216 = scmp.lt.s32.totalorder %s86, 1
          %s1217 = scalar_select %p1216, %s86, 1
          %s1218 = scalar_lea.vmem %s23, %s1217
        $region72: #{conformer_apply.1} parent=39 // pred_fallthru
          _
        // Predicated region
        $region73: #{conformer_apply.1} parent=39 // pred_check
          %p1219 = pneg %p398
        $region74: #{conformer_apply.1} parent=39 // pred_check_branch
          %1221 = sbr.rel (%p1219) target = $region76
        $region75: #{conformer_apply.1} parent=39 // pred_region
          %s1222 = sand.u32 %s86, 1
          %s1223 = scalar_lea.sflag [#allocation4], %s1222
          %s1224 = sand.u32 %s388, 1
          %s1225 = smul.addr %s1224, 192
          %s1226 = scalar_lea.vmem [#allocation12], %s1225
          %s1228 = ssub.s32 3072, 3072
          %1229 = vsyncadd %s1223, %s1228
          %s1230 = smul.addr %s86, 48
          %s1231 = smul.addr %s1230, 64
          %s1232 = scalar_lea.hbm %s25, %s1231
          %s1233 = sshll.u32 %s1226, 4
          %s1234 = int_to_ptr.vmem [resolvable:$true] %s1233
          %1239 = dma.hbm_to_vmem [thread:$0]  %s1232, 3072, %s1234, %s1223, 192, 192, 12
        $region76: #{conformer_apply.1} parent=39 // pred_fallthru
          _
        // Predicated region
        $region77: #{conformer_apply.1} parent=39 // pred_check
          %p1240 = pneg %p424
        $region78: #{conformer_apply.1} parent=39 // pred_check_branch
          %1242 = sbr.rel (%p1240) target = $region80
        $region79: #{conformer_apply.1} parent=39 // pred_region
          %p1243 = scmp.lt.s32.totalorder %s86, 1
          %s1244 = scalar_select %p1243, %s86, 1
          %s1245 = smul.addr %s1244, 3
          %s1246 = scalar_lea.vmem %s27, %s1245
        $region80: #{conformer_apply.1} parent=39 // pred_fallthru
          _
        // Predicated region
        $region81: #{conformer_apply.1} parent=39 // pred_check
          %p1247 = pneg %p450
        $region82: #{conformer_apply.1} parent=39 // pred_check_branch
          %1249 = sbr.rel (%p1247) target = $region84
        $region83: #{conformer_apply.1} parent=39 // pred_region
          %s1250 = sand.u32 %s86, 1
          %s1251 = scalar_lea.sflag [#allocation4], %s1250
          %s1252 = sand.u32 %s440, 1
          %s1253 = smul.addr %s1252, 64
          %s1254 = scalar_lea.vmem [#allocation13], %s1253
          %s1256 = ssub.s32 1024, 1024
          %1257 = vsyncadd %s1251, %s1256
          %s1258 = smul.addr %s86, 16
          %s1259 = smul.addr %s1258, 64
          %s1260 = scalar_lea.hbm %s29, %s1259
          %s1261 = sshll.u32 %s1254, 4
          %s1262 = int_to_ptr.vmem [resolvable:$true] %s1261
          %1267 = dma.hbm_to_vmem [thread:$0]  %s1260, 1024, %s1262, %s1251, 64, 64, 4
        $region84: #{conformer_apply.1} parent=39 // pred_fallthru
          _
        // Predicated region
        $region85: #{conformer_apply.1} parent=39 // pred_check
          %p1268 = pneg %p476
        $region86: #{conformer_apply.1} parent=39 // pred_check_branch
          %1270 = sbr.rel (%p1268) target = $region88
        $region87: #{conformer_apply.1} parent=39 // pred_region
          %p1271 = scmp.lt.s32.totalorder %s86, 1
          %s1272 = scalar_select %p1271, %s86, 1
          %s1273 = scalar_lea.vmem %s31, %s1272
        $region88: #{conformer_apply.1} parent=39 // pred_fallthru
          _
        // Predicated region
        $region89: #{conformer_apply.1} parent=39 // pred_check
          %p1274 = pneg %p502
        $region90: #{conformer_apply.1} parent=39 // pred_check_branch
          %1276 = sbr.rel (%p1274) target = $region92
        $region91: #{conformer_apply.1} parent=39 // pred_region
          %p1277 = scmp.lt.s32.totalorder %s86, 1
          %s1278 = scalar_select %p1277, %s86, 1
          %s1279 = scalar_lea.vmem %s33, %s1278
        $region92: #{conformer_apply.1} parent=39 // pred_fallthru
          _
        // Predicated region
        $region93: #{conformer_apply.1} parent=39 // pred_check
          %p1280 = pneg %p528
        $region94: #{conformer_apply.1} parent=39 // pred_check_branch
          %1282 = sbr.rel (%p1280) target = $region96
        $region95: #{conformer_apply.1} parent=39 // pred_region
          %p1283 = scmp.lt.s32.totalorder %s86, 1
          %s1284 = scalar_select %p1283, %s86, 1
          %s1285 = scalar_lea.vmem %s35, %s1284
        $region96: #{conformer_apply.1} parent=39 // pred_fallthru
          _
        // Predicated region
        $region97: #{conformer_apply.1} parent=39 // pred_check
          %p1286 = pneg %p554
        $region98: #{conformer_apply.1} parent=39 // pred_check_branch
          %1288 = sbr.rel (%p1286) target = $region100
        $region99: #{conformer_apply.1} parent=39 // pred_region
          %s1289 = sand.u32 %s86, 1
          %s1290 = scalar_lea.sflag [#allocation4], %s1289
          %s1291 = sand.u32 %s544, 1
          %s1292 = smul.addr %s1291, 128
          %s1293 = scalar_lea.vmem [#allocation14], %s1292
          %s1295 = ssub.s32 2048, 2048
          %1296 = vsyncadd %s1290, %s1295
          %s1297 = smul.addr %s86, 32
          %s1298 = smul.addr %s1297, 64
          %s1299 = scalar_lea.hbm %s37, %s1298
          %s1300 = sshll.u32 %s1293, 4
          %s1301 = int_to_ptr.vmem [resolvable:$true] %s1300
          %1306 = dma.hbm_to_vmem [thread:$0]  %s1299, 2048, %s1301, %s1290, 128, 128, 8
        $region100: #{conformer_apply.1} parent=39 // pred_fallthru
          _
        // Predicated region
        $region101: #{conformer_apply.1} parent=39 // pred_check
          %p1307 = pneg %p580
        $region102: #{conformer_apply.1} parent=39 // pred_check_branch
          %1309 = sbr.rel (%p1307) target = $region104
        $region103: #{conformer_apply.1} parent=39 // pred_region
          %p1310 = scmp.lt.s32.totalorder %s86, 1
          %s1311 = scalar_select %p1310, %s86, 1
          %s1312 = smul.addr %s1311, 2
          %s1313 = scalar_lea.vmem %s39, %s1312
        $region104: #{conformer_apply.1} parent=39 // pred_fallthru
          _
        // Predicated region
        $region105: #{conformer_apply.1} parent=39 // pred_check
          %p1314 = pneg %p606
        $region106: #{conformer_apply.1} parent=39 // pred_check_branch
          %1316 = sbr.rel (%p1314) target = $region108
        $region107: #{conformer_apply.1} parent=39 // pred_region
          %p1317 = scmp.lt.s32.totalorder %s86, 1
          %s1318 = scalar_select %p1317, %s86, 1
          %s1319 = smul.addr %s1318, 8
          %s1320 = scalar_lea.vmem %s41, %s1319
        $region108: #{conformer_apply.1} parent=39 // pred_fallthru
          _
        // Predicated region
        $region109: #{conformer_apply.1} parent=39 // pred_check
          %p1321 = pneg %p632
        $region110: #{conformer_apply.1} parent=39 // pred_check_branch
          %1323 = sbr.rel (%p1321) target = $region112
        $region111: #{conformer_apply.1} parent=39 // pred_region
          %p1324 = scmp.lt.s32.totalorder %s86, 1
          %s1325 = scalar_select %p1324, %s86, 1
          %s1326 = scalar_lea.vmem %s43, %s1325
        $region112: #{conformer_apply.1} parent=39 // pred_fallthru
          _
        // Predicated region
        $region113: #{conformer_apply.1} parent=39 // pred_check
          %p1327 = pneg %p658
        $region114: #{conformer_apply.1} parent=39 // pred_check_branch
          %1329 = sbr.rel (%p1327) target = $region116
        $region115: #{conformer_apply.1} parent=39 // pred_region
          %p1330 = scmp.lt.s32.totalorder %s86, 1
          %s1331 = scalar_select %p1330, %s86, 1
          %s1332 = scalar_lea.vmem %s45, %s1331
        $region116: #{conformer_apply.1} parent=39 // pred_fallthru
          _
        // Predicated region
        $region117: #{conformer_apply.1} parent=39 // pred_check
          %p1333 = pneg %p684
        $region118: #{conformer_apply.1} parent=39 // pred_check_branch
          %1335 = sbr.rel (%p1333) target = $region120
        $region119: #{conformer_apply.1} parent=39 // pred_region
          %p1336 = scmp.lt.s32.totalorder %s86, 1
          %s1337 = scalar_select %p1336, %s86, 1
          %s1338 = scalar_lea.vmem %s47, %s1337
        $region120: #{conformer_apply.1} parent=39 // pred_fallthru
          _
        // Predicated region
        $region121: #{conformer_apply.1} parent=39 // pred_check
          %p1339 = pneg %p710
        $region122: #{conformer_apply.1} parent=39 // pred_check_branch
          %1341 = sbr.rel (%p1339) target = $region124
        $region123: #{conformer_apply.1} parent=39 // pred_region
          %p1342 = scmp.lt.s32.totalorder %s86, 1
          %s1343 = scalar_select %p1342, %s86, 1
          %s1344 = scalar_lea.vmem %s49, %s1343
        $region124: #{conformer_apply.1} parent=39 // pred_fallthru
          _
        // Predicated region
        $region125: #{conformer_apply.1} parent=39 // pred_check
          %p1345 = pneg %p736
        $region126: #{conformer_apply.1} parent=39 // pred_check_branch
          %1347 = sbr.rel (%p1345) target = $region128
        $region127: #{conformer_apply.1} parent=39 // pred_region
          %s1348 = sand.u32 %s86, 1
          %s1349 = scalar_lea.sflag [#allocation4], %s1348
          %s1350 = sand.u32 %s726, 1
          %s1351 = scalar_lea.vmem [#allocation15], %s1350
          %s1353 = ssub.s32 16, 16
          %1354 = vsyncadd %s1349, %s1353
          %s1355 = smul.addr %s86, 16
          %s1356 = scalar_lea.hbm %s51, %s1355
          %s1358 = sshll.u32 %s1351, 4
          %s1359 = int_to_ptr.vmem [resolvable:$true] %s1358
          %1361 = dma.hbm_to_vmem [thread:$0]  %s1356, 16, %s1359, %s1349
        $region128: #{conformer_apply.1} parent=39 // pred_fallthru
          _
        // Predicated region
        $region129: #{conformer_apply.1} parent=39 // pred_check
          %p1362 = pneg %p762
        $region130: #{conformer_apply.1} parent=39 // pred_check_branch
          %1364 = sbr.rel (%p1362) target = $region132
        $region131: #{conformer_apply.1} parent=39 // pred_region
          %s1365 = sand.u32 %s86, 1
          %s1366 = scalar_lea.sflag [#allocation4], %s1365
          %s1367 = sand.u32 %s752, 1
          %s1368 = smul.addr %s1367, 64
          %s1369 = scalar_lea.vmem [#allocation16], %s1368
          %s1371 = ssub.s32 1024, 1024
          %1372 = vsyncadd %s1366, %s1371
          %s1373 = smul.addr %s86, 16
          %s1374 = smul.addr %s1373, 64
          %s1375 = scalar_lea.hbm %s53, %s1374
          %s1376 = sshll.u32 %s1369, 4
          %s1377 = int_to_ptr.vmem [resolvable:$true] %s1376
          %1382 = dma.hbm_to_vmem [thread:$0]  %s1375, 1024, %s1377, %s1366, 64, 64, 4
        $region132: #{conformer_apply.1} parent=39 // pred_fallthru
          _
        // Predicated region
        $region133: #{conformer_apply.1} parent=39 // pred_check
          %p1383 = pneg %p788
        $region134: #{conformer_apply.1} parent=39 // pred_check_branch
          %1385 = sbr.rel (%p1383) target = $region136
        $region135: #{conformer_apply.1} parent=39 // pred_region
          %s1386 = sand.u32 %s86, 1
          %s1387 = scalar_lea.sflag [#allocation4], %s1386
          %s1388 = sand.u32 %s778, 1
          %s1389 = scalar_lea.vmem [#allocation17], %s1388
          %s1391 = ssub.s32 16, 16
          %1392 = vsyncadd %s1387, %s1391
          %s1393 = smul.addr %s86, 16
          %s1394 = scalar_lea.hbm %s55, %s1393
          %s1396 = sshll.u32 %s1389, 4
          %s1397 = int_to_ptr.vmem [resolvable:$true] %s1396
          %1399 = dma.hbm_to_vmem [thread:$0]  %s1394, 16, %s1397, %s1387
        $region136: #{conformer_apply.1} parent=39 // pred_fallthru
          _
        // Predicated region
        $region137: #{conformer_apply.1} parent=39 // pred_check
          %p1400 = pneg %p814
        $region138: #{conformer_apply.1} parent=39 // pred_check_branch
          %1402 = sbr.rel (%p1400) target = $region140
        $region139: #{conformer_apply.1} parent=39 // pred_region
          %p1403 = scmp.lt.s32.totalorder %s86, 1
          %s1404 = scalar_select %p1403, %s86, 1
          %s1405 = scalar_lea.vmem %s57, %s1404
        $region140: #{conformer_apply.1} parent=39 // pred_fallthru
          _
        // Predicated region
        $region141: #{conformer_apply.1} parent=39 // pred_check
          %p1406 = pneg %p840
        $region142: #{conformer_apply.1} parent=39 // pred_check_branch
          %1408 = sbr.rel (%p1406) target = $region144
        $region143: #{conformer_apply.1} parent=39 // pred_region
          %p1409 = scmp.lt.s32.totalorder %s86, 1
          %s1410 = scalar_select %p1409, %s86, 1
          %s1411 = scalar_lea.vmem %s59, %s1410
        $region144: #{conformer_apply.1} parent=39 // pred_fallthru
          _
        // Predicated region
        $region145: #{conformer_apply.1} parent=39 // pred_check
          %p1412 = pneg %p866
        $region146: #{conformer_apply.1} parent=39 // pred_check_branch
          %1414 = sbr.rel (%p1412) target = $region148
        $region147: #{conformer_apply.1} parent=39 // pred_region
          %s1415 = sand.u32 %s86, 1
          %s1416 = scalar_lea.sflag [#allocation4], %s1415
          %s1417 = sand.u32 %s856, 1
          %s1418 = smul.addr %s1417, 256
          %s1419 = scalar_lea.vmem [#allocation18], %s1418
          %s1421 = ssub.s32 4096, 4096
          %1422 = vsyncadd %s1416, %s1421
          %s1423 = smul.addr %s86, 64
          %s1424 = smul.addr %s1423, 64
          %s1425 = scalar_lea.hbm %s61, %s1424
          %s1426 = sshll.u32 %s1419, 4
          %s1427 = int_to_ptr.vmem [resolvable:$true] %s1426
          %1432 = dma.hbm_to_vmem [thread:$0]  %s1425, 4096, %s1427, %s1416, 256, 256, 16
        $region148: #{conformer_apply.1} parent=39 // pred_fallthru
          _
        // Predicated region
        $region149: #{conformer_apply.1} parent=39 // pred_check
          %p1433 = pneg %p892
        $region150: #{conformer_apply.1} parent=39 // pred_check_branch
          %1435 = sbr.rel (%p1433) target = $region152
        $region151: #{conformer_apply.1} parent=39 // pred_region
          %p1436 = scmp.lt.s32.totalorder %s86, 1
          %s1437 = scalar_select %p1436, %s86, 1
          %s1438 = smul.addr %s1437, 4
          %s1439 = scalar_lea.vmem %s63, %s1438
        $region152: #{conformer_apply.1} parent=39 // pred_fallthru
          _
        // Predicated region
        $region153: #{conformer_apply.1} parent=39 // pred_check
          %p1440 = pneg %p918
        $region154: #{conformer_apply.1} parent=39 // pred_check_branch
          %1442 = sbr.rel (%p1440) target = $region156
        $region155: #{conformer_apply.1} parent=39 // pred_region
          %s1443 = sand.u32 %s86, 1
          %s1444 = scalar_lea.sflag [#allocation4], %s1443
          %s1445 = sand.u32 %s908, 1
          %s1446 = smul.addr %s1445, 256
          %s1447 = scalar_lea.vmem [#allocation19], %s1446
          %s1449 = ssub.s32 4096, 4096
          %1450 = vsyncadd %s1444, %s1449
          %s1451 = smul.addr %s86, 64
          %s1452 = smul.addr %s1451, 64
          %s1453 = scalar_lea.hbm %s65, %s1452
          %s1454 = sshll.u32 %s1447, 4
          %s1455 = int_to_ptr.vmem [resolvable:$true] %s1454
          %1460 = dma.hbm_to_vmem [thread:$0]  %s1453, 4096, %s1455, %s1444, 64, 64, 4
        $region156: #{conformer_apply.1} parent=39 // pred_fallthru
          _
        // Predicated region
        $region157: #{conformer_apply.1} parent=39 // pred_check
          %p1461 = pneg %p944
        $region158: #{conformer_apply.1} parent=39 // pred_check_branch
          %1463 = sbr.rel (%p1461) target = $region160
        $region159: #{conformer_apply.1} parent=39 // pred_region
          %p1464 = scmp.lt.s32.totalorder %s86, 1
          %s1465 = scalar_select %p1464, %s86, 1
          %s1466 = scalar_lea.vmem %s67, %s1465
        $region160: #{conformer_apply.1} parent=39 // pred_fallthru
          _
        // Predicated region
        $region161: #{conformer_apply.1} parent=39 // pred_check
          %p1467 = pneg %p970
        $region162: #{conformer_apply.1} parent=39 // pred_check_branch
          %1469 = sbr.rel (%p1467) target = $region164
        $region163: #{conformer_apply.1} parent=39 // pred_region
          %p1470 = scmp.lt.s32.totalorder %s86, 1
          %s1471 = scalar_select %p1470, %s86, 1
          %s1472 = scalar_lea.vmem %s69, %s1471
        $region164: #{conformer_apply.1} parent=39 // pred_fallthru
          _
        // Predicated region
        $region165: #{conformer_apply.1} parent=39 // pred_check
          %p1473 = pneg %p996
        $region166: #{conformer_apply.1} parent=39 // pred_check_branch
          %1475 = sbr.rel (%p1473) target = $region168
        $region167: #{conformer_apply.1} parent=39 // pred_region
          %p1476 = scmp.lt.s32.totalorder %s86, 1
          %s1477 = scalar_select %p1476, %s86, 1
          %s1478 = scalar_lea.vmem %s71, %s1477
        $region168: #{conformer_apply.1} parent=39 // pred_fallthru
          _
      $region40: #{conformer_apply.1} parent=5 // pred_fallthru
        _
      %p1479 = scmp.le.s32.totalorder 1, %s86
      %p1480 = scmp.lt.s32.totalorder %s86, 3
      %p1481 = pnand %p1479, %p1480
      %p1482 = pneg %p1481
      // Predicated region
      $region169: #{conformer_apply.1} parent=5 // pred_check
        _
      $region170: #{conformer_apply.1} parent=5 // pred_check_branch
        %1484 = sbr.rel (%p1481) target = $region172
      $region171: #{conformer_apply.1} parent=5 // pred_region
        %s1485 = ssub.s32 %s86, 1
        // Predicated region
        $region173: #{conformer_apply.1} parent=171 // pred_check
          %p1486 = pneg %p107
        $region174: #{conformer_apply.1} parent=171 // pred_check_branch
          %1488 = sbr.rel (%p1486) target = $region176
        $region175: #{conformer_apply.1} parent=171 // pred_region
          %1489 = dma.done [#allocation4], 512
        $region176: #{conformer_apply.1} parent=171 // pred_fallthru
          _
        // Predicated region
        $region177: #{conformer_apply.1} parent=171 // pred_check
          %p1490 = pneg %p128
        $region178: #{conformer_apply.1} parent=171 // pred_check_branch
          %1492 = sbr.rel (%p1490) target = $region180
        $region179: #{conformer_apply.1} parent=171 // pred_region
          %1493 = dma.done [#allocation6], 3584
        $region180: #{conformer_apply.1} parent=171 // pred_fallthru
          _
        // Predicated region
        $region181: #{conformer_apply.1} parent=171 // pred_check
          %p1494 = pneg %p149
        $region182: #{conformer_apply.1} parent=171 // pred_check_branch
          %1496 = sbr.rel (%p1494) target = $region184
        $region183: #{conformer_apply.1} parent=171 // pred_region
          %1497 = dma.done [#allocation6], 640
        $region184: #{conformer_apply.1} parent=171 // pred_fallthru
          _
        // Predicated region
        $region185: #{conformer_apply.1} parent=171 // pred_check
          %p1498 = pneg %p170
        $region186: #{conformer_apply.1} parent=171 // pred_check_branch
          %1500 = sbr.rel (%p1498) target = $region188
        $region187: #{conformer_apply.1} parent=171 // pred_region
          %1501 = dma.done [#allocation9], 16
        $region188: #{conformer_apply.1} parent=171 // pred_fallthru
          _
        %s1502 = sand.u32 %s91, 1
        %s1503 = scalar_lea.sflag [#allocation4], %s1502
        %s1504 = sand.u32 %s235, 1
        %s1505 = smul.addr %s1504, 256
        %s1506 = scalar_lea.vmem [#allocation10], %s1505
        // Predicated region
        $region189: #{conformer_apply.1} parent=171 // pred_check
          %p1507 = pneg %p248
        $region190: #{conformer_apply.1} parent=171 // pred_check_branch
          %1509 = sbr.rel (%p1507) target = $region192
        $region191: #{conformer_apply.1} parent=171 // pred_region
          %1510 = dma.done %s1503, 4096
        $region192: #{conformer_apply.1} parent=171 // pred_fallthru
          _
        %s1511 = sand.u32 %s91, 1
        %s1512 = scalar_lea.sflag [#allocation4], %s1511
        %s1513 = sand.u32 %s287, 1
        %s1514 = smul.addr %s1513, 256
        %s1515 = scalar_lea.vmem [#allocation11], %s1514
        // Predicated region
        $region193: #{conformer_apply.1} parent=171 // pred_check
          %p1516 = pneg %p300
        $region194: #{conformer_apply.1} parent=171 // pred_check_branch
          %1518 = sbr.rel (%p1516) target = $region196
        $region195: #{conformer_apply.1} parent=171 // pred_region
          %1519 = dma.done %s1512, 4096
        $region196: #{conformer_apply.1} parent=171 // pred_fallthru
          _
        %s1520 = sand.u32 %s91, 1
        %s1521 = scalar_lea.sflag [#allocation4], %s1520
        %s1522 = sand.u32 %s391, 1
        %s1523 = smul.addr %s1522, 192
        %s1524 = scalar_lea.vmem [#allocation12], %s1523
        // Predicated region
        $region197: #{conformer_apply.1} parent=171 // pred_check
          %p1525 = pneg %p404
        $region198: #{conformer_apply.1} parent=171 // pred_check_branch
          %1527 = sbr.rel (%p1525) target = $region200
        $region199: #{conformer_apply.1} parent=171 // pred_region
          %1528 = dma.done %s1521, 3072
        $region200: #{conformer_apply.1} parent=171 // pred_fallthru
          _
        %s1529 = sand.u32 %s91, 1
        %s1530 = scalar_lea.sflag [#allocation4], %s1529
        %s1531 = sand.u32 %s443, 1
        %s1532 = smul.addr %s1531, 64
        %s1533 = scalar_lea.vmem [#allocation13], %s1532
        // Predicated region
        $region201: #{conformer_apply.1} parent=171 // pred_check
          %p1534 = pneg %p456
        $region202: #{conformer_apply.1} parent=171 // pred_check_branch
          %1536 = sbr.rel (%p1534) target = $region204
        $region203: #{conformer_apply.1} parent=171 // pred_region
          %1537 = dma.done %s1530, 1024
        $region204: #{conformer_apply.1} parent=171 // pred_fallthru
          _
        %s1538 = sand.u32 %s91, 1
        %s1539 = scalar_lea.sflag [#allocation4], %s1538
        %s1540 = sand.u32 %s547, 1
        %s1541 = smul.addr %s1540, 128
        %s1542 = scalar_lea.vmem [#allocation14], %s1541
        // Predicated region
        $region205: #{conformer_apply.1} parent=171 // pred_check
          %p1543 = pneg %p560
        $region206: #{conformer_apply.1} parent=171 // pred_check_branch
          %1545 = sbr.rel (%p1543) target = $region208
        $region207: #{conformer_apply.1} parent=171 // pred_region
          %1546 = dma.done %s1539, 2048
        $region208: #{conformer_apply.1} parent=171 // pred_fallthru
          _
        %s1547 = sand.u32 %s91, 1
        %s1548 = scalar_lea.sflag [#allocation4], %s1547
        %s1549 = sand.u32 %s729, 1
        %s1550 = scalar_lea.vmem [#allocation15], %s1549
        // Predicated region
        $region209: #{conformer_apply.1} parent=171 // pred_check
          %p1551 = pneg %p742
        $region210: #{conformer_apply.1} parent=171 // pred_check_branch
          %1553 = sbr.rel (%p1551) target = $region212
        $region211: #{conformer_apply.1} parent=171 // pred_region
          %1554 = dma.done %s1548, 16
        $region212: #{conformer_apply.1} parent=171 // pred_fallthru
          _
        %s1555 = sand.u32 %s91, 1
        %s1556 = scalar_lea.sflag [#allocation4], %s1555
        %s1557 = sand.u32 %s755, 1
        %s1558 = smul.addr %s1557, 64
        %s1559 = scalar_lea.vmem [#allocation16], %s1558
        // Predicated region
        $region213: #{conformer_apply.1} parent=171 // pred_check
          %p1560 = pneg %p768
        $region214: #{conformer_apply.1} parent=171 // pred_check_branch
          %1562 = sbr.rel (%p1560) target = $region216
        $region215: #{conformer_apply.1} parent=171 // pred_region
          %1563 = dma.done %s1556, 1024
        $region216: #{conformer_apply.1} parent=171 // pred_fallthru
          _
        %s1564 = sand.u32 %s91, 1
        %s1565 = scalar_lea.sflag [#allocation4], %s1564
        %s1566 = sand.u32 %s781, 1
        %s1567 = scalar_lea.vmem [#allocation17], %s1566
        // Predicated region
        $region217: #{conformer_apply.1} parent=171 // pred_check
          %p1568 = pneg %p794
        $region218: #{conformer_apply.1} parent=171 // pred_check_branch
          %1570 = sbr.rel (%p1568) target = $region220
        $region219: #{conformer_apply.1} parent=171 // pred_region
          %1571 = dma.done %s1565, 16
        $region220: #{conformer_apply.1} parent=171 // pred_fallthru
          _
        %s1572 = sand.u32 %s91, 1
        %s1573 = scalar_lea.sflag [#allocation4], %s1572
        %s1574 = sand.u32 %s859, 1
        %s1575 = smul.addr %s1574, 256
        %s1576 = scalar_lea.vmem [#allocation18], %s1575
        // Predicated region
        $region221: #{conformer_apply.1} parent=171 // pred_check
          %p1577 = pneg %p872
        $region222: #{conformer_apply.1} parent=171 // pred_check_branch
          %1579 = sbr.rel (%p1577) target = $region224
        $region223: #{conformer_apply.1} parent=171 // pred_region
          %1580 = dma.done %s1573, 4096
        $region224: #{conformer_apply.1} parent=171 // pred_fallthru
          _
        %s1581 = sand.u32 %s91, 1
        %s1582 = scalar_lea.sflag [#allocation4], %s1581
        %s1583 = sand.u32 %s911, 1
        %s1584 = smul.addr %s1583, 256
        %s1585 = scalar_lea.vmem [#allocation19], %s1584
        // Predicated region
        $region225: #{conformer_apply.1} parent=171 // pred_check
          %p1586 = pneg %p924
        $region226: #{conformer_apply.1} parent=171 // pred_check_branch
          %1588 = sbr.rel (%p1586) target = $region228
        $region227: #{conformer_apply.1} parent=171 // pred_region
          %1589 = dma.done %s1582, 4096
        $region228: #{conformer_apply.1} parent=171 // pred_fallthru
          _
        %p1590 = pneg %p107
        %p1591 = pneg %p104
        %p1592 = pneg %p128
        %p1593 = pneg %p125
        %p1594 = pneg %p149
        %p1595 = pneg %p146
        %p1596 = pneg %p170
        %p1597 = pneg %p167
        %p1598 = scmp.lt.s32.totalorder %s91, 1
        %s1599 = scalar_select %p1598, %s91, 1
        %s1600 = scalar_lea.vmem %s9, %s1599
        %p1601 = pneg %p196
        %p1602 = pneg %p193
        %p1603 = scmp.lt.s32.totalorder %s91, 1
        %s1604 = scalar_select %p1603, %s91, 1
        %s1605 = scalar_lea.vmem %s11, %s1604
        %p1606 = pneg %p222
        %p1607 = pneg %p219
        %s1608 = sand.u32 %s91, 1
        %s1609 = scalar_lea.sflag [#allocation4], %s1608
        %s1610 = sand.u32 %s235, 1
        %s1611 = smul.addr %s1610, 256
        %s1612 = scalar_lea.vmem [#allocation10], %s1611
        %p1613 = pneg %p248
        %p1614 = pneg %p245
        %p1615 = scmp.lt.s32.totalorder %s91, 1
        %s1616 = scalar_select %p1615, %s91, 1
        %s1617 = smul.addr %s1616, 4
        %s1618 = scalar_lea.vmem %s15, %s1617
        %p1619 = pneg %p274
        %p1620 = pneg %p271
        %s1621 = sand.u32 %s91, 1
        %s1622 = scalar_lea.sflag [#allocation4], %s1621
        %s1623 = sand.u32 %s287, 1
        %s1624 = smul.addr %s1623, 256
        %s1625 = scalar_lea.vmem [#allocation11], %s1624
        %p1626 = pneg %p300
        %p1627 = pneg %p297
        %p1628 = scmp.lt.s32.totalorder %s91, 1
        %s1629 = scalar_select %p1628, %s91, 1
        %s1630 = scalar_lea.vmem %s19, %s1629
        %p1631 = pneg %p326
        %p1632 = pneg %p323
        %p1633 = scmp.lt.s32.totalorder %s91, 1
        %s1634 = scalar_select %p1633, %s91, 1
        %s1635 = scalar_lea.vmem %s21, %s1634
        %p1636 = pneg %p352
        %p1637 = pneg %p349
        %p1638 = scmp.lt.s32.totalorder %s91, 1
        %s1639 = scalar_select %p1638, %s91, 1
        %s1640 = scalar_lea.vmem %s23, %s1639
        %p1641 = pneg %p378
        %p1642 = pneg %p375
        %s1643 = sand.u32 %s91, 1
        %s1644 = scalar_lea.sflag [#allocation4], %s1643
        %s1645 = sand.u32 %s391, 1
        %s1646 = smul.addr %s1645, 192
        %s1647 = scalar_lea.vmem [#allocation12], %s1646
        %p1648 = pneg %p404
        %p1649 = pneg %p401
        %p1650 = scmp.lt.s32.totalorder %s91, 1
        %s1651 = scalar_select %p1650, %s91, 1
        %s1652 = smul.addr %s1651, 3
        %s1653 = scalar_lea.vmem %s27, %s1652
        %p1654 = pneg %p430
        %p1655 = pneg %p427
        %s1656 = sand.u32 %s91, 1
        %s1657 = scalar_lea.sflag [#allocation4], %s1656
        %s1658 = sand.u32 %s443, 1
        %s1659 = smul.addr %s1658, 64
        %s1660 = scalar_lea.vmem [#allocation13], %s1659
        %p1661 = pneg %p456
        %p1662 = pneg %p453
        %p1663 = scmp.lt.s32.totalorder %s91, 1
        %s1664 = scalar_select %p1663, %s91, 1
        %s1665 = scalar_lea.vmem %s31, %s1664
        %p1666 = pneg %p482
        %p1667 = pneg %p479
        %p1668 = scmp.lt.s32.totalorder %s91, 1
        %s1669 = scalar_select %p1668, %s91, 1
        %s1670 = scalar_lea.vmem %s33, %s1669
        %p1671 = pneg %p508
        %p1672 = pneg %p505
        %p1673 = scmp.lt.s32.totalorder %s91, 1
        %s1674 = scalar_select %p1673, %s91, 1
        %s1675 = scalar_lea.vmem %s35, %s1674
        %p1676 = pneg %p534
        %p1677 = pneg %p531
        %s1678 = sand.u32 %s91, 1
        %s1679 = scalar_lea.sflag [#allocation4], %s1678
        %s1680 = sand.u32 %s547, 1
        %s1681 = smul.addr %s1680, 128
        %s1682 = scalar_lea.vmem [#allocation14], %s1681
        %p1683 = pneg %p560
        %p1684 = pneg %p557
        %p1685 = scmp.lt.s32.totalorder %s91, 1
        %s1686 = scalar_select %p1685, %s91, 1
        %s1687 = smul.addr %s1686, 2
        %s1688 = scalar_lea.vmem %s39, %s1687
        %p1689 = pneg %p586
        %p1690 = pneg %p583
        %p1691 = scmp.lt.s32.totalorder %s91, 1
        %s1692 = scalar_select %p1691, %s91, 1
        %s1693 = smul.addr %s1692, 8
        %s1694 = scalar_lea.vmem %s41, %s1693
        %p1695 = pneg %p612
        %p1696 = pneg %p609
        %p1697 = scmp.lt.s32.totalorder %s91, 1
        %s1698 = scalar_select %p1697, %s91, 1
        %s1699 = scalar_lea.vmem %s43, %s1698
        %p1700 = pneg %p638
        %p1701 = pneg %p635
        %p1702 = scmp.lt.s32.totalorder %s91, 1
        %s1703 = scalar_select %p1702, %s91, 1
        %s1704 = scalar_lea.vmem %s45, %s1703
        %p1705 = pneg %p664
        %p1706 = pneg %p661
        %p1707 = scmp.lt.s32.totalorder %s91, 1
        %s1708 = scalar_select %p1707, %s91, 1
        %s1709 = scalar_lea.vmem %s47, %s1708
        %p1710 = pneg %p690
        %p1711 = pneg %p687
        %p1712 = scmp.lt.s32.totalorder %s91, 1
        %s1713 = scalar_select %p1712, %s91, 1
        %s1714 = scalar_lea.vmem %s49, %s1713
        %p1715 = pneg %p716
        %p1716 = pneg %p713
        %s1717 = sand.u32 %s91, 1
        %s1718 = scalar_lea.sflag [#allocation4], %s1717
        %s1719 = sand.u32 %s729, 1
        %s1720 = scalar_lea.vmem [#allocation15], %s1719
        %p1721 = pneg %p742
        %p1722 = pneg %p739
        %s1723 = sand.u32 %s91, 1
        %s1724 = scalar_lea.sflag [#allocation4], %s1723
        %s1725 = sand.u32 %s755, 1
        %s1726 = smul.addr %s1725, 64
        %s1727 = scalar_lea.vmem [#allocation16], %s1726
        %p1728 = pneg %p768
        %p1729 = pneg %p765
        %s1730 = sand.u32 %s91, 1
        %s1731 = scalar_lea.sflag [#allocation4], %s1730
        %s1732 = sand.u32 %s781, 1
        %s1733 = scalar_lea.vmem [#allocation17], %s1732
        %p1734 = pneg %p794
        %p1735 = pneg %p791
        %p1736 = scmp.lt.s32.totalorder %s91, 1
        %s1737 = scalar_select %p1736, %s91, 1
        %s1738 = scalar_lea.vmem %s57, %s1737
        %p1739 = pneg %p820
        %p1740 = pneg %p817
        %p1741 = scmp.lt.s32.totalorder %s91, 1
        %s1742 = scalar_select %p1741, %s91, 1
        %s1743 = scalar_lea.vmem %s59, %s1742
        %p1744 = pneg %p846
        %p1745 = pneg %p843
        %s1746 = sand.u32 %s91, 1
        %s1747 = scalar_lea.sflag [#allocation4], %s1746
        %s1748 = sand.u32 %s859, 1
        %s1749 = smul.addr %s1748, 256
        %s1750 = scalar_lea.vmem [#allocation18], %s1749
        %p1751 = pneg %p872
        %p1752 = pneg %p869
        %p1753 = scmp.lt.s32.totalorder %s91, 1
        %s1754 = scalar_select %p1753, %s91, 1
        %s1755 = smul.addr %s1754, 4
        %s1756 = scalar_lea.vmem %s63, %s1755
        %p1757 = pneg %p898
        %p1758 = pneg %p895
        %s1759 = sand.u32 %s91, 1
        %s1760 = scalar_lea.sflag [#allocation4], %s1759
        %s1761 = sand.u32 %s911, 1
        %s1762 = smul.addr %s1761, 256
        %s1763 = scalar_lea.vmem [#allocation19], %s1762
        %p1764 = pneg %p924
        %p1765 = pneg %p921
        %p1766 = scmp.lt.s32.totalorder %s91, 1
        %s1767 = scalar_select %p1766, %s91, 1
        %s1768 = scalar_lea.vmem %s67, %s1767
        %p1769 = pneg %p950
        %p1770 = pneg %p947
        %p1771 = scmp.lt.s32.totalorder %s91, 1
        %s1772 = scalar_select %p1771, %s91, 1
        %s1773 = scalar_lea.vmem %s69, %s1772
        %p1774 = pneg %p976
        %p1775 = pneg %p973
        %p1776 = scmp.lt.s32.totalorder %s91, 1
        %s1777 = scalar_select %p1776, %s91, 1
        %s1778 = scalar_lea.vmem %s71, %s1777
        %p1779 = pneg %p1002
        %p1780 = pneg %p999
        %p1781 = pneg %p1023
        %p1782 = pneg %p1020
        %p1783 = pneg %p1044
        %p1784 = pneg %p1041
        %p1785 = pneg %p1065
        %p1786 = pneg %p1062
        %p1787 = scmp.lt.s32.totalorder %s91, 1
        %s1788 = scalar_select %p1787, %s91, 1
        %s1789 = scalar_lea.vmem %s9, %s1788
        %p1790 = scmp.lt.s32.totalorder %s91, 1
        %s1791 = scalar_select %p1790, %s91, 1
        %s1792 = scalar_lea.vmem %s11, %s1791
        %p1793 = scmp.lt.s32.totalorder %s91, 1
        %s1794 = scalar_select %p1793, %s91, 1
        %s1795 = smul.addr %s1794, 4
        %s1796 = scalar_lea.vmem %s15, %s1795
        %p1797 = scmp.lt.s32.totalorder %s91, 1
        %s1798 = scalar_select %p1797, %s91, 1
        %s1799 = scalar_lea.vmem %s19, %s1798
        %p1800 = scmp.lt.s32.totalorder %s91, 1
        %s1801 = scalar_select %p1800, %s91, 1
        %s1802 = scalar_lea.vmem %s21, %s1801
        %p1803 = scmp.lt.s32.totalorder %s91, 1
        %s1804 = scalar_select %p1803, %s91, 1
        %s1805 = scalar_lea.vmem %s23, %s1804
        %p1806 = scmp.lt.s32.totalorder %s91, 1
        %s1807 = scalar_select %p1806, %s91, 1
        %s1808 = smul.addr %s1807, 3
        %s1809 = scalar_lea.vmem %s27, %s1808
        %p1810 = scmp.lt.s32.totalorder %s91, 1
        %s1811 = scalar_select %p1810, %s91, 1
        %s1812 = scalar_lea.vmem %s31, %s1811
        %p1813 = scmp.lt.s32.totalorder %s91, 1
        %s1814 = scalar_select %p1813, %s91, 1
        %s1815 = scalar_lea.vmem %s33, %s1814
        %p1816 = scmp.lt.s32.totalorder %s91, 1
        %s1817 = scalar_select %p1816, %s91, 1
        %s1818 = scalar_lea.vmem %s35, %s1817
        %p1819 = scmp.lt.s32.totalorder %s91, 1
        %s1820 = scalar_select %p1819, %s91, 1
        %s1821 = smul.addr %s1820, 2
        %s1822 = scalar_lea.vmem %s39, %s1821
        %p1823 = scmp.lt.s32.totalorder %s91, 1
        %s1824 = scalar_select %p1823, %s91, 1
        %s1825 = smul.addr %s1824, 8
        %s1826 = scalar_lea.vmem %s41, %s1825
        %p1827 = scmp.lt.s32.totalorder %s91, 1
        %s1828 = scalar_select %p1827, %s91, 1
        %s1829 = scalar_lea.vmem %s43, %s1828
        %p1830 = scmp.lt.s32.totalorder %s91, 1
        %s1831 = scalar_select %p1830, %s91, 1
        %s1832 = scalar_lea.vmem %s45, %s1831
        %p1833 = scmp.lt.s32.totalorder %s91, 1
        %s1834 = scalar_select %p1833, %s91, 1
        %s1835 = scalar_lea.vmem %s47, %s1834
        %p1836 = scmp.lt.s32.totalorder %s91, 1
        %s1837 = scalar_select %p1836, %s91, 1
        %s1838 = scalar_lea.vmem %s49, %s1837
        %p1839 = scmp.lt.s32.totalorder %s91, 1
        %s1840 = scalar_select %p1839, %s91, 1
        %s1841 = scalar_lea.vmem %s57, %s1840
        %p1842 = scmp.lt.s32.totalorder %s91, 1
        %s1843 = scalar_select %p1842, %s91, 1
        %s1844 = scalar_lea.vmem %s59, %s1843
        %p1845 = scmp.lt.s32.totalorder %s91, 1
        %s1846 = scalar_select %p1845, %s91, 1
        %s1847 = smul.addr %s1846, 4
        %s1848 = scalar_lea.vmem %s63, %s1847
        %p1849 = scmp.lt.s32.totalorder %s91, 1
        %s1850 = scalar_select %p1849, %s91, 1
        %s1851 = scalar_lea.vmem %s67, %s1850
        %p1852 = scmp.lt.s32.totalorder %s91, 1
        %s1853 = scalar_select %p1852, %s91, 1
        %s1854 = scalar_lea.vmem %s69, %s1853
        %p1855 = scmp.lt.s32.totalorder %s91, 1
        %s1856 = scalar_select %p1855, %s91, 1
        %s1857 = scalar_lea.vmem %s71, %s1856
        %p1859 = scmp.eq.s32.totalorder %s91, 0
        // Predicated region
        $region229: #{conformer_apply.1} parent=171 // pred_check
          %p1860 = pneg %p1859
        $region230: #{conformer_apply.1} parent=171 // pred_check_branch
          %1862 = sbr.rel (%p1860) target = $region232
        $region231: #{conformer_apply.1} parent=171 // pred_region
          %v1863 = vld [vmem:[#allocation3] sm:$0xff]
          %v1864 = vld [vmem:[#allocation3 + $0x8] sm:$0xff]
          %v1865 = vld [vmem:[#allocation3 + $0x10] sm:$0xff]
          %v1866 = vld [vmem:[#allocation3 + $0x18] sm:$0xff]
          %v1867 = vpack.c.bf16 %v1864, %v1863
          %v1868 = vpack.c.bf16 %v1866, %v1865
          %v1869 = vld [vmem:[#allocation7] sm:$0xf]
          %v1870 = vld [vmem:[#allocation7 + $0x4] sm:$0xf]
          %v1871 = vld [vmem:[#allocation7 + $0x8] sm:$0xf]
          %v1872 = vld [vmem:[#allocation7 + $0xc] sm:$0xf]
          %v1873 = vld [vmem:[#allocation7 + $0x10] sm:$0xf]
          %v1874 = vld [vmem:[#allocation7 + $0x14] sm:$0xf]
          %v1875 = vld [vmem:[#allocation7 + $0x18] sm:$0xf]
          %v1876 = vld [vmem:[#allocation7 + $0x1c] sm:$0xf]
          %v1877 = vld [vmem:[#allocation7 + $0x20] sm:$0xf]
          %v1878 = vld [vmem:[#allocation7 + $0x24] sm:$0xf]
          %v1879 = vld [vmem:[#allocation8] sm:$0x1]
          %v1881 = vlaneseq
          %v1882 = vshrl.u32 %v1881, 7
          %v1883 = vsub.s32 0, %v1882
          %v1884 = vrot.slane %v1879, %v1883
          %v1896 = vunpack.c.l.b16 %v1869
          %v1897 = vunpack.c.l.b16 %v1870
          %v1898 = vunpack.c.l.b16 %v1871
          %v1899 = vunpack.c.l.b16 %v1872
          %v1900 = vunpack.c.l.b16 %v1873
          %v1901 = vunpack.c.l.b16 %v1874
          %v1902 = vunpack.c.l.b16 %v1875
          %v1903 = vunpack.c.l.b16 %v1876
          %v1904 = vunpack.c.l.b16 %v1877
          %v1905 = vunpack.c.l.b16 %v1878
          %v1906 = vpack.c.b16 %v1897, %v1896
          %v1907 = vpack.c.b16 %v1899, %v1898
          %v1908 = vpack.c.b16 %v1901, %v1900
          %v1909 = vpack.c.b16 %v1903, %v1902
          %v1910 = vpack.c.b16 %v1905, %v1904
          %vm1916 = vcmask 654336
          %v1918 = vsel %vm1916, %v1867, 0
          %v1921 = vsel %vm1916, %v1868, 0
          %1923 = vmatprep.subr.bf16.mxu0 0
          %1924 = vmatpush1.bf16.msra.mxu0 %v1906
          %1925 = vmatprep.subr.bf16.mxu0 0
          %1926 = vmatpush1.bf16.msra.mxu0 %v1907
          %1927 = vmatprep.subr.bf16.mxu0 0
          %1928 = vmatpush1.bf16.msra.mxu0 %v1908
          %1929 = vmatprep.subr.bf16.mxu0 0
          %1930 = vmatpush1.bf16.msra.mxu0 %v1909
          %1931 = vmatprep.subr.bf16.mxu0 0
          %1932 = vmatpush1.bf16.msra.mxu0 %v1910
          %1933 = vmatprep.subr.bf16.mxu0 0
          %1934 = vmatpush1.bf16.msra.mxu0 0
          %1935 = vmatprep.subr.bf16.mxu0 0
          %1936 = vmatpush1.bf16.msra.mxu0 0
          %1937 = vmatprep.subr.bf16.mxu0 0
          %1938 = vmatpush1.bf16.msra.mxu0 0
          %1939 = vmatprep.subr.bf16.mxu0 0
          %1940 = vmatpush1.bf16.msra.mxu0 0
          %1941 = vmatprep.subr.bf16.mxu0 0
          %1942 = vmatpush1.bf16.msra.mxu0 0
          %1943 = vmatprep.subr.bf16.mxu0 0
          %1944 = vmatpush1.bf16.msra.mxu0 0
          %1945 = vmatprep.subr.bf16.mxu0 0
          %1946 = vmatpush1.bf16.msra.mxu0 0
          %1947 = vmatprep.subr.bf16.mxu0 0
          %1948 = vmatpush1.bf16.msra.mxu0 0
          %1949 = vmatprep.subr.bf16.mxu0 0
          %1950 = vmatpush1.bf16.msra.mxu0 0
          %1951 = vmatprep.subr.bf16.mxu0 0
          %1952 = vmatpush1.bf16.msra.mxu0 0
          %1953 = vmatprep.subr.bf16.mxu0 0
          %1954 = vmatpush1.bf16.msra.mxu0 0
          %1955 = vmatprep.mubr.bf16.mxu0 0
          %1956 = vmatmul.mubr.bf16.gmra.mrb[0].mxu0 %v1918
          %v1957 = vpop.f32.mrb[0].mxu0
          %v1958 = vadd.f32 %v1884, %v1957
          %v1959 = vpop.f32.mrb[0].mxu0
          %v1960 = vpop.f32.mrb[0].mxu0
          %v1961 = vadd.f32 %v1884, %v1960
          %v1962 = vpop.f32.mrb[0].mxu0
          %1963 = vmatprep.mubr.bf16.mxu0 0
          %1964 = vmatmul.mubr.bf16.gmra.mrb[0].mxu0 %v1921
          %v1965 = vpop.f32.mrb[0].mxu0
          %v1966 = vadd.f32 %v1884, %v1965
          %v1967 = vpop.f32.mrb[0].mxu0
          %v1968 = vpop.f32.mrb[0].mxu0
          %v1969 = vadd.f32 %v1884, %v1968
          %v1970 = vpop.f32.mrb[0].mxu0
          %1971 = vdwg.mxu0
          %1972 = vst [vmem:[#allocation2] sm:$0xff] %v1958
          %1973 = vst [vmem:[#allocation2 + $0x8] sm:$0xff] %v1961
          %1974 = vst [vmem:[#allocation2 + $0x10] sm:$0xff] %v1966
          %1975 = vst [vmem:[#allocation2 + $0x18] sm:$0xff] %v1969
        $region232: #{conformer_apply.1} parent=171 // pred_fallthru
          _
        %v1976 = vld [vmem:[#allocation2] sm:$0xff]
        %v1977 = vld [vmem:[#allocation2 + $0x8] sm:$0xff]
        %v1978 = vld [vmem:[#allocation2 + $0x10] sm:$0xff]
        %v1979 = vld [vmem:[#allocation2 + $0x18] sm:$0xff]
        %v1980 = vld [vmem:[%s1789] sm:$0x1]
        %v1981 = vld [vmem:[%s1792] sm:$0x1]
        %1982 = vadd.xlane.f32.xlu0 %v1976
        %v1983 = vpop.xlane.xlu0 %1982
        %1984 = vadd.xlane.f32.xlu0 %v1977
        %v1985 = vpop.xlane.xlu0 %1984
        %1986 = vadd.xlane.f32.xlu0 %v1978
        %v1987 = vpop.xlane.xlu0 %1986
        %1988 = vadd.xlane.f32.xlu0 %v1979
        %v1989 = vpop.xlane.xlu0 %1988
        %v1990 = vrcp.pop 128.0
        %v1991 = vmul.f32 %v1983, %v1990
        %v1992 = vmul.f32 %v1985, %v1990
        %v1993 = vmul.f32 %v1987, %v1990
        %v1994 = vmul.f32 %v1989, %v1990
        %v1995 = vsub.f32 %v1976, %v1991
        %v1996 = vsub.f32 %v1977, %v1992
        %v1997 = vsub.f32 %v1978, %v1993
        %v1998 = vsub.f32 %v1979, %v1994
        %v1999 = vmul.f32 %v1995, %v1995
        %v2000 = vmul.f32 %v1996, %v1996
        %v2001 = vmul.f32 %v1997, %v1997
        %v2002 = vmul.f32 %v1998, %v1998
        %2003 = vadd.xlane.f32.xlu0 %v1999
        %v2004 = vpop.xlane.xlu0 %2003
        %2005 = vadd.xlane.f32.xlu0 %v2000
        %v2006 = vpop.xlane.xlu0 %2005
        %2007 = vadd.xlane.f32.xlu0 %v2001
        %v2008 = vpop.xlane.xlu0 %2007
        %2009 = vadd.xlane.f32.xlu0 %v2002
        %v2010 = vpop.xlane.xlu0 %2009
        %v2011 = vmul.f32 %v2004, %v1990
        %v2012 = vmul.f32 %v2006, %v1990
        %v2013 = vmul.f32 %v2008, %v1990
        %v2014 = vmul.f32 %v2010, %v1990
        %v2015 = vadd.f32 %v2011, 1e-05
        %v2016 = vadd.f32 %v2012, 1e-05
        %v2017 = vadd.f32 %v2013, 1e-05
        %v2018 = vadd.f32 %v2014, 1e-05
        %v2019 = vrsqrt.pop %v2015
        %v2020 = vrsqrt.pop %v2016
        %v2021 = vrsqrt.pop %v2017
        %v2022 = vrsqrt.pop %v2018
        %v2023 = vmul.f32 %v1995, %v2019
        %v2024 = vmul.f32 %v1996, %v2020
        %v2025 = vmul.f32 %v1997, %v2021
        %v2026 = vmul.f32 %v1998, %v2022
        %v2028 = vlaneseq
        %v2029 = vshrl.u32 %v2028, 7
        %v2030 = vsub.s32 0, %v2029
        %v2031 = vrot.slane %v1980, %v2030
        %v2033 = vmul.f32 %v2023, %v2031
        %v2034 = vmul.f32 %v2024, %v2031
        %v2035 = vmul.f32 %v2025, %v2031
        %v2036 = vmul.f32 %v2026, %v2031
        %v2038 = vlaneseq
        %v2039 = vshrl.u32 %v2038, 7
        %v2040 = vsub.s32 0, %v2039
        %v2041 = vrot.slane %v1981, %v2040
        %v2043 = vadd.f32 %v2033, %v2041
        %v2044 = vadd.f32 %v2034, %v2041
        %v2045 = vadd.f32 %v2035, %v2041
        %v2046 = vadd.f32 %v2036, %v2041
        %v2047 = vpack.c.bf16 %v2044, %v2043
        %v2048 = vpack.c.bf16 %v2046, %v2045
        %v2049 = vld [vmem:[%s1506] sm:$0xff]
        %v2050 = vld [vmem:[%s1506 + $0x8] sm:$0xff]
        %v2051 = vld [vmem:[%s1506 + $0x10] sm:$0xff]
        %v2052 = vld [vmem:[%s1506 + $0x18] sm:$0xff]
        %v2053 = vld [vmem:[%s1506 + $0x20] sm:$0xff]
        %v2054 = vld [vmem:[%s1506 + $0x28] sm:$0xff]
        %v2055 = vld [vmem:[%s1506 + $0x30] sm:$0xff]
        %v2056 = vld [vmem:[%s1506 + $0x38] sm:$0xff]
        %v2057 = vld [vmem:[%s1506 + $0x40] sm:$0xff]
        %v2058 = vld [vmem:[%s1506 + $0x48] sm:$0xff]
        %v2059 = vld [vmem:[%s1506 + $0x50] sm:$0xff]
        %v2060 = vld [vmem:[%s1506 + $0x58] sm:$0xff]
        %v2061 = vld [vmem:[%s1506 + $0x60] sm:$0xff]
        %v2062 = vld [vmem:[%s1506 + $0x68] sm:$0xff]
        %v2063 = vld [vmem:[%s1506 + $0x70] sm:$0xff]
        %v2064 = vld [vmem:[%s1506 + $0x78] sm:$0xff]
        %v2065 = vld [vmem:[%s1506 + $0x80] sm:$0xff]
        %v2066 = vld [vmem:[%s1506 + $0x88] sm:$0xff]
        %v2067 = vld [vmem:[%s1506 + $0x90] sm:$0xff]
        %v2068 = vld [vmem:[%s1506 + $0x98] sm:$0xff]
        %v2069 = vld [vmem:[%s1506 + $0xa0] sm:$0xff]
        %v2070 = vld [vmem:[%s1506 + $0xa8] sm:$0xff]
        %v2071 = vld [vmem:[%s1506 + $0xb0] sm:$0xff]
        %v2072 = vld [vmem:[%s1506 + $0xb8] sm:$0xff]
        %v2073 = vld [vmem:[%s1506 + $0xc0] sm:$0xff]
        %v2074 = vld [vmem:[%s1506 + $0xc8] sm:$0xff]
        %v2075 = vld [vmem:[%s1506 + $0xd0] sm:$0xff]
        %v2076 = vld [vmem:[%s1506 + $0xd8] sm:$0xff]
        %v2077 = vld [vmem:[%s1506 + $0xe0] sm:$0xff]
        %v2078 = vld [vmem:[%s1506 + $0xe8] sm:$0xff]
        %v2079 = vld [vmem:[%s1506 + $0xf0] sm:$0xff]
        %v2080 = vld [vmem:[%s1506 + $0xf8] sm:$0xff]
        %v2081 = vld [vmem:[%s1796] sm:$0xf]
        %v2083 = vlaneseq
        %v2084 = vshrl.u32 %v2083, 7
        %v2085 = vsub.s32 0, %v2084
        %v2086 = vrot.slane %v2081, %v2085
        %v2087 = vlaneseq
        %v2088 = vshrl.u32 %v2087, 7
        %v2089 = vsub.s32 1, %v2088
        %v2090 = vrot.slane %v2081, %v2089
        %v2091 = vlaneseq
        %v2092 = vshrl.u32 %v2091, 7
        %v2093 = vsub.s32 2, %v2092
        %v2094 = vrot.slane %v2081, %v2093
        %v2095 = vlaneseq
        %v2096 = vshrl.u32 %v2095, 7
        %v2097 = vsub.s32 3, %v2096
        %v2098 = vrot.slane %v2081, %v2097
        %v2135 = vunpack.c.l.b16 %v2049
        %v2136 = vunpack.c.h.b16 %v2049
        %v2137 = vunpack.c.l.b16 %v2050
        %v2138 = vunpack.c.h.b16 %v2050
        %v2139 = vunpack.c.l.b16 %v2051
        %v2140 = vunpack.c.h.b16 %v2051
        %v2141 = vunpack.c.l.b16 %v2052
        %v2142 = vunpack.c.h.b16 %v2052
        %v2143 = vunpack.c.l.b16 %v2053
        %v2144 = vunpack.c.h.b16 %v2053
        %v2145 = vunpack.c.l.b16 %v2054
        %v2146 = vunpack.c.h.b16 %v2054
        %v2147 = vunpack.c.l.b16 %v2055
        %v2148 = vunpack.c.h.b16 %v2055
        %v2149 = vunpack.c.l.b16 %v2056
        %v2150 = vunpack.c.h.b16 %v2056
        %v2151 = vunpack.c.l.b16 %v2057
        %v2152 = vunpack.c.h.b16 %v2057
        %v2153 = vunpack.c.l.b16 %v2058
        %v2154 = vunpack.c.h.b16 %v2058
        %v2155 = vunpack.c.l.b16 %v2059
        %v2156 = vunpack.c.h.b16 %v2059
        %v2157 = vunpack.c.l.b16 %v2060
        %v2158 = vunpack.c.h.b16 %v2060
        %v2159 = vunpack.c.l.b16 %v2061
        %v2160 = vunpack.c.h.b16 %v2061
        %v2161 = vunpack.c.l.b16 %v2062
        %v2162 = vunpack.c.h.b16 %v2062
        %v2163 = vunpack.c.l.b16 %v2063
        %v2164 = vunpack.c.h.b16 %v2063
        %v2165 = vunpack.c.l.b16 %v2064
        %v2166 = vunpack.c.h.b16 %v2064
        %v2167 = vunpack.c.l.b16 %v2065
        %v2168 = vunpack.c.h.b16 %v2065
        %v2169 = vunpack.c.l.b16 %v2066
        %v2170 = vunpack.c.h.b16 %v2066
        %v2171 = vunpack.c.l.b16 %v2067
        %v2172 = vunpack.c.h.b16 %v2067
        %v2173 = vunpack.c.l.b16 %v2068
        %v2174 = vunpack.c.h.b16 %v2068
        %v2175 = vunpack.c.l.b16 %v2069
        %v2176 = vunpack.c.h.b16 %v2069
        %v2177 = vunpack.c.l.b16 %v2070
        %v2178 = vunpack.c.h.b16 %v2070
        %v2179 = vunpack.c.l.b16 %v2071
        %v2180 = vunpack.c.h.b16 %v2071
        %v2181 = vunpack.c.l.b16 %v2072
        %v2182 = vunpack.c.h.b16 %v2072
        %v2183 = vunpack.c.l.b16 %v2073
        %v2184 = vunpack.c.h.b16 %v2073
        %v2185 = vunpack.c.l.b16 %v2074
        %v2186 = vunpack.c.h.b16 %v2074
        %v2187 = vunpack.c.l.b16 %v2075
        %v2188 = vunpack.c.h.b16 %v2075
        %v2189 = vunpack.c.l.b16 %v2076
        %v2190 = vunpack.c.h.b16 %v2076
        %v2191 = vunpack.c.l.b16 %v2077
        %v2192 = vunpack.c.h.b16 %v2077
        %v2193 = vunpack.c.l.b16 %v2078
        %v2194 = vunpack.c.h.b16 %v2078
        %v2195 = vunpack.c.l.b16 %v2079
        %v2196 = vunpack.c.h.b16 %v2079
        %v2197 = vunpack.c.l.b16 %v2080
        %v2198 = vunpack.c.h.b16 %v2080
        %v2199 = vpack.c.b16 %v2139, %v2135
        %v2200 = vpack.c.b16 %v2140, %v2136
        %v2201 = vpack.c.b16 %v2141, %v2137
        %v2202 = vpack.c.b16 %v2142, %v2138
        %v2203 = vpack.c.b16 %v2147, %v2143
        %v2204 = vpack.c.b16 %v2148, %v2144
        %v2205 = vpack.c.b16 %v2149, %v2145
        %v2206 = vpack.c.b16 %v2150, %v2146
        %v2207 = vpack.c.b16 %v2155, %v2151
        %v2208 = vpack.c.b16 %v2156, %v2152
        %v2209 = vpack.c.b16 %v2157, %v2153
        %v2210 = vpack.c.b16 %v2158, %v2154
        %v2211 = vpack.c.b16 %v2163, %v2159
        %v2212 = vpack.c.b16 %v2164, %v2160
        %v2213 = vpack.c.b16 %v2165, %v2161
        %v2214 = vpack.c.b16 %v2166, %v2162
        %v2215 = vpack.c.b16 %v2171, %v2167
        %v2216 = vpack.c.b16 %v2172, %v2168
        %v2217 = vpack.c.b16 %v2173, %v2169
        %v2218 = vpack.c.b16 %v2174, %v2170
        %v2219 = vpack.c.b16 %v2179, %v2175
        %v2220 = vpack.c.b16 %v2180, %v2176
        %v2221 = vpack.c.b16 %v2181, %v2177
        %v2222 = vpack.c.b16 %v2182, %v2178
        %v2223 = vpack.c.b16 %v2187, %v2183
        %v2224 = vpack.c.b16 %v2188, %v2184
        %v2225 = vpack.c.b16 %v2189, %v2185
        %v2226 = vpack.c.b16 %v2190, %v2186
        %v2227 = vpack.c.b16 %v2195, %v2191
        %v2228 = vpack.c.b16 %v2196, %v2192
        %v2229 = vpack.c.b16 %v2197, %v2193
        %v2230 = vpack.c.b16 %v2198, %v2194
        %2263 = vmatprep.subr.bf16.mxu0 %v2200
        %2264 = vmatpush1.bf16.msra.mxu0 %v2199
        %2265 = vmatprep.subr.bf16.mxu0 %v2204
        %2266 = vmatpush1.bf16.msra.mxu0 %v2203
        %2267 = vmatprep.subr.bf16.mxu0 %v2208
        %2268 = vmatpush1.bf16.msra.mxu0 %v2207
        %2269 = vmatprep.subr.bf16.mxu0 %v2212
        %2270 = vmatpush1.bf16.msra.mxu0 %v2211
        %2271 = vmatprep.subr.bf16.mxu0 %v2216
        %2272 = vmatpush1.bf16.msra.mxu0 %v2215
        %2273 = vmatprep.subr.bf16.mxu0 %v2220
        %2274 = vmatpush1.bf16.msra.mxu0 %v2219
        %2275 = vmatprep.subr.bf16.mxu0 %v2224
        %2276 = vmatpush1.bf16.msra.mxu0 %v2223
        %2277 = vmatprep.subr.bf16.mxu0 %v2228
        %2278 = vmatpush1.bf16.msra.mxu0 %v2227
        %2279 = vmatprep.subr.bf16.mxu0 0
        %2280 = vmatpush1.bf16.msra.mxu0 0
        %2281 = vmatprep.subr.bf16.mxu0 0
        %2282 = vmatpush1.bf16.msra.mxu0 0
        %2283 = vmatprep.subr.bf16.mxu0 0
        %2284 = vmatpush1.bf16.msra.mxu0 0
        %2285 = vmatprep.subr.bf16.mxu0 0
        %2286 = vmatpush1.bf16.msra.mxu0 0
        %2287 = vmatprep.subr.bf16.mxu0 0
        %2288 = vmatpush1.bf16.msra.mxu0 0
        %2289 = vmatprep.subr.bf16.mxu0 0
        %2290 = vmatpush1.bf16.msra.mxu0 0
        %2291 = vmatprep.subr.bf16.mxu0 0
        %2292 = vmatpush1.bf16.msra.mxu0 0
        %2293 = vmatprep.subr.bf16.mxu0 0
        %2294 = vmatpush1.bf16.msra.mxu0 0
        %2295 = vmatprep.mubr.bf16.mxu0 0
        %2296 = vmatmul.mubr.bf16.gmra.mrb[0].mxu0 %v2047
        %v2297 = vpop.f32.mrb[0].mxu0
        %v2298 = vadd.f32 %v2086, %v2297
        %v2299 = vpop.f32.mrb[0].mxu0
        %v2300 = vadd.f32 %v2090, %v2299
        %v2301 = vpop.f32.mrb[0].mxu0
        %v2302 = vadd.f32 %v2086, %v2301
        %v2303 = vpop.f32.mrb[0].mxu0
        %v2304 = vadd.f32 %v2090, %v2303
        %2305 = vmatprep.mubr.bf16.mxu0 0
        %2306 = vmatmul.mubr.bf16.gmra.mrb[0].mxu0 %v2048
        %v2307 = vpop.f32.mrb[0].mxu0
        %v2308 = vadd.f32 %v2086, %v2307
        %v2309 = vpop.f32.mrb[0].mxu0
        %v2310 = vadd.f32 %v2090, %v2309
        %v2311 = vpop.f32.mrb[0].mxu0
        %v2312 = vadd.f32 %v2086, %v2311
        %v2313 = vpop.f32.mrb[0].mxu0
        %v2314 = vadd.f32 %v2090, %v2313
        %2315 = vdwg.mxu0
        %2316 = vmatprep.subr.bf16.mxu0 %v2202
        %2317 = vmatpush1.bf16.msra.mxu0 %v2201
        %2318 = vmatprep.subr.bf16.mxu0 %v2206
        %2319 = vmatpush1.bf16.msra.mxu0 %v2205
        %2320 = vmatprep.subr.bf16.mxu0 %v2210
        %2321 = vmatpush1.bf16.msra.mxu0 %v2209
        %2322 = vmatprep.subr.bf16.mxu0 %v2214
        %2323 = vmatpush1.bf16.msra.mxu0 %v2213
        %2324 = vmatprep.subr.bf16.mxu0 %v2218
        %2325 = vmatpush1.bf16.msra.mxu0 %v2217
        %2326 = vmatprep.subr.bf16.mxu0 %v2222
        %2327 = vmatpush1.bf16.msra.mxu0 %v2221
        %2328 = vmatprep.subr.bf16.mxu0 %v2226
        %2329 = vmatpush1.bf16.msra.mxu0 %v2225
        %2330 = vmatprep.subr.bf16.mxu0 %v2230
        %2331 = vmatpush1.bf16.msra.mxu0 %v2229
        %2332 = vmatprep.subr.bf16.mxu0 0
        %2333 = vmatpush1.bf16.msra.mxu0 0
        %2334 = vmatprep.subr.bf16.mxu0 0
        %2335 = vmatpush1.bf16.msra.mxu0 0
        %2336 = vmatprep.subr.bf16.mxu0 0
        %2337 = vmatpush1.bf16.msra.mxu0 0
        %2338 = vmatprep.subr.bf16.mxu0 0
        %2339 = vmatpush1.bf16.msra.mxu0 0
        %2340 = vmatprep.subr.bf16.mxu0 0
        %2341 = vmatpush1.bf16.msra.mxu0 0
        %2342 = vmatprep.subr.bf16.mxu0 0
        %2343 = vmatpush1.bf16.msra.mxu0 0
        %2344 = vmatprep.subr.bf16.mxu0 0
        %2345 = vmatpush1.bf16.msra.mxu0 0
        %2346 = vmatprep.subr.bf16.mxu0 0
        %2347 = vmatpush1.bf16.msra.mxu0 0
        %2348 = vmatprep.mubr.bf16.mxu0 0
        %2349 = vmatmul.mubr.bf16.gmra.mrb[0].mxu0 %v2047
        %v2350 = vpop.f32.mrb[0].mxu0
        %v2351 = vadd.f32 %v2094, %v2350
        %v2352 = vpop.f32.mrb[0].mxu0
        %v2353 = vadd.f32 %v2098, %v2352
        %v2354 = vpop.f32.mrb[0].mxu0
        %v2355 = vadd.f32 %v2094, %v2354
        %v2356 = vpop.f32.mrb[0].mxu0
        %v2357 = vadd.f32 %v2098, %v2356
        %2358 = vmatprep.mubr.bf16.mxu0 0
        %2359 = vmatmul.mubr.bf16.gmra.mrb[0].mxu0 %v2048
        %v2360 = vpop.f32.mrb[0].mxu0
        %v2361 = vadd.f32 %v2094, %v2360
        %v2362 = vpop.f32.mrb[0].mxu0
        %v2363 = vadd.f32 %v2098, %v2362
        %v2364 = vpop.f32.mrb[0].mxu0
        %v2365 = vadd.f32 %v2094, %v2364
        %v2366 = vpop.f32.mrb[0].mxu0
        %v2367 = vadd.f32 %v2098, %v2366
        %2368 = vdwg.mxu0
        %v2369 = vmax.f32 %v2298, 0.0
        %v2370 = vmax.f32 %v2300, 0.0
        %v2371 = vmax.f32 %v2351, 0.0
        %v2372 = vmax.f32 %v2353, 0.0
        %v2373 = vmax.f32 %v2302, 0.0
        %v2374 = vmax.f32 %v2304, 0.0
        %v2375 = vmax.f32 %v2355, 0.0
        %v2376 = vmax.f32 %v2357, 0.0
        %v2377 = vmax.f32 %v2308, 0.0
        %v2378 = vmax.f32 %v2310, 0.0
        %v2379 = vmax.f32 %v2361, 0.0
        %v2380 = vmax.f32 %v2363, 0.0
        %v2381 = vmax.f32 %v2312, 0.0
        %v2382 = vmax.f32 %v2314, 0.0
        %v2383 = vmax.f32 %v2365, 0.0
        %v2384 = vmax.f32 %v2367, 0.0
        %v2385 = vpack.c.bf16 %v2373, %v2369
        %v2386 = vpack.c.bf16 %v2374, %v2370
        %v2387 = vpack.c.bf16 %v2375, %v2371
        %v2388 = vpack.c.bf16 %v2376, %v2372
        %v2389 = vpack.c.bf16 %v2381, %v2377
        %v2390 = vpack.c.bf16 %v2382, %v2378
        %v2391 = vpack.c.bf16 %v2383, %v2379
        %v2392 = vpack.c.bf16 %v2384, %v2380
        %v2393 = vld [vmem:[%s1515] sm:$0xf]
        %v2394 = vld [vmem:[%s1515 + $0x4] sm:$0xf]
        %v2395 = vld [vmem:[%s1515 + $0x8] sm:$0xf]
        %v2396 = vld [vmem:[%s1515 + $0xc] sm:$0xf]
        %v2397 = vld [vmem:[%s1515 + $0x10] sm:$0xf]
        %v2398 = vld [vmem:[%s1515 + $0x14] sm:$0xf]
        %v2399 = vld [vmem:[%s1515 + $0x18] sm:$0xf]
        %v2400 = vld [vmem:[%s1515 + $0x1c] sm:$0xf]
        %v2401 = vld [vmem:[%s1515 + $0x20] sm:$0xf]
        %v2402 = vld [vmem:[%s1515 + $0x24] sm:$0xf]
        %v2403 = vld [vmem:[%s1515 + $0x28] sm:$0xf]
        %v2404 = vld [vmem:[%s1515 + $0x2c] sm:$0xf]
        %v2405 = vld [vmem:[%s1515 + $0x30] sm:$0xf]
        %v2406 = vld [vmem:[%s1515 + $0x34] sm:$0xf]
        %v2407 = vld [vmem:[%s1515 + $0x38] sm:$0xf]
        %v2408 = vld [vmem:[%s1515 + $0x3c] sm:$0xf]
        %v2409 = vld [vmem:[%s1515 + $0x40] sm:$0xf]
        %v2410 = vld [vmem:[%s1515 + $0x44] sm:$0xf]
        %v2411 = vld [vmem:[%s1515 + $0x48] sm:$0xf]
        %v2412 = vld [vmem:[%s1515 + $0x4c] sm:$0xf]
        %v2413 = vld [vmem:[%s1515 + $0x50] sm:$0xf]
        %v2414 = vld [vmem:[%s1515 + $0x54] sm:$0xf]
        %v2415 = vld [vmem:[%s1515 + $0x58] sm:$0xf]
        %v2416 = vld [vmem:[%s1515 + $0x5c] sm:$0xf]
        %v2417 = vld [vmem:[%s1515 + $0x60] sm:$0xf]
        %v2418 = vld [vmem:[%s1515 + $0x64] sm:$0xf]
        %v2419 = vld [vmem:[%s1515 + $0x68] sm:$0xf]
        %v2420 = vld [vmem:[%s1515 + $0x6c] sm:$0xf]
        %v2421 = vld [vmem:[%s1515 + $0x70] sm:$0xf]
        %v2422 = vld [vmem:[%s1515 + $0x74] sm:$0xf]
        %v2423 = vld [vmem:[%s1515 + $0x78] sm:$0xf]
        %v2424 = vld [vmem:[%s1515 + $0x7c] sm:$0xf]
        %v2425 = vld [vmem:[%s1515 + $0x80] sm:$0xf]
        %v2426 = vld [vmem:[%s1515 + $0x84] sm:$0xf]
        %v2427 = vld [vmem:[%s1515 + $0x88] sm:$0xf]
        %v2428 = vld [vmem:[%s1515 + $0x8c] sm:$0xf]
        %v2429 = vld [vmem:[%s1515 + $0x90] sm:$0xf]
        %v2430 = vld [vmem:[%s1515 + $0x94] sm:$0xf]
        %v2431 = vld [vmem:[%s1515 + $0x98] sm:$0xf]
        %v2432 = vld [vmem:[%s1515 + $0x9c] sm:$0xf]
        %v2433 = vld [vmem:[%s1515 + $0xa0] sm:$0xf]
        %v2434 = vld [vmem:[%s1515 + $0xa4] sm:$0xf]
        %v2435 = vld [vmem:[%s1515 + $0xa8] sm:$0xf]
        %v2436 = vld [vmem:[%s1515 + $0xac] sm:$0xf]
        %v2437 = vld [vmem:[%s1515 + $0xb0] sm:$0xf]
        %v2438 = vld [vmem:[%s1515 + $0xb4] sm:$0xf]
        %v2439 = vld [vmem:[%s1515 + $0xb8] sm:$0xf]
        %v2440 = vld [vmem:[%s1515 + $0xbc] sm:$0xf]
        %v2441 = vld [vmem:[%s1515 + $0xc0] sm:$0xf]
        %v2442 = vld [vmem:[%s1515 + $0xc4] sm:$0xf]
        %v2443 = vld [vmem:[%s1515 + $0xc8] sm:$0xf]
        %v2444 = vld [vmem:[%s1515 + $0xcc] sm:$0xf]
        %v2445 = vld [vmem:[%s1515 + $0xd0] sm:$0xf]
        %v2446 = vld [vmem:[%s1515 + $0xd4] sm:$0xf]
        %v2447 = vld [vmem:[%s1515 + $0xd8] sm:$0xf]
        %v2448 = vld [vmem:[%s1515 + $0xdc] sm:$0xf]
        %v2449 = vld [vmem:[%s1515 + $0xe0] sm:$0xf]
        %v2450 = vld [vmem:[%s1515 + $0xe4] sm:$0xf]
        %v2451 = vld [vmem:[%s1515 + $0xe8] sm:$0xf]
        %v2452 = vld [vmem:[%s1515 + $0xec] sm:$0xf]
        %v2453 = vld [vmem:[%s1515 + $0xf0] sm:$0xf]
        %v2454 = vld [vmem:[%s1515 + $0xf4] sm:$0xf]
        %v2455 = vld [vmem:[%s1515 + $0xf8] sm:$0xf]
        %v2456 = vld [vmem:[%s1515 + $0xfc] sm:$0xf]
        %v2457 = vld [vmem:[%s1799] sm:$0x1]
        %v2459 = vlaneseq
        %v2460 = vshrl.u32 %v2459, 7
        %v2461 = vsub.s32 0, %v2460
        %v2462 = vrot.slane %v2457, %v2461
        %v2528 = vunpack.c.l.b16 %v2393
        %v2529 = vunpack.c.l.b16 %v2394
        %v2530 = vunpack.c.l.b16 %v2395
        %v2531 = vunpack.c.l.b16 %v2396
        %v2532 = vunpack.c.l.b16 %v2397
        %v2533 = vunpack.c.l.b16 %v2398
        %v2534 = vunpack.c.l.b16 %v2399
        %v2535 = vunpack.c.l.b16 %v2400
        %v2536 = vunpack.c.l.b16 %v2401
        %v2537 = vunpack.c.l.b16 %v2402
        %v2538 = vunpack.c.l.b16 %v2403
        %v2539 = vunpack.c.l.b16 %v2404
        %v2540 = vunpack.c.l.b16 %v2405
        %v2541 = vunpack.c.l.b16 %v2406
        %v2542 = vunpack.c.l.b16 %v2407
        %v2543 = vunpack.c.l.b16 %v2408
        %v2544 = vunpack.c.l.b16 %v2409
        %v2545 = vunpack.c.l.b16 %v2410
        %v2546 = vunpack.c.l.b16 %v2411
        %v2547 = vunpack.c.l.b16 %v2412
        %v2548 = vunpack.c.l.b16 %v2413
        %v2549 = vunpack.c.l.b16 %v2414
        %v2550 = vunpack.c.l.b16 %v2415
        %v2551 = vunpack.c.l.b16 %v2416
        %v2552 = vunpack.c.l.b16 %v2417
        %v2553 = vunpack.c.l.b16 %v2418
        %v2554 = vunpack.c.l.b16 %v2419
        %v2555 = vunpack.c.l.b16 %v2420
        %v2556 = vunpack.c.l.b16 %v2421
        %v2557 = vunpack.c.l.b16 %v2422
        %v2558 = vunpack.c.l.b16 %v2423
        %v2559 = vunpack.c.l.b16 %v2424
        %v2560 = vunpack.c.l.b16 %v2425
        %v2561 = vunpack.c.l.b16 %v2426
        %v2562 = vunpack.c.l.b16 %v2427
        %v2563 = vunpack.c.l.b16 %v2428
        %v2564 = vunpack.c.l.b16 %v2429
        %v2565 = vunpack.c.l.b16 %v2430
        %v2566 = vunpack.c.l.b16 %v2431
        %v2567 = vunpack.c.l.b16 %v2432
        %v2568 = vunpack.c.l.b16 %v2433
        %v2569 = vunpack.c.l.b16 %v2434
        %v2570 = vunpack.c.l.b16 %v2435
        %v2571 = vunpack.c.l.b16 %v2436
        %v2572 = vunpack.c.l.b16 %v2437
        %v2573 = vunpack.c.l.b16 %v2438
        %v2574 = vunpack.c.l.b16 %v2439
        %v2575 = vunpack.c.l.b16 %v2440
        %v2576 = vunpack.c.l.b16 %v2441
        %v2577 = vunpack.c.l.b16 %v2442
        %v2578 = vunpack.c.l.b16 %v2443
        %v2579 = vunpack.c.l.b16 %v2444
        %v2580 = vunpack.c.l.b16 %v2445
        %v2581 = vunpack.c.l.b16 %v2446
        %v2582 = vunpack.c.l.b16 %v2447
        %v2583 = vunpack.c.l.b16 %v2448
        %v2584 = vunpack.c.l.b16 %v2449
        %v2585 = vunpack.c.l.b16 %v2450
        %v2586 = vunpack.c.l.b16 %v2451
        %v2587 = vunpack.c.l.b16 %v2452
        %v2588 = vunpack.c.l.b16 %v2453
        %v2589 = vunpack.c.l.b16 %v2454
        %v2590 = vunpack.c.l.b16 %v2455
        %v2591 = vunpack.c.l.b16 %v2456
        %v2592 = vpack.c.b16 %v2529, %v2528
        %v2593 = vpack.c.b16 %v2531, %v2530
        %v2594 = vpack.c.b16 %v2533, %v2532
        %v2595 = vpack.c.b16 %v2535, %v2534
        %v2596 = vpack.c.b16 %v2537, %v2536
        %v2597 = vpack.c.b16 %v2539, %v2538
        %v2598 = vpack.c.b16 %v2541, %v2540
        %v2599 = vpack.c.b16 %v2543, %v2542
        %v2600 = vpack.c.b16 %v2545, %v2544
        %v2601 = vpack.c.b16 %v2547, %v2546
        %v2602 = vpack.c.b16 %v2549, %v2548
        %v2603 = vpack.c.b16 %v2551, %v2550
        %v2604 = vpack.c.b16 %v2553, %v2552
        %v2605 = vpack.c.b16 %v2555, %v2554
        %v2606 = vpack.c.b16 %v2557, %v2556
        %v2607 = vpack.c.b16 %v2559, %v2558
        %v2608 = vpack.c.b16 %v2561, %v2560
        %v2609 = vpack.c.b16 %v2563, %v2562
        %v2610 = vpack.c.b16 %v2565, %v2564
        %v2611 = vpack.c.b16 %v2567, %v2566
        %v2612 = vpack.c.b16 %v2569, %v2568
        %v2613 = vpack.c.b16 %v2571, %v2570
        %v2614 = vpack.c.b16 %v2573, %v2572
        %v2615 = vpack.c.b16 %v2575, %v2574
        %v2616 = vpack.c.b16 %v2577, %v2576
        %v2617 = vpack.c.b16 %v2579, %v2578
        %v2618 = vpack.c.b16 %v2581, %v2580
        %v2619 = vpack.c.b16 %v2583, %v2582
        %v2620 = vpack.c.b16 %v2585, %v2584
        %v2621 = vpack.c.b16 %v2587, %v2586
        %v2622 = vpack.c.b16 %v2589, %v2588
        %v2623 = vpack.c.b16 %v2591, %v2590
        %2656 = vmatprep.subr.bf16.mxu0 0
        %2657 = vmatpush1.bf16.msra.mxu0 %v2592
        %2658 = vmatprep.subr.bf16.mxu0 0
        %2659 = vmatpush1.bf16.msra.mxu0 %v2593
        %2660 = vmatprep.subr.bf16.mxu0 0
        %2661 = vmatpush1.bf16.msra.mxu0 %v2594
        %2662 = vmatprep.subr.bf16.mxu0 0
        %2663 = vmatpush1.bf16.msra.mxu0 %v2595
        %2664 = vmatprep.subr.bf16.mxu0 0
        %2665 = vmatpush1.bf16.msra.mxu0 %v2596
        %2666 = vmatprep.subr.bf16.mxu0 0
        %2667 = vmatpush1.bf16.msra.mxu0 %v2597
        %2668 = vmatprep.subr.bf16.mxu0 0
        %2669 = vmatpush1.bf16.msra.mxu0 %v2598
        %2670 = vmatprep.subr.bf16.mxu0 0
        %2671 = vmatpush1.bf16.msra.mxu0 %v2599
        %2672 = vmatprep.subr.bf16.mxu0 0
        %2673 = vmatpush1.bf16.msra.mxu0 %v2600
        %2674 = vmatprep.subr.bf16.mxu0 0
        %2675 = vmatpush1.bf16.msra.mxu0 %v2601
        %2676 = vmatprep.subr.bf16.mxu0 0
        %2677 = vmatpush1.bf16.msra.mxu0 %v2602
        %2678 = vmatprep.subr.bf16.mxu0 0
        %2679 = vmatpush1.bf16.msra.mxu0 %v2603
        %2680 = vmatprep.subr.bf16.mxu0 0
        %2681 = vmatpush1.bf16.msra.mxu0 %v2604
        %2682 = vmatprep.subr.bf16.mxu0 0
        %2683 = vmatpush1.bf16.msra.mxu0 %v2605
        %2684 = vmatprep.subr.bf16.mxu0 0
        %2685 = vmatpush1.bf16.msra.mxu0 %v2606
        %2686 = vmatprep.subr.bf16.mxu0 0
        %2687 = vmatpush1.bf16.msra.mxu0 %v2607
        %2688 = vmatprep.mubr.bf16.mxu0 %v2386
        %2689 = vmatmul.mubr.bf16.gmra.mrb[0].mxu0 %v2385
        %v2690 = vpop.f32.mrb[0].mxu0
        %v2691 = vadd.f32 %v2462, %v2690
        %v2692 = vpop.f32.mrb[0].mxu0
        %v2693 = vpop.f32.mrb[0].mxu0
        %v2694 = vadd.f32 %v2462, %v2693
        %v2695 = vpop.f32.mrb[0].mxu0
        %2696 = vmatprep.mubr.bf16.mxu0 %v2390
        %2697 = vmatmul.mubr.bf16.gmra.mrb[0].mxu0 %v2389
        %v2698 = vpop.f32.mrb[0].mxu0
        %v2699 = vadd.f32 %v2462, %v2698
        %v2700 = vpop.f32.mrb[0].mxu0
        %v2701 = vpop.f32.mrb[0].mxu0
        %v2702 = vadd.f32 %v2462, %v2701
        %v2703 = vpop.f32.mrb[0].mxu0
        %2704 = vdwg.mxu0
        %2705 = vmatprep.subr.bf16.mxu0 0
        %2706 = vmatpush1.bf16.msra.mxu0 %v2608
        %2707 = vmatprep.subr.bf16.mxu0 0
        %2708 = vmatpush1.bf16.msra.mxu0 %v2609
        %2709 = vmatprep.subr.bf16.mxu0 0
        %2710 = vmatpush1.bf16.msra.mxu0 %v2610
        %2711 = vmatprep.subr.bf16.mxu0 0
        %2712 = vmatpush1.bf16.msra.mxu0 %v2611
        %2713 = vmatprep.subr.bf16.mxu0 0
        %2714 = vmatpush1.bf16.msra.mxu0 %v2612
        %2715 = vmatprep.subr.bf16.mxu0 0
        %2716 = vmatpush1.bf16.msra.mxu0 %v2613
        %2717 = vmatprep.subr.bf16.mxu0 0
        %2718 = vmatpush1.bf16.msra.mxu0 %v2614
        %2719 = vmatprep.subr.bf16.mxu0 0
        %2720 = vmatpush1.bf16.msra.mxu0 %v2615
        %2721 = vmatprep.subr.bf16.mxu0 0
        %2722 = vmatpush1.bf16.msra.mxu0 %v2616
        %2723 = vmatprep.subr.bf16.mxu0 0
        %2724 = vmatpush1.bf16.msra.mxu0 %v2617
        %2725 = vmatprep.subr.bf16.mxu0 0
        %2726 = vmatpush1.bf16.msra.mxu0 %v2618
        %2727 = vmatprep.subr.bf16.mxu0 0
        %2728 = vmatpush1.bf16.msra.mxu0 %v2619
        %2729 = vmatprep.subr.bf16.mxu0 0
        %2730 = vmatpush1.bf16.msra.mxu0 %v2620
        %2731 = vmatprep.subr.bf16.mxu0 0
        %2732 = vmatpush1.bf16.msra.mxu0 %v2621
        %2733 = vmatprep.subr.bf16.mxu0 0
        %2734 = vmatpush1.bf16.msra.mxu0 %v2622
        %2735 = vmatprep.subr.bf16.mxu0 0
        %2736 = vmatpush1.bf16.msra.mxu0 %v2623
        %2737 = vmatprep.mubr.bf16.mxu0 %v2388
        %2738 = vmatmul.mubr.bf16.gmra.mrb[0].mxu0 %v2387
        %v2739 = vpop.f32.mrb[0].mxu0
        %v2740 = vadd.f32 %v2691, %v2739
        %v2741 = vpop.f32.mrb[0].mxu0
        %v2742 = vpop.f32.mrb[0].mxu0
        %v2743 = vadd.f32 %v2694, %v2742
        %v2744 = vpop.f32.mrb[0].mxu0
        %2745 = vmatprep.mubr.bf16.mxu0 %v2392
        %2746 = vmatmul.mubr.bf16.gmra.mrb[0].mxu0 %v2391
        %v2747 = vpop.f32.mrb[0].mxu0
        %v2748 = vadd.f32 %v2699, %v2747
        %v2749 = vpop.f32.mrb[0].mxu0
        %v2750 = vpop.f32.mrb[0].mxu0
        %v2751 = vadd.f32 %v2702, %v2750
        %v2752 = vpop.f32.mrb[0].mxu0
        %2753 = vdwg.mxu0
        %v2754 = vmul.f32 %v2740, 0.5
        %v2755 = vmul.f32 %v2743, 0.5
        %v2756 = vmul.f32 %v2748, 0.5
        %v2757 = vmul.f32 %v2751, 0.5
        %v2758 = vadd.f32 %v1976, %v2754
        %v2759 = vadd.f32 %v1977, %v2755
        %v2760 = vadd.f32 %v1978, %v2756
        %v2761 = vadd.f32 %v1979, %v2757
        %v2762 = vld [vmem:[%s1802] sm:$0x1]
        %v2763 = vld [vmem:[%s1805] sm:$0x1]
        %2764 = vadd.xlane.f32.xlu0 %v2758
        %v2765 = vpop.xlane.xlu0 %2764
        %2766 = vadd.xlane.f32.xlu0 %v2759
        %v2767 = vpop.xlane.xlu0 %2766
        %2768 = vadd.xlane.f32.xlu0 %v2760
        %v2769 = vpop.xlane.xlu0 %2768
        %2770 = vadd.xlane.f32.xlu0 %v2761
        %v2771 = vpop.xlane.xlu0 %2770
        %v2772 = vmul.f32 %v2765, %v1990
        %v2773 = vmul.f32 %v2767, %v1990
        %v2774 = vmul.f32 %v2769, %v1990
        %v2775 = vmul.f32 %v2771, %v1990
        %v2776 = vsub.f32 %v2758, %v2772
        %v2777 = vsub.f32 %v2759, %v2773
        %v2778 = vsub.f32 %v2760, %v2774
        %v2779 = vsub.f32 %v2761, %v2775
        %v2780 = vmul.f32 %v2776, %v2776
        %v2781 = vmul.f32 %v2777, %v2777
        %v2782 = vmul.f32 %v2778, %v2778
        %v2783 = vmul.f32 %v2779, %v2779
        %2784 = vadd.xlane.f32.xlu0 %v2780
        %v2785 = vpop.xlane.xlu0 %2784
        %2786 = vadd.xlane.f32.xlu0 %v2781
        %v2787 = vpop.xlane.xlu0 %2786
        %2788 = vadd.xlane.f32.xlu0 %v2782
        %v2789 = vpop.xlane.xlu0 %2788
        %2790 = vadd.xlane.f32.xlu0 %v2783
        %v2791 = vpop.xlane.xlu0 %2790
        %v2792 = vmul.f32 %v2785, %v1990
        %v2793 = vmul.f32 %v2787, %v1990
        %v2794 = vmul.f32 %v2789, %v1990
        %v2795 = vmul.f32 %v2791, %v1990
        %v2796 = vadd.f32 %v2792, 1e-05
        %v2797 = vadd.f32 %v2793, 1e-05
        %v2798 = vadd.f32 %v2794, 1e-05
        %v2799 = vadd.f32 %v2795, 1e-05
        %v2800 = vrsqrt.pop %v2796
        %v2801 = vrsqrt.pop %v2797
        %v2802 = vrsqrt.pop %v2798
        %v2803 = vrsqrt.pop %v2799
        %v2804 = vmul.f32 %v2776, %v2800
        %v2805 = vmul.f32 %v2777, %v2801
        %v2806 = vmul.f32 %v2778, %v2802
        %v2807 = vmul.f32 %v2779, %v2803
        %v2809 = vlaneseq
        %v2810 = vshrl.u32 %v2809, 7
        %v2811 = vsub.s32 0, %v2810
        %v2812 = vrot.slane %v2762, %v2811
        %v2814 = vmul.f32 %v2804, %v2812
        %v2815 = vmul.f32 %v2805, %v2812
        %v2816 = vmul.f32 %v2806, %v2812
        %v2817 = vmul.f32 %v2807, %v2812
        %v2819 = vlaneseq
        %v2820 = vshrl.u32 %v2819, 7
        %v2821 = vsub.s32 0, %v2820
        %v2822 = vrot.slane %v2763, %v2821
        %v2824 = vadd.f32 %v2814, %v2822
        %v2825 = vadd.f32 %v2815, %v2822
        %v2826 = vadd.f32 %v2816, %v2822
        %v2827 = vadd.f32 %v2817, %v2822
        %v2828 = vpack.c.bf16 %v2825, %v2824
        %v2829 = vpack.c.bf16 %v2827, %v2826
        %v2830 = vld [vmem:[%s1524] sm:$0xff]
        %v2831 = vld [vmem:[%s1524 + $0x8] sm:$0xf]
        %v2832 = vld [vmem:[%s1524 + $0xc] sm:$0xff]
        %v2833 = vld [vmem:[%s1524 + $0x14] sm:$0xf]
        %v2834 = vld [vmem:[%s1524 + $0x18] sm:$0xff]
        %v2835 = vld [vmem:[%s1524 + $0x20] sm:$0xf]
        %v2836 = vld [vmem:[%s1524 + $0x24] sm:$0xff]
        %v2837 = vld [vmem:[%s1524 + $0x2c] sm:$0xf]
        %v2838 = vld [vmem:[%s1524 + $0x30] sm:$0xff]
        %v2839 = vld [vmem:[%s1524 + $0x38] sm:$0xf]
        %v2840 = vld [vmem:[%s1524 + $0x3c] sm:$0xff]
        %v2841 = vld [vmem:[%s1524 + $0x44] sm:$0xf]
        %v2842 = vld [vmem:[%s1524 + $0x48] sm:$0xff]
        %v2843 = vld [vmem:[%s1524 + $0x50] sm:$0xf]
        %v2844 = vld [vmem:[%s1524 + $0x54] sm:$0xff]
        %v2845 = vld [vmem:[%s1524 + $0x5c] sm:$0xf]
        %v2846 = vld [vmem:[%s1524 + $0x60] sm:$0xff]
        %v2847 = vld [vmem:[%s1524 + $0x68] sm:$0xf]
        %v2848 = vld [vmem:[%s1524 + $0x6c] sm:$0xff]
        %v2849 = vld [vmem:[%s1524 + $0x74] sm:$0xf]
        %v2850 = vld [vmem:[%s1524 + $0x78] sm:$0xff]
        %v2851 = vld [vmem:[%s1524 + $0x80] sm:$0xf]
        %v2852 = vld [vmem:[%s1524 + $0x84] sm:$0xff]
        %v2853 = vld [vmem:[%s1524 + $0x8c] sm:$0xf]
        %v2854 = vld [vmem:[%s1524 + $0x90] sm:$0xff]
        %v2855 = vld [vmem:[%s1524 + $0x98] sm:$0xf]
        %v2856 = vld [vmem:[%s1524 + $0x9c] sm:$0xff]
        %v2857 = vld [vmem:[%s1524 + $0xa4] sm:$0xf]
        %v2858 = vld [vmem:[%s1524 + $0xa8] sm:$0xff]
        %v2859 = vld [vmem:[%s1524 + $0xb0] sm:$0xf]
        %v2860 = vld [vmem:[%s1524 + $0xb4] sm:$0xff]
        %v2861 = vld [vmem:[%s1524 + $0xbc] sm:$0xf]
        %v2862 = vld [vmem:[%s1809] sm:$0x7]
        %v2864 = vlaneseq
        %v2865 = vshrl.u32 %v2864, 7
        %v2866 = vsub.s32 0, %v2865
        %v2867 = vrot.slane %v2862, %v2866
        %v2868 = vlaneseq
        %v2869 = vshrl.u32 %v2868, 7
        %v2870 = vsub.s32 1, %v2869
        %v2871 = vrot.slane %v2862, %v2870
        %v2872 = vlaneseq
        %v2873 = vshrl.u32 %v2872, 7
        %v2874 = vsub.s32 2, %v2873
        %v2875 = vrot.slane %v2862, %v2874
        %v2911 = vunpack.c.l.b16 %v2830
        %v2912 = vunpack.c.h.b16 %v2830
        %v2913 = vunpack.c.l.b16 %v2831
        %v2914 = vunpack.c.l.b16 %v2832
        %v2915 = vunpack.c.h.b16 %v2832
        %v2916 = vunpack.c.l.b16 %v2833
        %v2917 = vunpack.c.l.b16 %v2834
        %v2918 = vunpack.c.h.b16 %v2834
        %v2919 = vunpack.c.l.b16 %v2835
        %v2920 = vunpack.c.l.b16 %v2836
        %v2921 = vunpack.c.h.b16 %v2836
        %v2922 = vunpack.c.l.b16 %v2837
        %v2923 = vunpack.c.l.b16 %v2838
        %v2924 = vunpack.c.h.b16 %v2838
        %v2925 = vunpack.c.l.b16 %v2839
        %v2926 = vunpack.c.l.b16 %v2840
        %v2927 = vunpack.c.h.b16 %v2840
        %v2928 = vunpack.c.l.b16 %v2841
        %v2929 = vunpack.c.l.b16 %v2842
        %v2930 = vunpack.c.h.b16 %v2842
        %v2931 = vunpack.c.l.b16 %v2843
        %v2932 = vunpack.c.l.b16 %v2844
        %v2933 = vunpack.c.h.b16 %v2844
        %v2934 = vunpack.c.l.b16 %v2845
        %v2935 = vunpack.c.l.b16 %v2846
        %v2936 = vunpack.c.h.b16 %v2846
        %v2937 = vunpack.c.l.b16 %v2847
        %v2938 = vunpack.c.l.b16 %v2848
        %v2939 = vunpack.c.h.b16 %v2848
        %v2940 = vunpack.c.l.b16 %v2849
        %v2941 = vunpack.c.l.b16 %v2850
        %v2942 = vunpack.c.h.b16 %v2850
        %v2943 = vunpack.c.l.b16 %v2851
        %v2944 = vunpack.c.l.b16 %v2852
        %v2945 = vunpack.c.h.b16 %v2852
        %v2946 = vunpack.c.l.b16 %v2853
        %v2947 = vunpack.c.l.b16 %v2854
        %v2948 = vunpack.c.h.b16 %v2854
        %v2949 = vunpack.c.l.b16 %v2855
        %v2950 = vunpack.c.l.b16 %v2856
        %v2951 = vunpack.c.h.b16 %v2856
        %v2952 = vunpack.c.l.b16 %v2857
        %v2953 = vunpack.c.l.b16 %v2858
        %v2954 = vunpack.c.h.b16 %v2858
        %v2955 = vunpack.c.l.b16 %v2859
        %v2956 = vunpack.c.l.b16 %v2860
        %v2957 = vunpack.c.h.b16 %v2860
        %v2958 = vunpack.c.l.b16 %v2861
        %v2959 = vpack.c.b16 %v2914, %v2911
        %v2960 = vpack.c.b16 %v2915, %v2912
        %v2961 = vpack.c.b16 %v2916, %v2913
        %v2962 = vpack.c.b16 %v2920, %v2917
        %v2963 = vpack.c.b16 %v2921, %v2918
        %v2964 = vpack.c.b16 %v2922, %v2919
        %v2965 = vpack.c.b16 %v2926, %v2923
        %v2966 = vpack.c.b16 %v2927, %v2924
        %v2967 = vpack.c.b16 %v2928, %v2925
        %v2968 = vpack.c.b16 %v2932, %v2929
        %v2969 = vpack.c.b16 %v2933, %v2930
        %v2970 = vpack.c.b16 %v2934, %v2931
        %v2971 = vpack.c.b16 %v2938, %v2935
        %v2972 = vpack.c.b16 %v2939, %v2936
        %v2973 = vpack.c.b16 %v2940, %v2937
        %v2974 = vpack.c.b16 %v2944, %v2941
        %v2975 = vpack.c.b16 %v2945, %v2942
        %v2976 = vpack.c.b16 %v2946, %v2943
        %v2977 = vpack.c.b16 %v2950, %v2947
        %v2978 = vpack.c.b16 %v2951, %v2948
        %v2979 = vpack.c.b16 %v2952, %v2949
        %v2980 = vpack.c.b16 %v2956, %v2953
        %v2981 = vpack.c.b16 %v2957, %v2954
        %v2982 = vpack.c.b16 %v2958, %v2955
        %3007 = vmatprep.subr.bf16.mxu0 %v2960
        %3008 = vmatpush1.bf16.msra.mxu0 %v2959
        %3009 = vmatprep.subr.bf16.mxu0 %v2963
        %3010 = vmatpush1.bf16.msra.mxu0 %v2962
        %3011 = vmatprep.subr.bf16.mxu0 %v2966
        %3012 = vmatpush1.bf16.msra.mxu0 %v2965
        %3013 = vmatprep.subr.bf16.mxu0 %v2969
        %3014 = vmatpush1.bf16.msra.mxu0 %v2968
        %3015 = vmatprep.subr.bf16.mxu0 %v2972
        %3016 = vmatpush1.bf16.msra.mxu0 %v2971
        %3017 = vmatprep.subr.bf16.mxu0 %v2975
        %3018 = vmatpush1.bf16.msra.mxu0 %v2974
        %3019 = vmatprep.subr.bf16.mxu0 %v2978
        %3020 = vmatpush1.bf16.msra.mxu0 %v2977
        %3021 = vmatprep.subr.bf16.mxu0 %v2981
        %3022 = vmatpush1.bf16.msra.mxu0 %v2980
        %3023 = vmatprep.subr.bf16.mxu0 0
        %3024 = vmatpush1.bf16.msra.mxu0 0
        %3025 = vmatprep.subr.bf16.mxu0 0
        %3026 = vmatpush1.bf16.msra.mxu0 0
        %3027 = vmatprep.subr.bf16.mxu0 0
        %3028 = vmatpush1.bf16.msra.mxu0 0
        %3029 = vmatprep.subr.bf16.mxu0 0
        %3030 = vmatpush1.bf16.msra.mxu0 0
        %3031 = vmatprep.subr.bf16.mxu0 0
        %3032 = vmatpush1.bf16.msra.mxu0 0
        %3033 = vmatprep.subr.bf16.mxu0 0
        %3034 = vmatpush1.bf16.msra.mxu0 0
        %3035 = vmatprep.subr.bf16.mxu0 0
        %3036 = vmatpush1.bf16.msra.mxu0 0
        %3037 = vmatprep.subr.bf16.mxu0 0
        %3038 = vmatpush1.bf16.msra.mxu0 0
        %3039 = vmatprep.mubr.bf16.mxu0 0
        %3040 = vmatmul.mubr.bf16.gmra.mrb[0].mxu0 %v2828
        %v3041 = vpop.f32.mrb[0].mxu0
        %v3042 = vadd.f32 %v2867, %v3041
        %v3043 = vpop.f32.mrb[0].mxu0
        %v3044 = vadd.f32 %v2871, %v3043
        %v3045 = vpop.f32.mrb[0].mxu0
        %v3046 = vadd.f32 %v2867, %v3045
        %v3047 = vpop.f32.mrb[0].mxu0
        %v3048 = vadd.f32 %v2871, %v3047
        %3049 = vmatprep.mubr.bf16.mxu0 0
        %3050 = vmatmul.mubr.bf16.gmra.mrb[0].mxu0 %v2829
        %v3051 = vpop.f32.mrb[0].mxu0
        %v3052 = vadd.f32 %v2867, %v3051
        %v3053 = vpop.f32.mrb[0].mxu0
        %v3054 = vadd.f32 %v2871, %v3053
        %v3055 = vpop.f32.mrb[0].mxu0
        %v3056 = vadd.f32 %v2867, %v3055
        %v3057 = vpop.f32.mrb[0].mxu0
        %v3058 = vadd.f32 %v2871, %v3057
        %3059 = vdwg.mxu0
        %3060 = vmatprep.subr.bf16.mxu0 0
        %3061 = vmatpush1.bf16.msra.mxu0 %v2961
        %3062 = vmatprep.subr.bf16.mxu0 0
        %3063 = vmatpush1.bf16.msra.mxu0 %v2964
        %3064 = vmatprep.subr.bf16.mxu0 0
        %3065 = vmatpush1.bf16.msra.mxu0 %v2967
        %3066 = vmatprep.subr.bf16.mxu0 0
        %3067 = vmatpush1.bf16.msra.mxu0 %v2970
        %3068 = vmatprep.subr.bf16.mxu0 0
        %3069 = vmatpush1.bf16.msra.mxu0 %v2973
        %3070 = vmatprep.subr.bf16.mxu0 0
        %3071 = vmatpush1.bf16.msra.mxu0 %v2976
        %3072 = vmatprep.subr.bf16.mxu0 0
        %3073 = vmatpush1.bf16.msra.mxu0 %v2979
        %3074 = vmatprep.subr.bf16.mxu0 0
        %3075 = vmatpush1.bf16.msra.mxu0 %v2982
        %3076 = vmatprep.subr.bf16.mxu0 0
        %3077 = vmatpush1.bf16.msra.mxu0 0
        %3078 = vmatprep.subr.bf16.mxu0 0
        %3079 = vmatpush1.bf16.msra.mxu0 0
        %3080 = vmatprep.subr.bf16.mxu0 0
        %3081 = vmatpush1.bf16.msra.mxu0 0
        %3082 = vmatprep.subr.bf16.mxu0 0
        %3083 = vmatpush1.bf16.msra.mxu0 0
        %3084 = vmatprep.subr.bf16.mxu0 0
        %3085 = vmatpush1.bf16.msra.mxu0 0
        %3086 = vmatprep.subr.bf16.mxu0 0
        %3087 = vmatpush1.bf16.msra.mxu0 0
        %3088 = vmatprep.subr.bf16.mxu0 0
        %3089 = vmatpush1.bf16.msra.mxu0 0
        %3090 = vmatprep.subr.bf16.mxu0 0
        %3091 = vmatpush1.bf16.msra.mxu0 0
        %3092 = vmatprep.mubr.bf16.mxu0 0
        %3093 = vmatmul.mubr.bf16.gmra.mrb[0].mxu0 %v2828
        %v3094 = vpop.f32.mrb[0].mxu0
        %v3095 = vadd.f32 %v2875, %v3094
        %v3096 = vpop.f32.mrb[0].mxu0
        %v3097 = vpop.f32.mrb[0].mxu0
        %v3098 = vadd.f32 %v2875, %v3097
        %v3099 = vpop.f32.mrb[0].mxu0
        %3100 = vmatprep.mubr.bf16.mxu0 0
        %3101 = vmatmul.mubr.bf16.gmra.mrb[0].mxu0 %v2829
        %v3102 = vpop.f32.mrb[0].mxu0
        %v3103 = vadd.f32 %v2875, %v3102
        %v3104 = vpop.f32.mrb[0].mxu0
        %v3105 = vpop.f32.mrb[0].mxu0
        %v3106 = vadd.f32 %v2875, %v3105
        %v3107 = vpop.f32.mrb[0].mxu0
        %3108 = vdwg.mxu0
        %v3109 = vpack.c.bf16 %v3046, %v3042
        %v3110 = vpack.c.bf16 %v3056, %v3052
        %v3111 = vpack.c.bf16 %v3048, %v3044
        %v3112 = vpack.c.bf16 %v3058, %v3054
        %v3113 = vpack.c.bf16 %v3098, %v3095
        %v3114 = vpack.c.bf16 %v3106, %v3103
        %vm3115 = vcmask 261120
        %v3117 = vsel %vm3115, %v3109, 0
        %v3120 = vsel %vm3115, %v3111, 0
        %3122 = vmatprep.subr.bf16.mxu0 0
        %3123 = vmatpush1.bf16.xpose.msra.mxu0 %v3120
        %3124 = vmatprep.subr.bf16.mxu0 0
        %3125 = vmatpush1.bf16.xpose.msra.mxu0 0
        %3126 = vmatprep.subr.bf16.mxu0 0
        %3127 = vmatpush1.bf16.xpose.msra.mxu0 0
        %3128 = vmatprep.subr.bf16.mxu0 0
        %3129 = vmatpush1.bf16.xpose.msra.mxu0 0
        %3130 = vmatprep.subr.bf16.mxu0 0
        %3131 = vmatpush1.bf16.xpose.msra.mxu0 0
        %3132 = vmatprep.subr.bf16.mxu0 0
        %3133 = vmatpush1.bf16.xpose.msra.mxu0 0
        %3134 = vmatprep.subr.bf16.mxu0 0
        %3135 = vmatpush1.bf16.xpose.msra.mxu0 0
        %3136 = vmatprep.subr.bf16.mxu0 0
        %3137 = vmatpush1.bf16.xpose.msra.mxu0 0
        %3138 = vmatprep.subr.bf16.mxu0 0
        %3139 = vmatpush1.bf16.xpose.msra.mxu0 0
        %3140 = vmatprep.subr.bf16.mxu0 0
        %3141 = vmatpush1.bf16.xpose.msra.mxu0 0
        %3142 = vmatprep.subr.bf16.mxu0 0
        %3143 = vmatpush1.bf16.xpose.msra.mxu0 0
        %3144 = vmatprep.subr.bf16.mxu0 0
        %3145 = vmatpush1.bf16.xpose.msra.mxu0 0
        %3146 = vmatprep.subr.bf16.mxu0 0
        %3147 = vmatpush1.bf16.xpose.msra.mxu0 0
        %3148 = vmatprep.subr.bf16.mxu0 0
        %3149 = vmatpush1.bf16.xpose.msra.mxu0 0
        %3150 = vmatprep.subr.bf16.mxu0 0
        %3151 = vmatpush1.bf16.xpose.msra.mxu0 0
        %3152 = vmatprep.subr.bf16.mxu0 0
        %3153 = vmatpush1.bf16.xpose.msra.mxu0 0
        %3154 = vmatprep.mubr.bf16.mxu0 0
        %3155 = vmatmul.mubr.bf16.gmra.mrb[0].mxu0 %v3117
        %v3156 = vpop.f32.mrb[0].mxu0
        %v3157 = vadd.f32 0.0, %v3156
        %v3158 = vpop.f32.mrb[0].mxu0
        %v3159 = vpop.f32.mrb[0].mxu0
        %v3160 = vadd.f32 0.0, %v3159
        %v3161 = vpop.f32.mrb[0].mxu0
        %3162 = vdwg.mxu0
        %v3164 = vsel %vm3115, %v3110, 0
        %v3167 = vsel %vm3115, %v3112, 0
        %3169 = vmatprep.subr.bf16.mxu0 0
        %3170 = vmatpush1.bf16.xpose.msra.mxu0 %v3167
        %3171 = vmatprep.subr.bf16.mxu0 0
        %3172 = vmatpush1.bf16.xpose.msra.mxu0 0
        %3173 = vmatprep.subr.bf16.mxu0 0
        %3174 = vmatpush1.bf16.xpose.msra.mxu0 0
        %3175 = vmatprep.subr.bf16.mxu0 0
        %3176 = vmatpush1.bf16.xpose.msra.mxu0 0
        %3177 = vmatprep.subr.bf16.mxu0 0
        %3178 = vmatpush1.bf16.xpose.msra.mxu0 0
        %3179 = vmatprep.subr.bf16.mxu0 0
        %3180 = vmatpush1.bf16.xpose.msra.mxu0 0
        %3181 = vmatprep.subr.bf16.mxu0 0
        %3182 = vmatpush1.bf16.xpose.msra.mxu0 0
        %3183 = vmatprep.subr.bf16.mxu0 0
        %3184 = vmatpush1.bf16.xpose.msra.mxu0 0
        %3185 = vmatprep.subr.bf16.mxu0 0
        %3186 = vmatpush1.bf16.xpose.msra.mxu0 0
        %3187 = vmatprep.subr.bf16.mxu0 0
        %3188 = vmatpush1.bf16.xpose.msra.mxu0 0
        %3189 = vmatprep.subr.bf16.mxu0 0
        %3190 = vmatpush1.bf16.xpose.msra.mxu0 0
        %3191 = vmatprep.subr.bf16.mxu0 0
        %3192 = vmatpush1.bf16.xpose.msra.mxu0 0
        %3193 = vmatprep.subr.bf16.mxu0 0
        %3194 = vmatpush1.bf16.xpose.msra.mxu0 0
        %3195 = vmatprep.subr.bf16.mxu0 0
        %3196 = vmatpush1.bf16.xpose.msra.mxu0 0
        %3197 = vmatprep.subr.bf16.mxu0 0
        %3198 = vmatpush1.bf16.xpose.msra.mxu0 0
        %3199 = vmatprep.subr.bf16.mxu0 0
        %3200 = vmatpush1.bf16.xpose.msra.mxu0 0
        %3201 = vmatprep.mubr.bf16.mxu0 0
        %3202 = vmatmul.mubr.bf16.gmra.mrb[0].mxu0 %v3164
        %v3203 = vpop.f32.mrb[0].mxu0
        %v3204 = vadd.f32 0.0, %v3203
        %v3205 = vpop.f32.mrb[0].mxu0
        %v3206 = vpop.f32.mrb[0].mxu0
        %v3207 = vadd.f32 0.0, %v3206
        %v3208 = vpop.f32.mrb[0].mxu0
        %3209 = vdwg.mxu0
        %v3210 = vmul.f32 %v3157, 0.17677669
        %v3211 = vmul.f32 %v3160, 0.17677669
        %v3212 = vmul.f32 %v3204, 0.17677669
        %v3213 = vmul.f32 %v3207, 0.17677669
        %vm3214 = vcmask 130048
        %v3215 = vsel %vm3214, %v3210, -inf
        %3216 = vmax.xlane.f32.xlu0 %v3215
        %v3217 = vpop.xlane.xlu0 %3216
        %v3218 = vsel %vm3214, %v3211, -inf
        %3219 = vmax.xlane.f32.xlu0 %v3218
        %v3220 = vpop.xlane.xlu0 %3219
        %v3221 = vsel %vm3214, %v3212, -inf
        %3222 = vmax.xlane.f32.xlu0 %v3221
        %v3223 = vpop.xlane.xlu0 %3222
        %v3224 = vsel %vm3214, %v3213, -inf
        %3225 = vmax.xlane.f32.xlu0 %v3224
        %v3226 = vpop.xlane.xlu0 %3225
        %v3227 = vsub.f32 %v3210, %v3217
        %v3228 = vsub.f32 %v3211, %v3220
        %v3229 = vsub.f32 %v3212, %v3223
        %v3230 = vsub.f32 %v3213, %v3226
        %v3231 = vmul.f32 %v3227, 1.442695
        %v3232 = vpow.pop %v3231
        %v3233 = vmul.f32 %v3228, 1.442695
        %v3234 = vpow.pop %v3233
        %v3235 = vmul.f32 %v3229, 1.442695
        %v3236 = vpow.pop %v3235
        %v3237 = vmul.f32 %v3230, 1.442695
        %v3238 = vpow.pop %v3237
        %v3239 = vsel %vm3214, %v3232, 0.0
        %3240 = vadd.xlane.f32.xlu0 %v3239
        %v3241 = vpop.xlane.xlu0 %3240
        %v3242 = vsel %vm3214, %v3234, 0.0
        %3243 = vadd.xlane.f32.xlu0 %v3242
        %v3244 = vpop.xlane.xlu0 %3243
        %v3245 = vsel %vm3214, %v3236, 0.0
        %3246 = vadd.xlane.f32.xlu0 %v3245
        %v3247 = vpop.xlane.xlu0 %3246
        %v3248 = vsel %vm3214, %v3238, 0.0
        %3249 = vadd.xlane.f32.xlu0 %v3248
        %v3250 = vpop.xlane.xlu0 %3249
        %v3251 = vrcp.pop %v3241
        %v3252 = vrcp.pop %v3244
        %v3253 = vrcp.pop %v3247
        %v3254 = vrcp.pop %v3250
        %v3255 = vmul.f32 %v3232, %v3251
        %v3256 = vmul.f32 %v3234, %v3252
        %v3257 = vmul.f32 %v3236, %v3253
        %v3258 = vmul.f32 %v3238, %v3254
        %v3259 = vpack.c.bf16 %v3256, %v3255
        %v3260 = vpack.c.bf16 %v3258, %v3257
        %v3262 = vsel %vm3214, %v3259, 0
        %3264 = vmatprep.subr.bf16.mxu0 0
        %3265 = vmatpush1.bf16.msra.mxu0 %v3113
        %3266 = vmatprep.subr.bf16.mxu0 0
        %3267 = vmatpush1.bf16.msra.mxu0 0
        %3268 = vmatprep.subr.bf16.mxu0 0
        %3269 = vmatpush1.bf16.msra.mxu0 0
        %3270 = vmatprep.subr.bf16.mxu0 0
        %3271 = vmatpush1.bf16.msra.mxu0 0
        %3272 = vmatprep.subr.bf16.mxu0 0
        %3273 = vmatpush1.bf16.msra.mxu0 0
        %3274 = vmatprep.subr.bf16.mxu0 0
        %3275 = vmatpush1.bf16.msra.mxu0 0
        %3276 = vmatprep.subr.bf16.mxu0 0
        %3277 = vmatpush1.bf16.msra.mxu0 0
        %3278 = vmatprep.subr.bf16.mxu0 0
        %3279 = vmatpush1.bf16.msra.mxu0 0
        %3280 = vmatprep.subr.bf16.mxu0 0
        %3281 = vmatpush1.bf16.msra.mxu0 0
        %3282 = vmatprep.subr.bf16.mxu0 0
        %3283 = vmatpush1.bf16.msra.mxu0 0
        %3284 = vmatprep.subr.bf16.mxu0 0
        %3285 = vmatpush1.bf16.msra.mxu0 0
        %3286 = vmatprep.subr.bf16.mxu0 0
        %3287 = vmatpush1.bf16.msra.mxu0 0
        %3288 = vmatprep.subr.bf16.mxu0 0
        %3289 = vmatpush1.bf16.msra.mxu0 0
        %3290 = vmatprep.subr.bf16.mxu0 0
        %3291 = vmatpush1.bf16.msra.mxu0 0
        %3292 = vmatprep.subr.bf16.mxu0 0
        %3293 = vmatpush1.bf16.msra.mxu0 0
        %3294 = vmatprep.subr.bf16.mxu0 0
        %3295 = vmatpush1.bf16.msra.mxu0 0
        %3296 = vmatprep.mubr.bf16.mxu0 0
        %3297 = vmatmul.mubr.bf16.gmra.mrb[0].mxu0 %v3262
        %v3298 = vpop.f32.mrb[0].mxu0
        %v3299 = vadd.f32 0.0, %v3298
        %v3300 = vpop.f32.mrb[0].mxu0
        %v3301 = vpop.f32.mrb[0].mxu0
        %v3302 = vadd.f32 0.0, %v3301
        %v3303 = vpop.f32.mrb[0].mxu0
        %3304 = vdwg.mxu0
        %v3306 = vsel %vm3214, %v3260, 0
        %3308 = vmatprep.subr.bf16.mxu0 0
        %3309 = vmatpush1.bf16.msra.mxu0 %v3114
        %3310 = vmatprep.subr.bf16.mxu0 0
        %3311 = vmatpush1.bf16.msra.mxu0 0
        %3312 = vmatprep.subr.bf16.mxu0 0
        %3313 = vmatpush1.bf16.msra.mxu0 0
        %3314 = vmatprep.subr.bf16.mxu0 0
        %3315 = vmatpush1.bf16.msra.mxu0 0
        %3316 = vmatprep.subr.bf16.mxu0 0
        %3317 = vmatpush1.bf16.msra.mxu0 0
        %3318 = vmatprep.subr.bf16.mxu0 0
        %3319 = vmatpush1.bf16.msra.mxu0 0
        %3320 = vmatprep.subr.bf16.mxu0 0
        %3321 = vmatpush1.bf16.msra.mxu0 0
        %3322 = vmatprep.subr.bf16.mxu0 0
        %3323 = vmatpush1.bf16.msra.mxu0 0
        %3324 = vmatprep.subr.bf16.mxu0 0
        %3325 = vmatpush1.bf16.msra.mxu0 0
        %3326 = vmatprep.subr.bf16.mxu0 0
        %3327 = vmatpush1.bf16.msra.mxu0 0
        %3328 = vmatprep.subr.bf16.mxu0 0
        %3329 = vmatpush1.bf16.msra.mxu0 0
        %3330 = vmatprep.subr.bf16.mxu0 0
        %3331 = vmatpush1.bf16.msra.mxu0 0
        %3332 = vmatprep.subr.bf16.mxu0 0
        %3333 = vmatpush1.bf16.msra.mxu0 0
        %3334 = vmatprep.subr.bf16.mxu0 0
        %3335 = vmatpush1.bf16.msra.mxu0 0
        %3336 = vmatprep.subr.bf16.mxu0 0
        %3337 = vmatpush1.bf16.msra.mxu0 0
        %3338 = vmatprep.subr.bf16.mxu0 0
        %3339 = vmatpush1.bf16.msra.mxu0 0
        %3340 = vmatprep.mubr.bf16.mxu0 0
        %3341 = vmatmul.mubr.bf16.gmra.mrb[0].mxu0 %v3306
        %v3342 = vpop.f32.mrb[0].mxu0
        %v3343 = vadd.f32 0.0, %v3342
        %v3344 = vpop.f32.mrb[0].mxu0
        %v3345 = vpop.f32.mrb[0].mxu0
        %v3346 = vadd.f32 0.0, %v3345
        %v3347 = vpop.f32.mrb[0].mxu0
        %3348 = vdwg.mxu0
        %3350 = vrot.lane.b32.xlu0 %v3109, 96
        %v3351 = vpop.permute.xlu0 %3350
        %3353 = vrot.lane.b32.xlu0 %v3111, 96
        %v3354 = vpop.permute.xlu0 %3353
        %v3356 = vsel %vm3115, %v3351, 0
        %v3359 = vsel %vm3115, %v3354, 0
        %3361 = vmatprep.subr.bf16.mxu0 0
        %3362 = vmatpush1.bf16.xpose.msra.mxu0 %v3359
        %3363 = vmatprep.subr.bf16.mxu0 0
        %3364 = vmatpush1.bf16.xpose.msra.mxu0 0
        %3365 = vmatprep.subr.bf16.mxu0 0
        %3366 = vmatpush1.bf16.xpose.msra.mxu0 0
        %3367 = vmatprep.subr.bf16.mxu0 0
        %3368 = vmatpush1.bf16.xpose.msra.mxu0 0
        %3369 = vmatprep.subr.bf16.mxu0 0
        %3370 = vmatpush1.bf16.xpose.msra.mxu0 0
        %3371 = vmatprep.subr.bf16.mxu0 0
        %3372 = vmatpush1.bf16.xpose.msra.mxu0 0
        %3373 = vmatprep.subr.bf16.mxu0 0
        %3374 = vmatpush1.bf16.xpose.msra.mxu0 0
        %3375 = vmatprep.subr.bf16.mxu0 0
        %3376 = vmatpush1.bf16.xpose.msra.mxu0 0
        %3377 = vmatprep.subr.bf16.mxu0 0
        %3378 = vmatpush1.bf16.xpose.msra.mxu0 0
        %3379 = vmatprep.subr.bf16.mxu0 0
        %3380 = vmatpush1.bf16.xpose.msra.mxu0 0
        %3381 = vmatprep.subr.bf16.mxu0 0
        %3382 = vmatpush1.bf16.xpose.msra.mxu0 0
        %3383 = vmatprep.subr.bf16.mxu0 0
        %3384 = vmatpush1.bf16.xpose.msra.mxu0 0
        %3385 = vmatprep.subr.bf16.mxu0 0
        %3386 = vmatpush1.bf16.xpose.msra.mxu0 0
        %3387 = vmatprep.subr.bf16.mxu0 0
        %3388 = vmatpush1.bf16.xpose.msra.mxu0 0
        %3389 = vmatprep.subr.bf16.mxu0 0
        %3390 = vmatpush1.bf16.xpose.msra.mxu0 0
        %3391 = vmatprep.subr.bf16.mxu0 0
        %3392 = vmatpush1.bf16.xpose.msra.mxu0 0
        %3393 = vmatprep.mubr.bf16.mxu0 0
        %3394 = vmatmul.mubr.bf16.gmra.mrb[0].mxu0 %v3356
        %v3395 = vpop.f32.mrb[0].mxu0
        %v3396 = vadd.f32 0.0, %v3395
        %v3397 = vpop.f32.mrb[0].mxu0
        %v3398 = vpop.f32.mrb[0].mxu0
        %v3399 = vadd.f32 0.0, %v3398
        %v3400 = vpop.f32.mrb[0].mxu0
        %3401 = vdwg.mxu0
        %3403 = vrot.lane.b32.xlu0 %v3110, 96
        %v3404 = vpop.permute.xlu0 %3403
        %3406 = vrot.lane.b32.xlu0 %v3112, 96
        %v3407 = vpop.permute.xlu0 %3406
        %v3409 = vsel %vm3115, %v3404, 0
        %v3412 = vsel %vm3115, %v3407, 0
        %3414 = vmatprep.subr.bf16.mxu0 0
        %3415 = vmatpush1.bf16.xpose.msra.mxu0 %v3412
        %3416 = vmatprep.subr.bf16.mxu0 0
        %3417 = vmatpush1.bf16.xpose.msra.mxu0 0
        %3418 = vmatprep.subr.bf16.mxu0 0
        %3419 = vmatpush1.bf16.xpose.msra.mxu0 0
        %3420 = vmatprep.subr.bf16.mxu0 0
        %3421 = vmatpush1.bf16.xpose.msra.mxu0 0
        %3422 = vmatprep.subr.bf16.mxu0 0
        %3423 = vmatpush1.bf16.xpose.msra.mxu0 0
        %3424 = vmatprep.subr.bf16.mxu0 0
        %3425 = vmatpush1.bf16.xpose.msra.mxu0 0
        %3426 = vmatprep.subr.bf16.mxu0 0
        %3427 = vmatpush1.bf16.xpose.msra.mxu0 0
        %3428 = vmatprep.subr.bf16.mxu0 0
        %3429 = vmatpush1.bf16.xpose.msra.mxu0 0
        %3430 = vmatprep.subr.bf16.mxu0 0
        %3431 = vmatpush1.bf16.xpose.msra.mxu0 0
        %3432 = vmatprep.subr.bf16.mxu0 0
        %3433 = vmatpush1.bf16.xpose.msra.mxu0 0
        %3434 = vmatprep.subr.bf16.mxu0 0
        %3435 = vmatpush1.bf16.xpose.msra.mxu0 0
        %3436 = vmatprep.subr.bf16.mxu0 0
        %3437 = vmatpush1.bf16.xpose.msra.mxu0 0
        %3438 = vmatprep.subr.bf16.mxu0 0
        %3439 = vmatpush1.bf16.xpose.msra.mxu0 0
        %3440 = vmatprep.subr.bf16.mxu0 0
        %3441 = vmatpush1.bf16.xpose.msra.mxu0 0
        %3442 = vmatprep.subr.bf16.mxu0 0
        %3443 = vmatpush1.bf16.xpose.msra.mxu0 0
        %3444 = vmatprep.subr.bf16.mxu0 0
        %3445 = vmatpush1.bf16.xpose.msra.mxu0 0
        %3446 = vmatprep.mubr.bf16.mxu0 0
        %3447 = vmatmul.mubr.bf16.gmra.mrb[0].mxu0 %v3409
        %v3448 = vpop.f32.mrb[0].mxu0
        %v3449 = vadd.f32 0.0, %v3448
        %v3450 = vpop.f32.mrb[0].mxu0
        %v3451 = vpop.f32.mrb[0].mxu0
        %v3452 = vadd.f32 0.0, %v3451
        %v3453 = vpop.f32.mrb[0].mxu0
        %3454 = vdwg.mxu0
        %v3455 = vmul.f32 %v3396, 0.17677669
        %v3456 = vmul.f32 %v3399, 0.17677669
        %v3457 = vmul.f32 %v3449, 0.17677669
        %v3458 = vmul.f32 %v3452, 0.17677669
        %v3459 = vsel %vm3214, %v3455, -inf
        %3460 = vmax.xlane.f32.xlu0 %v3459
        %v3461 = vpop.xlane.xlu0 %3460
        %v3462 = vsel %vm3214, %v3456, -inf
        %3463 = vmax.xlane.f32.xlu0 %v3462
        %v3464 = vpop.xlane.xlu0 %3463
        %v3465 = vsel %vm3214, %v3457, -inf
        %3466 = vmax.xlane.f32.xlu0 %v3465
        %v3467 = vpop.xlane.xlu0 %3466
        %v3468 = vsel %vm3214, %v3458, -inf
        %3469 = vmax.xlane.f32.xlu0 %v3468
        %v3470 = vpop.xlane.xlu0 %3469
        %v3471 = vsub.f32 %v3455, %v3461
        %v3472 = vsub.f32 %v3456, %v3464
        %v3473 = vsub.f32 %v3457, %v3467
        %v3474 = vsub.f32 %v3458, %v3470
        %v3475 = vmul.f32 %v3471, 1.442695
        %v3476 = vpow.pop %v3475
        %v3477 = vmul.f32 %v3472, 1.442695
        %v3478 = vpow.pop %v3477
        %v3479 = vmul.f32 %v3473, 1.442695
        %v3480 = vpow.pop %v3479
        %v3481 = vmul.f32 %v3474, 1.442695
        %v3482 = vpow.pop %v3481
        %v3483 = vsel %vm3214, %v3476, 0.0
        %3484 = vadd.xlane.f32.xlu0 %v3483
        %v3485 = vpop.xlane.xlu0 %3484
        %v3486 = vsel %vm3214, %v3478, 0.0
        %3487 = vadd.xlane.f32.xlu0 %v3486
        %v3488 = vpop.xlane.xlu0 %3487
        %v3489 = vsel %vm3214, %v3480, 0.0
        %3490 = vadd.xlane.f32.xlu0 %v3489
        %v3491 = vpop.xlane.xlu0 %3490
        %v3492 = vsel %vm3214, %v3482, 0.0
        %3493 = vadd.xlane.f32.xlu0 %v3492
        %v3494 = vpop.xlane.xlu0 %3493
        %v3495 = vrcp.pop %v3485
        %v3496 = vrcp.pop %v3488
        %v3497 = vrcp.pop %v3491
        %v3498 = vrcp.pop %v3494
        %v3499 = vmul.f32 %v3476, %v3495
        %v3500 = vmul.f32 %v3478, %v3496
        %v3501 = vmul.f32 %v3480, %v3497
        %v3502 = vmul.f32 %v3482, %v3498
        %v3503 = vpack.c.bf16 %v3500, %v3499
        %v3504 = vpack.c.bf16 %v3502, %v3501
        %3506 = vrot.lane.b32.xlu0 %v3113, 96
        %v3507 = vpop.permute.xlu0 %3506
        %v3510 = vsel %vm3214, %v3503, 0
        %3512 = vmatprep.subr.bf16.mxu0 0
        %3513 = vmatpush1.bf16.msra.mxu0 %v3507
        %3514 = vmatprep.subr.bf16.mxu0 0
        %3515 = vmatpush1.bf16.msra.mxu0 0
        %3516 = vmatprep.subr.bf16.mxu0 0
        %3517 = vmatpush1.bf16.msra.mxu0 0
        %3518 = vmatprep.subr.bf16.mxu0 0
        %3519 = vmatpush1.bf16.msra.mxu0 0
        %3520 = vmatprep.subr.bf16.mxu0 0
        %3521 = vmatpush1.bf16.msra.mxu0 0
        %3522 = vmatprep.subr.bf16.mxu0 0
        %3523 = vmatpush1.bf16.msra.mxu0 0
        %3524 = vmatprep.subr.bf16.mxu0 0
        %3525 = vmatpush1.bf16.msra.mxu0 0
        %3526 = vmatprep.subr.bf16.mxu0 0
        %3527 = vmatpush1.bf16.msra.mxu0 0
        %3528 = vmatprep.subr.bf16.mxu0 0
        %3529 = vmatpush1.bf16.msra.mxu0 0
        %3530 = vmatprep.subr.bf16.mxu0 0
        %3531 = vmatpush1.bf16.msra.mxu0 0
        %3532 = vmatprep.subr.bf16.mxu0 0
        %3533 = vmatpush1.bf16.msra.mxu0 0
        %3534 = vmatprep.subr.bf16.mxu0 0
        %3535 = vmatpush1.bf16.msra.mxu0 0
        %3536 = vmatprep.subr.bf16.mxu0 0
        %3537 = vmatpush1.bf16.msra.mxu0 0
        %3538 = vmatprep.subr.bf16.mxu0 0
        %3539 = vmatpush1.bf16.msra.mxu0 0
        %3540 = vmatprep.subr.bf16.mxu0 0
        %3541 = vmatpush1.bf16.msra.mxu0 0
        %3542 = vmatprep.subr.bf16.mxu0 0
        %3543 = vmatpush1.bf16.msra.mxu0 0
        %3544 = vmatprep.mubr.bf16.mxu0 0
        %3545 = vmatmul.mubr.bf16.gmra.mrb[0].mxu0 %v3510
        %v3546 = vpop.f32.mrb[0].mxu0
        %v3547 = vadd.f32 0.0, %v3546
        %v3548 = vpop.f32.mrb[0].mxu0
        %v3549 = vpop.f32.mrb[0].mxu0
        %v3550 = vadd.f32 0.0, %v3549
        %v3551 = vpop.f32.mrb[0].mxu0
        %3552 = vdwg.mxu0
        %3554 = vrot.lane.b32.xlu0 %v3114, 96
        %v3555 = vpop.permute.xlu0 %3554
        %v3558 = vsel %vm3214, %v3504, 0
        %3560 = vmatprep.subr.bf16.mxu0 0
        %3561 = vmatpush1.bf16.msra.mxu0 %v3555
        %3562 = vmatprep.subr.bf16.mxu0 0
        %3563 = vmatpush1.bf16.msra.mxu0 0
        %3564 = vmatprep.subr.bf16.mxu0 0
        %3565 = vmatpush1.bf16.msra.mxu0 0
        %3566 = vmatprep.subr.bf16.mxu0 0
        %3567 = vmatpush1.bf16.msra.mxu0 0
        %3568 = vmatprep.subr.bf16.mxu0 0
        %3569 = vmatpush1.bf16.msra.mxu0 0
        %3570 = vmatprep.subr.bf16.mxu0 0
        %3571 = vmatpush1.bf16.msra.mxu0 0
        %3572 = vmatprep.subr.bf16.mxu0 0
        %3573 = vmatpush1.bf16.msra.mxu0 0
        %3574 = vmatprep.subr.bf16.mxu0 0
        %3575 = vmatpush1.bf16.msra.mxu0 0
        %3576 = vmatprep.subr.bf16.mxu0 0
        %3577 = vmatpush1.bf16.msra.mxu0 0
        %3578 = vmatprep.subr.bf16.mxu0 0
        %3579 = vmatpush1.bf16.msra.mxu0 0
        %3580 = vmatprep.subr.bf16.mxu0 0
        %3581 = vmatpush1.bf16.msra.mxu0 0
        %3582 = vmatprep.subr.bf16.mxu0 0
        %3583 = vmatpush1.bf16.msra.mxu0 0
        %3584 = vmatprep.subr.bf16.mxu0 0
        %3585 = vmatpush1.bf16.msra.mxu0 0
        %3586 = vmatprep.subr.bf16.mxu0 0
        %3587 = vmatpush1.bf16.msra.mxu0 0
        %3588 = vmatprep.subr.bf16.mxu0 0
        %3589 = vmatpush1.bf16.msra.mxu0 0
        %3590 = vmatprep.subr.bf16.mxu0 0
        %3591 = vmatpush1.bf16.msra.mxu0 0
        %3592 = vmatprep.mubr.bf16.mxu0 0
        %3593 = vmatmul.mubr.bf16.gmra.mrb[0].mxu0 %v3558
        %v3594 = vpop.f32.mrb[0].mxu0
        %v3595 = vadd.f32 0.0, %v3594
        %v3596 = vpop.f32.mrb[0].mxu0
        %v3597 = vpop.f32.mrb[0].mxu0
        %v3598 = vadd.f32 0.0, %v3597
        %v3599 = vpop.f32.mrb[0].mxu0
        %3600 = vdwg.mxu0
        %3601 = vrot.lane.b32.xlu0 %v3109, 64
        %v3602 = vpop.permute.xlu0 %3601
        %3603 = vrot.lane.b32.xlu0 %v3111, 64
        %v3604 = vpop.permute.xlu0 %3603
        %v3606 = vsel %vm3115, %v3602, 0
        %v3609 = vsel %vm3115, %v3604, 0
        %3611 = vmatprep.subr.bf16.mxu0 0
        %3612 = vmatpush1.bf16.xpose.msra.mxu0 %v3609
        %3613 = vmatprep.subr.bf16.mxu0 0
        %3614 = vmatpush1.bf16.xpose.msra.mxu0 0
        %3615 = vmatprep.subr.bf16.mxu0 0
        %3616 = vmatpush1.bf16.xpose.msra.mxu0 0
        %3617 = vmatprep.subr.bf16.mxu0 0
        %3618 = vmatpush1.bf16.xpose.msra.mxu0 0
        %3619 = vmatprep.subr.bf16.mxu0 0
        %3620 = vmatpush1.bf16.xpose.msra.mxu0 0
        %3621 = vmatprep.subr.bf16.mxu0 0
        %3622 = vmatpush1.bf16.xpose.msra.mxu0 0
        %3623 = vmatprep.subr.bf16.mxu0 0
        %3624 = vmatpush1.bf16.xpose.msra.mxu0 0
        %3625 = vmatprep.subr.bf16.mxu0 0
        %3626 = vmatpush1.bf16.xpose.msra.mxu0 0
        %3627 = vmatprep.subr.bf16.mxu0 0
        %3628 = vmatpush1.bf16.xpose.msra.mxu0 0
        %3629 = vmatprep.subr.bf16.mxu0 0
        %3630 = vmatpush1.bf16.xpose.msra.mxu0 0
        %3631 = vmatprep.subr.bf16.mxu0 0
        %3632 = vmatpush1.bf16.xpose.msra.mxu0 0
        %3633 = vmatprep.subr.bf16.mxu0 0
        %3634 = vmatpush1.bf16.xpose.msra.mxu0 0
        %3635 = vmatprep.subr.bf16.mxu0 0
        %3636 = vmatpush1.bf16.xpose.msra.mxu0 0
        %3637 = vmatprep.subr.bf16.mxu0 0
        %3638 = vmatpush1.bf16.xpose.msra.mxu0 0
        %3639 = vmatprep.subr.bf16.mxu0 0
        %3640 = vmatpush1.bf16.xpose.msra.mxu0 0
        %3641 = vmatprep.subr.bf16.mxu0 0
        %3642 = vmatpush1.bf16.xpose.msra.mxu0 0
        %3643 = vmatprep.mubr.bf16.mxu0 0
        %3644 = vmatmul.mubr.bf16.gmra.mrb[0].mxu0 %v3606
        %v3645 = vpop.f32.mrb[0].mxu0
        %v3646 = vadd.f32 0.0, %v3645
        %v3647 = vpop.f32.mrb[0].mxu0
        %v3648 = vpop.f32.mrb[0].mxu0
        %v3649 = vadd.f32 0.0, %v3648
        %v3650 = vpop.f32.mrb[0].mxu0
        %3651 = vdwg.mxu0
        %3652 = vrot.lane.b32.xlu0 %v3110, 64
        %v3653 = vpop.permute.xlu0 %3652
        %3654 = vrot.lane.b32.xlu0 %v3112, 64
        %v3655 = vpop.permute.xlu0 %3654
        %v3657 = vsel %vm3115, %v3653, 0
        %v3660 = vsel %vm3115, %v3655, 0
        %3662 = vmatprep.subr.bf16.mxu0 0
        %3663 = vmatpush1.bf16.xpose.msra.mxu0 %v3660
        %3664 = vmatprep.subr.bf16.mxu0 0
        %3665 = vmatpush1.bf16.xpose.msra.mxu0 0
        %3666 = vmatprep.subr.bf16.mxu0 0
        %3667 = vmatpush1.bf16.xpose.msra.mxu0 0
        %3668 = vmatprep.subr.bf16.mxu0 0
        %3669 = vmatpush1.bf16.xpose.msra.mxu0 0
        %3670 = vmatprep.subr.bf16.mxu0 0
        %3671 = vmatpush1.bf16.xpose.msra.mxu0 0
        %3672 = vmatprep.subr.bf16.mxu0 0
        %3673 = vmatpush1.bf16.xpose.msra.mxu0 0
        %3674 = vmatprep.subr.bf16.mxu0 0
        %3675 = vmatpush1.bf16.xpose.msra.mxu0 0
        %3676 = vmatprep.subr.bf16.mxu0 0
        %3677 = vmatpush1.bf16.xpose.msra.mxu0 0
        %3678 = vmatprep.subr.bf16.mxu0 0
        %3679 = vmatpush1.bf16.xpose.msra.mxu0 0
        %3680 = vmatprep.subr.bf16.mxu0 0
        %3681 = vmatpush1.bf16.xpose.msra.mxu0 0
        %3682 = vmatprep.subr.bf16.mxu0 0
        %3683 = vmatpush1.bf16.xpose.msra.mxu0 0
        %3684 = vmatprep.subr.bf16.mxu0 0
        %3685 = vmatpush1.bf16.xpose.msra.mxu0 0
        %3686 = vmatprep.subr.bf16.mxu0 0
        %3687 = vmatpush1.bf16.xpose.msra.mxu0 0
        %3688 = vmatprep.subr.bf16.mxu0 0
        %3689 = vmatpush1.bf16.xpose.msra.mxu0 0
        %3690 = vmatprep.subr.bf16.mxu0 0
        %3691 = vmatpush1.bf16.xpose.msra.mxu0 0
        %3692 = vmatprep.subr.bf16.mxu0 0
        %3693 = vmatpush1.bf16.xpose.msra.mxu0 0
        %3694 = vmatprep.mubr.bf16.mxu0 0
        %3695 = vmatmul.mubr.bf16.gmra.mrb[0].mxu0 %v3657
        %v3696 = vpop.f32.mrb[0].mxu0
        %v3697 = vadd.f32 0.0, %v3696
        %v3698 = vpop.f32.mrb[0].mxu0
        %v3699 = vpop.f32.mrb[0].mxu0
        %v3700 = vadd.f32 0.0, %v3699
        %v3701 = vpop.f32.mrb[0].mxu0
        %3702 = vdwg.mxu0
        %v3703 = vmul.f32 %v3646, 0.17677669
        %v3704 = vmul.f32 %v3649, 0.17677669
        %v3705 = vmul.f32 %v3697, 0.17677669
        %v3706 = vmul.f32 %v3700, 0.17677669
        %v3707 = vsel %vm3214, %v3703, -inf
        %3708 = vmax.xlane.f32.xlu0 %v3707
        %v3709 = vpop.xlane.xlu0 %3708
        %v3710 = vsel %vm3214, %v3704, -inf
        %3711 = vmax.xlane.f32.xlu0 %v3710
        %v3712 = vpop.xlane.xlu0 %3711
        %v3713 = vsel %vm3214, %v3705, -inf
        %3714 = vmax.xlane.f32.xlu0 %v3713
        %v3715 = vpop.xlane.xlu0 %3714
        %v3716 = vsel %vm3214, %v3706, -inf
        %3717 = vmax.xlane.f32.xlu0 %v3716
        %v3718 = vpop.xlane.xlu0 %3717
        %v3719 = vsub.f32 %v3703, %v3709
        %v3720 = vsub.f32 %v3704, %v3712
        %v3721 = vsub.f32 %v3705, %v3715
        %v3722 = vsub.f32 %v3706, %v3718
        %v3723 = vmul.f32 %v3719, 1.442695
        %v3724 = vpow.pop %v3723
        %v3725 = vmul.f32 %v3720, 1.442695
        %v3726 = vpow.pop %v3725
        %v3727 = vmul.f32 %v3721, 1.442695
        %v3728 = vpow.pop %v3727
        %v3729 = vmul.f32 %v3722, 1.442695
        %v3730 = vpow.pop %v3729
        %v3731 = vsel %vm3214, %v3724, 0.0
        %3732 = vadd.xlane.f32.xlu0 %v3731
        %v3733 = vpop.xlane.xlu0 %3732
        %v3734 = vsel %vm3214, %v3726, 0.0
        %3735 = vadd.xlane.f32.xlu0 %v3734
        %v3736 = vpop.xlane.xlu0 %3735
        %v3737 = vsel %vm3214, %v3728, 0.0
        %3738 = vadd.xlane.f32.xlu0 %v3737
        %v3739 = vpop.xlane.xlu0 %3738
        %v3740 = vsel %vm3214, %v3730, 0.0
        %3741 = vadd.xlane.f32.xlu0 %v3740
        %v3742 = vpop.xlane.xlu0 %3741
        %v3743 = vrcp.pop %v3733
        %v3744 = vrcp.pop %v3736
        %v3745 = vrcp.pop %v3739
        %v3746 = vrcp.pop %v3742
        %v3747 = vmul.f32 %v3724, %v3743
        %v3748 = vmul.f32 %v3726, %v3744
        %v3749 = vmul.f32 %v3728, %v3745
        %v3750 = vmul.f32 %v3730, %v3746
        %v3751 = vpack.c.bf16 %v3748, %v3747
        %v3752 = vpack.c.bf16 %v3750, %v3749
        %3753 = vrot.lane.b32.xlu0 %v3113, 64
        %v3754 = vpop.permute.xlu0 %3753
        %v3757 = vsel %vm3214, %v3751, 0
        %3759 = vmatprep.subr.bf16.mxu0 0
        %3760 = vmatpush1.bf16.msra.mxu0 %v3754
        %3761 = vmatprep.subr.bf16.mxu0 0
        %3762 = vmatpush1.bf16.msra.mxu0 0
        %3763 = vmatprep.subr.bf16.mxu0 0
        %3764 = vmatpush1.bf16.msra.mxu0 0
        %3765 = vmatprep.subr.bf16.mxu0 0
        %3766 = vmatpush1.bf16.msra.mxu0 0
        %3767 = vmatprep.subr.bf16.mxu0 0
        %3768 = vmatpush1.bf16.msra.mxu0 0
        %3769 = vmatprep.subr.bf16.mxu0 0
        %3770 = vmatpush1.bf16.msra.mxu0 0
        %3771 = vmatprep.subr.bf16.mxu0 0
        %3772 = vmatpush1.bf16.msra.mxu0 0
        %3773 = vmatprep.subr.bf16.mxu0 0
        %3774 = vmatpush1.bf16.msra.mxu0 0
        %3775 = vmatprep.subr.bf16.mxu0 0
        %3776 = vmatpush1.bf16.msra.mxu0 0
        %3777 = vmatprep.subr.bf16.mxu0 0
        %3778 = vmatpush1.bf16.msra.mxu0 0
        %3779 = vmatprep.subr.bf16.mxu0 0
        %3780 = vmatpush1.bf16.msra.mxu0 0
        %3781 = vmatprep.subr.bf16.mxu0 0
        %3782 = vmatpush1.bf16.msra.mxu0 0
        %3783 = vmatprep.subr.bf16.mxu0 0
        %3784 = vmatpush1.bf16.msra.mxu0 0
        %3785 = vmatprep.subr.bf16.mxu0 0
        %3786 = vmatpush1.bf16.msra.mxu0 0
        %3787 = vmatprep.subr.bf16.mxu0 0
        %3788 = vmatpush1.bf16.msra.mxu0 0
        %3789 = vmatprep.subr.bf16.mxu0 0
        %3790 = vmatpush1.bf16.msra.mxu0 0
        %3791 = vmatprep.mubr.bf16.mxu0 0
        %3792 = vmatmul.mubr.bf16.gmra.mrb[0].mxu0 %v3757
        %v3793 = vpop.f32.mrb[0].mxu0
        %v3794 = vadd.f32 0.0, %v3793
        %v3795 = vpop.f32.mrb[0].mxu0
        %v3796 = vpop.f32.mrb[0].mxu0
        %v3797 = vadd.f32 0.0, %v3796
        %v3798 = vpop.f32.mrb[0].mxu0
        %3799 = vdwg.mxu0
        %3800 = vrot.lane.b32.xlu0 %v3114, 64
        %v3801 = vpop.permute.xlu0 %3800
        %v3804 = vsel %vm3214, %v3752, 0
        %3806 = vmatprep.subr.bf16.mxu0 0
        %3807 = vmatpush1.bf16.msra.mxu0 %v3801
        %3808 = vmatprep.subr.bf16.mxu0 0
        %3809 = vmatpush1.bf16.msra.mxu0 0
        %3810 = vmatprep.subr.bf16.mxu0 0
        %3811 = vmatpush1.bf16.msra.mxu0 0
        %3812 = vmatprep.subr.bf16.mxu0 0
        %3813 = vmatpush1.bf16.msra.mxu0 0
        %3814 = vmatprep.subr.bf16.mxu0 0
        %3815 = vmatpush1.bf16.msra.mxu0 0
        %3816 = vmatprep.subr.bf16.mxu0 0
        %3817 = vmatpush1.bf16.msra.mxu0 0
        %3818 = vmatprep.subr.bf16.mxu0 0
        %3819 = vmatpush1.bf16.msra.mxu0 0
        %3820 = vmatprep.subr.bf16.mxu0 0
        %3821 = vmatpush1.bf16.msra.mxu0 0
        %3822 = vmatprep.subr.bf16.mxu0 0
        %3823 = vmatpush1.bf16.msra.mxu0 0
        %3824 = vmatprep.subr.bf16.mxu0 0
        %3825 = vmatpush1.bf16.msra.mxu0 0
        %3826 = vmatprep.subr.bf16.mxu0 0
        %3827 = vmatpush1.bf16.msra.mxu0 0
        %3828 = vmatprep.subr.bf16.mxu0 0
        %3829 = vmatpush1.bf16.msra.mxu0 0
        %3830 = vmatprep.subr.bf16.mxu0 0
        %3831 = vmatpush1.bf16.msra.mxu0 0
        %3832 = vmatprep.subr.bf16.mxu0 0
        %3833 = vmatpush1.bf16.msra.mxu0 0
        %3834 = vmatprep.subr.bf16.mxu0 0
        %3835 = vmatpush1.bf16.msra.mxu0 0
        %3836 = vmatprep.subr.bf16.mxu0 0
        %3837 = vmatpush1.bf16.msra.mxu0 0
        %3838 = vmatprep.mubr.bf16.mxu0 0
        %3839 = vmatmul.mubr.bf16.gmra.mrb[0].mxu0 %v3804
        %v3840 = vpop.f32.mrb[0].mxu0
        %v3841 = vadd.f32 0.0, %v3840
        %v3842 = vpop.f32.mrb[0].mxu0
        %v3843 = vpop.f32.mrb[0].mxu0
        %v3844 = vadd.f32 0.0, %v3843
        %v3845 = vpop.f32.mrb[0].mxu0
        %3846 = vdwg.mxu0
        %3847 = vrot.lane.b32.xlu0 %v3109, 32
        %v3848 = vpop.permute.xlu0 %3847
        %3849 = vrot.lane.b32.xlu0 %v3111, 32
        %v3850 = vpop.permute.xlu0 %3849
        %v3852 = vsel %vm3115, %v3848, 0
        %v3855 = vsel %vm3115, %v3850, 0
        %3857 = vmatprep.subr.bf16.mxu0 0
        %3858 = vmatpush1.bf16.xpose.msra.mxu0 %v3855
        %3859 = vmatprep.subr.bf16.mxu0 0
        %3860 = vmatpush1.bf16.xpose.msra.mxu0 0
        %3861 = vmatprep.subr.bf16.mxu0 0
        %3862 = vmatpush1.bf16.xpose.msra.mxu0 0
        %3863 = vmatprep.subr.bf16.mxu0 0
        %3864 = vmatpush1.bf16.xpose.msra.mxu0 0
        %3865 = vmatprep.subr.bf16.mxu0 0
        %3866 = vmatpush1.bf16.xpose.msra.mxu0 0
        %3867 = vmatprep.subr.bf16.mxu0 0
        %3868 = vmatpush1.bf16.xpose.msra.mxu0 0
        %3869 = vmatprep.subr.bf16.mxu0 0
        %3870 = vmatpush1.bf16.xpose.msra.mxu0 0
        %3871 = vmatprep.subr.bf16.mxu0 0
        %3872 = vmatpush1.bf16.xpose.msra.mxu0 0
        %3873 = vmatprep.subr.bf16.mxu0 0
        %3874 = vmatpush1.bf16.xpose.msra.mxu0 0
        %3875 = vmatprep.subr.bf16.mxu0 0
        %3876 = vmatpush1.bf16.xpose.msra.mxu0 0
        %3877 = vmatprep.subr.bf16.mxu0 0
        %3878 = vmatpush1.bf16.xpose.msra.mxu0 0
        %3879 = vmatprep.subr.bf16.mxu0 0
        %3880 = vmatpush1.bf16.xpose.msra.mxu0 0
        %3881 = vmatprep.subr.bf16.mxu0 0
        %3882 = vmatpush1.bf16.xpose.msra.mxu0 0
        %3883 = vmatprep.subr.bf16.mxu0 0
        %3884 = vmatpush1.bf16.xpose.msra.mxu0 0
        %3885 = vmatprep.subr.bf16.mxu0 0
        %3886 = vmatpush1.bf16.xpose.msra.mxu0 0
        %3887 = vmatprep.subr.bf16.mxu0 0
        %3888 = vmatpush1.bf16.xpose.msra.mxu0 0
        %3889 = vmatprep.mubr.bf16.mxu0 0
        %3890 = vmatmul.mubr.bf16.gmra.mrb[0].mxu0 %v3852
        %v3891 = vpop.f32.mrb[0].mxu0
        %v3892 = vadd.f32 0.0, %v3891
        %v3893 = vpop.f32.mrb[0].mxu0
        %v3894 = vpop.f32.mrb[0].mxu0
        %v3895 = vadd.f32 0.0, %v3894
        %v3896 = vpop.f32.mrb[0].mxu0
        %3897 = vdwg.mxu0
        %3898 = vrot.lane.b32.xlu0 %v3110, 32
        %v3899 = vpop.permute.xlu0 %3898
        %3900 = vrot.lane.b32.xlu0 %v3112, 32
        %v3901 = vpop.permute.xlu0 %3900
        %v3903 = vsel %vm3115, %v3899, 0
        %v3906 = vsel %vm3115, %v3901, 0
        %3908 = vmatprep.subr.bf16.mxu0 0
        %3909 = vmatpush1.bf16.xpose.msra.mxu0 %v3906
        %3910 = vmatprep.subr.bf16.mxu0 0
        %3911 = vmatpush1.bf16.xpose.msra.mxu0 0
        %3912 = vmatprep.subr.bf16.mxu0 0
        %3913 = vmatpush1.bf16.xpose.msra.mxu0 0
        %3914 = vmatprep.subr.bf16.mxu0 0
        %3915 = vmatpush1.bf16.xpose.msra.mxu0 0
        %3916 = vmatprep.subr.bf16.mxu0 0
        %3917 = vmatpush1.bf16.xpose.msra.mxu0 0
        %3918 = vmatprep.subr.bf16.mxu0 0
        %3919 = vmatpush1.bf16.xpose.msra.mxu0 0
        %3920 = vmatprep.subr.bf16.mxu0 0
        %3921 = vmatpush1.bf16.xpose.msra.mxu0 0
        %3922 = vmatprep.subr.bf16.mxu0 0
        %3923 = vmatpush1.bf16.xpose.msra.mxu0 0
        %3924 = vmatprep.subr.bf16.mxu0 0
        %3925 = vmatpush1.bf16.xpose.msra.mxu0 0
        %3926 = vmatprep.subr.bf16.mxu0 0
        %3927 = vmatpush1.bf16.xpose.msra.mxu0 0
        %3928 = vmatprep.subr.bf16.mxu0 0
        %3929 = vmatpush1.bf16.xpose.msra.mxu0 0
        %3930 = vmatprep.subr.bf16.mxu0 0
        %3931 = vmatpush1.bf16.xpose.msra.mxu0 0
        %3932 = vmatprep.subr.bf16.mxu0 0
        %3933 = vmatpush1.bf16.xpose.msra.mxu0 0
        %3934 = vmatprep.subr.bf16.mxu0 0
        %3935 = vmatpush1.bf16.xpose.msra.mxu0 0
        %3936 = vmatprep.subr.bf16.mxu0 0
        %3937 = vmatpush1.bf16.xpose.msra.mxu0 0
        %3938 = vmatprep.subr.bf16.mxu0 0
        %3939 = vmatpush1.bf16.xpose.msra.mxu0 0
        %3940 = vmatprep.mubr.bf16.mxu0 0
        %3941 = vmatmul.mubr.bf16.gmra.mrb[0].mxu0 %v3903
        %v3942 = vpop.f32.mrb[0].mxu0
        %v3943 = vadd.f32 0.0, %v3942
        %v3944 = vpop.f32.mrb[0].mxu0
        %v3945 = vpop.f32.mrb[0].mxu0
        %v3946 = vadd.f32 0.0, %v3945
        %v3947 = vpop.f32.mrb[0].mxu0
        %3948 = vdwg.mxu0
        %v3949 = vmul.f32 %v3892, 0.17677669
        %v3950 = vmul.f32 %v3895, 0.17677669
        %v3951 = vmul.f32 %v3943, 0.17677669
        %v3952 = vmul.f32 %v3946, 0.17677669
        %v3953 = vsel %vm3214, %v3949, -inf
        %3954 = vmax.xlane.f32.xlu0 %v3953
        %v3955 = vpop.xlane.xlu0 %3954
        %v3956 = vsel %vm3214, %v3950, -inf
        %3957 = vmax.xlane.f32.xlu0 %v3956
        %v3958 = vpop.xlane.xlu0 %3957
        %v3959 = vsel %vm3214, %v3951, -inf
        %3960 = vmax.xlane.f32.xlu0 %v3959
        %v3961 = vpop.xlane.xlu0 %3960
        %v3962 = vsel %vm3214, %v3952, -inf
        %3963 = vmax.xlane.f32.xlu0 %v3962
        %v3964 = vpop.xlane.xlu0 %3963
        %v3965 = vsub.f32 %v3949, %v3955
        %v3966 = vsub.f32 %v3950, %v3958
        %v3967 = vsub.f32 %v3951, %v3961
        %v3968 = vsub.f32 %v3952, %v3964
        %v3969 = vmul.f32 %v3965, 1.442695
        %v3970 = vpow.pop %v3969
        %v3971 = vmul.f32 %v3966, 1.442695
        %v3972 = vpow.pop %v3971
        %v3973 = vmul.f32 %v3967, 1.442695
        %v3974 = vpow.pop %v3973
        %v3975 = vmul.f32 %v3968, 1.442695
        %v3976 = vpow.pop %v3975
        %v3977 = vsel %vm3214, %v3970, 0.0
        %3978 = vadd.xlane.f32.xlu0 %v3977
        %v3979 = vpop.xlane.xlu0 %3978
        %v3980 = vsel %vm3214, %v3972, 0.0
        %3981 = vadd.xlane.f32.xlu0 %v3980
        %v3982 = vpop.xlane.xlu0 %3981
        %v3983 = vsel %vm3214, %v3974, 0.0
        %3984 = vadd.xlane.f32.xlu0 %v3983
        %v3985 = vpop.xlane.xlu0 %3984
        %v3986 = vsel %vm3214, %v3976, 0.0
        %3987 = vadd.xlane.f32.xlu0 %v3986
        %v3988 = vpop.xlane.xlu0 %3987
        %v3989 = vrcp.pop %v3979
        %v3990 = vrcp.pop %v3982
        %v3991 = vrcp.pop %v3985
        %v3992 = vrcp.pop %v3988
        %v3993 = vmul.f32 %v3970, %v3989
        %v3994 = vmul.f32 %v3972, %v3990
        %v3995 = vmul.f32 %v3974, %v3991
        %v3996 = vmul.f32 %v3976, %v3992
        %v3997 = vpack.c.bf16 %v3994, %v3993
        %v3998 = vpack.c.bf16 %v3996, %v3995
        %3999 = vrot.lane.b32.xlu0 %v3113, 32
        %v4000 = vpop.permute.xlu0 %3999
        %v4003 = vsel %vm3214, %v3997, 0
        %4005 = vmatprep.subr.bf16.mxu0 0
        %4006 = vmatpush1.bf16.msra.mxu0 %v4000
        %4007 = vmatprep.subr.bf16.mxu0 0
        %4008 = vmatpush1.bf16.msra.mxu0 0
        %4009 = vmatprep.subr.bf16.mxu0 0
        %4010 = vmatpush1.bf16.msra.mxu0 0
        %4011 = vmatprep.subr.bf16.mxu0 0
        %4012 = vmatpush1.bf16.msra.mxu0 0
        %4013 = vmatprep.subr.bf16.mxu0 0
        %4014 = vmatpush1.bf16.msra.mxu0 0
        %4015 = vmatprep.subr.bf16.mxu0 0
        %4016 = vmatpush1.bf16.msra.mxu0 0
        %4017 = vmatprep.subr.bf16.mxu0 0
        %4018 = vmatpush1.bf16.msra.mxu0 0
        %4019 = vmatprep.subr.bf16.mxu0 0
        %4020 = vmatpush1.bf16.msra.mxu0 0
        %4021 = vmatprep.subr.bf16.mxu0 0
        %4022 = vmatpush1.bf16.msra.mxu0 0
        %4023 = vmatprep.subr.bf16.mxu0 0
        %4024 = vmatpush1.bf16.msra.mxu0 0
        %4025 = vmatprep.subr.bf16.mxu0 0
        %4026 = vmatpush1.bf16.msra.mxu0 0
        %4027 = vmatprep.subr.bf16.mxu0 0
        %4028 = vmatpush1.bf16.msra.mxu0 0
        %4029 = vmatprep.subr.bf16.mxu0 0
        %4030 = vmatpush1.bf16.msra.mxu0 0
        %4031 = vmatprep.subr.bf16.mxu0 0
        %4032 = vmatpush1.bf16.msra.mxu0 0
        %4033 = vmatprep.subr.bf16.mxu0 0
        %4034 = vmatpush1.bf16.msra.mxu0 0
        %4035 = vmatprep.subr.bf16.mxu0 0
        %4036 = vmatpush1.bf16.msra.mxu0 0
        %4037 = vmatprep.mubr.bf16.mxu0 0
        %4038 = vmatmul.mubr.bf16.gmra.mrb[0].mxu0 %v4003
        %v4039 = vpop.f32.mrb[0].mxu0
        %v4040 = vadd.f32 0.0, %v4039
        %v4041 = vpop.f32.mrb[0].mxu0
        %v4042 = vpop.f32.mrb[0].mxu0
        %v4043 = vadd.f32 0.0, %v4042
        %v4044 = vpop.f32.mrb[0].mxu0
        %4045 = vdwg.mxu0
        %4046 = vrot.lane.b32.xlu0 %v3114, 32
        %v4047 = vpop.permute.xlu0 %4046
        %v4050 = vsel %vm3214, %v3998, 0
        %4052 = vmatprep.subr.bf16.mxu0 0
        %4053 = vmatpush1.bf16.msra.mxu0 %v4047
        %4054 = vmatprep.subr.bf16.mxu0 0
        %4055 = vmatpush1.bf16.msra.mxu0 0
        %4056 = vmatprep.subr.bf16.mxu0 0
        %4057 = vmatpush1.bf16.msra.mxu0 0
        %4058 = vmatprep.subr.bf16.mxu0 0
        %4059 = vmatpush1.bf16.msra.mxu0 0
        %4060 = vmatprep.subr.bf16.mxu0 0
        %4061 = vmatpush1.bf16.msra.mxu0 0
        %4062 = vmatprep.subr.bf16.mxu0 0
        %4063 = vmatpush1.bf16.msra.mxu0 0
        %4064 = vmatprep.subr.bf16.mxu0 0
        %4065 = vmatpush1.bf16.msra.mxu0 0
        %4066 = vmatprep.subr.bf16.mxu0 0
        %4067 = vmatpush1.bf16.msra.mxu0 0
        %4068 = vmatprep.subr.bf16.mxu0 0
        %4069 = vmatpush1.bf16.msra.mxu0 0
        %4070 = vmatprep.subr.bf16.mxu0 0
        %4071 = vmatpush1.bf16.msra.mxu0 0
        %4072 = vmatprep.subr.bf16.mxu0 0
        %4073 = vmatpush1.bf16.msra.mxu0 0
        %4074 = vmatprep.subr.bf16.mxu0 0
        %4075 = vmatpush1.bf16.msra.mxu0 0
        %4076 = vmatprep.subr.bf16.mxu0 0
        %4077 = vmatpush1.bf16.msra.mxu0 0
        %4078 = vmatprep.subr.bf16.mxu0 0
        %4079 = vmatpush1.bf16.msra.mxu0 0
        %4080 = vmatprep.subr.bf16.mxu0 0
        %4081 = vmatpush1.bf16.msra.mxu0 0
        %4082 = vmatprep.subr.bf16.mxu0 0
        %4083 = vmatpush1.bf16.msra.mxu0 0
        %4084 = vmatprep.mubr.bf16.mxu0 0
        %4085 = vmatmul.mubr.bf16.gmra.mrb[0].mxu0 %v4050
        %v4086 = vpop.f32.mrb[0].mxu0
        %v4087 = vadd.f32 0.0, %v4086
        %v4088 = vpop.f32.mrb[0].mxu0
        %v4089 = vpop.f32.mrb[0].mxu0
        %v4090 = vadd.f32 0.0, %v4089
        %v4091 = vpop.f32.mrb[0].mxu0
        %4092 = vdwg.mxu0
        %4097 = vrot.lane.b32.xlu0 %v3547, 32
        %v4098 = vpop.permute.xlu0 %4097
        %4099 = vrot.lane.b32.xlu0 %v3550, 32
        %v4100 = vpop.permute.xlu0 %4099
        %4101 = vrot.lane.b32.xlu0 %v3595, 32
        %v4102 = vpop.permute.xlu0 %4101
        %4103 = vrot.lane.b32.xlu0 %v3598, 32
        %v4104 = vpop.permute.xlu0 %4103
        %4113 = vrot.lane.b32.xlu0 %v3794, 64
        %v4114 = vpop.permute.xlu0 %4113
        %4115 = vrot.lane.b32.xlu0 %v3797, 64
        %v4116 = vpop.permute.xlu0 %4115
        %4117 = vrot.lane.b32.xlu0 %v3841, 64
        %v4118 = vpop.permute.xlu0 %4117
        %4119 = vrot.lane.b32.xlu0 %v3844, 64
        %v4120 = vpop.permute.xlu0 %4119
        %4129 = vrot.lane.b32.xlu0 %v4040, 96
        %v4130 = vpop.permute.xlu0 %4129
        %4131 = vrot.lane.b32.xlu0 %v4043, 96
        %v4132 = vpop.permute.xlu0 %4131
        %4133 = vrot.lane.b32.xlu0 %v4087, 96
        %v4134 = vpop.permute.xlu0 %4133
        %4135 = vrot.lane.b32.xlu0 %v4090, 96
        %v4136 = vpop.permute.xlu0 %4135
        %v4141 = vsel %vm3115, %v3299, %v4098
        %v4142 = vsel %vm3115, %v3302, %v4100
        %v4143 = vsel %vm3115, %v3343, %v4102
        %v4144 = vsel %vm3115, %v3346, %v4104
        %vm4145 = vcmask 523264
        %v4146 = vsel %vm4145, %v4141, %v4114
        %v4147 = vsel %vm4145, %v4142, %v4116
        %v4148 = vsel %vm4145, %v4143, %v4118
        %v4149 = vsel %vm4145, %v4144, %v4120
        %vm4150 = vcmask 785408
        %v4151 = vsel %vm4150, %v4146, %v4130
        %v4152 = vsel %vm4150, %v4147, %v4132
        %v4153 = vsel %vm4150, %v4148, %v4134
        %v4154 = vsel %vm4150, %v4149, %v4136
        %v4155 = vpack.c.bf16 %v4152, %v4151
        %v4156 = vpack.c.bf16 %v4154, %v4153
        %v4157 = vld [vmem:[%s1533] sm:$0xf]
        %v4158 = vld [vmem:[%s1533 + $0x4] sm:$0xf]
        %v4159 = vld [vmem:[%s1533 + $0x8] sm:$0xf]
        %v4160 = vld [vmem:[%s1533 + $0xc] sm:$0xf]
        %v4161 = vld [vmem:[%s1533 + $0x10] sm:$0xf]
        %v4162 = vld [vmem:[%s1533 + $0x14] sm:$0xf]
        %v4163 = vld [vmem:[%s1533 + $0x18] sm:$0xf]
        %v4164 = vld [vmem:[%s1533 + $0x1c] sm:$0xf]
        %v4165 = vld [vmem:[%s1533 + $0x20] sm:$0xf]
        %v4166 = vld [vmem:[%s1533 + $0x24] sm:$0xf]
        %v4167 = vld [vmem:[%s1533 + $0x28] sm:$0xf]
        %v4168 = vld [vmem:[%s1533 + $0x2c] sm:$0xf]
        %v4169 = vld [vmem:[%s1533 + $0x30] sm:$0xf]
        %v4170 = vld [vmem:[%s1533 + $0x34] sm:$0xf]
        %v4171 = vld [vmem:[%s1533 + $0x38] sm:$0xf]
        %v4172 = vld [vmem:[%s1533 + $0x3c] sm:$0xf]
        %v4173 = vld [vmem:[%s1812] sm:$0x1]
        %v4175 = vlaneseq
        %v4176 = vshrl.u32 %v4175, 7
        %v4177 = vsub.s32 0, %v4176
        %v4178 = vrot.slane %v4173, %v4177
        %v4196 = vunpack.c.l.b16 %v4157
        %v4197 = vunpack.c.l.b16 %v4158
        %v4198 = vunpack.c.l.b16 %v4159
        %v4199 = vunpack.c.l.b16 %v4160
        %v4200 = vunpack.c.l.b16 %v4161
        %v4201 = vunpack.c.l.b16 %v4162
        %v4202 = vunpack.c.l.b16 %v4163
        %v4203 = vunpack.c.l.b16 %v4164
        %v4204 = vunpack.c.l.b16 %v4165
        %v4205 = vunpack.c.l.b16 %v4166
        %v4206 = vunpack.c.l.b16 %v4167
        %v4207 = vunpack.c.l.b16 %v4168
        %v4208 = vunpack.c.l.b16 %v4169
        %v4209 = vunpack.c.l.b16 %v4170
        %v4210 = vunpack.c.l.b16 %v4171
        %v4211 = vunpack.c.l.b16 %v4172
        %v4212 = vpack.c.b16 %v4197, %v4196
        %v4213 = vpack.c.b16 %v4199, %v4198
        %v4214 = vpack.c.b16 %v4201, %v4200
        %v4215 = vpack.c.b16 %v4203, %v4202
        %v4216 = vpack.c.b16 %v4205, %v4204
        %v4217 = vpack.c.b16 %v4207, %v4206
        %v4218 = vpack.c.b16 %v4209, %v4208
        %v4219 = vpack.c.b16 %v4211, %v4210
        %4228 = vmatprep.subr.bf16.mxu0 0
        %4229 = vmatpush1.bf16.msra.mxu0 %v4212
        %4230 = vmatprep.subr.bf16.mxu0 0
        %4231 = vmatpush1.bf16.msra.mxu0 %v4213
        %4232 = vmatprep.subr.bf16.mxu0 0
        %4233 = vmatpush1.bf16.msra.mxu0 %v4214
        %4234 = vmatprep.subr.bf16.mxu0 0
        %4235 = vmatpush1.bf16.msra.mxu0 %v4215
        %4236 = vmatprep.subr.bf16.mxu0 0
        %4237 = vmatpush1.bf16.msra.mxu0 %v4216
        %4238 = vmatprep.subr.bf16.mxu0 0
        %4239 = vmatpush1.bf16.msra.mxu0 %v4217
        %4240 = vmatprep.subr.bf16.mxu0 0
        %4241 = vmatpush1.bf16.msra.mxu0 %v4218
        %4242 = vmatprep.subr.bf16.mxu0 0
        %4243 = vmatpush1.bf16.msra.mxu0 %v4219
        %4244 = vmatprep.subr.bf16.mxu0 0
        %4245 = vmatpush1.bf16.msra.mxu0 0
        %4246 = vmatprep.subr.bf16.mxu0 0
        %4247 = vmatpush1.bf16.msra.mxu0 0
        %4248 = vmatprep.subr.bf16.mxu0 0
        %4249 = vmatpush1.bf16.msra.mxu0 0
        %4250 = vmatprep.subr.bf16.mxu0 0
        %4251 = vmatpush1.bf16.msra.mxu0 0
        %4252 = vmatprep.subr.bf16.mxu0 0
        %4253 = vmatpush1.bf16.msra.mxu0 0
        %4254 = vmatprep.subr.bf16.mxu0 0
        %4255 = vmatpush1.bf16.msra.mxu0 0
        %4256 = vmatprep.subr.bf16.mxu0 0
        %4257 = vmatpush1.bf16.msra.mxu0 0
        %4258 = vmatprep.subr.bf16.mxu0 0
        %4259 = vmatpush1.bf16.msra.mxu0 0
        %4260 = vmatprep.mubr.bf16.mxu0 0
        %4261 = vmatmul.mubr.bf16.gmra.mrb[0].mxu0 %v4155
        %v4262 = vpop.f32.mrb[0].mxu0
        %v4263 = vadd.f32 %v4178, %v4262
        %v4264 = vpop.f32.mrb[0].mxu0
        %v4265 = vpop.f32.mrb[0].mxu0
        %v4266 = vadd.f32 %v4178, %v4265
        %v4267 = vpop.f32.mrb[0].mxu0
        %4268 = vmatprep.mubr.bf16.mxu0 0
        %4269 = vmatmul.mubr.bf16.gmra.mrb[0].mxu0 %v4156
        %v4270 = vpop.f32.mrb[0].mxu0
        %v4271 = vadd.f32 %v4178, %v4270
        %v4272 = vpop.f32.mrb[0].mxu0
        %v4273 = vpop.f32.mrb[0].mxu0
        %v4274 = vadd.f32 %v4178, %v4273
        %v4275 = vpop.f32.mrb[0].mxu0
        %4276 = vdwg.mxu0
        %v4277 = vadd.f32 %v2758, %v4263
        %v4278 = vadd.f32 %v2759, %v4266
        %v4279 = vadd.f32 %v2760, %v4271
        %v4280 = vadd.f32 %v2761, %v4274
        %v4281 = vld [vmem:[%s1815] sm:$0x1]
        %v4282 = vld [vmem:[%s1818] sm:$0x1]
        %4283 = vadd.xlane.f32.xlu0 %v4277
        %v4284 = vpop.xlane.xlu0 %4283
        %4285 = vadd.xlane.f32.xlu0 %v4278
        %v4286 = vpop.xlane.xlu0 %4285
        %4287 = vadd.xlane.f32.xlu0 %v4279
        %v4288 = vpop.xlane.xlu0 %4287
        %4289 = vadd.xlane.f32.xlu0 %v4280
        %v4290 = vpop.xlane.xlu0 %4289
        %v4291 = vmul.f32 %v4284, %v1990
        %v4292 = vmul.f32 %v4286, %v1990
        %v4293 = vmul.f32 %v4288, %v1990
        %v4294 = vmul.f32 %v4290, %v1990
        %v4295 = vsub.f32 %v4277, %v4291
        %v4296 = vsub.f32 %v4278, %v4292
        %v4297 = vsub.f32 %v4279, %v4293
        %v4298 = vsub.f32 %v4280, %v4294
        %v4299 = vmul.f32 %v4295, %v4295
        %v4300 = vmul.f32 %v4296, %v4296
        %v4301 = vmul.f32 %v4297, %v4297
        %v4302 = vmul.f32 %v4298, %v4298
        %4303 = vadd.xlane.f32.xlu0 %v4299
        %v4304 = vpop.xlane.xlu0 %4303
        %4305 = vadd.xlane.f32.xlu0 %v4300
        %v4306 = vpop.xlane.xlu0 %4305
        %4307 = vadd.xlane.f32.xlu0 %v4301
        %v4308 = vpop.xlane.xlu0 %4307
        %4309 = vadd.xlane.f32.xlu0 %v4302
        %v4310 = vpop.xlane.xlu0 %4309
        %v4311 = vmul.f32 %v4304, %v1990
        %v4312 = vmul.f32 %v4306, %v1990
        %v4313 = vmul.f32 %v4308, %v1990
        %v4314 = vmul.f32 %v4310, %v1990
        %v4315 = vadd.f32 %v4311, 1e-05
        %v4316 = vadd.f32 %v4312, 1e-05
        %v4317 = vadd.f32 %v4313, 1e-05
        %v4318 = vadd.f32 %v4314, 1e-05
        %v4319 = vrsqrt.pop %v4315
        %v4320 = vrsqrt.pop %v4316
        %v4321 = vrsqrt.pop %v4317
        %v4322 = vrsqrt.pop %v4318
        %v4323 = vmul.f32 %v4295, %v4319
        %v4324 = vmul.f32 %v4296, %v4320
        %v4325 = vmul.f32 %v4297, %v4321
        %v4326 = vmul.f32 %v4298, %v4322
        %v4328 = vlaneseq
        %v4329 = vshrl.u32 %v4328, 7
        %v4330 = vsub.s32 0, %v4329
        %v4331 = vrot.slane %v4281, %v4330
        %v4333 = vmul.f32 %v4323, %v4331
        %v4334 = vmul.f32 %v4324, %v4331
        %v4335 = vmul.f32 %v4325, %v4331
        %v4336 = vmul.f32 %v4326, %v4331
        %v4338 = vlaneseq
        %v4339 = vshrl.u32 %v4338, 7
        %v4340 = vsub.s32 0, %v4339
        %v4341 = vrot.slane %v4282, %v4340
        %v4343 = vadd.f32 %v4333, %v4341
        %v4344 = vadd.f32 %v4334, %v4341
        %v4345 = vadd.f32 %v4335, %v4341
        %v4346 = vadd.f32 %v4336, %v4341
        %v4347 = vpack.c.bf16 %v4344, %v4343
        %v4348 = vpack.c.bf16 %v4346, %v4345
        %v4349 = vld [vmem:[%s1542] sm:$0xff]
        %v4350 = vld [vmem:[%s1542 + $0x8] sm:$0xff]
        %v4351 = vld [vmem:[%s1542 + $0x10] sm:$0xff]
        %v4352 = vld [vmem:[%s1542 + $0x18] sm:$0xff]
        %v4353 = vld [vmem:[%s1542 + $0x20] sm:$0xff]
        %v4354 = vld [vmem:[%s1542 + $0x28] sm:$0xff]
        %v4355 = vld [vmem:[%s1542 + $0x30] sm:$0xff]
        %v4356 = vld [vmem:[%s1542 + $0x38] sm:$0xff]
        %v4357 = vld [vmem:[%s1542 + $0x40] sm:$0xff]
        %v4358 = vld [vmem:[%s1542 + $0x48] sm:$0xff]
        %v4359 = vld [vmem:[%s1542 + $0x50] sm:$0xff]
        %v4360 = vld [vmem:[%s1542 + $0x58] sm:$0xff]
        %v4361 = vld [vmem:[%s1542 + $0x60] sm:$0xff]
        %v4362 = vld [vmem:[%s1542 + $0x68] sm:$0xff]
        %v4363 = vld [vmem:[%s1542 + $0x70] sm:$0xff]
        %v4364 = vld [vmem:[%s1542 + $0x78] sm:$0xff]
        %v4365 = vld [vmem:[%s1822] sm:$0x3]
        %v4367 = vlaneseq
        %v4368 = vshrl.u32 %v4367, 7
        %v4369 = vsub.s32 0, %v4368
        %v4370 = vrot.slane %v4365, %v4369
        %v4371 = vlaneseq
        %v4372 = vshrl.u32 %v4371, 7
        %v4373 = vsub.s32 1, %v4372
        %v4374 = vrot.slane %v4365, %v4373
        %v4393 = vunpack.c.l.b16 %v4349
        %v4394 = vunpack.c.h.b16 %v4349
        %v4395 = vunpack.c.l.b16 %v4350
        %v4396 = vunpack.c.h.b16 %v4350
        %v4397 = vunpack.c.l.b16 %v4351
        %v4398 = vunpack.c.h.b16 %v4351
        %v4399 = vunpack.c.l.b16 %v4352
        %v4400 = vunpack.c.h.b16 %v4352
        %v4401 = vunpack.c.l.b16 %v4353
        %v4402 = vunpack.c.h.b16 %v4353
        %v4403 = vunpack.c.l.b16 %v4354
        %v4404 = vunpack.c.h.b16 %v4354
        %v4405 = vunpack.c.l.b16 %v4355
        %v4406 = vunpack.c.h.b16 %v4355
        %v4407 = vunpack.c.l.b16 %v4356
        %v4408 = vunpack.c.h.b16 %v4356
        %v4409 = vunpack.c.l.b16 %v4357
        %v4410 = vunpack.c.h.b16 %v4357
        %v4411 = vunpack.c.l.b16 %v4358
        %v4412 = vunpack.c.h.b16 %v4358
        %v4413 = vunpack.c.l.b16 %v4359
        %v4414 = vunpack.c.h.b16 %v4359
        %v4415 = vunpack.c.l.b16 %v4360
        %v4416 = vunpack.c.h.b16 %v4360
        %v4417 = vunpack.c.l.b16 %v4361
        %v4418 = vunpack.c.h.b16 %v4361
        %v4419 = vunpack.c.l.b16 %v4362
        %v4420 = vunpack.c.h.b16 %v4362
        %v4421 = vunpack.c.l.b16 %v4363
        %v4422 = vunpack.c.h.b16 %v4363
        %v4423 = vunpack.c.l.b16 %v4364
        %v4424 = vunpack.c.h.b16 %v4364
        %v4425 = vpack.c.b16 %v4395, %v4393
        %v4426 = vpack.c.b16 %v4396, %v4394
        %v4427 = vpack.c.b16 %v4399, %v4397
        %v4428 = vpack.c.b16 %v4400, %v4398
        %v4429 = vpack.c.b16 %v4403, %v4401
        %v4430 = vpack.c.b16 %v4404, %v4402
        %v4431 = vpack.c.b16 %v4407, %v4405
        %v4432 = vpack.c.b16 %v4408, %v4406
        %v4433 = vpack.c.b16 %v4411, %v4409
        %v4434 = vpack.c.b16 %v4412, %v4410
        %v4435 = vpack.c.b16 %v4415, %v4413
        %v4436 = vpack.c.b16 %v4416, %v4414
        %v4437 = vpack.c.b16 %v4419, %v4417
        %v4438 = vpack.c.b16 %v4420, %v4418
        %v4439 = vpack.c.b16 %v4423, %v4421
        %v4440 = vpack.c.b16 %v4424, %v4422
        %4457 = vmatprep.subr.bf16.mxu0 %v4426
        %4458 = vmatpush1.bf16.msra.mxu0 %v4425
        %4459 = vmatprep.subr.bf16.mxu0 %v4428
        %4460 = vmatpush1.bf16.msra.mxu0 %v4427
        %4461 = vmatprep.subr.bf16.mxu0 %v4430
        %4462 = vmatpush1.bf16.msra.mxu0 %v4429
        %4463 = vmatprep.subr.bf16.mxu0 %v4432
        %4464 = vmatpush1.bf16.msra.mxu0 %v4431
        %4465 = vmatprep.subr.bf16.mxu0 %v4434
        %4466 = vmatpush1.bf16.msra.mxu0 %v4433
        %4467 = vmatprep.subr.bf16.mxu0 %v4436
        %4468 = vmatpush1.bf16.msra.mxu0 %v4435
        %4469 = vmatprep.subr.bf16.mxu0 %v4438
        %4470 = vmatpush1.bf16.msra.mxu0 %v4437
        %4471 = vmatprep.subr.bf16.mxu0 %v4440
        %4472 = vmatpush1.bf16.msra.mxu0 %v4439
        %4473 = vmatprep.subr.bf16.mxu0 0
        %4474 = vmatpush1.bf16.msra.mxu0 0
        %4475 = vmatprep.subr.bf16.mxu0 0
        %4476 = vmatpush1.bf16.msra.mxu0 0
        %4477 = vmatprep.subr.bf16.mxu0 0
        %4478 = vmatpush1.bf16.msra.mxu0 0
        %4479 = vmatprep.subr.bf16.mxu0 0
        %4480 = vmatpush1.bf16.msra.mxu0 0
        %4481 = vmatprep.subr.bf16.mxu0 0
        %4482 = vmatpush1.bf16.msra.mxu0 0
        %4483 = vmatprep.subr.bf16.mxu0 0
        %4484 = vmatpush1.bf16.msra.mxu0 0
        %4485 = vmatprep.subr.bf16.mxu0 0
        %4486 = vmatpush1.bf16.msra.mxu0 0
        %4487 = vmatprep.subr.bf16.mxu0 0
        %4488 = vmatpush1.bf16.msra.mxu0 0
        %4489 = vmatprep.mubr.bf16.mxu0 0
        %4490 = vmatmul.mubr.bf16.gmra.mrb[0].mxu0 %v4347
        %v4491 = vpop.f32.mrb[0].mxu0
        %v4492 = vadd.f32 %v4370, %v4491
        %v4493 = vpop.f32.mrb[0].mxu0
        %v4494 = vadd.f32 %v4374, %v4493
        %v4495 = vpop.f32.mrb[0].mxu0
        %v4496 = vadd.f32 %v4370, %v4495
        %v4497 = vpop.f32.mrb[0].mxu0
        %v4498 = vadd.f32 %v4374, %v4497
        %4499 = vmatprep.mubr.bf16.mxu0 0
        %4500 = vmatmul.mubr.bf16.gmra.mrb[0].mxu0 %v4348
        %v4501 = vpop.f32.mrb[0].mxu0
        %v4502 = vadd.f32 %v4370, %v4501
        %v4503 = vpop.f32.mrb[0].mxu0
        %v4504 = vadd.f32 %v4374, %v4503
        %v4505 = vpop.f32.mrb[0].mxu0
        %v4506 = vadd.f32 %v4370, %v4505
        %v4507 = vpop.f32.mrb[0].mxu0
        %v4508 = vadd.f32 %v4374, %v4507
        %4509 = vdwg.mxu0
        %v4510 = vsub.f32 0.0, %v4494
        %v4511 = vsub.f32 0.0, %v4498
        %v4512 = vsub.f32 0.0, %v4504
        %v4513 = vsub.f32 0.0, %v4508
        %v4514 = vmul.f32 %v4510, 1.442695
        %v4515 = vpow.pop %v4514
        %v4516 = vmul.f32 %v4511, 1.442695
        %v4517 = vpow.pop %v4516
        %v4518 = vmul.f32 %v4512, 1.442695
        %v4519 = vpow.pop %v4518
        %v4520 = vmul.f32 %v4513, 1.442695
        %v4521 = vpow.pop %v4520
        %v4522 = vadd.f32 %v4515, 1.0
        %v4523 = vadd.f32 %v4517, 1.0
        %v4524 = vadd.f32 %v4519, 1.0
        %v4525 = vadd.f32 %v4521, 1.0
        %v4526 = vrcp.pop %v4522
        %v4527 = vrcp.pop %v4523
        %v4528 = vrcp.pop %v4524
        %v4529 = vrcp.pop %v4525
        %v4530 = vmul.f32 %v4492, %v4526
        %v4531 = vmul.f32 %v4496, %v4527
        %v4532 = vmul.f32 %v4502, %v4528
        %v4533 = vmul.f32 %v4506, %v4529
        %v4534 = vld [vmem:[%s1826] sm:$0x7f]
        %v4535 = vlaneseq
        %v4536 = vshrl.u32 %v4535, 7
        %v4537 = vsub.s32 3, %v4536
        %v4538 = vrot.slane %v4534, %v4537
        %v4539 = vmul.f32 %v4538, %v4530
        %v4540 = vmul.f32 %v4538, %v4531
        %v4541 = vmul.f32 %v4538, %v4532
        %v4542 = vmul.f32 %v4538, %v4533
        %v4543 = vrot.slane %v4530, 5
        %v4544 = vrot.slane %v4531, 5
        %v4545 = vrot.slane %v4532, 5
        %v4546 = vrot.slane %v4533, 5
        %v4547 = vlaneseq
        %v4548 = vshrl.u32 %v4547, 7
        %vm4549 = vcmp.lt.s32.totalorder %v4548, 3
        %v4550 = vsel %vm4549, %v4545, %v4546
        %v4551 = vsel %vm4549, %v4544, %v4545
        %v4552 = vsel %vm4549, %v4543, %v4544
        %v4553 = vsel %vm4549, %v4546, %v4543
        %v4554 = vld [vmem:[#allocation5] sm:$0xff]
        %v4555 = vld [vmem:[#allocation5 + $0x8] sm:$0xff]
        %v4556 = vld [vmem:[#allocation5 + $0x10] sm:$0xff]
        %v4557 = vld [vmem:[#allocation5 + $0x18] sm:$0xff]
        %4559 = vset.pattern.permute.xlu0 0
        %4560 = vperm.xlu0 %4559, %v4554
        %v4561 = vpop.permute.xlu0 %4560
        %4564 = vset.pattern.permute.xlu0 0
        %4565 = vperm.xlu0 %4564, %v4555
        %v4566 = vpop.permute.xlu0 %4565
        %4569 = vset.pattern.permute.xlu0 0
        %4570 = vperm.xlu0 %4569, %v4556
        %v4571 = vpop.permute.xlu0 %4570
        %4574 = vset.pattern.permute.xlu0 0
        %4575 = vperm.xlu0 %4574, %v4557
        %v4576 = vpop.permute.xlu0 %4575
        %v4578 = vmul.f32 %v4553, %v4561
        %v4579 = vmul.f32 %v4552, %v4566
        %v4580 = vmul.f32 %v4551, %v4571
        %v4581 = vmul.f32 %v4550, %v4576
        %v4582 = vlaneseq
        %v4583 = vshrl.u32 %v4582, 7
        %v4584 = vsub.s32 0, %v4583
        %v4585 = vrot.slane %v4534, %v4584
        %v4586 = vmul.f32 %v4585, %v4578
        %v4587 = vmul.f32 %v4585, %v4579
        %v4588 = vmul.f32 %v4585, %v4580
        %v4589 = vmul.f32 %v4585, %v4581
        %v4590 = vadd.f32 %v4539, %v4586
        %v4591 = vadd.f32 %v4540, %v4587
        %v4592 = vadd.f32 %v4541, %v4588
        %v4593 = vadd.f32 %v4542, %v4589
        %v4594 = vrot.slane %v4530, 6
        %v4595 = vrot.slane %v4531, 6
        %v4596 = vrot.slane %v4532, 6
        %v4597 = vrot.slane %v4533, 6
        %vm4598 = vcmp.lt.s32.totalorder %v4548, 2
        %v4599 = vsel %vm4598, %v4596, %v4597
        %v4600 = vsel %vm4598, %v4595, %v4596
        %v4601 = vsel %vm4598, %v4594, %v4595
        %v4602 = vsel %vm4598, %v4597, %v4594
        %s4603 = scalar_lea.vmem [#allocation5], 32
        %v4604 = vld [vmem:[%s4603] sm:$0xff]
        %v4605 = vld [vmem:[%s4603 + $0x8] sm:$0xff]
        %v4606 = vld [vmem:[%s4603 + $0x10] sm:$0xff]
        %v4607 = vld [vmem:[%s4603 + $0x18] sm:$0xff]
        %4609 = vset.pattern.permute.xlu0 0
        %4610 = vperm.xlu0 %4609, %v4604
        %v4611 = vpop.permute.xlu0 %4610
        %4614 = vset.pattern.permute.xlu0 0
        %4615 = vperm.xlu0 %4614, %v4605
        %v4616 = vpop.permute.xlu0 %4615
        %4619 = vset.pattern.permute.xlu0 0
        %4620 = vperm.xlu0 %4619, %v4606
        %v4621 = vpop.permute.xlu0 %4620
        %4624 = vset.pattern.permute.xlu0 0
        %4625 = vperm.xlu0 %4624, %v4607
        %v4626 = vpop.permute.xlu0 %4625
        %v4628 = vmul.f32 %v4602, %v4611
        %v4629 = vmul.f32 %v4601, %v4616
        %v4630 = vmul.f32 %v4600, %v4621
        %v4631 = vmul.f32 %v4599, %v4626
        %v4632 = vlaneseq
        %v4633 = vshrl.u32 %v4632, 7
        %v4634 = vsub.s32 1, %v4633
        %v4635 = vrot.slane %v4534, %v4634
        %v4636 = vmul.f32 %v4635, %v4628
        %v4637 = vmul.f32 %v4635, %v4629
        %v4638 = vmul.f32 %v4635, %v4630
        %v4639 = vmul.f32 %v4635, %v4631
        %v4640 = vadd.f32 %v4590, %v4636
        %v4641 = vadd.f32 %v4591, %v4637
        %v4642 = vadd.f32 %v4592, %v4638
        %v4643 = vadd.f32 %v4593, %v4639
        %v4644 = vrot.slane %v4530, 7
        %v4645 = vrot.slane %v4531, 7
        %v4646 = vrot.slane %v4532, 7
        %v4647 = vrot.slane %v4533, 7
        %vm4648 = vcmp.lt.s32.totalorder %v4548, 1
        %v4649 = vsel %vm4648, %v4646, %v4647
        %v4650 = vsel %vm4648, %v4645, %v4646
        %v4651 = vsel %vm4648, %v4644, %v4645
        %v4652 = vsel %vm4648, %v4647, %v4644
        %s4653 = scalar_lea.vmem [#allocation5], 64
        %v4654 = vld [vmem:[%s4653] sm:$0xff]
        %v4655 = vld [vmem:[%s4653 + $0x8] sm:$0xff]
        %v4656 = vld [vmem:[%s4653 + $0x10] sm:$0xff]
        %v4657 = vld [vmem:[%s4653 + $0x18] sm:$0xff]
        %4659 = vset.pattern.permute.xlu0 0
        %4660 = vperm.xlu0 %4659, %v4654
        %v4661 = vpop.permute.xlu0 %4660
        %4664 = vset.pattern.permute.xlu0 0
        %4665 = vperm.xlu0 %4664, %v4655
        %v4666 = vpop.permute.xlu0 %4665
        %4669 = vset.pattern.permute.xlu0 0
        %4670 = vperm.xlu0 %4669, %v4656
        %v4671 = vpop.permute.xlu0 %4670
        %4674 = vset.pattern.permute.xlu0 0
        %4675 = vperm.xlu0 %4674, %v4657
        %v4676 = vpop.permute.xlu0 %4675
        %v4678 = vmul.f32 %v4652, %v4661
        %v4679 = vmul.f32 %v4651, %v4666
        %v4680 = vmul.f32 %v4650, %v4671
        %v4681 = vmul.f32 %v4649, %v4676
        %v4682 = vlaneseq
        %v4683 = vshrl.u32 %v4682, 7
        %v4684 = vsub.s32 2, %v4683
        %v4685 = vrot.slane %v4534, %v4684
        %v4686 = vmul.f32 %v4685, %v4678
        %v4687 = vmul.f32 %v4685, %v4679
        %v4688 = vmul.f32 %v4685, %v4680
        %v4689 = vmul.f32 %v4685, %v4681
        %v4690 = vadd.f32 %v4640, %v4686
        %v4691 = vadd.f32 %v4641, %v4687
        %v4692 = vadd.f32 %v4642, %v4688
        %v4693 = vadd.f32 %v4643, %v4689
        %v4694 = vrot.slane %v4530, 1
        %v4695 = vrot.slane %v4531, 1
        %v4696 = vrot.slane %v4532, 1
        %v4697 = vrot.slane %v4533, 1
        %vm4698 = vcmp.lt.s32.totalorder %v4548, 7
        %v4699 = vsel %vm4698, %v4696, %v4697
        %v4700 = vsel %vm4698, %v4695, %v4696
        %v4701 = vsel %vm4698, %v4694, %v4695
        %v4702 = vsel %vm4698, %v4697, %v4694
        %s4703 = scalar_lea.vmem [#allocation5], 128
        %v4704 = vld [vmem:[%s4703] sm:$0xff]
        %v4705 = vld [vmem:[%s4703 + $0x8] sm:$0xff]
        %v4706 = vld [vmem:[%s4703 + $0x10] sm:$0xff]
        %v4707 = vld [vmem:[%s4703 + $0x18] sm:$0xff]
        %4709 = vset.pattern.permute.xlu0 0
        %4710 = vperm.xlu0 %4709, %v4704
        %v4711 = vpop.permute.xlu0 %4710
        %4714 = vset.pattern.permute.xlu0 0
        %4715 = vperm.xlu0 %4714, %v4705
        %v4716 = vpop.permute.xlu0 %4715
        %4719 = vset.pattern.permute.xlu0 0
        %4720 = vperm.xlu0 %4719, %v4706
        %v4721 = vpop.permute.xlu0 %4720
        %4724 = vset.pattern.permute.xlu0 0
        %4725 = vperm.xlu0 %4724, %v4707
        %v4726 = vpop.permute.xlu0 %4725
        %v4728 = vmul.f32 %v4701, %v4711
        %v4729 = vmul.f32 %v4700, %v4716
        %v4730 = vmul.f32 %v4699, %v4721
        %v4731 = vmul.f32 %v4702, %v4726
        %v4732 = vlaneseq
        %v4733 = vshrl.u32 %v4732, 7
        %v4734 = vsub.s32 4, %v4733
        %v4735 = vrot.slane %v4534, %v4734
        %v4736 = vmul.f32 %v4735, %v4728
        %v4737 = vmul.f32 %v4735, %v4729
        %v4738 = vmul.f32 %v4735, %v4730
        %v4739 = vmul.f32 %v4735, %v4731
        %v4740 = vadd.f32 %v4690, %v4736
        %v4741 = vadd.f32 %v4691, %v4737
        %v4742 = vadd.f32 %v4692, %v4738
        %v4743 = vadd.f32 %v4693, %v4739
        %v4744 = vrot.slane %v4530, 2
        %v4745 = vrot.slane %v4531, 2
        %v4746 = vrot.slane %v4532, 2
        %v4747 = vrot.slane %v4533, 2
        %vm4748 = vcmp.lt.s32.totalorder %v4548, 6
        %v4749 = vsel %vm4748, %v4746, %v4747
        %v4750 = vsel %vm4748, %v4745, %v4746
        %v4751 = vsel %vm4748, %v4744, %v4745
        %v4752 = vsel %vm4748, %v4747, %v4744
        %s4753 = scalar_lea.vmem [#allocation5], 160
        %v4754 = vld [vmem:[%s4753] sm:$0xff]
        %v4755 = vld [vmem:[%s4753 + $0x8] sm:$0xff]
        %v4756 = vld [vmem:[%s4753 + $0x10] sm:$0xff]
        %v4757 = vld [vmem:[%s4753 + $0x18] sm:$0xff]
        %4759 = vset.pattern.permute.xlu0 0
        %4760 = vperm.xlu0 %4759, %v4754
        %v4761 = vpop.permute.xlu0 %4760
        %4764 = vset.pattern.permute.xlu0 0
        %4765 = vperm.xlu0 %4764, %v4755
        %v4766 = vpop.permute.xlu0 %4765
        %4769 = vset.pattern.permute.xlu0 0
        %4770 = vperm.xlu0 %4769, %v4756
        %v4771 = vpop.permute.xlu0 %4770
        %4774 = vset.pattern.permute.xlu0 0
        %4775 = vperm.xlu0 %4774, %v4757
        %v4776 = vpop.permute.xlu0 %4775
        %v4778 = vmul.f32 %v4751, %v4761
        %v4779 = vmul.f32 %v4750, %v4766
        %v4780 = vmul.f32 %v4749, %v4771
        %v4781 = vmul.f32 %v4752, %v4776
        %v4782 = vlaneseq
        %v4783 = vshrl.u32 %v4782, 7
        %v4784 = vsub.s32 5, %v4783
        %v4785 = vrot.slane %v4534, %v4784
        %v4786 = vmul.f32 %v4785, %v4778
        %v4787 = vmul.f32 %v4785, %v4779
        %v4788 = vmul.f32 %v4785, %v4780
        %v4789 = vmul.f32 %v4785, %v4781
        %v4790 = vadd.f32 %v4740, %v4786
        %v4791 = vadd.f32 %v4741, %v4787
        %v4792 = vadd.f32 %v4742, %v4788
        %v4793 = vadd.f32 %v4743, %v4789
        %v4794 = vrot.slane %v4530, 3
        %v4795 = vrot.slane %v4531, 3
        %v4796 = vrot.slane %v4532, 3
        %v4797 = vrot.slane %v4533, 3
        %vm4798 = vcmp.lt.s32.totalorder %v4548, 5
        %v4799 = vsel %vm4798, %v4796, %v4797
        %v4800 = vsel %vm4798, %v4795, %v4796
        %v4801 = vsel %vm4798, %v4794, %v4795
        %v4802 = vsel %vm4798, %v4797, %v4794
        %s4803 = scalar_lea.vmem [#allocation5], 192
        %v4804 = vld [vmem:[%s4803] sm:$0xff]
        %v4805 = vld [vmem:[%s4803 + $0x8] sm:$0xff]
        %v4806 = vld [vmem:[%s4803 + $0x10] sm:$0xff]
        %v4807 = vld [vmem:[%s4803 + $0x18] sm:$0xff]
        %4809 = vset.pattern.permute.xlu0 0
        %4810 = vperm.xlu0 %4809, %v4804
        %v4811 = vpop.permute.xlu0 %4810
        %4814 = vset.pattern.permute.xlu0 0
        %4815 = vperm.xlu0 %4814, %v4805
        %v4816 = vpop.permute.xlu0 %4815
        %4819 = vset.pattern.permute.xlu0 0
        %4820 = vperm.xlu0 %4819, %v4806
        %v4821 = vpop.permute.xlu0 %4820
        %4824 = vset.pattern.permute.xlu0 0
        %4825 = vperm.xlu0 %4824, %v4807
        %v4826 = vpop.permute.xlu0 %4825
        %v4828 = vmul.f32 %v4801, %v4811
        %v4829 = vmul.f32 %v4800, %v4816
        %v4830 = vmul.f32 %v4799, %v4821
        %v4831 = vmul.f32 %v4802, %v4826
        %v4832 = vlaneseq
        %v4833 = vshrl.u32 %v4832, 7
        %v4834 = vsub.s32 6, %v4833
        %v4835 = vrot.slane %v4534, %v4834
        %v4836 = vmul.f32 %v4835, %v4828
        %v4837 = vmul.f32 %v4835, %v4829
        %v4838 = vmul.f32 %v4835, %v4830
        %v4839 = vmul.f32 %v4835, %v4831
        %v4840 = vadd.f32 %v4790, %v4836
        %v4841 = vadd.f32 %v4791, %v4837
        %v4842 = vadd.f32 %v4792, %v4838
        %v4843 = vadd.f32 %v4793, %v4839
        %v4844 = vld [vmem:[%s1829] sm:$0x1]
        %v4846 = vlaneseq
        %v4847 = vshrl.u32 %v4846, 7
        %v4848 = vsub.s32 0, %v4847
        %v4849 = vrot.slane %v4844, %v4848
        %v4851 = vadd.f32 %v4840, %v4849
        %v4852 = vadd.f32 %v4841, %v4849
        %v4853 = vadd.f32 %v4842, %v4849
        %v4854 = vadd.f32 %v4843, %v4849
        %v4855 = vld [vmem:[%s1838] sm:$0x1]
        %v4857 = vlaneseq
        %v4858 = vshrl.u32 %v4857, 7
        %v4859 = vsub.s32 0, %v4858
        %v4860 = vrot.slane %v4855, %v4859
        %v4862 = vsub.f32 %v4851, %v4860
        %v4863 = vsub.f32 %v4852, %v4860
        %v4864 = vsub.f32 %v4853, %v4860
        %v4865 = vsub.f32 %v4854, %v4860
        %v4866 = vld [vmem:[%s1550] sm:$0x1]
        %v4867 = vadd.f32 %v4866, 1e-05
        %v4868 = vrsqrt.pop %v4867
        %v4870 = vlaneseq
        %v4871 = vshrl.u32 %v4870, 7
        %v4872 = vsub.s32 0, %v4871
        %v4873 = vrot.slane %v4868, %v4872
        %v4875 = vmul.f32 %v4862, %v4873
        %v4876 = vmul.f32 %v4863, %v4873
        %v4877 = vmul.f32 %v4864, %v4873
        %v4878 = vmul.f32 %v4865, %v4873
        %v4879 = vld [vmem:[%s1832] sm:$0x1]
        %v4881 = vlaneseq
        %v4882 = vshrl.u32 %v4881, 7
        %v4883 = vsub.s32 0, %v4882
        %v4884 = vrot.slane %v4879, %v4883
        %v4886 = vmul.f32 %v4875, %v4884
        %v4887 = vmul.f32 %v4876, %v4884
        %v4888 = vmul.f32 %v4877, %v4884
        %v4889 = vmul.f32 %v4878, %v4884
        %v4890 = vld [vmem:[%s1835] sm:$0x1]
        %v4892 = vlaneseq
        %v4893 = vshrl.u32 %v4892, 7
        %v4894 = vsub.s32 0, %v4893
        %v4895 = vrot.slane %v4890, %v4894
        %v4897 = vadd.f32 %v4886, %v4895
        %v4898 = vadd.f32 %v4887, %v4895
        %v4899 = vadd.f32 %v4888, %v4895
        %v4900 = vadd.f32 %v4889, %v4895
        %v4901 = vmax.f32 %v4897, 0.0
        %v4902 = vmax.f32 %v4898, 0.0
        %v4903 = vmax.f32 %v4899, 0.0
        %v4904 = vmax.f32 %v4900, 0.0
        %v4905 = vpack.c.bf16 %v4902, %v4901
        %v4906 = vpack.c.bf16 %v4904, %v4903
        %v4907 = vld [vmem:[%s1559] sm:$0xf]
        %v4908 = vld [vmem:[%s1559 + $0x4] sm:$0xf]
        %v4909 = vld [vmem:[%s1559 + $0x8] sm:$0xf]
        %v4910 = vld [vmem:[%s1559 + $0xc] sm:$0xf]
        %v4911 = vld [vmem:[%s1559 + $0x10] sm:$0xf]
        %v4912 = vld [vmem:[%s1559 + $0x14] sm:$0xf]
        %v4913 = vld [vmem:[%s1559 + $0x18] sm:$0xf]
        %v4914 = vld [vmem:[%s1559 + $0x1c] sm:$0xf]
        %v4915 = vld [vmem:[%s1559 + $0x20] sm:$0xf]
        %v4916 = vld [vmem:[%s1559 + $0x24] sm:$0xf]
        %v4917 = vld [vmem:[%s1559 + $0x28] sm:$0xf]
        %v4918 = vld [vmem:[%s1559 + $0x2c] sm:$0xf]
        %v4919 = vld [vmem:[%s1559 + $0x30] sm:$0xf]
        %v4920 = vld [vmem:[%s1559 + $0x34] sm:$0xf]
        %v4921 = vld [vmem:[%s1559 + $0x38] sm:$0xf]
        %v4922 = vld [vmem:[%s1559 + $0x3c] sm:$0xf]
        %v4923 = vld [vmem:[%s1567] sm:$0x1]
        %v4925 = vlaneseq
        %v4926 = vshrl.u32 %v4925, 7
        %v4927 = vsub.s32 0, %v4926
        %v4928 = vrot.slane %v4923, %v4927
        %v4946 = vunpack.c.l.b16 %v4907
        %v4947 = vunpack.c.l.b16 %v4908
        %v4948 = vunpack.c.l.b16 %v4909
        %v4949 = vunpack.c.l.b16 %v4910
        %v4950 = vunpack.c.l.b16 %v4911
        %v4951 = vunpack.c.l.b16 %v4912
        %v4952 = vunpack.c.l.b16 %v4913
        %v4953 = vunpack.c.l.b16 %v4914
        %v4954 = vunpack.c.l.b16 %v4915
        %v4955 = vunpack.c.l.b16 %v4916
        %v4956 = vunpack.c.l.b16 %v4917
        %v4957 = vunpack.c.l.b16 %v4918
        %v4958 = vunpack.c.l.b16 %v4919
        %v4959 = vunpack.c.l.b16 %v4920
        %v4960 = vunpack.c.l.b16 %v4921
        %v4961 = vunpack.c.l.b16 %v4922
        %v4962 = vpack.c.b16 %v4947, %v4946
        %v4963 = vpack.c.b16 %v4949, %v4948
        %v4964 = vpack.c.b16 %v4951, %v4950
        %v4965 = vpack.c.b16 %v4953, %v4952
        %v4966 = vpack.c.b16 %v4955, %v4954
        %v4967 = vpack.c.b16 %v4957, %v4956
        %v4968 = vpack.c.b16 %v4959, %v4958
        %v4969 = vpack.c.b16 %v4961, %v4960
        %4978 = vmatprep.subr.bf16.mxu0 0
        %4979 = vmatpush1.bf16.msra.mxu0 %v4962
        %4980 = vmatprep.subr.bf16.mxu0 0
        %4981 = vmatpush1.bf16.msra.mxu0 %v4963
        %4982 = vmatprep.subr.bf16.mxu0 0
        %4983 = vmatpush1.bf16.msra.mxu0 %v4964
        %4984 = vmatprep.subr.bf16.mxu0 0
        %4985 = vmatpush1.bf16.msra.mxu0 %v4965
        %4986 = vmatprep.subr.bf16.mxu0 0
        %4987 = vmatpush1.bf16.msra.mxu0 %v4966
        %4988 = vmatprep.subr.bf16.mxu0 0
        %4989 = vmatpush1.bf16.msra.mxu0 %v4967
        %4990 = vmatprep.subr.bf16.mxu0 0
        %4991 = vmatpush1.bf16.msra.mxu0 %v4968
        %4992 = vmatprep.subr.bf16.mxu0 0
        %4993 = vmatpush1.bf16.msra.mxu0 %v4969
        %4994 = vmatprep.subr.bf16.mxu0 0
        %4995 = vmatpush1.bf16.msra.mxu0 0
        %4996 = vmatprep.subr.bf16.mxu0 0
        %4997 = vmatpush1.bf16.msra.mxu0 0
        %4998 = vmatprep.subr.bf16.mxu0 0
        %4999 = vmatpush1.bf16.msra.mxu0 0
        %5000 = vmatprep.subr.bf16.mxu0 0
        %5001 = vmatpush1.bf16.msra.mxu0 0
        %5002 = vmatprep.subr.bf16.mxu0 0
        %5003 = vmatpush1.bf16.msra.mxu0 0
        %5004 = vmatprep.subr.bf16.mxu0 0
        %5005 = vmatpush1.bf16.msra.mxu0 0
        %5006 = vmatprep.subr.bf16.mxu0 0
        %5007 = vmatpush1.bf16.msra.mxu0 0
        %5008 = vmatprep.subr.bf16.mxu0 0
        %5009 = vmatpush1.bf16.msra.mxu0 0
        %5010 = vmatprep.mubr.bf16.mxu0 0
        %5011 = vmatmul.mubr.bf16.gmra.mrb[0].mxu0 %v4905
        %v5012 = vpop.f32.mrb[0].mxu0
        %v5013 = vadd.f32 %v4928, %v5012
        %v5014 = vpop.f32.mrb[0].mxu0
        %v5015 = vpop.f32.mrb[0].mxu0
        %v5016 = vadd.f32 %v4928, %v5015
        %v5017 = vpop.f32.mrb[0].mxu0
        %5018 = vmatprep.mubr.bf16.mxu0 0
        %5019 = vmatmul.mubr.bf16.gmra.mrb[0].mxu0 %v4906
        %v5020 = vpop.f32.mrb[0].mxu0
        %v5021 = vadd.f32 %v4928, %v5020
        %v5022 = vpop.f32.mrb[0].mxu0
        %v5023 = vpop.f32.mrb[0].mxu0
        %v5024 = vadd.f32 %v4928, %v5023
        %v5025 = vpop.f32.mrb[0].mxu0
        %5026 = vdwg.mxu0
        %v5027 = vadd.f32 %v4277, %v5013
        %v5028 = vadd.f32 %v4278, %v5016
        %v5029 = vadd.f32 %v4279, %v5021
        %v5030 = vadd.f32 %v4280, %v5024
        %v5031 = vld [vmem:[%s1841] sm:$0x1]
        %v5032 = vld [vmem:[%s1844] sm:$0x1]
        %5033 = vadd.xlane.f32.xlu0 %v5027
        %v5034 = vpop.xlane.xlu0 %5033
        %5035 = vadd.xlane.f32.xlu0 %v5028
        %v5036 = vpop.xlane.xlu0 %5035
        %5037 = vadd.xlane.f32.xlu0 %v5029
        %v5038 = vpop.xlane.xlu0 %5037
        %5039 = vadd.xlane.f32.xlu0 %v5030
        %v5040 = vpop.xlane.xlu0 %5039
        %v5041 = vmul.f32 %v5034, %v1990
        %v5042 = vmul.f32 %v5036, %v1990
        %v5043 = vmul.f32 %v5038, %v1990
        %v5044 = vmul.f32 %v5040, %v1990
        %v5045 = vsub.f32 %v5027, %v5041
        %v5046 = vsub.f32 %v5028, %v5042
        %v5047 = vsub.f32 %v5029, %v5043
        %v5048 = vsub.f32 %v5030, %v5044
        %v5049 = vmul.f32 %v5045, %v5045
        %v5050 = vmul.f32 %v5046, %v5046
        %v5051 = vmul.f32 %v5047, %v5047
        %v5052 = vmul.f32 %v5048, %v5048
        %5053 = vadd.xlane.f32.xlu0 %v5049
        %v5054 = vpop.xlane.xlu0 %5053
        %5055 = vadd.xlane.f32.xlu0 %v5050
        %v5056 = vpop.xlane.xlu0 %5055
        %5057 = vadd.xlane.f32.xlu0 %v5051
        %v5058 = vpop.xlane.xlu0 %5057
        %5059 = vadd.xlane.f32.xlu0 %v5052
        %v5060 = vpop.xlane.xlu0 %5059
        %v5061 = vmul.f32 %v5054, %v1990
        %v5062 = vmul.f32 %v5056, %v1990
        %v5063 = vmul.f32 %v5058, %v1990
        %v5064 = vmul.f32 %v5060, %v1990
        %v5065 = vadd.f32 %v5061, 1e-05
        %v5066 = vadd.f32 %v5062, 1e-05
        %v5067 = vadd.f32 %v5063, 1e-05
        %v5068 = vadd.f32 %v5064, 1e-05
        %v5069 = vrsqrt.pop %v5065
        %v5070 = vrsqrt.pop %v5066
        %v5071 = vrsqrt.pop %v5067
        %v5072 = vrsqrt.pop %v5068
        %v5073 = vmul.f32 %v5045, %v5069
        %v5074 = vmul.f32 %v5046, %v5070
        %v5075 = vmul.f32 %v5047, %v5071
        %v5076 = vmul.f32 %v5048, %v5072
        %v5078 = vlaneseq
        %v5079 = vshrl.u32 %v5078, 7
        %v5080 = vsub.s32 0, %v5079
        %v5081 = vrot.slane %v5031, %v5080
        %v5083 = vmul.f32 %v5073, %v5081
        %v5084 = vmul.f32 %v5074, %v5081
        %v5085 = vmul.f32 %v5075, %v5081
        %v5086 = vmul.f32 %v5076, %v5081
        %v5088 = vlaneseq
        %v5089 = vshrl.u32 %v5088, 7
        %v5090 = vsub.s32 0, %v5089
        %v5091 = vrot.slane %v5032, %v5090
        %v5093 = vadd.f32 %v5083, %v5091
        %v5094 = vadd.f32 %v5084, %v5091
        %v5095 = vadd.f32 %v5085, %v5091
        %v5096 = vadd.f32 %v5086, %v5091
        %v5097 = vpack.c.bf16 %v5094, %v5093
        %v5098 = vpack.c.bf16 %v5096, %v5095
        %v5099 = vld [vmem:[%s1576] sm:$0xff]
        %v5100 = vld [vmem:[%s1576 + $0x8] sm:$0xff]
        %v5101 = vld [vmem:[%s1576 + $0x10] sm:$0xff]
        %v5102 = vld [vmem:[%s1576 + $0x18] sm:$0xff]
        %v5103 = vld [vmem:[%s1576 + $0x20] sm:$0xff]
        %v5104 = vld [vmem:[%s1576 + $0x28] sm:$0xff]
        %v5105 = vld [vmem:[%s1576 + $0x30] sm:$0xff]
        %v5106 = vld [vmem:[%s1576 + $0x38] sm:$0xff]
        %v5107 = vld [vmem:[%s1576 + $0x40] sm:$0xff]
        %v5108 = vld [vmem:[%s1576 + $0x48] sm:$0xff]
        %v5109 = vld [vmem:[%s1576 + $0x50] sm:$0xff]
        %v5110 = vld [vmem:[%s1576 + $0x58] sm:$0xff]
        %v5111 = vld [vmem:[%s1576 + $0x60] sm:$0xff]
        %v5112 = vld [vmem:[%s1576 + $0x68] sm:$0xff]
        %v5113 = vld [vmem:[%s1576 + $0x70] sm:$0xff]
        %v5114 = vld [vmem:[%s1576 + $0x78] sm:$0xff]
        %v5115 = vld [vmem:[%s1576 + $0x80] sm:$0xff]
        %v5116 = vld [vmem:[%s1576 + $0x88] sm:$0xff]
        %v5117 = vld [vmem:[%s1576 + $0x90] sm:$0xff]
        %v5118 = vld [vmem:[%s1576 + $0x98] sm:$0xff]
        %v5119 = vld [vmem:[%s1576 + $0xa0] sm:$0xff]
        %v5120 = vld [vmem:[%s1576 + $0xa8] sm:$0xff]
        %v5121 = vld [vmem:[%s1576 + $0xb0] sm:$0xff]
        %v5122 = vld [vmem:[%s1576 + $0xb8] sm:$0xff]
        %v5123 = vld [vmem:[%s1576 + $0xc0] sm:$0xff]
        %v5124 = vld [vmem:[%s1576 + $0xc8] sm:$0xff]
        %v5125 = vld [vmem:[%s1576 + $0xd0] sm:$0xff]
        %v5126 = vld [vmem:[%s1576 + $0xd8] sm:$0xff]
        %v5127 = vld [vmem:[%s1576 + $0xe0] sm:$0xff]
        %v5128 = vld [vmem:[%s1576 + $0xe8] sm:$0xff]
        %v5129 = vld [vmem:[%s1576 + $0xf0] sm:$0xff]
        %v5130 = vld [vmem:[%s1576 + $0xf8] sm:$0xff]
        %v5131 = vld [vmem:[%s1848] sm:$0xf]
        %v5133 = vlaneseq
        %v5134 = vshrl.u32 %v5133, 7
        %v5135 = vsub.s32 0, %v5134
        %v5136 = vrot.slane %v5131, %v5135
        %v5137 = vlaneseq
        %v5138 = vshrl.u32 %v5137, 7
        %v5139 = vsub.s32 1, %v5138
        %v5140 = vrot.slane %v5131, %v5139
        %v5141 = vlaneseq
        %v5142 = vshrl.u32 %v5141, 7
        %v5143 = vsub.s32 2, %v5142
        %v5144 = vrot.slane %v5131, %v5143
        %v5145 = vlaneseq
        %v5146 = vshrl.u32 %v5145, 7
        %v5147 = vsub.s32 3, %v5146
        %v5148 = vrot.slane %v5131, %v5147
        %v5185 = vunpack.c.l.b16 %v5099
        %v5186 = vunpack.c.h.b16 %v5099
        %v5187 = vunpack.c.l.b16 %v5100
        %v5188 = vunpack.c.h.b16 %v5100
        %v5189 = vunpack.c.l.b16 %v5101
        %v5190 = vunpack.c.h.b16 %v5101
        %v5191 = vunpack.c.l.b16 %v5102
        %v5192 = vunpack.c.h.b16 %v5102
        %v5193 = vunpack.c.l.b16 %v5103
        %v5194 = vunpack.c.h.b16 %v5103
        %v5195 = vunpack.c.l.b16 %v5104
        %v5196 = vunpack.c.h.b16 %v5104
        %v5197 = vunpack.c.l.b16 %v5105
        %v5198 = vunpack.c.h.b16 %v5105
        %v5199 = vunpack.c.l.b16 %v5106
        %v5200 = vunpack.c.h.b16 %v5106
        %v5201 = vunpack.c.l.b16 %v5107
        %v5202 = vunpack.c.h.b16 %v5107
        %v5203 = vunpack.c.l.b16 %v5108
        %v5204 = vunpack.c.h.b16 %v5108
        %v5205 = vunpack.c.l.b16 %v5109
        %v5206 = vunpack.c.h.b16 %v5109
        %v5207 = vunpack.c.l.b16 %v5110
        %v5208 = vunpack.c.h.b16 %v5110
        %v5209 = vunpack.c.l.b16 %v5111
        %v5210 = vunpack.c.h.b16 %v5111
        %v5211 = vunpack.c.l.b16 %v5112
        %v5212 = vunpack.c.h.b16 %v5112
        %v5213 = vunpack.c.l.b16 %v5113
        %v5214 = vunpack.c.h.b16 %v5113
        %v5215 = vunpack.c.l.b16 %v5114
        %v5216 = vunpack.c.h.b16 %v5114
        %v5217 = vunpack.c.l.b16 %v5115
        %v5218 = vunpack.c.h.b16 %v5115
        %v5219 = vunpack.c.l.b16 %v5116
        %v5220 = vunpack.c.h.b16 %v5116
        %v5221 = vunpack.c.l.b16 %v5117
        %v5222 = vunpack.c.h.b16 %v5117
        %v5223 = vunpack.c.l.b16 %v5118
        %v5224 = vunpack.c.h.b16 %v5118
        %v5225 = vunpack.c.l.b16 %v5119
        %v5226 = vunpack.c.h.b16 %v5119
        %v5227 = vunpack.c.l.b16 %v5120
        %v5228 = vunpack.c.h.b16 %v5120
        %v5229 = vunpack.c.l.b16 %v5121
        %v5230 = vunpack.c.h.b16 %v5121
        %v5231 = vunpack.c.l.b16 %v5122
        %v5232 = vunpack.c.h.b16 %v5122
        %v5233 = vunpack.c.l.b16 %v5123
        %v5234 = vunpack.c.h.b16 %v5123
        %v5235 = vunpack.c.l.b16 %v5124
        %v5236 = vunpack.c.h.b16 %v5124
        %v5237 = vunpack.c.l.b16 %v5125
        %v5238 = vunpack.c.h.b16 %v5125
        %v5239 = vunpack.c.l.b16 %v5126
        %v5240 = vunpack.c.h.b16 %v5126
        %v5241 = vunpack.c.l.b16 %v5127
        %v5242 = vunpack.c.h.b16 %v5127
        %v5243 = vunpack.c.l.b16 %v5128
        %v5244 = vunpack.c.h.b16 %v5128
        %v5245 = vunpack.c.l.b16 %v5129
        %v5246 = vunpack.c.h.b16 %v5129
        %v5247 = vunpack.c.l.b16 %v5130
        %v5248 = vunpack.c.h.b16 %v5130
        %v5249 = vpack.c.b16 %v5189, %v5185
        %v5250 = vpack.c.b16 %v5190, %v5186
        %v5251 = vpack.c.b16 %v5191, %v5187
        %v5252 = vpack.c.b16 %v5192, %v5188
        %v5253 = vpack.c.b16 %v5197, %v5193
        %v5254 = vpack.c.b16 %v5198, %v5194
        %v5255 = vpack.c.b16 %v5199, %v5195
        %v5256 = vpack.c.b16 %v5200, %v5196
        %v5257 = vpack.c.b16 %v5205, %v5201
        %v5258 = vpack.c.b16 %v5206, %v5202
        %v5259 = vpack.c.b16 %v5207, %v5203
        %v5260 = vpack.c.b16 %v5208, %v5204
        %v5261 = vpack.c.b16 %v5213, %v5209
        %v5262 = vpack.c.b16 %v5214, %v5210
        %v5263 = vpack.c.b16 %v5215, %v5211
        %v5264 = vpack.c.b16 %v5216, %v5212
        %v5265 = vpack.c.b16 %v5221, %v5217
        %v5266 = vpack.c.b16 %v5222, %v5218
        %v5267 = vpack.c.b16 %v5223, %v5219
        %v5268 = vpack.c.b16 %v5224, %v5220
        %v5269 = vpack.c.b16 %v5229, %v5225
        %v5270 = vpack.c.b16 %v5230, %v5226
        %v5271 = vpack.c.b16 %v5231, %v5227
        %v5272 = vpack.c.b16 %v5232, %v5228
        %v5273 = vpack.c.b16 %v5237, %v5233
        %v5274 = vpack.c.b16 %v5238, %v5234
        %v5275 = vpack.c.b16 %v5239, %v5235
        %v5276 = vpack.c.b16 %v5240, %v5236
        %v5277 = vpack.c.b16 %v5245, %v5241
        %v5278 = vpack.c.b16 %v5246, %v5242
        %v5279 = vpack.c.b16 %v5247, %v5243
        %v5280 = vpack.c.b16 %v5248, %v5244
        %5313 = vmatprep.subr.bf16.mxu0 %v5250
        %5314 = vmatpush1.bf16.msra.mxu0 %v5249
        %5315 = vmatprep.subr.bf16.mxu0 %v5254
        %5316 = vmatpush1.bf16.msra.mxu0 %v5253
        %5317 = vmatprep.subr.bf16.mxu0 %v5258
        %5318 = vmatpush1.bf16.msra.mxu0 %v5257
        %5319 = vmatprep.subr.bf16.mxu0 %v5262
        %5320 = vmatpush1.bf16.msra.mxu0 %v5261
        %5321 = vmatprep.subr.bf16.mxu0 %v5266
        %5322 = vmatpush1.bf16.msra.mxu0 %v5265
        %5323 = vmatprep.subr.bf16.mxu0 %v5270
        %5324 = vmatpush1.bf16.msra.mxu0 %v5269
        %5325 = vmatprep.subr.bf16.mxu0 %v5274
        %5326 = vmatpush1.bf16.msra.mxu0 %v5273
        %5327 = vmatprep.subr.bf16.mxu0 %v5278
        %5328 = vmatpush1.bf16.msra.mxu0 %v5277
        %5329 = vmatprep.subr.bf16.mxu0 0
        %5330 = vmatpush1.bf16.msra.mxu0 0
        %5331 = vmatprep.subr.bf16.mxu0 0
        %5332 = vmatpush1.bf16.msra.mxu0 0
        %5333 = vmatprep.subr.bf16.mxu0 0
        %5334 = vmatpush1.bf16.msra.mxu0 0
        %5335 = vmatprep.subr.bf16.mxu0 0
        %5336 = vmatpush1.bf16.msra.mxu0 0
        %5337 = vmatprep.subr.bf16.mxu0 0
        %5338 = vmatpush1.bf16.msra.mxu0 0
        %5339 = vmatprep.subr.bf16.mxu0 0
        %5340 = vmatpush1.bf16.msra.mxu0 0
        %5341 = vmatprep.subr.bf16.mxu0 0
        %5342 = vmatpush1.bf16.msra.mxu0 0
        %5343 = vmatprep.subr.bf16.mxu0 0
        %5344 = vmatpush1.bf16.msra.mxu0 0
        %5345 = vmatprep.mubr.bf16.mxu0 0
        %5346 = vmatmul.mubr.bf16.gmra.mrb[0].mxu0 %v5097
        %v5347 = vpop.f32.mrb[0].mxu0
        %v5348 = vadd.f32 %v5136, %v5347
        %v5349 = vpop.f32.mrb[0].mxu0
        %v5350 = vadd.f32 %v5140, %v5349
        %v5351 = vpop.f32.mrb[0].mxu0
        %v5352 = vadd.f32 %v5136, %v5351
        %v5353 = vpop.f32.mrb[0].mxu0
        %v5354 = vadd.f32 %v5140, %v5353
        %5355 = vmatprep.mubr.bf16.mxu0 0
        %5356 = vmatmul.mubr.bf16.gmra.mrb[0].mxu0 %v5098
        %v5357 = vpop.f32.mrb[0].mxu0
        %v5358 = vadd.f32 %v5136, %v5357
        %v5359 = vpop.f32.mrb[0].mxu0
        %v5360 = vadd.f32 %v5140, %v5359
        %v5361 = vpop.f32.mrb[0].mxu0
        %v5362 = vadd.f32 %v5136, %v5361
        %v5363 = vpop.f32.mrb[0].mxu0
        %v5364 = vadd.f32 %v5140, %v5363
        %5365 = vdwg.mxu0
        %5366 = vmatprep.subr.bf16.mxu0 %v5252
        %5367 = vmatpush1.bf16.msra.mxu0 %v5251
        %5368 = vmatprep.subr.bf16.mxu0 %v5256
        %5369 = vmatpush1.bf16.msra.mxu0 %v5255
        %5370 = vmatprep.subr.bf16.mxu0 %v5260
        %5371 = vmatpush1.bf16.msra.mxu0 %v5259
        %5372 = vmatprep.subr.bf16.mxu0 %v5264
        %5373 = vmatpush1.bf16.msra.mxu0 %v5263
        %5374 = vmatprep.subr.bf16.mxu0 %v5268
        %5375 = vmatpush1.bf16.msra.mxu0 %v5267
        %5376 = vmatprep.subr.bf16.mxu0 %v5272
        %5377 = vmatpush1.bf16.msra.mxu0 %v5271
        %5378 = vmatprep.subr.bf16.mxu0 %v5276
        %5379 = vmatpush1.bf16.msra.mxu0 %v5275
        %5380 = vmatprep.subr.bf16.mxu0 %v5280
        %5381 = vmatpush1.bf16.msra.mxu0 %v5279
        %5382 = vmatprep.subr.bf16.mxu0 0
        %5383 = vmatpush1.bf16.msra.mxu0 0
        %5384 = vmatprep.subr.bf16.mxu0 0
        %5385 = vmatpush1.bf16.msra.mxu0 0
        %5386 = vmatprep.subr.bf16.mxu0 0
        %5387 = vmatpush1.bf16.msra.mxu0 0
        %5388 = vmatprep.subr.bf16.mxu0 0
        %5389 = vmatpush1.bf16.msra.mxu0 0
        %5390 = vmatprep.subr.bf16.mxu0 0
        %5391 = vmatpush1.bf16.msra.mxu0 0
        %5392 = vmatprep.subr.bf16.mxu0 0
        %5393 = vmatpush1.bf16.msra.mxu0 0
        %5394 = vmatprep.subr.bf16.mxu0 0
        %5395 = vmatpush1.bf16.msra.mxu0 0
        %5396 = vmatprep.subr.bf16.mxu0 0
        %5397 = vmatpush1.bf16.msra.mxu0 0
        %5398 = vmatprep.mubr.bf16.mxu0 0
        %5399 = vmatmul.mubr.bf16.gmra.mrb[0].mxu0 %v5097
        %v5400 = vpop.f32.mrb[0].mxu0
        %v5401 = vadd.f32 %v5144, %v5400
        %v5402 = vpop.f32.mrb[0].mxu0
        %v5403 = vadd.f32 %v5148, %v5402
        %v5404 = vpop.f32.mrb[0].mxu0
        %v5405 = vadd.f32 %v5144, %v5404
        %v5406 = vpop.f32.mrb[0].mxu0
        %v5407 = vadd.f32 %v5148, %v5406
        %5408 = vmatprep.mubr.bf16.mxu0 0
        %5409 = vmatmul.mubr.bf16.gmra.mrb[0].mxu0 %v5098
        %v5410 = vpop.f32.mrb[0].mxu0
        %v5411 = vadd.f32 %v5144, %v5410
        %v5412 = vpop.f32.mrb[0].mxu0
        %v5413 = vadd.f32 %v5148, %v5412
        %v5414 = vpop.f32.mrb[0].mxu0
        %v5415 = vadd.f32 %v5144, %v5414
        %v5416 = vpop.f32.mrb[0].mxu0
        %v5417 = vadd.f32 %v5148, %v5416
        %5418 = vdwg.mxu0
        %v5419 = vmax.f32 %v5348, 0.0
        %v5420 = vmax.f32 %v5350, 0.0
        %v5421 = vmax.f32 %v5401, 0.0
        %v5422 = vmax.f32 %v5403, 0.0
        %v5423 = vmax.f32 %v5352, 0.0
        %v5424 = vmax.f32 %v5354, 0.0
        %v5425 = vmax.f32 %v5405, 0.0
        %v5426 = vmax.f32 %v5407, 0.0
        %v5427 = vmax.f32 %v5358, 0.0
        %v5428 = vmax.f32 %v5360, 0.0
        %v5429 = vmax.f32 %v5411, 0.0
        %v5430 = vmax.f32 %v5413, 0.0
        %v5431 = vmax.f32 %v5362, 0.0
        %v5432 = vmax.f32 %v5364, 0.0
        %v5433 = vmax.f32 %v5415, 0.0
        %v5434 = vmax.f32 %v5417, 0.0
        %v5435 = vpack.c.bf16 %v5423, %v5419
        %v5436 = vpack.c.bf16 %v5424, %v5420
        %v5437 = vpack.c.bf16 %v5425, %v5421
        %v5438 = vpack.c.bf16 %v5426, %v5422
        %v5439 = vpack.c.bf16 %v5431, %v5427
        %v5440 = vpack.c.bf16 %v5432, %v5428
        %v5441 = vpack.c.bf16 %v5433, %v5429
        %v5442 = vpack.c.bf16 %v5434, %v5430
        %v5443 = vld [vmem:[%s1585] sm:$0xf]
        %v5444 = vld [vmem:[%s1585 + $0x4] sm:$0xf]
        %v5445 = vld [vmem:[%s1585 + $0x8] sm:$0xf]
        %v5446 = vld [vmem:[%s1585 + $0xc] sm:$0xf]
        %v5447 = vld [vmem:[%s1585 + $0x10] sm:$0xf]
        %v5448 = vld [vmem:[%s1585 + $0x14] sm:$0xf]
        %v5449 = vld [vmem:[%s1585 + $0x18] sm:$0xf]
        %v5450 = vld [vmem:[%s1585 + $0x1c] sm:$0xf]
        %v5451 = vld [vmem:[%s1585 + $0x20] sm:$0xf]
        %v5452 = vld [vmem:[%s1585 + $0x24] sm:$0xf]
        %v5453 = vld [vmem:[%s1585 + $0x28] sm:$0xf]
        %v5454 = vld [vmem:[%s1585 + $0x2c] sm:$0xf]
        %v5455 = vld [vmem:[%s1585 + $0x30] sm:$0xf]
        %v5456 = vld [vmem:[%s1585 + $0x34] sm:$0xf]
        %v5457 = vld [vmem:[%s1585 + $0x38] sm:$0xf]
        %v5458 = vld [vmem:[%s1585 + $0x3c] sm:$0xf]
        %v5459 = vld [vmem:[%s1585 + $0x40] sm:$0xf]
        %v5460 = vld [vmem:[%s1585 + $0x44] sm:$0xf]
        %v5461 = vld [vmem:[%s1585 + $0x48] sm:$0xf]
        %v5462 = vld [vmem:[%s1585 + $0x4c] sm:$0xf]
        %v5463 = vld [vmem:[%s1585 + $0x50] sm:$0xf]
        %v5464 = vld [vmem:[%s1585 + $0x54] sm:$0xf]
        %v5465 = vld [vmem:[%s1585 + $0x58] sm:$0xf]
        %v5466 = vld [vmem:[%s1585 + $0x5c] sm:$0xf]
        %v5467 = vld [vmem:[%s1585 + $0x60] sm:$0xf]
        %v5468 = vld [vmem:[%s1585 + $0x64] sm:$0xf]
        %v5469 = vld [vmem:[%s1585 + $0x68] sm:$0xf]
        %v5470 = vld [vmem:[%s1585 + $0x6c] sm:$0xf]
        %v5471 = vld [vmem:[%s1585 + $0x70] sm:$0xf]
        %v5472 = vld [vmem:[%s1585 + $0x74] sm:$0xf]
        %v5473 = vld [vmem:[%s1585 + $0x78] sm:$0xf]
        %v5474 = vld [vmem:[%s1585 + $0x7c] sm:$0xf]
        %v5475 = vld [vmem:[%s1585 + $0x80] sm:$0xf]
        %v5476 = vld [vmem:[%s1585 + $0x84] sm:$0xf]
        %v5477 = vld [vmem:[%s1585 + $0x88] sm:$0xf]
        %v5478 = vld [vmem:[%s1585 + $0x8c] sm:$0xf]
        %v5479 = vld [vmem:[%s1585 + $0x90] sm:$0xf]
        %v5480 = vld [vmem:[%s1585 + $0x94] sm:$0xf]
        %v5481 = vld [vmem:[%s1585 + $0x98] sm:$0xf]
        %v5482 = vld [vmem:[%s1585 + $0x9c] sm:$0xf]
        %v5483 = vld [vmem:[%s1585 + $0xa0] sm:$0xf]
        %v5484 = vld [vmem:[%s1585 + $0xa4] sm:$0xf]
        %v5485 = vld [vmem:[%s1585 + $0xa8] sm:$0xf]
        %v5486 = vld [vmem:[%s1585 + $0xac] sm:$0xf]
        %v5487 = vld [vmem:[%s1585 + $0xb0] sm:$0xf]
        %v5488 = vld [vmem:[%s1585 + $0xb4] sm:$0xf]
        %v5489 = vld [vmem:[%s1585 + $0xb8] sm:$0xf]
        %v5490 = vld [vmem:[%s1585 + $0xbc] sm:$0xf]
        %v5491 = vld [vmem:[%s1585 + $0xc0] sm:$0xf]
        %v5492 = vld [vmem:[%s1585 + $0xc4] sm:$0xf]
        %v5493 = vld [vmem:[%s1585 + $0xc8] sm:$0xf]
        %v5494 = vld [vmem:[%s1585 + $0xcc] sm:$0xf]
        %v5495 = vld [vmem:[%s1585 + $0xd0] sm:$0xf]
        %v5496 = vld [vmem:[%s1585 + $0xd4] sm:$0xf]
        %v5497 = vld [vmem:[%s1585 + $0xd8] sm:$0xf]
        %v5498 = vld [vmem:[%s1585 + $0xdc] sm:$0xf]
        %v5499 = vld [vmem:[%s1585 + $0xe0] sm:$0xf]
        %v5500 = vld [vmem:[%s1585 + $0xe4] sm:$0xf]
        %v5501 = vld [vmem:[%s1585 + $0xe8] sm:$0xf]
        %v5502 = vld [vmem:[%s1585 + $0xec] sm:$0xf]
        %v5503 = vld [vmem:[%s1585 + $0xf0] sm:$0xf]
        %v5504 = vld [vmem:[%s1585 + $0xf4] sm:$0xf]
        %v5505 = vld [vmem:[%s1585 + $0xf8] sm:$0xf]
        %v5506 = vld [vmem:[%s1585 + $0xfc] sm:$0xf]
        %v5507 = vld [vmem:[%s1851] sm:$0x1]
        %v5509 = vlaneseq
        %v5510 = vshrl.u32 %v5509, 7
        %v5511 = vsub.s32 0, %v5510
        %v5512 = vrot.slane %v5507, %v5511
        %v5578 = vunpack.c.l.b16 %v5443
        %v5579 = vunpack.c.l.b16 %v5444
        %v5580 = vunpack.c.l.b16 %v5445
        %v5581 = vunpack.c.l.b16 %v5446
        %v5582 = vunpack.c.l.b16 %v5447
        %v5583 = vunpack.c.l.b16 %v5448
        %v5584 = vunpack.c.l.b16 %v5449
        %v5585 = vunpack.c.l.b16 %v5450
        %v5586 = vunpack.c.l.b16 %v5451
        %v5587 = vunpack.c.l.b16 %v5452
        %v5588 = vunpack.c.l.b16 %v5453
        %v5589 = vunpack.c.l.b16 %v5454
        %v5590 = vunpack.c.l.b16 %v5455
        %v5591 = vunpack.c.l.b16 %v5456
        %v5592 = vunpack.c.l.b16 %v5457
        %v5593 = vunpack.c.l.b16 %v5458
        %v5594 = vunpack.c.l.b16 %v5459
        %v5595 = vunpack.c.l.b16 %v5460
        %v5596 = vunpack.c.l.b16 %v5461
        %v5597 = vunpack.c.l.b16 %v5462
        %v5598 = vunpack.c.l.b16 %v5463
        %v5599 = vunpack.c.l.b16 %v5464
        %v5600 = vunpack.c.l.b16 %v5465
        %v5601 = vunpack.c.l.b16 %v5466
        %v5602 = vunpack.c.l.b16 %v5467
        %v5603 = vunpack.c.l.b16 %v5468
        %v5604 = vunpack.c.l.b16 %v5469
        %v5605 = vunpack.c.l.b16 %v5470
        %v5606 = vunpack.c.l.b16 %v5471
        %v5607 = vunpack.c.l.b16 %v5472
        %v5608 = vunpack.c.l.b16 %v5473
        %v5609 = vunpack.c.l.b16 %v5474
        %v5610 = vunpack.c.l.b16 %v5475
        %v5611 = vunpack.c.l.b16 %v5476
        %v5612 = vunpack.c.l.b16 %v5477
        %v5613 = vunpack.c.l.b16 %v5478
        %v5614 = vunpack.c.l.b16 %v5479
        %v5615 = vunpack.c.l.b16 %v5480
        %v5616 = vunpack.c.l.b16 %v5481
        %v5617 = vunpack.c.l.b16 %v5482
        %v5618 = vunpack.c.l.b16 %v5483
        %v5619 = vunpack.c.l.b16 %v5484
        %v5620 = vunpack.c.l.b16 %v5485
        %v5621 = vunpack.c.l.b16 %v5486
        %v5622 = vunpack.c.l.b16 %v5487
        %v5623 = vunpack.c.l.b16 %v5488
        %v5624 = vunpack.c.l.b16 %v5489
        %v5625 = vunpack.c.l.b16 %v5490
        %v5626 = vunpack.c.l.b16 %v5491
        %v5627 = vunpack.c.l.b16 %v5492
        %v5628 = vunpack.c.l.b16 %v5493
        %v5629 = vunpack.c.l.b16 %v5494
        %v5630 = vunpack.c.l.b16 %v5495
        %v5631 = vunpack.c.l.b16 %v5496
        %v5632 = vunpack.c.l.b16 %v5497
        %v5633 = vunpack.c.l.b16 %v5498
        %v5634 = vunpack.c.l.b16 %v5499
        %v5635 = vunpack.c.l.b16 %v5500
        %v5636 = vunpack.c.l.b16 %v5501
        %v5637 = vunpack.c.l.b16 %v5502
        %v5638 = vunpack.c.l.b16 %v5503
        %v5639 = vunpack.c.l.b16 %v5504
        %v5640 = vunpack.c.l.b16 %v5505
        %v5641 = vunpack.c.l.b16 %v5506
        %v5642 = vpack.c.b16 %v5579, %v5578
        %v5643 = vpack.c.b16 %v5581, %v5580
        %v5644 = vpack.c.b16 %v5583, %v5582
        %v5645 = vpack.c.b16 %v5585, %v5584
        %v5646 = vpack.c.b16 %v5587, %v5586
        %v5647 = vpack.c.b16 %v5589, %v5588
        %v5648 = vpack.c.b16 %v5591, %v5590
        %v5649 = vpack.c.b16 %v5593, %v5592
        %v5650 = vpack.c.b16 %v5595, %v5594
        %v5651 = vpack.c.b16 %v5597, %v5596
        %v5652 = vpack.c.b16 %v5599, %v5598
        %v5653 = vpack.c.b16 %v5601, %v5600
        %v5654 = vpack.c.b16 %v5603, %v5602
        %v5655 = vpack.c.b16 %v5605, %v5604
        %v5656 = vpack.c.b16 %v5607, %v5606
        %v5657 = vpack.c.b16 %v5609, %v5608
        %v5658 = vpack.c.b16 %v5611, %v5610
        %v5659 = vpack.c.b16 %v5613, %v5612
        %v5660 = vpack.c.b16 %v5615, %v5614
        %v5661 = vpack.c.b16 %v5617, %v5616
        %v5662 = vpack.c.b16 %v5619, %v5618
        %v5663 = vpack.c.b16 %v5621, %v5620
        %v5664 = vpack.c.b16 %v5623, %v5622
        %v5665 = vpack.c.b16 %v5625, %v5624
        %v5666 = vpack.c.b16 %v5627, %v5626
        %v5667 = vpack.c.b16 %v5629, %v5628
        %v5668 = vpack.c.b16 %v5631, %v5630
        %v5669 = vpack.c.b16 %v5633, %v5632
        %v5670 = vpack.c.b16 %v5635, %v5634
        %v5671 = vpack.c.b16 %v5637, %v5636
        %v5672 = vpack.c.b16 %v5639, %v5638
        %v5673 = vpack.c.b16 %v5641, %v5640
        %5706 = vmatprep.subr.bf16.mxu0 0
        %5707 = vmatpush1.bf16.msra.mxu0 %v5642
        %5708 = vmatprep.subr.bf16.mxu0 0
        %5709 = vmatpush1.bf16.msra.mxu0 %v5643
        %5710 = vmatprep.subr.bf16.mxu0 0
        %5711 = vmatpush1.bf16.msra.mxu0 %v5644
        %5712 = vmatprep.subr.bf16.mxu0 0
        %5713 = vmatpush1.bf16.msra.mxu0 %v5645
        %5714 = vmatprep.subr.bf16.mxu0 0
        %5715 = vmatpush1.bf16.msra.mxu0 %v5646
        %5716 = vmatprep.subr.bf16.mxu0 0
        %5717 = vmatpush1.bf16.msra.mxu0 %v5647
        %5718 = vmatprep.subr.bf16.mxu0 0
        %5719 = vmatpush1.bf16.msra.mxu0 %v5648
        %5720 = vmatprep.subr.bf16.mxu0 0
        %5721 = vmatpush1.bf16.msra.mxu0 %v5649
        %5722 = vmatprep.subr.bf16.mxu0 0
        %5723 = vmatpush1.bf16.msra.mxu0 %v5650
        %5724 = vmatprep.subr.bf16.mxu0 0
        %5725 = vmatpush1.bf16.msra.mxu0 %v5651
        %5726 = vmatprep.subr.bf16.mxu0 0
        %5727 = vmatpush1.bf16.msra.mxu0 %v5652
        %5728 = vmatprep.subr.bf16.mxu0 0
        %5729 = vmatpush1.bf16.msra.mxu0 %v5653
        %5730 = vmatprep.subr.bf16.mxu0 0
        %5731 = vmatpush1.bf16.msra.mxu0 %v5654
        %5732 = vmatprep.subr.bf16.mxu0 0
        %5733 = vmatpush1.bf16.msra.mxu0 %v5655
        %5734 = vmatprep.subr.bf16.mxu0 0
        %5735 = vmatpush1.bf16.msra.mxu0 %v5656
        %5736 = vmatprep.subr.bf16.mxu0 0
        %5737 = vmatpush1.bf16.msra.mxu0 %v5657
        %5738 = vmatprep.mubr.bf16.mxu0 %v5436
        %5739 = vmatmul.mubr.bf16.gmra.mrb[0].mxu0 %v5435
        %v5740 = vpop.f32.mrb[0].mxu0
        %v5741 = vadd.f32 %v5512, %v5740
        %v5742 = vpop.f32.mrb[0].mxu0
        %v5743 = vpop.f32.mrb[0].mxu0
        %v5744 = vadd.f32 %v5512, %v5743
        %v5745 = vpop.f32.mrb[0].mxu0
        %5746 = vmatprep.mubr.bf16.mxu0 %v5440
        %5747 = vmatmul.mubr.bf16.gmra.mrb[0].mxu0 %v5439
        %v5748 = vpop.f32.mrb[0].mxu0
        %v5749 = vadd.f32 %v5512, %v5748
        %v5750 = vpop.f32.mrb[0].mxu0
        %v5751 = vpop.f32.mrb[0].mxu0
        %v5752 = vadd.f32 %v5512, %v5751
        %v5753 = vpop.f32.mrb[0].mxu0
        %5754 = vdwg.mxu0
        %5755 = vmatprep.subr.bf16.mxu0 0
        %5756 = vmatpush1.bf16.msra.mxu0 %v5658
        %5757 = vmatprep.subr.bf16.mxu0 0
        %5758 = vmatpush1.bf16.msra.mxu0 %v5659
        %5759 = vmatprep.subr.bf16.mxu0 0
        %5760 = vmatpush1.bf16.msra.mxu0 %v5660
        %5761 = vmatprep.subr.bf16.mxu0 0
        %5762 = vmatpush1.bf16.msra.mxu0 %v5661
        %5763 = vmatprep.subr.bf16.mxu0 0
        %5764 = vmatpush1.bf16.msra.mxu0 %v5662
        %5765 = vmatprep.subr.bf16.mxu0 0
        %5766 = vmatpush1.bf16.msra.mxu0 %v5663
        %5767 = vmatprep.subr.bf16.mxu0 0
        %5768 = vmatpush1.bf16.msra.mxu0 %v5664
        %5769 = vmatprep.subr.bf16.mxu0 0
        %5770 = vmatpush1.bf16.msra.mxu0 %v5665
        %5771 = vmatprep.subr.bf16.mxu0 0
        %5772 = vmatpush1.bf16.msra.mxu0 %v5666
        %5773 = vmatprep.subr.bf16.mxu0 0
        %5774 = vmatpush1.bf16.msra.mxu0 %v5667
        %5775 = vmatprep.subr.bf16.mxu0 0
        %5776 = vmatpush1.bf16.msra.mxu0 %v5668
        %5777 = vmatprep.subr.bf16.mxu0 0
        %5778 = vmatpush1.bf16.msra.mxu0 %v5669
        %5779 = vmatprep.subr.bf16.mxu0 0
        %5780 = vmatpush1.bf16.msra.mxu0 %v5670
        %5781 = vmatprep.subr.bf16.mxu0 0
        %5782 = vmatpush1.bf16.msra.mxu0 %v5671
        %5783 = vmatprep.subr.bf16.mxu0 0
        %5784 = vmatpush1.bf16.msra.mxu0 %v5672
        %5785 = vmatprep.subr.bf16.mxu0 0
        %5786 = vmatpush1.bf16.msra.mxu0 %v5673
        %5787 = vmatprep.mubr.bf16.mxu0 %v5438
        %5788 = vmatmul.mubr.bf16.gmra.mrb[0].mxu0 %v5437
        %v5789 = vpop.f32.mrb[0].mxu0
        %v5790 = vadd.f32 %v5741, %v5789
        %v5791 = vpop.f32.mrb[0].mxu0
        %v5792 = vpop.f32.mrb[0].mxu0
        %v5793 = vadd.f32 %v5744, %v5792
        %v5794 = vpop.f32.mrb[0].mxu0
        %5795 = vmatprep.mubr.bf16.mxu0 %v5442
        %5796 = vmatmul.mubr.bf16.gmra.mrb[0].mxu0 %v5441
        %v5797 = vpop.f32.mrb[0].mxu0
        %v5798 = vadd.f32 %v5749, %v5797
        %v5799 = vpop.f32.mrb[0].mxu0
        %v5800 = vpop.f32.mrb[0].mxu0
        %v5801 = vadd.f32 %v5752, %v5800
        %v5802 = vpop.f32.mrb[0].mxu0
        %5803 = vdwg.mxu0
        %v5804 = vmul.f32 %v5790, 0.5
        %v5805 = vmul.f32 %v5793, 0.5
        %v5806 = vmul.f32 %v5798, 0.5
        %v5807 = vmul.f32 %v5801, 0.5
        %v5808 = vadd.f32 %v5027, %v5804
        %v5809 = vadd.f32 %v5028, %v5805
        %v5810 = vadd.f32 %v5029, %v5806
        %v5811 = vadd.f32 %v5030, %v5807
        %v5812 = vld [vmem:[%s1854] sm:$0x1]
        %v5813 = vld [vmem:[%s1857] sm:$0x1]
        %5814 = vadd.xlane.f32.xlu0 %v5808
        %v5815 = vpop.xlane.xlu0 %5814
        %5816 = vadd.xlane.f32.xlu0 %v5809
        %v5817 = vpop.xlane.xlu0 %5816
        %5818 = vadd.xlane.f32.xlu0 %v5810
        %v5819 = vpop.xlane.xlu0 %5818
        %5820 = vadd.xlane.f32.xlu0 %v5811
        %v5821 = vpop.xlane.xlu0 %5820
        %v5822 = vmul.f32 %v5815, %v1990
        %v5823 = vmul.f32 %v5817, %v1990
        %v5824 = vmul.f32 %v5819, %v1990
        %v5825 = vmul.f32 %v5821, %v1990
        %v5826 = vsub.f32 %v5808, %v5822
        %v5827 = vsub.f32 %v5809, %v5823
        %v5828 = vsub.f32 %v5810, %v5824
        %v5829 = vsub.f32 %v5811, %v5825
        %v5830 = vmul.f32 %v5826, %v5826
        %v5831 = vmul.f32 %v5827, %v5827
        %v5832 = vmul.f32 %v5828, %v5828
        %v5833 = vmul.f32 %v5829, %v5829
        %5834 = vadd.xlane.f32.xlu0 %v5830
        %v5835 = vpop.xlane.xlu0 %5834
        %5836 = vadd.xlane.f32.xlu0 %v5831
        %v5837 = vpop.xlane.xlu0 %5836
        %5838 = vadd.xlane.f32.xlu0 %v5832
        %v5839 = vpop.xlane.xlu0 %5838
        %5840 = vadd.xlane.f32.xlu0 %v5833
        %v5841 = vpop.xlane.xlu0 %5840
        %v5842 = vmul.f32 %v5835, %v1990
        %v5843 = vmul.f32 %v5837, %v1990
        %v5844 = vmul.f32 %v5839, %v1990
        %v5845 = vmul.f32 %v5841, %v1990
        %v5846 = vadd.f32 %v5842, 1e-05
        %v5847 = vadd.f32 %v5843, 1e-05
        %v5848 = vadd.f32 %v5844, 1e-05
        %v5849 = vadd.f32 %v5845, 1e-05
        %v5850 = vrsqrt.pop %v5846
        %v5851 = vrsqrt.pop %v5847
        %v5852 = vrsqrt.pop %v5848
        %v5853 = vrsqrt.pop %v5849
        %v5854 = vmul.f32 %v5826, %v5850
        %v5855 = vmul.f32 %v5827, %v5851
        %v5856 = vmul.f32 %v5828, %v5852
        %v5857 = vmul.f32 %v5829, %v5853
        %v5859 = vlaneseq
        %v5860 = vshrl.u32 %v5859, 7
        %v5861 = vsub.s32 0, %v5860
        %v5862 = vrot.slane %v5812, %v5861
        %v5864 = vmul.f32 %v5854, %v5862
        %v5865 = vmul.f32 %v5855, %v5862
        %v5866 = vmul.f32 %v5856, %v5862
        %v5867 = vmul.f32 %v5857, %v5862
        %v5869 = vlaneseq
        %v5870 = vshrl.u32 %v5869, 7
        %v5871 = vsub.s32 0, %v5870
        %v5872 = vrot.slane %v5813, %v5871
        %v5874 = vadd.f32 %v5864, %v5872
        %v5875 = vadd.f32 %v5865, %v5872
        %v5876 = vadd.f32 %v5866, %v5872
        %v5877 = vadd.f32 %v5867, %v5872
        %5878 = vst [vmem:[#allocation2] sm:$0xff] %v5874
        %5879 = vst [vmem:[#allocation2 + $0x8] sm:$0xff] %v5875
        %5880 = vst [vmem:[#allocation2 + $0x10] sm:$0xff] %v5876
        %5881 = vst [vmem:[#allocation2 + $0x18] sm:$0xff] %v5877
        %p5882 = scmp.eq.s32.totalorder %s91, 1
        // Predicated region
        $region233: #{conformer_apply.1} parent=171 // pred_check
          %p5883 = pneg %p5882
        $region234: #{conformer_apply.1} parent=171 // pred_check_branch
          %5885 = sbr.rel (%p5883) target = $region236
        $region235: #{conformer_apply.1} parent=171 // pred_region
          %v5886 = vpack.c.bf16 %v5875, %v5874
          %v5887 = vpack.c.bf16 %v5877, %v5876
          %v5888 = vld [vmem:[%s73] sm:$0xf]
          %v5889 = vld [vmem:[%s73 + $0x4] sm:$0xf]
          %v5890 = vld [vmem:[%s73 + $0x8] sm:$0xf]
          %v5891 = vld [vmem:[%s73 + $0xc] sm:$0xf]
          %v5892 = vld [vmem:[%s73 + $0x10] sm:$0xf]
          %v5893 = vld [vmem:[%s73 + $0x14] sm:$0xf]
          %v5894 = vld [vmem:[%s73 + $0x18] sm:$0xf]
          %v5895 = vld [vmem:[%s73 + $0x1c] sm:$0xf]
          %v5896 = vld [vmem:[%s73 + $0x20] sm:$0xf]
          %v5897 = vld [vmem:[%s73 + $0x24] sm:$0xf]
          %v5898 = vld [vmem:[%s73 + $0x28] sm:$0xf]
          %v5899 = vld [vmem:[%s73 + $0x2c] sm:$0xf]
          %v5900 = vld [vmem:[%s73 + $0x30] sm:$0xf]
          %v5901 = vld [vmem:[%s73 + $0x34] sm:$0xf]
          %v5902 = vld [vmem:[%s73 + $0x38] sm:$0xf]
          %v5903 = vld [vmem:[%s73 + $0x3c] sm:$0xf]
          %v5904 = vld [vmem:[%s75] sm:$0x1]
          %v5906 = vlaneseq
          %v5907 = vshrl.u32 %v5906, 7
          %v5908 = vsub.s32 0, %v5907
          %v5909 = vrot.slane %v5904, %v5908
          %v5927 = vunpack.c.l.b16 %v5888
          %v5928 = vunpack.c.l.b16 %v5889
          %v5929 = vunpack.c.l.b16 %v5890
          %v5930 = vunpack.c.l.b16 %v5891
          %v5931 = vunpack.c.l.b16 %v5892
          %v5932 = vunpack.c.l.b16 %v5893
          %v5933 = vunpack.c.l.b16 %v5894
          %v5934 = vunpack.c.l.b16 %v5895
          %v5935 = vunpack.c.l.b16 %v5896
          %v5936 = vunpack.c.l.b16 %v5897
          %v5937 = vunpack.c.l.b16 %v5898
          %v5938 = vunpack.c.l.b16 %v5899
          %v5939 = vunpack.c.l.b16 %v5900
          %v5940 = vunpack.c.l.b16 %v5901
          %v5941 = vunpack.c.l.b16 %v5902
          %v5942 = vunpack.c.l.b16 %v5903
          %v5943 = vpack.c.b16 %v5928, %v5927
          %v5944 = vpack.c.b16 %v5930, %v5929
          %v5945 = vpack.c.b16 %v5932, %v5931
          %v5946 = vpack.c.b16 %v5934, %v5933
          %v5947 = vpack.c.b16 %v5936, %v5935
          %v5948 = vpack.c.b16 %v5938, %v5937
          %v5949 = vpack.c.b16 %v5940, %v5939
          %v5950 = vpack.c.b16 %v5942, %v5941
          %5959 = vmatprep.subr.bf16.mxu0 0
          %5960 = vmatpush1.bf16.msra.mxu0 %v5943
          %5961 = vmatprep.subr.bf16.mxu0 0
          %5962 = vmatpush1.bf16.msra.mxu0 %v5944
          %5963 = vmatprep.subr.bf16.mxu0 0
          %5964 = vmatpush1.bf16.msra.mxu0 %v5945
          %5965 = vmatprep.subr.bf16.mxu0 0
          %5966 = vmatpush1.bf16.msra.mxu0 %v5946
          %5967 = vmatprep.subr.bf16.mxu0 0
          %5968 = vmatpush1.bf16.msra.mxu0 %v5947
          %5969 = vmatprep.subr.bf16.mxu0 0
          %5970 = vmatpush1.bf16.msra.mxu0 %v5948
          %5971 = vmatprep.subr.bf16.mxu0 0
          %5972 = vmatpush1.bf16.msra.mxu0 %v5949
          %5973 = vmatprep.subr.bf16.mxu0 0
          %5974 = vmatpush1.bf16.msra.mxu0 %v5950
          %5975 = vmatprep.subr.bf16.mxu0 0
          %5976 = vmatpush1.bf16.msra.mxu0 0
          %5977 = vmatprep.subr.bf16.mxu0 0
          %5978 = vmatpush1.bf16.msra.mxu0 0
          %5979 = vmatprep.subr.bf16.mxu0 0
          %5980 = vmatpush1.bf16.msra.mxu0 0
          %5981 = vmatprep.subr.bf16.mxu0 0
          %5982 = vmatpush1.bf16.msra.mxu0 0
          %5983 = vmatprep.subr.bf16.mxu0 0
          %5984 = vmatpush1.bf16.msra.mxu0 0
          %5985 = vmatprep.subr.bf16.mxu0 0
          %5986 = vmatpush1.bf16.msra.mxu0 0
          %5987 = vmatprep.subr.bf16.mxu0 0
          %5988 = vmatpush1.bf16.msra.mxu0 0
          %5989 = vmatprep.subr.bf16.mxu0 0
          %5990 = vmatpush1.bf16.msra.mxu0 0
          %5991 = vmatprep.mubr.bf16.mxu0 0
          %5992 = vmatmul.mubr.bf16.gmra.mrb[0].mxu0 %v5886
          %v5993 = vpop.f32.mrb[0].mxu0
          %v5994 = vadd.f32 %v5909, %v5993
          %v5995 = vpop.f32.mrb[0].mxu0
          %v5996 = vpop.f32.mrb[0].mxu0
          %v5997 = vadd.f32 %v5909, %v5996
          %v5998 = vpop.f32.mrb[0].mxu0
          %5999 = vmatprep.mubr.bf16.mxu0 0
          %6000 = vmatmul.mubr.bf16.gmra.mrb[0].mxu0 %v5887
          %v6001 = vpop.f32.mrb[0].mxu0
          %v6002 = vadd.f32 %v5909, %v6001
          %v6003 = vpop.f32.mrb[0].mxu0
          %v6004 = vpop.f32.mrb[0].mxu0
          %v6005 = vadd.f32 %v5909, %v6004
          %v6006 = vpop.f32.mrb[0].mxu0
          %6007 = vdwg.mxu0
          %6008 = vst [vmem:[%s77] sm:$0xff] %v5994
          %6009 = vst [vmem:[%s77 + $0x8] sm:$0xff] %v5997
          %6010 = vst [vmem:[%s77 + $0x10] sm:$0xff] %v6002
          %6011 = vst [vmem:[%s77 + $0x18] sm:$0xff] %v6005
        $region236: #{conformer_apply.1} parent=171 // pred_fallthru
          _
        // Predicated region
        $region237: #{conformer_apply.1} parent=171 // pred_check
          %p6012 = pneg %p1062
        $region238: #{conformer_apply.1} parent=171 // pred_check_branch
          %6014 = sbr.rel (%p6012) target = $region240
        $region239: #{conformer_apply.1} parent=171 // pred_region
          _
        $region240: #{conformer_apply.1} parent=171 // pred_fallthru
          _
        // Predicated region
        $region241: #{conformer_apply.1} parent=171 // pred_check
          %p6015 = pneg %p1062
        $region242: #{conformer_apply.1} parent=171 // pred_check_branch
          %6017 = sbr.rel (%p6015) target = $region244
        $region243: #{conformer_apply.1} parent=171 // pred_region
          _
        $region244: #{conformer_apply.1} parent=171 // pred_fallthru
          _
      $region172: #{conformer_apply.1} parent=5 // pred_fallthru
        _
      %p6018 = scmp.le.s32.totalorder 2, %s86
      // Predicated region
      $region245: #{conformer_apply.1} parent=5 // pred_check
        %p6019 = pneg %p6018
      $region246: #{conformer_apply.1} parent=5 // pred_check_branch
        %6021 = sbr.rel (%p6019) target = $region248
      $region247: #{conformer_apply.1} parent=5 // pred_region
        %s6022 = ssub.s32 %s86, 2
      $region248: #{conformer_apply.1} parent=5 // pred_fallthru
        _
    $region6: #{conformer_apply.1} parent=1 // loop_footer
      %s90 = sadd.s32 1, %s86
    $region7: #{conformer_apply.1} parent=1 // loop_footer_branch
      %85 = sbr.rel target = $region3
    $region8: #{conformer_apply.1} parent=1 // loop_exit
      _
    %6023 = vsyncpa [#allocation4], 1
    %s6024 = scalar_lea.sflag [#allocation4], 1
    %6025 = vsyncpa %s6024, 1
    %6026 = vsyncpa [#allocation6], 1
    %6027 = vsyncpa [#allocation9], 1

</llo_original>
